<compile_context>
chip_gen: v7x
topology: tpu7x:2x2x1
jax: 0.10.0
libtpu: 0.0.40
codegen_flags: <defaults>
</compile_context>

<pallas_src>
import functools

import jax
import jax.numpy as jnp
from jax.experimental import pallas as pl
from jax.experimental.pallas import tpu as pltpu


def _round_up(x, m):
    return ((x + m - 1) // m) * m


def _pick_tile(dim, cap, align):
    """Largest divisor of `dim` that is a multiple of `align` and <= cap."""
    if dim <= cap:
        return dim
    for n in range(2, dim // align + 1):
        if dim % n == 0:
            t = dim // n
            if t <= cap and t % align == 0:
                return t
    return align


def _linear_kernel(x_ref, w_ref, b_ref, o_ref, *, slope, apply_act):
    """Fused linear (+ optional LeakyReLU) tile kernel.

    Grid = (M tiles, N tiles, K tiles); K is the reduction axis (last,
    "arbitrary"). The f32 output block is resident across K and serves as the
    accumulator (no extra VMEM scratch, no final acc->out copy).
    """
    k = pl.program_id(2)

    @pl.when(k == 0)
    def _():
        o_ref[...] = jnp.zeros_like(o_ref)

    o_ref[...] += jnp.dot(
        x_ref[...], w_ref[...], preferred_element_type=jnp.float32
    )

    @pl.when(k == pl.num_programs(2) - 1)
    def _():
        y = o_ref[...] + b_ref[...]
        if apply_act:
            y = jnp.where(y > 0, y, slope * y)  # LeakyReLU(slope)
        o_ref[...] = y


def linear_pallas_padded(x, w, b, *, slope=0.01, apply_act=True):
    """y = leaky_relu(x @ w + b) (or x @ w + b) on pre-padded operands.

    Expects x: (Mp, Kp), w: (Kp, Np), b: (1, Np) with Mp % 8 == 0 and
    Kp % 128 == 0, Np % 128 == 0. Returns (Mp, Np) float32.
    """
    Mp, Kp = x.shape
    Kw, Np = w.shape
    assert Kp == Kw and b.shape == (1, Np)
    assert Mp % 8 == 0 and Kp % 128 == 0 and Np % 128 == 0

    # Big tiles: fewer grid steps, lane-dense output stores. Caps keep the
    # double-buffered weight block ~<= 6 MB so it fits every generation's
    # default scoped-VMEM budget (v5e 16 MiB, v6e/v7x 32 MiB).
    tm = _pick_tile(Mp, 256, 8)
    tn = _pick_tile(Np, 2048, 128)   # 4224 -> 1408 (3 parallel N tiles)
    tk = _pick_tile(Kp, 2048, 128)   # 4224 -> 1408 (3 K steps)

    grid = (Mp // tm, Np // tn, Kp // tk)

    return pl.pallas_call(
        functools.partial(_linear_kernel, slope=slope, apply_act=apply_act),
        out_shape=jax.ShapeDtypeStruct((Mp, Np), jnp.float32),
        grid_spec=pltpu.PrefetchScalarGridSpec(
            num_scalar_prefetch=0,
            grid=grid,
            in_specs=[
                pl.BlockSpec((tm, tk), lambda i, j, k: (i, k)),  # x tile
                pl.BlockSpec((tk, tn), lambda i, j, k: (k, j)),  # w tile
                pl.BlockSpec((1, tn), lambda i, j, k: (0, j)),   # bias tile
            ],
            out_specs=pl.BlockSpec((tm, tn), lambda i, j, k: (i, j)),
        ),
        compiler_params=pltpu.CompilerParams(
            dimension_semantics=("parallel", "parallel", "arbitrary"),
            vmem_limit_bytes=32 * 1024 * 1024,
        ),
    )(x, w, b)


def init_params(key, in_dim=4097, hidden_dim=512):
    """Deterministic synthetic parameters matching ModelRegression's shapes."""
    dims = [(in_dim, hidden_dim), (hidden_dim, hidden_dim),
            (hidden_dim, hidden_dim), (hidden_dim, in_dim)]
    params = []
    for fan_in, fan_out in dims:
        kw, kb, key = jax.random.split(key, 3)
        bound = 1.0 / jnp.sqrt(fan_in)
        # Stored as (in_features, out_features) = PyTorch weight transposed.
        w = jax.random.uniform(kw, (fan_in, fan_out), jnp.float32, -bound, bound)
        b = jax.random.uniform(kb, (fan_out,), jnp.float32, -bound, bound)
        params.append((w, b))
    return params


def pad_params(params):
    """Zero-pad all weights/biases once (model-setup time, outside jit)."""
    padded = []
    for w, b in params:
        K, N = w.shape
        Kp, Np = _round_up(K, 128), _round_up(N, 128)
        w_p = jnp.pad(w, ((0, Kp - K), (0, Np - N)))
        b_p = jnp.pad(b, (0, Np - N)).reshape(1, Np)
        padded.append((w_p, b_p))
    return padded


@functools.partial(jax.jit, static_argnames=("out_dim", "slope"))
def model_regression_forward(padded_params, x, *, out_dim, slope=0.01):
    """Forward pass on pre-padded params; pads x once, slices output once."""
    M, K = x.shape
    Kp0 = padded_params[0][0].shape[0]
    Mp = _round_up(M, 8)
    h = jnp.pad(x, ((0, Mp - M), (0, Kp0 - K)))
    n = len(padded_params)
    for i, (w_p, b_p) in enumerate(padded_params):
        h = linear_pallas_padded(h, w_p, b_p, slope=slope, apply_act=(i < n - 1))
    return h[:M, :out_dim]


def model_regression_reference(params, x, slope=0.01):
    h = x
    n = len(params)
    for i, (w, b) in enumerate(params):
        h = h @ w + b
        if i < n - 1:
            h = jnp.where(h > 0, h, slope * h)
    return h


if __name__ == "__main__":
    in_dim = 4097      # module default
    hidden_dim = 512   # fixed by the module
    batch = 4

    key = jax.random.PRNGKey(0)
    kx, kp = jax.random.split(key)
    x = jax.random.normal(kx, (batch, in_dim), jnp.float32)
    params = init_params(kp, in_dim=in_dim, hidden_dim=hidden_dim)
    padded_params = pad_params(params)   # one-time padding, outside jit

    out = model_regression_forward(padded_params, x, out_dim=in_dim)
    out = jax.block_until_ready(out)

    ref = model_regression_reference(params, x)
    assert out.shape == (batch, in_dim), out.shape
    assert jnp.allclose(out, ref, rtol=1e-4, atol=1e-4), (
        float(jnp.max(jnp.abs(out - ref)))
    )
    print("KERNEL_OK")
</pallas_src>

<mosaic_0001>
module attributes {stable_mosaic.version = 11 : i64} {
  func.func @_linear_kernel(%arg0: i32, %arg1: i32, %arg2: i32, %arg3: memref<8x512xf32, #tpu.memory_space<vmem>>, %arg4: memref<512x512xf32, #tpu.memory_space<vmem>>, %arg5: memref<1x512xf32, #tpu.memory_space<vmem>>, %arg6: memref<8x512xf32, #tpu.memory_space<vmem>>) attributes {dimension_semantics = [#tpu.dimension_semantics<parallel>, #tpu.dimension_semantics<parallel>, #tpu.dimension_semantics<arbitrary>], iteration_bounds = array<i64: 1, 1, 1>, scalar_prefetch = 0 : i64, scratch_operands = 0 : i64, tpu.core_type = #tpu.core_type<tc>, window_params = [{transform_indices = @transform_0, window_bounds = array<i64: 8, 512>}, {transform_indices = @transform_1, window_bounds = array<i64: 512, 512>}, {transform_indices = @transform_2, window_bounds = array<i64: 1, 512>}, {transform_indices = @transform_3, window_bounds = array<i64: 8, 512>}]} {
    %c0_i32 = arith.constant 0 : i32
    %0 = arith.cmpi eq, %arg2, %c0_i32 : i32
    %1 = arith.extui %0 : i1 to i32
    %c0_i32_0 = arith.constant 0 : i32
    %2 = arith.cmpi ne, %1, %c0_i32_0 : i32
    scf.if %2 {
      %cst_10 = arith.constant 0.000000e+00 : f32
      %12 = vector.broadcast %cst_10 : f32 to vector<8x512xf32>
      %c0_11 = arith.constant 0 : index
      %c0_12 = arith.constant 0 : index
      %13 = vector.load %arg6[%c0_11, %c0_12] : memref<8x512xf32, #tpu.memory_space<vmem>>, vector<8x512xf32>
      tpu.vector_store %arg6[%c0_11, %c0_12], %12 {strides = array<i32>} : memref<8x512xf32, #tpu.memory_space<vmem>>, vector<8x512xf32>,
    } else {
    }
    %c0 = arith.constant 0 : index
    %c0_1 = arith.constant 0 : index
    %3 = vector.load %arg6[%c0, %c0_1] : memref<8x512xf32, #tpu.memory_space<vmem>>, vector<8x512xf32>
    %c0_2 = arith.constant 0 : index
    %c0_3 = arith.constant 0 : index
    %4 = vector.load %arg3[%c0_2, %c0_3] : memref<8x512xf32, #tpu.memory_space<vmem>>, vector<8x512xf32>
    %c0_4 = arith.constant 0 : index
    %c0_5 = arith.constant 0 : index
    %5 = vector.load %arg4[%c0_4, %c0_5] : memref<512x512xf32, #tpu.memory_space<vmem>>, vector<512x512xf32>
    %cst = arith.constant dense<0.000000e+00> : vector<8x512xf32>
    %6 = tpu.matmul %4, %5, %cst {dimension_numbers = #tpu.dot_dimension_numbers<[1], [0], [0], [1], [0, 0, 1, 1], [], []>} : vector<8x512xf32>, vector<512x512xf32>, vector<8x512xf32> -> vector<8x512xf32>
    %7 = arith.addf %3, %6 : vector<8x512xf32>
    %c0_6 = arith.constant 0 : index
    %c0_7 = arith.constant 0 : index
    %8 = vector.load %arg6[%c0_6, %c0_7] : memref<8x512xf32, #tpu.memory_space<vmem>>, vector<8x512xf32>
    tpu.vector_store %arg6[%c0_6, %c0_7], %7 {strides = array<i32>} : memref<8x512xf32, #tpu.memory_space<vmem>>, vector<8x512xf32>,
    %c0_i32_8 = arith.constant 0 : i32
    %9 = arith.cmpi eq, %arg2, %c0_i32_8 : i32
    %10 = arith.extui %9 : i1 to i32
    %c0_i32_9 = arith.constant 0 : i32
    %11 = arith.cmpi ne, %10, %c0_i32_9 : i32
    scf.if %11 {
      %c0_10 = arith.constant 0 : index
      %c0_11 = arith.constant 0 : index
      %12 = vector.load %arg6[%c0_10, %c0_11] : memref<8x512xf32, #tpu.memory_space<vmem>>, vector<8x512xf32>
      %c0_12 = arith.constant 0 : index
      %c0_13 = arith.constant 0 : index
      %13 = vector.load %arg5[%c0_12, %c0_13] : memref<1x512xf32, #tpu.memory_space<vmem>>, vector<1x512xf32>
      %14 = vector.broadcast %13 : vector<1x512xf32> to vector<8x512xf32>
      %15 = arith.addf %12, %14 : vector<8x512xf32>
      %cst_14 = arith.constant 0.000000e+00 : f32
      %16 = vector.broadcast %cst_14 : f32 to vector<8x512xf32>
      %17 = arith.cmpf ogt, %15, %16 : vector<8x512xf32>
      %cst_15 = arith.constant 0.00999999977 : f32
      %18 = vector.broadcast %cst_15 : f32 to vector<8x512xf32>
      %19 = arith.mulf %18, %15 : vector<8x512xf32>
      %20 = arith.select %17, %15, %19 : vector<8x512xi1>, vector<8x512xf32>
      %c0_16 = arith.constant 0 : index
      %c0_17 = arith.constant 0 : index
      %21 = vector.load %arg6[%c0_16, %c0_17] : memref<8x512xf32, #tpu.memory_space<vmem>>, vector<8x512xf32>
      tpu.vector_store %arg6[%c0_16, %c0_17], %20 {strides = array<i32>} : memref<8x512xf32, #tpu.memory_space<vmem>>, vector<8x512xf32>,
    } else {
    }
    return
  }
  func.func @transform_0(%arg0: i32, %arg1: i32, %arg2: i32) -> (i32, i32) {
    %c0_i32 = arith.constant 0 : i32
    return %arg0, %arg2 : i32, i32
  }
  func.func @transform_1(%arg0: i32, %arg1: i32, %arg2: i32) -> (i32, i32) {
    %c0_i32 = arith.constant 0 : i32
    return %arg2, %arg1 : i32, i32
  }
  func.func @transform_2(%arg0: i32, %arg1: i32, %arg2: i32) -> (i32, i32) {
    %c0_i32 = arith.constant 0 : i32
    %c0_i32_0 = arith.constant 0 : i32
    return %c0_i32, %arg1 : i32, i32
  }
  func.func @transform_3(%arg0: i32, %arg1: i32, %arg2: i32) -> (i32, i32) {
    %c0_i32 = arith.constant 0 : i32
    return %arg0, %arg1 : i32, i32
  }
}

module attributes {stable_mosaic.version = 11 : i64} {
  func.func @_linear_kernel(%arg0: i32, %arg1: i32, %arg2: i32, %arg3: memref<8x512xf32, #tpu.memory_space<vmem>>, %arg4: memref<512x512xf32, #tpu.memory_space<vmem>>, %arg5: memref<1x512xf32, #tpu.memory_space<vmem>>, %arg6: memref<8x512xf32, #tpu.memory_space<vmem>>) attributes {dimension_semantics = [#tpu.dimension_semantics<parallel>, #tpu.dimension_semantics<parallel>, #tpu.dimension_semantics<arbitrary>], iteration_bounds = array<i64: 1, 1, 1>, scalar_prefetch = 0 : i64, scratch_operands = 0 : i64, tpu.core_type = #tpu.core_type<tc>, window_params = [{transform_indices = @transform_0, window_bounds = array<i64: 8, 512>}, {transform_indices = @transform_1, window_bounds = array<i64: 512, 512>}, {transform_indices = @transform_2, window_bounds = array<i64: 1, 512>}, {transform_indices = @transform_3, window_bounds = array<i64: 8, 512>}]} {
    %c0_i32 = arith.constant 0 : i32
    %0 = arith.cmpi eq, %arg2, %c0_i32 : i32
    %1 = arith.extui %0 : i1 to i32
    %c0_i32_0 = arith.constant 0 : i32
    %2 = arith.cmpi ne, %1, %c0_i32_0 : i32
    scf.if %2 {
      %cst_10 = arith.constant 0.000000e+00 : f32
      %12 = vector.broadcast %cst_10 : f32 to vector<8x512xf32>
      %c0_11 = arith.constant 0 : index
      %c0_12 = arith.constant 0 : index
      %13 = vector.load %arg6[%c0_11, %c0_12] : memref<8x512xf32, #tpu.memory_space<vmem>>, vector<8x512xf32>
      tpu.vector_store %arg6[%c0_11, %c0_12], %12 {strides = array<i32>} : memref<8x512xf32, #tpu.memory_space<vmem>>, vector<8x512xf32>,
    } else {
    }
    %c0 = arith.constant 0 : index
    %c0_1 = arith.constant 0 : index
    %3 = vector.load %arg6[%c0, %c0_1] : memref<8x512xf32, #tpu.memory_space<vmem>>, vector<8x512xf32>
    %c0_2 = arith.constant 0 : index
    %c0_3 = arith.constant 0 : index
    %4 = vector.load %arg3[%c0_2, %c0_3] : memref<8x512xf32, #tpu.memory_space<vmem>>, vector<8x512xf32>
    %c0_4 = arith.constant 0 : index
    %c0_5 = arith.constant 0 : index
    %5 = vector.load %arg4[%c0_4, %c0_5] : memref<512x512xf32, #tpu.memory_space<vmem>>, vector<512x512xf32>
    %cst = arith.constant dense<0.000000e+00> : vector<8x512xf32>
    %6 = tpu.matmul %4, %5, %cst {dimension_numbers = #tpu.dot_dimension_numbers<[1], [0], [0], [1], [0, 0, 1, 1], [], []>} : vector<8x512xf32>, vector<512x512xf32>, vector<8x512xf32> -> vector<8x512xf32>
    %7 = arith.addf %3, %6 : vector<8x512xf32>
    %c0_6 = arith.constant 0 : index
    %c0_7 = arith.constant 0 : index
    %8 = vector.load %arg6[%c0_6, %c0_7] : memref<8x512xf32, #tpu.memory_space<vmem>>, vector<8x512xf32>
    tpu.vector_store %arg6[%c0_6, %c0_7], %7 {strides = array<i32>} : memref<8x512xf32, #tpu.memory_space<vmem>>, vector<8x512xf32>,
    %c0_i32_8 = arith.constant 0 : i32
    %9 = arith.cmpi eq, %arg2, %c0_i32_8 : i32
    %10 = arith.extui %9 : i1 to i32
    %c0_i32_9 = arith.constant 0 : i32
    %11 = arith.cmpi ne, %10, %c0_i32_9 : i32
    scf.if %11 {
      %c0_10 = arith.constant 0 : index
      %c0_11 = arith.constant 0 : index
      %12 = vector.load %arg6[%c0_10, %c0_11] : memref<8x512xf32, #tpu.memory_space<vmem>>, vector<8x512xf32>
      %c0_12 = arith.constant 0 : index
      %c0_13 = arith.constant 0 : index
      %13 = vector.load %arg5[%c0_12, %c0_13] : memref<1x512xf32, #tpu.memory_space<vmem>>, vector<1x512xf32>
      %14 = vector.broadcast %13 : vector<1x512xf32> to vector<8x512xf32>
      %15 = arith.addf %12, %14 : vector<8x512xf32>
      %cst_14 = arith.constant 0.000000e+00 : f32
      %16 = vector.broadcast %cst_14 : f32 to vector<8x512xf32>
      %17 = arith.cmpf ogt, %15, %16 : vector<8x512xf32>
      %cst_15 = arith.constant 0.00999999977 : f32
      %18 = vector.broadcast %cst_15 : f32 to vector<8x512xf32>
      %19 = arith.mulf %18, %15 : vector<8x512xf32>
      %20 = arith.select %17, %15, %19 : vector<8x512xi1>, vector<8x512xf32>
      %c0_16 = arith.constant 0 : index
      %c0_17 = arith.constant 0 : index
      %21 = vector.load %arg6[%c0_16, %c0_17] : memref<8x512xf32, #tpu.memory_space<vmem>>, vector<8x512xf32>
      tpu.vector_store %arg6[%c0_16, %c0_17], %20 {strides = array<i32>} : memref<8x512xf32, #tpu.memory_space<vmem>>, vector<8x512xf32>,
    } else {
    }
    return
  }
  func.func @transform_0(%arg0: i32, %arg1: i32, %arg2: i32) -> (i32, i32) {
    %c0_i32 = arith.constant 0 : i32
    return %arg0, %arg2 : i32, i32
  }
  func.func @transform_1(%arg0: i32, %arg1: i32, %arg2: i32) -> (i32, i32) {
    %c0_i32 = arith.constant 0 : i32
    return %arg2, %arg1 : i32, i32
  }
  func.func @transform_2(%arg0: i32, %arg1: i32, %arg2: i32) -> (i32, i32) {
    %c0_i32 = arith.constant 0 : i32
    %c0_i32_0 = arith.constant 0 : i32
    return %c0_i32, %arg1 : i32, i32
  }
  func.func @transform_3(%arg0: i32, %arg1: i32, %arg2: i32) -> (i32, i32) {
    %c0_i32 = arith.constant 0 : i32
    return %arg0, %arg1 : i32, i32
  }
}

module attributes {stable_mosaic.version = 11 : i64} {
  func.func @_linear_kernel(%arg0: i32, %arg1: i32, %arg2: i32, %arg3: memref<8x1408xf32, #tpu.memory_space<vmem>>, %arg4: memref<1408x512xf32, #tpu.memory_space<vmem>>, %arg5: memref<1x512xf32, #tpu.memory_space<vmem>>, %arg6: memref<8x512xf32, #tpu.memory_space<vmem>>) attributes {dimension_semantics = [#tpu.dimension_semantics<parallel>, #tpu.dimension_semantics<parallel>, #tpu.dimension_semantics<arbitrary>], iteration_bounds = array<i64: 1, 1, 3>, scalar_prefetch = 0 : i64, scratch_operands = 0 : i64, tpu.core_type = #tpu.core_type<tc>, window_params = [{transform_indices = @transform_0, window_bounds = array<i64: 8, 1408>}, {transform_indices = @transform_1, window_bounds = array<i64: 1408, 512>}, {transform_indices = @transform_2, window_bounds = array<i64: 1, 512>}, {transform_indices = @transform_3, window_bounds = array<i64: 8, 512>}]} {
    %c0_i32 = arith.constant 0 : i32
    %0 = arith.cmpi eq, %arg2, %c0_i32 : i32
    %1 = arith.extui %0 : i1 to i32
    %c0_i32_0 = arith.constant 0 : i32
    %2 = arith.cmpi ne, %1, %c0_i32_0 : i32
    scf.if %2 {
      %cst_9 = arith.constant 0.000000e+00 : f32
      %12 = vector.broadcast %cst_9 : f32 to vector<8x512xf32>
      %c0_10 = arith.constant 0 : index
      %c0_11 = arith.constant 0 : index
      %13 = vector.load %arg6[%c0_10, %c0_11] : memref<8x512xf32, #tpu.memory_space<vmem>>, vector<8x512xf32>
      tpu.vector_store %arg6[%c0_10, %c0_11], %12 {strides = array<i32>} : memref<8x512xf32, #tpu.memory_space<vmem>>, vector<8x512xf32>,
    } else {
    }
    %c0 = arith.constant 0 : index
    %c0_1 = arith.constant 0 : index
    %3 = vector.load %arg6[%c0, %c0_1] : memref<8x512xf32, #tpu.memory_space<vmem>>, vector<8x512xf32>
    %c0_2 = arith.constant 0 : index
    %c0_3 = arith.constant 0 : index
    %4 = vector.load %arg3[%c0_2, %c0_3] : memref<8x1408xf32, #tpu.memory_space<vmem>>, vector<8x1408xf32>
    %c0_4 = arith.constant 0 : index
    %c0_5 = arith.constant 0 : index
    %5 = vector.load %arg4[%c0_4, %c0_5] : memref<1408x512xf32, #tpu.memory_space<vmem>>, vector<1408x512xf32>
    %cst = arith.constant dense<0.000000e+00> : vector<8x512xf32>
    %6 = tpu.matmul %4, %5, %cst {dimension_numbers = #tpu.dot_dimension_numbers<[1], [0], [0], [1], [0, 0, 1, 1], [], []>} : vector<8x1408xf32>, vector<1408x512xf32>, vector<8x512xf32> -> vector<8x512xf32>
    %7 = arith.addf %3, %6 : vector<8x512xf32>
    %c0_6 = arith.constant 0 : index
    %c0_7 = arith.constant 0 : index
    %8 = vector.load %arg6[%c0_6, %c0_7] : memref<8x512xf32, #tpu.memory_space<vmem>>, vector<8x512xf32>
    tpu.vector_store %arg6[%c0_6, %c0_7], %7 {strides = array<i32>} : memref<8x512xf32, #tpu.memory_space<vmem>>, vector<8x512xf32>,
    %c2_i32 = arith.constant 2 : i32
    %9 = arith.cmpi eq, %arg2, %c2_i32 : i32
    %10 = arith.extui %9 : i1 to i32
    %c0_i32_8 = arith.constant 0 : i32
    %11 = arith.cmpi ne, %10, %c0_i32_8 : i32
    scf.if %11 {
      %c0_9 = arith.constant 0 : index
      %c0_10 = arith.constant 0 : index
      %12 = vector.load %arg6[%c0_9, %c0_10] : memref<8x512xf32, #tpu.memory_space<vmem>>, vector<8x512xf32>
      %c0_11 = arith.constant 0 : index
      %c0_12 = arith.constant 0 : index
      %13 = vector.load %arg5[%c0_11, %c0_12] : memref<1x512xf32, #tpu.memory_space<vmem>>, vector<1x512xf32>
      %14 = vector.broadcast %13 : vector<1x512xf32> to vector<8x512xf32>
      %15 = arith.addf %12, %14 : vector<8x512xf32>
      %cst_13 = arith.constant 0.000000e+00 : f32
      %16 = vector.broadcast %cst_13 : f32 to vector<8x512xf32>
      %17 = arith.cmpf ogt, %15, %16 : vector<8x512xf32>
      %cst_14 = arith.constant 0.00999999977 : f32
      %18 = vector.broadcast %cst_14 : f32 to vector<8x512xf32>
      %19 = arith.mulf %18, %15 : vector<8x512xf32>
      %20 = arith.select %17, %15, %19 : vector<8x512xi1>, vector<8x512xf32>
      %c0_15 = arith.constant 0 : index
      %c0_16 = arith.constant 0 : index
      %21 = vector.load %arg6[%c0_15, %c0_16] : memref<8x512xf32, #tpu.memory_space<vmem>>, vector<8x512xf32>
      tpu.vector_store %arg6[%c0_15, %c0_16], %20 {strides = array<i32>} : memref<8x512xf32, #tpu.memory_space<vmem>>, vector<8x512xf32>,
    } else {
    }
    return
  }
  func.func @transform_0(%arg0: i32, %arg1: i32, %arg2: i32) -> (i32, i32) {
    %c0_i32 = arith.constant 0 : i32
    return %arg0, %arg2 : i32, i32
  }
  func.func @transform_1(%arg0: i32, %arg1: i32, %arg2: i32) -> (i32, i32) {
    %c0_i32 = arith.constant 0 : i32
    return %arg2, %arg1 : i32, i32
  }
  func.func @transform_2(%arg0: i32, %arg1: i32, %arg2: i32) -> (i32, i32) {
    %c0_i32 = arith.constant 0 : i32
    %c0_i32_0 = arith.constant 0 : i32
    return %c0_i32, %arg1 : i32, i32
  }
  func.func @transform_3(%arg0: i32, %arg1: i32, %arg2: i32) -> (i32, i32) {
    %c0_i32 = arith.constant 0 : i32
    return %arg0, %arg1 : i32, i32
  }
}

module attributes {stable_mosaic.version = 11 : i64} {
  func.func @_linear_kernel(%arg0: i32, %arg1: i32, %arg2: i32, %arg3: memref<8x512xf32, #tpu.memory_space<vmem>>, %arg4: memref<512x1408xf32, #tpu.memory_space<vmem>>, %arg5: memref<1x1408xf32, #tpu.memory_space<vmem>>, %arg6: memref<8x1408xf32, #tpu.memory_space<vmem>>) attributes {dimension_semantics = [#tpu.dimension_semantics<parallel>, #tpu.dimension_semantics<parallel>, #tpu.dimension_semantics<arbitrary>], iteration_bounds = array<i64: 1, 3, 1>, scalar_prefetch = 0 : i64, scratch_operands = 0 : i64, tpu.core_type = #tpu.core_type<tc>, window_params = [{transform_indices = @transform_0, window_bounds = array<i64: 8, 512>}, {transform_indices = @transform_1, window_bounds = array<i64: 512, 1408>}, {transform_indices = @transform_2, window_bounds = array<i64: 1, 1408>}, {transform_indices = @transform_3, window_bounds = array<i64: 8, 1408>}]} {
    %c0_i32 = arith.constant 0 : i32
    %0 = arith.cmpi eq, %arg2, %c0_i32 : i32
    %1 = arith.extui %0 : i1 to i32
    %c0_i32_0 = arith.constant 0 : i32
    %2 = arith.cmpi ne, %1, %c0_i32_0 : i32
    scf.if %2 {
      %cst_10 = arith.constant 0.000000e+00 : f32
      %12 = vector.broadcast %cst_10 : f32 to vector<8x1408xf32>
      %c0_11 = arith.constant 0 : index
      %c0_12 = arith.constant 0 : index
      %13 = vector.load %arg6[%c0_11, %c0_12] : memref<8x1408xf32, #tpu.memory_space<vmem>>, vector<8x1408xf32>
      tpu.vector_store %arg6[%c0_11, %c0_12], %12 {strides = array<i32>} : memref<8x1408xf32, #tpu.memory_space<vmem>>, vector<8x1408xf32>,
    } else {
    }
    %c0 = arith.constant 0 : index
    %c0_1 = arith.constant 0 : index
    %3 = vector.load %arg6[%c0, %c0_1] : memref<8x1408xf32, #tpu.memory_space<vmem>>, vector<8x1408xf32>
    %c0_2 = arith.constant 0 : index
    %c0_3 = arith.constant 0 : index
    %4 = vector.load %arg3[%c0_2, %c0_3] : memref<8x512xf32, #tpu.memory_space<vmem>>, vector<8x512xf32>
    %c0_4 = arith.constant 0 : index
    %c0_5 = arith.constant 0 : index
    %5 = vector.load %arg4[%c0_4, %c0_5] : memref<512x1408xf32, #tpu.memory_space<vmem>>, vector<512x1408xf32>
    %cst = arith.constant dense<0.000000e+00> : vector<8x1408xf32>
    %6 = tpu.matmul %4, %5, %cst {dimension_numbers = #tpu.dot_dimension_numbers<[1], [0], [0], [1], [0, 0, 1, 1], [], []>} : vector<8x512xf32>, vector<512x1408xf32>, vector<8x1408xf32> -> vector<8x1408xf32>
    %7 = arith.addf %3, %6 : vector<8x1408xf32>
    %c0_6 = arith.constant 0 : index
    %c0_7 = arith.constant 0 : index
    %8 = vector.load %arg6[%c0_6, %c0_7] : memref<8x1408xf32, #tpu.memory_space<vmem>>, vector<8x1408xf32>
    tpu.vector_store %arg6[%c0_6, %c0_7], %7 {strides = array<i32>} : memref<8x1408xf32, #tpu.memory_space<vmem>>, vector<8x1408xf32>,
    %c0_i32_8 = arith.constant 0 : i32
    %9 = arith.cmpi eq, %arg2, %c0_i32_8 : i32
    %10 = arith.extui %9 : i1 to i32
    %c0_i32_9 = arith.constant 0 : i32
    %11 = arith.cmpi ne, %10, %c0_i32_9 : i32
    scf.if %11 {
      %c0_10 = arith.constant 0 : index
      %c0_11 = arith.constant 0 : index
      %12 = vector.load %arg6[%c0_10, %c0_11] : memref<8x1408xf32, #tpu.memory_space<vmem>>, vector<8x1408xf32>
      %c0_12 = arith.constant 0 : index
      %c0_13 = arith.constant 0 : index
      %13 = vector.load %arg5[%c0_12, %c0_13] : memref<1x1408xf32, #tpu.memory_space<vmem>>, vector<1x1408xf32>
      %14 = vector.broadcast %13 : vector<1x1408xf32> to vector<8x1408xf32>
      %15 = arith.addf %12, %14 : vector<8x1408xf32>
      %c0_14 = arith.constant 0 : index
      %c0_15 = arith.constant 0 : index
      %16 = vector.load %arg6[%c0_14, %c0_15] : memref<8x1408xf32, #tpu.memory_space<vmem>>, vector<8x1408xf32>
      tpu.vector_store %arg6[%c0_14, %c0_15], %15 {strides = array<i32>} : memref<8x1408xf32, #tpu.memory_space<vmem>>, vector<8x1408xf32>,
    } else {
    }
    return
  }
  func.func @transform_0(%arg0: i32, %arg1: i32, %arg2: i32) -> (i32, i32) {
    %c0_i32 = arith.constant 0 : i32
    return %arg0, %arg2 : i32, i32
  }
  func.func @transform_1(%arg0: i32, %arg1: i32, %arg2: i32) -> (i32, i32) {
    %c0_i32 = arith.constant 0 : i32
    return %arg2, %arg1 : i32, i32
  }
  func.func @transform_2(%arg0: i32, %arg1: i32, %arg2: i32) -> (i32, i32) {
    %c0_i32 = arith.constant 0 : i32
    %c0_i32_0 = arith.constant 0 : i32
    return %c0_i32, %arg1 : i32, i32
  }
  func.func @transform_3(%arg0: i32, %arg1: i32, %arg2: i32) -> (i32, i32) {
    %c0_i32 = arith.constant 0 : i32
    return %arg0, %arg1 : i32, i32
  }
}

</mosaic_0001>

<llo_original>
// kernel: model_regression_forward.5
$region0: #{model_regression_forward.5}
  #allocation0 [shape = 'u32[]', space=smem, size = 0x4, offset = 0x4, fixed_abs, tag = 'smem constant byte address 0x4 - core index']
  #allocation1 [shape = 'u32[144,128]{1,0:T(1,128)}', space=vmem, size = 0x12000, scoped, tag = 'internal scratch']
  %s0 = inlined_call_operand.vmem [shape: f32[8,512], index: 0, kind: input, shape index: {}]
  %s1 = inlined_call_operand.hbm [shape: f32[512,512], index: 1, kind: input, shape index: {}]
  %s2 = inlined_call_operand.hbm [shape: f32[1,512], index: 2, kind: input, shape index: {}]
  %s3 = inlined_call_operand.vmem [shape: f32[8,512], index: 3, kind: output, shape index: {}]
  %s4 = sld [smem:[#allocation0]]
  $region38: #{model_regression_forward.5} parent=0
    _
  %s6 = ssub.s32 1, %s4
  %s7 = scalar_select 0, %s6, %s4
  $region1: #{model_regression_forward.5} parent=0
    #allocation2 [shape = 'u8[1048576]{0}', space=vmem, size = 0x100000, scoped, tag = 'input window, operand 1, single buffered']
    #allocation3 [shape = 's32[1]{0}', space=sflag, size = 0x4, scoped, tag = 'scoped memory for model_regression_forward.5']
    #allocation4 [shape = 'u8[2048]{0}', space=vmem, size = 0x800, scoped, tag = 'input window, operand 2, single buffered']
    #allocation5 [shape = 's32[1]{0}', space=sflag, size = 0x4, scoped, tag = 'scoped memory for model_regression_forward.5']
    %8 = vsyncpa [#allocation3], 0
    %9 = vsyncpa [#allocation5], 0
    // Predicated region
    $region2: #{model_regression_forward.5} parent=1 // pred_check
      _
    $region3: #{model_regression_forward.5} parent=1 // pred_check_branch
      %11 = sbr.rel (0) target = $region5
    $region4: #{model_regression_forward.5} parent=1 // pred_region
      _
    $region5: #{model_regression_forward.5} parent=1 // pred_fallthru
      _
    // Predicated region
    $region6: #{model_regression_forward.5} parent=1 // pred_check
      _
    $region7: #{model_regression_forward.5} parent=1 // pred_check_branch
      %13 = sbr.rel (0) target = $region9
    $region8: #{model_regression_forward.5} parent=1 // pred_region
      %s15 = ssub.s32 32768, 32768
      %16 = vsyncadd [#allocation3], %s15
      %s17 = sshll.u32 [#allocation2], 4
      %s18 = int_to_ptr.vmem [resolvable:$true] %s17
      %23 = dma.hbm_to_vmem [thread:$0]  %s1, 32768, %s18, [#allocation3], 512, 512, 32
    $region9: #{model_regression_forward.5} parent=1 // pred_fallthru
      _
    // Predicated region
    $region10: #{model_regression_forward.5} parent=1 // pred_check
      _
    $region11: #{model_regression_forward.5} parent=1 // pred_check_branch
      %25 = sbr.rel (0) target = $region13
    $region12: #{model_regression_forward.5} parent=1 // pred_region
      %s27 = ssub.s32 64, 64
      %28 = vsyncadd [#allocation5], %s27
      %s30 = sshll.u32 [#allocation4], 4
      %s31 = int_to_ptr.vmem [resolvable:$true] %s30
      %33 = dma.hbm_to_vmem [thread:$0]  %s2, 64, %s31, [#allocation5]
    $region13: #{model_regression_forward.5} parent=1 // pred_fallthru
      _
    // Predicated region
    $region14: #{model_regression_forward.5} parent=1 // pred_check
      _
    $region15: #{model_regression_forward.5} parent=1 // pred_check_branch
      %35 = sbr.rel (0) target = $region17
    $region16: #{model_regression_forward.5} parent=1 // pred_region
      %36 = dma.done [#allocation3], 32768
    $region17: #{model_regression_forward.5} parent=1 // pred_fallthru
      _
    // Predicated region
    $region18: #{model_regression_forward.5} parent=1 // pred_check
      _
    $region19: #{model_regression_forward.5} parent=1 // pred_check_branch
      %38 = sbr.rel (0) target = $region21
    $region20: #{model_regression_forward.5} parent=1 // pred_region
      %39 = dma.done [#allocation5], 64
    $region21: #{model_regression_forward.5} parent=1 // pred_fallthru
      _
    %p40 = scmp.eq.s32.totalorder 0, 0
    // Predicated region
    $region22: #{model_regression_forward.5} parent=1 // pred_check
      %p41 = pneg %p40
    $region23: #{model_regression_forward.5} parent=1 // pred_check_branch
      %43 = sbr.rel (%p41) target = $region25
    $region24: #{model_regression_forward.5} parent=1 // pred_region
      %44 = vst [vmem:[%s3] sm:$0xff] 0.0
      %45 = vst [vmem:[%s3 + $0x8] sm:$0xff] 0.0
      %46 = vst [vmem:[%s3 + $0x10] sm:$0xff] 0.0
      %47 = vst [vmem:[%s3 + $0x18] sm:$0xff] 0.0
    $region25: #{model_regression_forward.5} parent=1 // pred_fallthru
      _
    %v48 = vld [vmem:[%s3] sm:$0xff]
    %v49 = vld [vmem:[%s3 + $0x8] sm:$0xff]
    %v50 = vld [vmem:[%s3 + $0x10] sm:$0xff]
    %v51 = vld [vmem:[%s3 + $0x18] sm:$0xff]
    %v52 = vld [vmem:[%s0] sm:$0xff]
    %v53 = vld [vmem:[%s0 + $0x8] sm:$0xff]
    %v54 = vld [vmem:[%s0 + $0x10] sm:$0xff]
    %v55 = vld [vmem:[%s0 + $0x18] sm:$0xff]
    %v56 = vld [vmem:[#allocation2] sm:$0xff]
    %v57 = vld [vmem:[#allocation2 + $0x8] sm:$0xff]
    %v58 = vld [vmem:[#allocation2 + $0x10] sm:$0xff]
    %v59 = vld [vmem:[#allocation2 + $0x18] sm:$0xff]
    %v60 = vld [vmem:[#allocation2 + $0x20] sm:$0xff]
    %v61 = vld [vmem:[#allocation2 + $0x28] sm:$0xff]
    %v62 = vld [vmem:[#allocation2 + $0x30] sm:$0xff]
    %v63 = vld [vmem:[#allocation2 + $0x38] sm:$0xff]
    %v64 = vld [vmem:[#allocation2 + $0x40] sm:$0xff]
    %v65 = vld [vmem:[#allocation2 + $0x48] sm:$0xff]
    %v66 = vld [vmem:[#allocation2 + $0x50] sm:$0xff]
    %v67 = vld [vmem:[#allocation2 + $0x58] sm:$0xff]
    %v68 = vld [vmem:[#allocation2 + $0x60] sm:$0xff]
    %v69 = vld [vmem:[#allocation2 + $0x68] sm:$0xff]
    %v70 = vld [vmem:[#allocation2 + $0x70] sm:$0xff]
    %v71 = vld [vmem:[#allocation2 + $0x78] sm:$0xff]
    %v72 = vld [vmem:[#allocation2 + $0x80] sm:$0xff]
    %v73 = vld [vmem:[#allocation2 + $0x88] sm:$0xff]
    %v74 = vld [vmem:[#allocation2 + $0x90] sm:$0xff]
    %v75 = vld [vmem:[#allocation2 + $0x98] sm:$0xff]
    %v76 = vld [vmem:[#allocation2 + $0xa0] sm:$0xff]
    %v77 = vld [vmem:[#allocation2 + $0xa8] sm:$0xff]
    %v78 = vld [vmem:[#allocation2 + $0xb0] sm:$0xff]
    %v79 = vld [vmem:[#allocation2 + $0xb8] sm:$0xff]
    %v80 = vld [vmem:[#allocation2 + $0xc0] sm:$0xff]
    %v81 = vld [vmem:[#allocation2 + $0xc8] sm:$0xff]
    %v82 = vld [vmem:[#allocation2 + $0xd0] sm:$0xff]
    %v83 = vld [vmem:[#allocation2 + $0xd8] sm:$0xff]
    %v84 = vld [vmem:[#allocation2 + $0xe0] sm:$0xff]
    %v85 = vld [vmem:[#allocation2 + $0xe8] sm:$0xff]
    %v86 = vld [vmem:[#allocation2 + $0xf0] sm:$0xff]
    %v87 = vld [vmem:[#allocation2 + $0xf8] sm:$0xff]
    %v88 = vld [vmem:[#allocation2 + $0x100] sm:$0xff]
    %v89 = vld [vmem:[#allocation2 + $0x108] sm:$0xff]
    %v90 = vld [vmem:[#allocation2 + $0x110] sm:$0xff]
    %v91 = vld [vmem:[#allocation2 + $0x118] sm:$0xff]
    %v92 = vld [vmem:[#allocation2 + $0x120] sm:$0xff]
    %v93 = vld [vmem:[#allocation2 + $0x128] sm:$0xff]
    %v94 = vld [vmem:[#allocation2 + $0x130] sm:$0xff]
    %v95 = vld [vmem:[#allocation2 + $0x138] sm:$0xff]
    %v96 = vld [vmem:[#allocation2 + $0x140] sm:$0xff]
    %v97 = vld [vmem:[#allocation2 + $0x148] sm:$0xff]
    %v98 = vld [vmem:[#allocation2 + $0x150] sm:$0xff]
    %v99 = vld [vmem:[#allocation2 + $0x158] sm:$0xff]
    %v100 = vld [vmem:[#allocation2 + $0x160] sm:$0xff]
    %v101 = vld [vmem:[#allocation2 + $0x168] sm:$0xff]
    %v102 = vld [vmem:[#allocation2 + $0x170] sm:$0xff]
    %v103 = vld [vmem:[#allocation2 + $0x178] sm:$0xff]
    %v104 = vld [vmem:[#allocation2 + $0x180] sm:$0xff]
    %v105 = vld [vmem:[#allocation2 + $0x188] sm:$0xff]
    %v106 = vld [vmem:[#allocation2 + $0x190] sm:$0xff]
    %v107 = vld [vmem:[#allocation2 + $0x198] sm:$0xff]
    %v108 = vld [vmem:[#allocation2 + $0x1a0] sm:$0xff]
    %v109 = vld [vmem:[#allocation2 + $0x1a8] sm:$0xff]
    %v110 = vld [vmem:[#allocation2 + $0x1b0] sm:$0xff]
    %v111 = vld [vmem:[#allocation2 + $0x1b8] sm:$0xff]
    %v112 = vld [vmem:[#allocation2 + $0x1c0] sm:$0xff]
    %v113 = vld [vmem:[#allocation2 + $0x1c8] sm:$0xff]
    %v114 = vld [vmem:[#allocation2 + $0x1d0] sm:$0xff]
    %v115 = vld [vmem:[#allocation2 + $0x1d8] sm:$0xff]
    %v116 = vld [vmem:[#allocation2 + $0x1e0] sm:$0xff]
    %v117 = vld [vmem:[#allocation2 + $0x1e8] sm:$0xff]
    %v118 = vld [vmem:[#allocation2 + $0x1f0] sm:$0xff]
    %v119 = vld [vmem:[#allocation2 + $0x1f8] sm:$0xff]
    %v120 = vld [vmem:[#allocation2 + $0x200] sm:$0xff]
    %v121 = vld [vmem:[#allocation2 + $0x208] sm:$0xff]
    %v122 = vld [vmem:[#allocation2 + $0x210] sm:$0xff]
    %v123 = vld [vmem:[#allocation2 + $0x218] sm:$0xff]
    %v124 = vld [vmem:[#allocation2 + $0x220] sm:$0xff]
    %v125 = vld [vmem:[#allocation2 + $0x228] sm:$0xff]
    %v126 = vld [vmem:[#allocation2 + $0x230] sm:$0xff]
    %v127 = vld [vmem:[#allocation2 + $0x238] sm:$0xff]
    %v128 = vld [vmem:[#allocation2 + $0x240] sm:$0xff]
    %v129 = vld [vmem:[#allocation2 + $0x248] sm:$0xff]
    %v130 = vld [vmem:[#allocation2 + $0x250] sm:$0xff]
    %v131 = vld [vmem:[#allocation2 + $0x258] sm:$0xff]
    %v132 = vld [vmem:[#allocation2 + $0x260] sm:$0xff]
    %v133 = vld [vmem:[#allocation2 + $0x268] sm:$0xff]
    %v134 = vld [vmem:[#allocation2 + $0x270] sm:$0xff]
    %v135 = vld [vmem:[#allocation2 + $0x278] sm:$0xff]
    %v136 = vld [vmem:[#allocation2 + $0x280] sm:$0xff]
    %v137 = vld [vmem:[#allocation2 + $0x288] sm:$0xff]
    %v138 = vld [vmem:[#allocation2 + $0x290] sm:$0xff]
    %v139 = vld [vmem:[#allocation2 + $0x298] sm:$0xff]
    %v140 = vld [vmem:[#allocation2 + $0x2a0] sm:$0xff]
    %v141 = vld [vmem:[#allocation2 + $0x2a8] sm:$0xff]
    %v142 = vld [vmem:[#allocation2 + $0x2b0] sm:$0xff]
    %v143 = vld [vmem:[#allocation2 + $0x2b8] sm:$0xff]
    %v144 = vld [vmem:[#allocation2 + $0x2c0] sm:$0xff]
    %v145 = vld [vmem:[#allocation2 + $0x2c8] sm:$0xff]
    %v146 = vld [vmem:[#allocation2 + $0x2d0] sm:$0xff]
    %v147 = vld [vmem:[#allocation2 + $0x2d8] sm:$0xff]
    %v148 = vld [vmem:[#allocation2 + $0x2e0] sm:$0xff]
    %v149 = vld [vmem:[#allocation2 + $0x2e8] sm:$0xff]
    %v150 = vld [vmem:[#allocation2 + $0x2f0] sm:$0xff]
    %v151 = vld [vmem:[#allocation2 + $0x2f8] sm:$0xff]
    %v152 = vld [vmem:[#allocation2 + $0x300] sm:$0xff]
    %v153 = vld [vmem:[#allocation2 + $0x308] sm:$0xff]
    %v154 = vld [vmem:[#allocation2 + $0x310] sm:$0xff]
    %v155 = vld [vmem:[#allocation2 + $0x318] sm:$0xff]
    %v156 = vld [vmem:[#allocation2 + $0x320] sm:$0xff]
    %v157 = vld [vmem:[#allocation2 + $0x328] sm:$0xff]
    %v158 = vld [vmem:[#allocation2 + $0x330] sm:$0xff]
    %v159 = vld [vmem:[#allocation2 + $0x338] sm:$0xff]
    %v160 = vld [vmem:[#allocation2 + $0x340] sm:$0xff]
    %v161 = vld [vmem:[#allocation2 + $0x348] sm:$0xff]
    %v162 = vld [vmem:[#allocation2 + $0x350] sm:$0xff]
    %v163 = vld [vmem:[#allocation2 + $0x358] sm:$0xff]
    %v164 = vld [vmem:[#allocation2 + $0x360] sm:$0xff]
    %v165 = vld [vmem:[#allocation2 + $0x368] sm:$0xff]
    %v166 = vld [vmem:[#allocation2 + $0x370] sm:$0xff]
    %v167 = vld [vmem:[#allocation2 + $0x378] sm:$0xff]
    %v168 = vld [vmem:[#allocation2 + $0x380] sm:$0xff]
    %v169 = vld [vmem:[#allocation2 + $0x388] sm:$0xff]
    %v170 = vld [vmem:[#allocation2 + $0x390] sm:$0xff]
    %v171 = vld [vmem:[#allocation2 + $0x398] sm:$0xff]
    %v172 = vld [vmem:[#allocation2 + $0x3a0] sm:$0xff]
    %v173 = vld [vmem:[#allocation2 + $0x3a8] sm:$0xff]
    %v174 = vld [vmem:[#allocation2 + $0x3b0] sm:$0xff]
    %v175 = vld [vmem:[#allocation2 + $0x3b8] sm:$0xff]
    %v176 = vld [vmem:[#allocation2 + $0x3c0] sm:$0xff]
    %v177 = vld [vmem:[#allocation2 + $0x3c8] sm:$0xff]
    %v178 = vld [vmem:[#allocation2 + $0x3d0] sm:$0xff]
    %v179 = vld [vmem:[#allocation2 + $0x3d8] sm:$0xff]
    %v180 = vld [vmem:[#allocation2 + $0x3e0] sm:$0xff]
    %v181 = vld [vmem:[#allocation2 + $0x3e8] sm:$0xff]
    %v182 = vld [vmem:[#allocation2 + $0x3f0] sm:$0xff]
    %v183 = vld [vmem:[#allocation2 + $0x3f8] sm:$0xff]
    %v184 = vld [vmem:[#allocation2 + $0x400] sm:$0xff]
    %v185 = vld [vmem:[#allocation2 + $0x408] sm:$0xff]
    %v186 = vld [vmem:[#allocation2 + $0x410] sm:$0xff]
    %v187 = vld [vmem:[#allocation2 + $0x418] sm:$0xff]
    %v188 = vld [vmem:[#allocation2 + $0x420] sm:$0xff]
    %v189 = vld [vmem:[#allocation2 + $0x428] sm:$0xff]
    %v190 = vld [vmem:[#allocation2 + $0x430] sm:$0xff]
    %v191 = vld [vmem:[#allocation2 + $0x438] sm:$0xff]
    %v192 = vld [vmem:[#allocation2 + $0x440] sm:$0xff]
    %v193 = vld [vmem:[#allocation2 + $0x448] sm:$0xff]
    %v194 = vld [vmem:[#allocation2 + $0x450] sm:$0xff]
    %v195 = vld [vmem:[#allocation2 + $0x458] sm:$0xff]
    %v196 = vld [vmem:[#allocation2 + $0x460] sm:$0xff]
    %v197 = vld [vmem:[#allocation2 + $0x468] sm:$0xff]
    %v198 = vld [vmem:[#allocation2 + $0x470] sm:$0xff]
    %v199 = vld [vmem:[#allocation2 + $0x478] sm:$0xff]
    %v200 = vld [vmem:[#allocation2 + $0x480] sm:$0xff]
    %v201 = vld [vmem:[#allocation2 + $0x488] sm:$0xff]
    %v202 = vld [vmem:[#allocation2 + $0x490] sm:$0xff]
    %v203 = vld [vmem:[#allocation2 + $0x498] sm:$0xff]
    %v204 = vld [vmem:[#allocation2 + $0x4a0] sm:$0xff]
    %v205 = vld [vmem:[#allocation2 + $0x4a8] sm:$0xff]
    %v206 = vld [vmem:[#allocation2 + $0x4b0] sm:$0xff]
    %v207 = vld [vmem:[#allocation2 + $0x4b8] sm:$0xff]
    %v208 = vld [vmem:[#allocation2 + $0x4c0] sm:$0xff]
    %v209 = vld [vmem:[#allocation2 + $0x4c8] sm:$0xff]
    %v210 = vld [vmem:[#allocation2 + $0x4d0] sm:$0xff]
    %v211 = vld [vmem:[#allocation2 + $0x4d8] sm:$0xff]
    %v212 = vld [vmem:[#allocation2 + $0x4e0] sm:$0xff]
    %v213 = vld [vmem:[#allocation2 + $0x4e8] sm:$0xff]
    %v214 = vld [vmem:[#allocation2 + $0x4f0] sm:$0xff]
    %v215 = vld [vmem:[#allocation2 + $0x4f8] sm:$0xff]
    %v216 = vld [vmem:[#allocation2 + $0x500] sm:$0xff]
    %v217 = vld [vmem:[#allocation2 + $0x508] sm:$0xff]
    %v218 = vld [vmem:[#allocation2 + $0x510] sm:$0xff]
    %v219 = vld [vmem:[#allocation2 + $0x518] sm:$0xff]
    %v220 = vld [vmem:[#allocation2 + $0x520] sm:$0xff]
    %v221 = vld [vmem:[#allocation2 + $0x528] sm:$0xff]
    %v222 = vld [vmem:[#allocation2 + $0x530] sm:$0xff]
    %v223 = vld [vmem:[#allocation2 + $0x538] sm:$0xff]
    %v224 = vld [vmem:[#allocation2 + $0x540] sm:$0xff]
    %v225 = vld [vmem:[#allocation2 + $0x548] sm:$0xff]
    %v226 = vld [vmem:[#allocation2 + $0x550] sm:$0xff]
    %v227 = vld [vmem:[#allocation2 + $0x558] sm:$0xff]
    %v228 = vld [vmem:[#allocation2 + $0x560] sm:$0xff]
    %v229 = vld [vmem:[#allocation2 + $0x568] sm:$0xff]
    %v230 = vld [vmem:[#allocation2 + $0x570] sm:$0xff]
    %v231 = vld [vmem:[#allocation2 + $0x578] sm:$0xff]
    %v232 = vld [vmem:[#allocation2 + $0x580] sm:$0xff]
    %v233 = vld [vmem:[#allocation2 + $0x588] sm:$0xff]
    %v234 = vld [vmem:[#allocation2 + $0x590] sm:$0xff]
    %v235 = vld [vmem:[#allocation2 + $0x598] sm:$0xff]
    %v236 = vld [vmem:[#allocation2 + $0x5a0] sm:$0xff]
    %v237 = vld [vmem:[#allocation2 + $0x5a8] sm:$0xff]
    %v238 = vld [vmem:[#allocation2 + $0x5b0] sm:$0xff]
    %v239 = vld [vmem:[#allocation2 + $0x5b8] sm:$0xff]
    %v240 = vld [vmem:[#allocation2 + $0x5c0] sm:$0xff]
    %v241 = vld [vmem:[#allocation2 + $0x5c8] sm:$0xff]
    %v242 = vld [vmem:[#allocation2 + $0x5d0] sm:$0xff]
    %v243 = vld [vmem:[#allocation2 + $0x5d8] sm:$0xff]
    %v244 = vld [vmem:[#allocation2 + $0x5e0] sm:$0xff]
    %v245 = vld [vmem:[#allocation2 + $0x5e8] sm:$0xff]
    %v246 = vld [vmem:[#allocation2 + $0x5f0] sm:$0xff]
    %v247 = vld [vmem:[#allocation2 + $0x5f8] sm:$0xff]
    %v248 = vld [vmem:[#allocation2 + $0x600] sm:$0xff]
    %v249 = vld [vmem:[#allocation2 + $0x608] sm:$0xff]
    %v250 = vld [vmem:[#allocation2 + $0x610] sm:$0xff]
    %v251 = vld [vmem:[#allocation2 + $0x618] sm:$0xff]
    %v252 = vld [vmem:[#allocation2 + $0x620] sm:$0xff]
    %v253 = vld [vmem:[#allocation2 + $0x628] sm:$0xff]
    %v254 = vld [vmem:[#allocation2 + $0x630] sm:$0xff]
    %v255 = vld [vmem:[#allocation2 + $0x638] sm:$0xff]
    %v256 = vld [vmem:[#allocation2 + $0x640] sm:$0xff]
    %v257 = vld [vmem:[#allocation2 + $0x648] sm:$0xff]
    %v258 = vld [vmem:[#allocation2 + $0x650] sm:$0xff]
    %v259 = vld [vmem:[#allocation2 + $0x658] sm:$0xff]
    %v260 = vld [vmem:[#allocation2 + $0x660] sm:$0xff]
    %v261 = vld [vmem:[#allocation2 + $0x668] sm:$0xff]
    %v262 = vld [vmem:[#allocation2 + $0x670] sm:$0xff]
    %v263 = vld [vmem:[#allocation2 + $0x678] sm:$0xff]
    %v264 = vld [vmem:[#allocation2 + $0x680] sm:$0xff]
    %v265 = vld [vmem:[#allocation2 + $0x688] sm:$0xff]
    %v266 = vld [vmem:[#allocation2 + $0x690] sm:$0xff]
    %v267 = vld [vmem:[#allocation2 + $0x698] sm:$0xff]
    %v268 = vld [vmem:[#allocation2 + $0x6a0] sm:$0xff]
    %v269 = vld [vmem:[#allocation2 + $0x6a8] sm:$0xff]
    %v270 = vld [vmem:[#allocation2 + $0x6b0] sm:$0xff]
    %v271 = vld [vmem:[#allocation2 + $0x6b8] sm:$0xff]
    %v272 = vld [vmem:[#allocation2 + $0x6c0] sm:$0xff]
    %v273 = vld [vmem:[#allocation2 + $0x6c8] sm:$0xff]
    %v274 = vld [vmem:[#allocation2 + $0x6d0] sm:$0xff]
    %v275 = vld [vmem:[#allocation2 + $0x6d8] sm:$0xff]
    %v276 = vld [vmem:[#allocation2 + $0x6e0] sm:$0xff]
    %v277 = vld [vmem:[#allocation2 + $0x6e8] sm:$0xff]
    %v278 = vld [vmem:[#allocation2 + $0x6f0] sm:$0xff]
    %v279 = vld [vmem:[#allocation2 + $0x6f8] sm:$0xff]
    %v280 = vld [vmem:[#allocation2 + $0x700] sm:$0xff]
    %v281 = vld [vmem:[#allocation2 + $0x708] sm:$0xff]
    %v282 = vld [vmem:[#allocation2 + $0x710] sm:$0xff]
    %v283 = vld [vmem:[#allocation2 + $0x718] sm:$0xff]
    %v284 = vld [vmem:[#allocation2 + $0x720] sm:$0xff]
    %v285 = vld [vmem:[#allocation2 + $0x728] sm:$0xff]
    %v286 = vld [vmem:[#allocation2 + $0x730] sm:$0xff]
    %v287 = vld [vmem:[#allocation2 + $0x738] sm:$0xff]
    %v288 = vld [vmem:[#allocation2 + $0x740] sm:$0xff]
    %v289 = vld [vmem:[#allocation2 + $0x748] sm:$0xff]
    %v290 = vld [vmem:[#allocation2 + $0x750] sm:$0xff]
    %v291 = vld [vmem:[#allocation2 + $0x758] sm:$0xff]
    %v292 = vld [vmem:[#allocation2 + $0x760] sm:$0xff]
    %v293 = vld [vmem:[#allocation2 + $0x768] sm:$0xff]
    %v294 = vld [vmem:[#allocation2 + $0x770] sm:$0xff]
    %v295 = vld [vmem:[#allocation2 + $0x778] sm:$0xff]
    %v296 = vld [vmem:[#allocation2 + $0x780] sm:$0xff]
    %v297 = vld [vmem:[#allocation2 + $0x788] sm:$0xff]
    %v298 = vld [vmem:[#allocation2 + $0x790] sm:$0xff]
    %v299 = vld [vmem:[#allocation2 + $0x798] sm:$0xff]
    %v300 = vld [vmem:[#allocation2 + $0x7a0] sm:$0xff]
    %v301 = vld [vmem:[#allocation2 + $0x7a8] sm:$0xff]
    %v302 = vld [vmem:[#allocation2 + $0x7b0] sm:$0xff]
    %v303 = vld [vmem:[#allocation2 + $0x7b8] sm:$0xff]
    %v304 = vld [vmem:[#allocation2 + $0x7c0] sm:$0xff]
    %v305 = vld [vmem:[#allocation2 + $0x7c8] sm:$0xff]
    %v306 = vld [vmem:[#allocation2 + $0x7d0] sm:$0xff]
    %v307 = vld [vmem:[#allocation2 + $0x7d8] sm:$0xff]
    %v308 = vld [vmem:[#allocation2 + $0x7e0] sm:$0xff]
    %v309 = vld [vmem:[#allocation2 + $0x7e8] sm:$0xff]
    %v310 = vld [vmem:[#allocation2 + $0x7f0] sm:$0xff]
    %v311 = vld [vmem:[#allocation2 + $0x7f8] sm:$0xff]
    %312 = vmatprep.subr.mxu0 %v57
    %313 = vmatpush1.msra.mxu0 %v56
    %314 = vmatprep.subr.mxu0 %v61
    %315 = vmatpush1.msra.mxu0 %v60
    %316 = vmatprep.subr.mxu0 %v65
    %317 = vmatpush1.msra.mxu0 %v64
    %318 = vmatprep.subr.mxu0 %v69
    %319 = vmatpush1.msra.mxu0 %v68
    %320 = vmatprep.subr.mxu0 %v73
    %321 = vmatpush1.msra.mxu0 %v72
    %322 = vmatprep.subr.mxu0 %v77
    %323 = vmatpush1.msra.mxu0 %v76
    %324 = vmatprep.subr.mxu0 %v81
    %325 = vmatpush1.msra.mxu0 %v80
    %326 = vmatprep.subr.mxu0 %v85
    %327 = vmatpush1.msra.mxu0 %v84
    %328 = vmatprep.subr.mxu0 %v89
    %329 = vmatpush1.msra.mxu0 %v88
    %330 = vmatprep.subr.mxu0 %v93
    %331 = vmatpush1.msra.mxu0 %v92
    %332 = vmatprep.subr.mxu0 %v97
    %333 = vmatpush1.msra.mxu0 %v96
    %334 = vmatprep.subr.mxu0 %v101
    %335 = vmatpush1.msra.mxu0 %v100
    %336 = vmatprep.subr.mxu0 %v105
    %337 = vmatpush1.msra.mxu0 %v104
    %338 = vmatprep.subr.mxu0 %v109
    %339 = vmatpush1.msra.mxu0 %v108
    %340 = vmatprep.subr.mxu0 %v113
    %341 = vmatpush1.msra.mxu0 %v112
    %342 = vmatprep.subr.mxu0 %v117
    %343 = vmatpush1.msra.mxu0 %v116
    %344 = vmatprep.subr.mxu0 %v121
    %345 = vmatpush1.msra.mxu0 %v120
    %346 = vmatprep.subr.mxu0 %v125
    %347 = vmatpush1.msra.mxu0 %v124
    %348 = vmatprep.subr.mxu0 %v129
    %349 = vmatpush1.msra.mxu0 %v128
    %350 = vmatprep.subr.mxu0 %v133
    %351 = vmatpush1.msra.mxu0 %v132
    %352 = vmatprep.subr.mxu0 %v137
    %353 = vmatpush1.msra.mxu0 %v136
    %354 = vmatprep.subr.mxu0 %v141
    %355 = vmatpush1.msra.mxu0 %v140
    %356 = vmatprep.subr.mxu0 %v145
    %357 = vmatpush1.msra.mxu0 %v144
    %358 = vmatprep.subr.mxu0 %v149
    %359 = vmatpush1.msra.mxu0 %v148
    %360 = vmatprep.subr.mxu0 %v153
    %361 = vmatpush1.msra.mxu0 %v152
    %362 = vmatprep.subr.mxu0 %v157
    %363 = vmatpush1.msra.mxu0 %v156
    %364 = vmatprep.subr.mxu0 %v161
    %365 = vmatpush1.msra.mxu0 %v160
    %366 = vmatprep.subr.mxu0 %v165
    %367 = vmatpush1.msra.mxu0 %v164
    %368 = vmatprep.subr.mxu0 %v169
    %369 = vmatpush1.msra.mxu0 %v168
    %370 = vmatprep.subr.mxu0 %v173
    %371 = vmatpush1.msra.mxu0 %v172
    %372 = vmatprep.subr.mxu0 %v177
    %373 = vmatpush1.msra.mxu0 %v176
    %374 = vmatprep.subr.mxu0 %v181
    %375 = vmatpush1.msra.mxu0 %v180
    %376 = vmatprep.mubr.f32.mxu0 %v53
    %377 = vmatmul.mubr.f32.gmra.mrb[0].mxu0 %v52
    %v378 = vpop.f32.mrb[0].mxu0
    %v379 = vadd.f32 0.0, %v378
    %v380 = vpop.f32.mrb[0].mxu0
    %v381 = vadd.f32 0.0, %v380
    %382 = vdwg.mxu0
    %383 = vmatprep.subr.mxu0 %v185
    %384 = vmatpush1.msra.mxu0 %v184
    %385 = vmatprep.subr.mxu0 %v189
    %386 = vmatpush1.msra.mxu0 %v188
    %387 = vmatprep.subr.mxu0 %v193
    %388 = vmatpush1.msra.mxu0 %v192
    %389 = vmatprep.subr.mxu0 %v197
    %390 = vmatpush1.msra.mxu0 %v196
    %391 = vmatprep.subr.mxu0 %v201
    %392 = vmatpush1.msra.mxu0 %v200
    %393 = vmatprep.subr.mxu0 %v205
    %394 = vmatpush1.msra.mxu0 %v204
    %395 = vmatprep.subr.mxu0 %v209
    %396 = vmatpush1.msra.mxu0 %v208
    %397 = vmatprep.subr.mxu0 %v213
    %398 = vmatpush1.msra.mxu0 %v212
    %399 = vmatprep.subr.mxu0 %v217
    %400 = vmatpush1.msra.mxu0 %v216
    %401 = vmatprep.subr.mxu0 %v221
    %402 = vmatpush1.msra.mxu0 %v220
    %403 = vmatprep.subr.mxu0 %v225
    %404 = vmatpush1.msra.mxu0 %v224
    %405 = vmatprep.subr.mxu0 %v229
    %406 = vmatpush1.msra.mxu0 %v228
    %407 = vmatprep.subr.mxu0 %v233
    %408 = vmatpush1.msra.mxu0 %v232
    %409 = vmatprep.subr.mxu0 %v237
    %410 = vmatpush1.msra.mxu0 %v236
    %411 = vmatprep.subr.mxu0 %v241
    %412 = vmatpush1.msra.mxu0 %v240
    %413 = vmatprep.subr.mxu0 %v245
    %414 = vmatpush1.msra.mxu0 %v244
    %415 = vmatprep.subr.mxu0 %v249
    %416 = vmatpush1.msra.mxu0 %v248
    %417 = vmatprep.subr.mxu0 %v253
    %418 = vmatpush1.msra.mxu0 %v252
    %419 = vmatprep.subr.mxu0 %v257
    %420 = vmatpush1.msra.mxu0 %v256
    %421 = vmatprep.subr.mxu0 %v261
    %422 = vmatpush1.msra.mxu0 %v260
    %423 = vmatprep.subr.mxu0 %v265
    %424 = vmatpush1.msra.mxu0 %v264
    %425 = vmatprep.subr.mxu0 %v269
    %426 = vmatpush1.msra.mxu0 %v268
    %427 = vmatprep.subr.mxu0 %v273
    %428 = vmatpush1.msra.mxu0 %v272
    %429 = vmatprep.subr.mxu0 %v277
    %430 = vmatpush1.msra.mxu0 %v276
    %431 = vmatprep.subr.mxu0 %v281
    %432 = vmatpush1.msra.mxu0 %v280
    %433 = vmatprep.subr.mxu0 %v285
    %434 = vmatpush1.msra.mxu0 %v284
    %435 = vmatprep.subr.mxu0 %v289
    %436 = vmatpush1.msra.mxu0 %v288
    %437 = vmatprep.subr.mxu0 %v293
    %438 = vmatpush1.msra.mxu0 %v292
    %439 = vmatprep.subr.mxu0 %v297
    %440 = vmatpush1.msra.mxu0 %v296
    %441 = vmatprep.subr.mxu0 %v301
    %442 = vmatpush1.msra.mxu0 %v300
    %443 = vmatprep.subr.mxu0 %v305
    %444 = vmatpush1.msra.mxu0 %v304
    %445 = vmatprep.subr.mxu0 %v309
    %446 = vmatpush1.msra.mxu0 %v308
    %447 = vmatprep.mubr.f32.mxu0 %v55
    %448 = vmatmul.mubr.f32.gmra.mrb[0].mxu0 %v54
    %v449 = vpop.f32.mrb[0].mxu0
    %v450 = vadd.f32 %v379, %v449
    %v451 = vpop.f32.mrb[0].mxu0
    %v452 = vadd.f32 %v381, %v451
    %453 = vdwg.mxu0
    %454 = vmatprep.subr.mxu0 %v59
    %455 = vmatpush1.msra.mxu0 %v58
    %456 = vmatprep.subr.mxu0 %v63
    %457 = vmatpush1.msra.mxu0 %v62
    %458 = vmatprep.subr.mxu0 %v67
    %459 = vmatpush1.msra.mxu0 %v66
    %460 = vmatprep.subr.mxu0 %v71
    %461 = vmatpush1.msra.mxu0 %v70
    %462 = vmatprep.subr.mxu0 %v75
    %463 = vmatpush1.msra.mxu0 %v74
    %464 = vmatprep.subr.mxu0 %v79
    %465 = vmatpush1.msra.mxu0 %v78
    %466 = vmatprep.subr.mxu0 %v83
    %467 = vmatpush1.msra.mxu0 %v82
    %468 = vmatprep.subr.mxu0 %v87
    %469 = vmatpush1.msra.mxu0 %v86
    %470 = vmatprep.subr.mxu0 %v91
    %471 = vmatpush1.msra.mxu0 %v90
    %472 = vmatprep.subr.mxu0 %v95
    %473 = vmatpush1.msra.mxu0 %v94
    %474 = vmatprep.subr.mxu0 %v99
    %475 = vmatpush1.msra.mxu0 %v98
    %476 = vmatprep.subr.mxu0 %v103
    %477 = vmatpush1.msra.mxu0 %v102
    %478 = vmatprep.subr.mxu0 %v107
    %479 = vmatpush1.msra.mxu0 %v106
    %480 = vmatprep.subr.mxu0 %v111
    %481 = vmatpush1.msra.mxu0 %v110
    %482 = vmatprep.subr.mxu0 %v115
    %483 = vmatpush1.msra.mxu0 %v114
    %484 = vmatprep.subr.mxu0 %v119
    %485 = vmatpush1.msra.mxu0 %v118
    %486 = vmatprep.subr.mxu0 %v123
    %487 = vmatpush1.msra.mxu0 %v122
    %488 = vmatprep.subr.mxu0 %v127
    %489 = vmatpush1.msra.mxu0 %v126
    %490 = vmatprep.subr.mxu0 %v131
    %491 = vmatpush1.msra.mxu0 %v130
    %492 = vmatprep.subr.mxu0 %v135
    %493 = vmatpush1.msra.mxu0 %v134
    %494 = vmatprep.subr.mxu0 %v139
    %495 = vmatpush1.msra.mxu0 %v138
    %496 = vmatprep.subr.mxu0 %v143
    %497 = vmatpush1.msra.mxu0 %v142
    %498 = vmatprep.subr.mxu0 %v147
    %499 = vmatpush1.msra.mxu0 %v146
    %500 = vmatprep.subr.mxu0 %v151
    %501 = vmatpush1.msra.mxu0 %v150
    %502 = vmatprep.subr.mxu0 %v155
    %503 = vmatpush1.msra.mxu0 %v154
    %504 = vmatprep.subr.mxu0 %v159
    %505 = vmatpush1.msra.mxu0 %v158
    %506 = vmatprep.subr.mxu0 %v163
    %507 = vmatpush1.msra.mxu0 %v162
    %508 = vmatprep.subr.mxu0 %v167
    %509 = vmatpush1.msra.mxu0 %v166
    %510 = vmatprep.subr.mxu0 %v171
    %511 = vmatpush1.msra.mxu0 %v170
    %512 = vmatprep.subr.mxu0 %v175
    %513 = vmatpush1.msra.mxu0 %v174
    %514 = vmatprep.subr.mxu0 %v179
    %515 = vmatpush1.msra.mxu0 %v178
    %516 = vmatprep.subr.mxu0 %v183
    %517 = vmatpush1.msra.mxu0 %v182
    %518 = vmatprep.mubr.f32.mxu0 %v53
    %519 = vmatmul.mubr.f32.gmra.mrb[0].mxu0 %v52
    %v520 = vpop.f32.mrb[0].mxu0
    %v521 = vadd.f32 0.0, %v520
    %v522 = vpop.f32.mrb[0].mxu0
    %v523 = vadd.f32 0.0, %v522
    %524 = vdwg.mxu0
    %525 = vmatprep.subr.mxu0 %v187
    %526 = vmatpush1.msra.mxu0 %v186
    %527 = vmatprep.subr.mxu0 %v191
    %528 = vmatpush1.msra.mxu0 %v190
    %529 = vmatprep.subr.mxu0 %v195
    %530 = vmatpush1.msra.mxu0 %v194
    %531 = vmatprep.subr.mxu0 %v199
    %532 = vmatpush1.msra.mxu0 %v198
    %533 = vmatprep.subr.mxu0 %v203
    %534 = vmatpush1.msra.mxu0 %v202
    %535 = vmatprep.subr.mxu0 %v207
    %536 = vmatpush1.msra.mxu0 %v206
    %537 = vmatprep.subr.mxu0 %v211
    %538 = vmatpush1.msra.mxu0 %v210
    %539 = vmatprep.subr.mxu0 %v215
    %540 = vmatpush1.msra.mxu0 %v214
    %541 = vmatprep.subr.mxu0 %v219
    %542 = vmatpush1.msra.mxu0 %v218
    %543 = vmatprep.subr.mxu0 %v223
    %544 = vmatpush1.msra.mxu0 %v222
    %545 = vmatprep.subr.mxu0 %v227
    %546 = vmatpush1.msra.mxu0 %v226
    %547 = vmatprep.subr.mxu0 %v231
    %548 = vmatpush1.msra.mxu0 %v230
    %549 = vmatprep.subr.mxu0 %v235
    %550 = vmatpush1.msra.mxu0 %v234
    %551 = vmatprep.subr.mxu0 %v239
    %552 = vmatpush1.msra.mxu0 %v238
    %553 = vmatprep.subr.mxu0 %v243
    %554 = vmatpush1.msra.mxu0 %v242
    %555 = vmatprep.subr.mxu0 %v247
    %556 = vmatpush1.msra.mxu0 %v246
    %557 = vmatprep.subr.mxu0 %v251
    %558 = vmatpush1.msra.mxu0 %v250
    %559 = vmatprep.subr.mxu0 %v255
    %560 = vmatpush1.msra.mxu0 %v254
    %561 = vmatprep.subr.mxu0 %v259
    %562 = vmatpush1.msra.mxu0 %v258
    %563 = vmatprep.subr.mxu0 %v263
    %564 = vmatpush1.msra.mxu0 %v262
    %565 = vmatprep.subr.mxu0 %v267
    %566 = vmatpush1.msra.mxu0 %v266
    %567 = vmatprep.subr.mxu0 %v271
    %568 = vmatpush1.msra.mxu0 %v270
    %569 = vmatprep.subr.mxu0 %v275
    %570 = vmatpush1.msra.mxu0 %v274
    %571 = vmatprep.subr.mxu0 %v279
    %572 = vmatpush1.msra.mxu0 %v278
    %573 = vmatprep.subr.mxu0 %v283
    %574 = vmatpush1.msra.mxu0 %v282
    %575 = vmatprep.subr.mxu0 %v287
    %576 = vmatpush1.msra.mxu0 %v286
    %577 = vmatprep.subr.mxu0 %v291
    %578 = vmatpush1.msra.mxu0 %v290
    %579 = vmatprep.subr.mxu0 %v295
    %580 = vmatpush1.msra.mxu0 %v294
    %581 = vmatprep.subr.mxu0 %v299
    %582 = vmatpush1.msra.mxu0 %v298
    %583 = vmatprep.subr.mxu0 %v303
    %584 = vmatpush1.msra.mxu0 %v302
    %585 = vmatprep.subr.mxu0 %v307
    %586 = vmatpush1.msra.mxu0 %v306
    %587 = vmatprep.subr.mxu0 %v311
    %588 = vmatpush1.msra.mxu0 %v310
    %589 = vmatprep.mubr.f32.mxu0 %v55
    %590 = vmatmul.mubr.f32.gmra.mrb[0].mxu0 %v54
    %v591 = vpop.f32.mrb[0].mxu0
    %v592 = vadd.f32 %v521, %v591
    %v593 = vpop.f32.mrb[0].mxu0
    %v594 = vadd.f32 %v523, %v593
    %595 = vdwg.mxu0
    %v596 = vadd.f32 %v48, %v450
    %v597 = vadd.f32 %v49, %v452
    %v598 = vadd.f32 %v50, %v592
    %v599 = vadd.f32 %v51, %v594
    %600 = vst [vmem:[%s3] sm:$0xff] %v596
    %601 = vst [vmem:[%s3 + $0x8] sm:$0xff] %v597
    %602 = vst [vmem:[%s3 + $0x10] sm:$0xff] %v598
    %603 = vst [vmem:[%s3 + $0x18] sm:$0xff] %v599
    // Predicated region
    $region26: #{model_regression_forward.5} parent=1 // pred_check
      %p604 = pneg %p40
    $region27: #{model_regression_forward.5} parent=1 // pred_check_branch
      %606 = sbr.rel (%p604) target = $region29
    $region28: #{model_regression_forward.5} parent=1 // pred_region
      %v607 = vld [vmem:[%s3] sm:$0xff]
      %v608 = vld [vmem:[%s3 + $0x8] sm:$0xff]
      %v609 = vld [vmem:[%s3 + $0x10] sm:$0xff]
      %v610 = vld [vmem:[%s3 + $0x18] sm:$0xff]
      %v611 = vld [vmem:[#allocation4] sm:$0xf]
      %v613 = vlaneseq
      %v614 = vshrl.u32 %v613, 7
      %v615 = vsub.s32 0, %v614
      %v616 = vrot.slane %v611, %v615
      %v617 = vlaneseq
      %v618 = vshrl.u32 %v617, 7
      %v619 = vsub.s32 1, %v618
      %v620 = vrot.slane %v611, %v619
      %v621 = vlaneseq
      %v622 = vshrl.u32 %v621, 7
      %v623 = vsub.s32 2, %v622
      %v624 = vrot.slane %v611, %v623
      %v625 = vlaneseq
      %v626 = vshrl.u32 %v625, 7
      %v627 = vsub.s32 3, %v626
      %v628 = vrot.slane %v611, %v627
      %v633 = vadd.f32 %v607, %v616
      %v634 = vadd.f32 %v608, %v620
      %v635 = vadd.f32 %v609, %v624
      %v636 = vadd.f32 %v610, %v628
      %vm637 = vcmp.gt.f32.partialorder %v633, 0.0
      %vm638 = vcmp.gt.f32.partialorder %v634, 0.0
      %vm639 = vcmp.gt.f32.partialorder %v635, 0.0
      %vm640 = vcmp.gt.f32.partialorder %v636, 0.0
      %v641 = vmul.f32 %v633, 0.01
      %v642 = vmul.f32 %v634, 0.01
      %v643 = vmul.f32 %v635, 0.01
      %v644 = vmul.f32 %v636, 0.01
      %v645 = vsel %vm637, %v633, %v641
      %v646 = vsel %vm638, %v634, %v642
      %v647 = vsel %vm639, %v635, %v643
      %v648 = vsel %vm640, %v636, %v644
      %649 = vst [vmem:[%s3] sm:$0xff] %v645
      %650 = vst [vmem:[%s3 + $0x8] sm:$0xff] %v646
      %651 = vst [vmem:[%s3 + $0x10] sm:$0xff] %v647
      %652 = vst [vmem:[%s3 + $0x18] sm:$0xff] %v648
    $region29: #{model_regression_forward.5} parent=1 // pred_fallthru
      _
    // Predicated region
    $region30: #{model_regression_forward.5} parent=1 // pred_check
      _
    $region31: #{model_regression_forward.5} parent=1 // pred_check_branch
      %654 = sbr.rel (0) target = $region33
    $region32: #{model_regression_forward.5} parent=1 // pred_region
      _
    $region33: #{model_regression_forward.5} parent=1 // pred_fallthru
      _
    // Predicated region
    $region34: #{model_regression_forward.5} parent=1 // pred_check
      _
    $region35: #{model_regression_forward.5} parent=1 // pred_check_branch
      %656 = sbr.rel (0) target = $region37
    $region36: #{model_regression_forward.5} parent=1 // pred_region
      _
    $region37: #{model_regression_forward.5} parent=1 // pred_fallthru
      _
    %657 = vsyncpa [#allocation3], 1
    %658 = vsyncpa [#allocation5], 1

// kernel: model_regression_forward.6
$region0: #{model_regression_forward.6}
  #allocation0 [shape = 'u32[]', space=smem, size = 0x4, offset = 0x4, fixed_abs, tag = 'smem constant byte address 0x4 - core index']
  #allocation1 [shape = 'u32[144,128]{1,0:T(1,128)}', space=vmem, size = 0x12000, scoped, tag = 'internal scratch']
  %s0 = inlined_call_operand.vmem [shape: f32[8,512], index: 0, kind: input, shape index: {}]
  %s1 = inlined_call_operand.vmem [shape: f32[512,512], index: 1, kind: input, shape index: {}]
  %s2 = inlined_call_operand.vmem [shape: f32[1,512], index: 2, kind: input, shape index: {}]
  %s3 = inlined_call_operand.vmem [shape: f32[8,512], index: 3, kind: output, shape index: {}]
  %s4 = sld [smem:[#allocation0]]
  $region30: #{model_regression_forward.6} parent=0
    _
  %s6 = ssub.s32 1, %s4
  %s7 = scalar_select 0, %s6, %s4
  // Predicated region
  $region2: #{model_regression_forward.6} parent=0 // pred_check
    _
  $region3: #{model_regression_forward.6} parent=0 // pred_check_branch
    %9 = sbr.rel (0) target = $region5
  $region4: #{model_regression_forward.6} parent=0 // pred_region
    _
  $region5: #{model_regression_forward.6} parent=0 // pred_fallthru
    _
  // Predicated region
  $region6: #{model_regression_forward.6} parent=0 // pred_check
    _
  $region7: #{model_regression_forward.6} parent=0 // pred_check_branch
    %11 = sbr.rel (0) target = $region9
  $region8: #{model_regression_forward.6} parent=0 // pred_region
    _
  $region9: #{model_regression_forward.6} parent=0 // pred_fallthru
    _
  // Predicated region
  $region10: #{model_regression_forward.6} parent=0 // pred_check
    _
  $region11: #{model_regression_forward.6} parent=0 // pred_check_branch
    %13 = sbr.rel (0) target = $region13
  $region12: #{model_regression_forward.6} parent=0 // pred_region
    _
  $region13: #{model_regression_forward.6} parent=0 // pred_fallthru
    _
  %p14 = scmp.eq.s32.totalorder 0, 0
  // Predicated region
  $region14: #{model_regression_forward.6} parent=0 // pred_check
    %p15 = pneg %p14
  $region15: #{model_regression_forward.6} parent=0 // pred_check_branch
    %17 = sbr.rel (%p15) target = $region17
  $region16: #{model_regression_forward.6} parent=0 // pred_region
    %18 = vst [vmem:[%s3] sm:$0xff] 0.0
    %19 = vst [vmem:[%s3 + $0x8] sm:$0xff] 0.0
    %20 = vst [vmem:[%s3 + $0x10] sm:$0xff] 0.0
    %21 = vst [vmem:[%s3 + $0x18] sm:$0xff] 0.0
  $region17: #{model_regression_forward.6} parent=0 // pred_fallthru
    _
  %v22 = vld [vmem:[%s3] sm:$0xff]
  %v23 = vld [vmem:[%s3 + $0x8] sm:$0xff]
  %v24 = vld [vmem:[%s3 + $0x10] sm:$0xff]
  %v25 = vld [vmem:[%s3 + $0x18] sm:$0xff]
  %v26 = vld [vmem:[%s0] sm:$0xff]
  %v27 = vld [vmem:[%s0 + $0x8] sm:$0xff]
  %v28 = vld [vmem:[%s0 + $0x10] sm:$0xff]
  %v29 = vld [vmem:[%s0 + $0x18] sm:$0xff]
  %v30 = vld [vmem:[%s1] sm:$0xff]
  %v31 = vld [vmem:[%s1 + $0x8] sm:$0xff]
  %v32 = vld [vmem:[%s1 + $0x10] sm:$0xff]
  %v33 = vld [vmem:[%s1 + $0x18] sm:$0xff]
  %v34 = vld [vmem:[%s1 + $0x20] sm:$0xff]
  %v35 = vld [vmem:[%s1 + $0x28] sm:$0xff]
  %v36 = vld [vmem:[%s1 + $0x30] sm:$0xff]
  %v37 = vld [vmem:[%s1 + $0x38] sm:$0xff]
  %v38 = vld [vmem:[%s1 + $0x40] sm:$0xff]
  %v39 = vld [vmem:[%s1 + $0x48] sm:$0xff]
  %v40 = vld [vmem:[%s1 + $0x50] sm:$0xff]
  %v41 = vld [vmem:[%s1 + $0x58] sm:$0xff]
  %v42 = vld [vmem:[%s1 + $0x60] sm:$0xff]
  %v43 = vld [vmem:[%s1 + $0x68] sm:$0xff]
  %v44 = vld [vmem:[%s1 + $0x70] sm:$0xff]
  %v45 = vld [vmem:[%s1 + $0x78] sm:$0xff]
  %v46 = vld [vmem:[%s1 + $0x80] sm:$0xff]
  %v47 = vld [vmem:[%s1 + $0x88] sm:$0xff]
  %v48 = vld [vmem:[%s1 + $0x90] sm:$0xff]
  %v49 = vld [vmem:[%s1 + $0x98] sm:$0xff]
  %v50 = vld [vmem:[%s1 + $0xa0] sm:$0xff]
  %v51 = vld [vmem:[%s1 + $0xa8] sm:$0xff]
  %v52 = vld [vmem:[%s1 + $0xb0] sm:$0xff]
  %v53 = vld [vmem:[%s1 + $0xb8] sm:$0xff]
  %v54 = vld [vmem:[%s1 + $0xc0] sm:$0xff]
  %v55 = vld [vmem:[%s1 + $0xc8] sm:$0xff]
  %v56 = vld [vmem:[%s1 + $0xd0] sm:$0xff]
  %v57 = vld [vmem:[%s1 + $0xd8] sm:$0xff]
  %v58 = vld [vmem:[%s1 + $0xe0] sm:$0xff]
  %v59 = vld [vmem:[%s1 + $0xe8] sm:$0xff]
  %v60 = vld [vmem:[%s1 + $0xf0] sm:$0xff]
  %v61 = vld [vmem:[%s1 + $0xf8] sm:$0xff]
  %v62 = vld [vmem:[%s1 + $0x100] sm:$0xff]
  %v63 = vld [vmem:[%s1 + $0x108] sm:$0xff]
  %v64 = vld [vmem:[%s1 + $0x110] sm:$0xff]
  %v65 = vld [vmem:[%s1 + $0x118] sm:$0xff]
  %v66 = vld [vmem:[%s1 + $0x120] sm:$0xff]
  %v67 = vld [vmem:[%s1 + $0x128] sm:$0xff]
  %v68 = vld [vmem:[%s1 + $0x130] sm:$0xff]
  %v69 = vld [vmem:[%s1 + $0x138] sm:$0xff]
  %v70 = vld [vmem:[%s1 + $0x140] sm:$0xff]
  %v71 = vld [vmem:[%s1 + $0x148] sm:$0xff]
  %v72 = vld [vmem:[%s1 + $0x150] sm:$0xff]
  %v73 = vld [vmem:[%s1 + $0x158] sm:$0xff]
  %v74 = vld [vmem:[%s1 + $0x160] sm:$0xff]
  %v75 = vld [vmem:[%s1 + $0x168] sm:$0xff]
  %v76 = vld [vmem:[%s1 + $0x170] sm:$0xff]
  %v77 = vld [vmem:[%s1 + $0x178] sm:$0xff]
  %v78 = vld [vmem:[%s1 + $0x180] sm:$0xff]
  %v79 = vld [vmem:[%s1 + $0x188] sm:$0xff]
  %v80 = vld [vmem:[%s1 + $0x190] sm:$0xff]
  %v81 = vld [vmem:[%s1 + $0x198] sm:$0xff]
  %v82 = vld [vmem:[%s1 + $0x1a0] sm:$0xff]
  %v83 = vld [vmem:[%s1 + $0x1a8] sm:$0xff]
  %v84 = vld [vmem:[%s1 + $0x1b0] sm:$0xff]
  %v85 = vld [vmem:[%s1 + $0x1b8] sm:$0xff]
  %v86 = vld [vmem:[%s1 + $0x1c0] sm:$0xff]
  %v87 = vld [vmem:[%s1 + $0x1c8] sm:$0xff]
  %v88 = vld [vmem:[%s1 + $0x1d0] sm:$0xff]
  %v89 = vld [vmem:[%s1 + $0x1d8] sm:$0xff]
  %v90 = vld [vmem:[%s1 + $0x1e0] sm:$0xff]
  %v91 = vld [vmem:[%s1 + $0x1e8] sm:$0xff]
  %v92 = vld [vmem:[%s1 + $0x1f0] sm:$0xff]
  %v93 = vld [vmem:[%s1 + $0x1f8] sm:$0xff]
  %v94 = vld [vmem:[%s1 + $0x200] sm:$0xff]
  %v95 = vld [vmem:[%s1 + $0x208] sm:$0xff]
  %v96 = vld [vmem:[%s1 + $0x210] sm:$0xff]
  %v97 = vld [vmem:[%s1 + $0x218] sm:$0xff]
  %v98 = vld [vmem:[%s1 + $0x220] sm:$0xff]
  %v99 = vld [vmem:[%s1 + $0x228] sm:$0xff]
  %v100 = vld [vmem:[%s1 + $0x230] sm:$0xff]
  %v101 = vld [vmem:[%s1 + $0x238] sm:$0xff]
  %v102 = vld [vmem:[%s1 + $0x240] sm:$0xff]
  %v103 = vld [vmem:[%s1 + $0x248] sm:$0xff]
  %v104 = vld [vmem:[%s1 + $0x250] sm:$0xff]
  %v105 = vld [vmem:[%s1 + $0x258] sm:$0xff]
  %v106 = vld [vmem:[%s1 + $0x260] sm:$0xff]
  %v107 = vld [vmem:[%s1 + $0x268] sm:$0xff]
  %v108 = vld [vmem:[%s1 + $0x270] sm:$0xff]
  %v109 = vld [vmem:[%s1 + $0x278] sm:$0xff]
  %v110 = vld [vmem:[%s1 + $0x280] sm:$0xff]
  %v111 = vld [vmem:[%s1 + $0x288] sm:$0xff]
  %v112 = vld [vmem:[%s1 + $0x290] sm:$0xff]
  %v113 = vld [vmem:[%s1 + $0x298] sm:$0xff]
  %v114 = vld [vmem:[%s1 + $0x2a0] sm:$0xff]
  %v115 = vld [vmem:[%s1 + $0x2a8] sm:$0xff]
  %v116 = vld [vmem:[%s1 + $0x2b0] sm:$0xff]
  %v117 = vld [vmem:[%s1 + $0x2b8] sm:$0xff]
  %v118 = vld [vmem:[%s1 + $0x2c0] sm:$0xff]
  %v119 = vld [vmem:[%s1 + $0x2c8] sm:$0xff]
  %v120 = vld [vmem:[%s1 + $0x2d0] sm:$0xff]
  %v121 = vld [vmem:[%s1 + $0x2d8] sm:$0xff]
  %v122 = vld [vmem:[%s1 + $0x2e0] sm:$0xff]
  %v123 = vld [vmem:[%s1 + $0x2e8] sm:$0xff]
  %v124 = vld [vmem:[%s1 + $0x2f0] sm:$0xff]
  %v125 = vld [vmem:[%s1 + $0x2f8] sm:$0xff]
  %v126 = vld [vmem:[%s1 + $0x300] sm:$0xff]
  %v127 = vld [vmem:[%s1 + $0x308] sm:$0xff]
  %v128 = vld [vmem:[%s1 + $0x310] sm:$0xff]
  %v129 = vld [vmem:[%s1 + $0x318] sm:$0xff]
  %v130 = vld [vmem:[%s1 + $0x320] sm:$0xff]
  %v131 = vld [vmem:[%s1 + $0x328] sm:$0xff]
  %v132 = vld [vmem:[%s1 + $0x330] sm:$0xff]
  %v133 = vld [vmem:[%s1 + $0x338] sm:$0xff]
  %v134 = vld [vmem:[%s1 + $0x340] sm:$0xff]
  %v135 = vld [vmem:[%s1 + $0x348] sm:$0xff]
  %v136 = vld [vmem:[%s1 + $0x350] sm:$0xff]
  %v137 = vld [vmem:[%s1 + $0x358] sm:$0xff]
  %v138 = vld [vmem:[%s1 + $0x360] sm:$0xff]
  %v139 = vld [vmem:[%s1 + $0x368] sm:$0xff]
  %v140 = vld [vmem:[%s1 + $0x370] sm:$0xff]
  %v141 = vld [vmem:[%s1 + $0x378] sm:$0xff]
  %v142 = vld [vmem:[%s1 + $0x380] sm:$0xff]
  %v143 = vld [vmem:[%s1 + $0x388] sm:$0xff]
  %v144 = vld [vmem:[%s1 + $0x390] sm:$0xff]
  %v145 = vld [vmem:[%s1 + $0x398] sm:$0xff]
  %v146 = vld [vmem:[%s1 + $0x3a0] sm:$0xff]
  %v147 = vld [vmem:[%s1 + $0x3a8] sm:$0xff]
  %v148 = vld [vmem:[%s1 + $0x3b0] sm:$0xff]
  %v149 = vld [vmem:[%s1 + $0x3b8] sm:$0xff]
  %v150 = vld [vmem:[%s1 + $0x3c0] sm:$0xff]
  %v151 = vld [vmem:[%s1 + $0x3c8] sm:$0xff]
  %v152 = vld [vmem:[%s1 + $0x3d0] sm:$0xff]
  %v153 = vld [vmem:[%s1 + $0x3d8] sm:$0xff]
  %v154 = vld [vmem:[%s1 + $0x3e0] sm:$0xff]
  %v155 = vld [vmem:[%s1 + $0x3e8] sm:$0xff]
  %v156 = vld [vmem:[%s1 + $0x3f0] sm:$0xff]
  %v157 = vld [vmem:[%s1 + $0x3f8] sm:$0xff]
  %v158 = vld [vmem:[%s1 + $0x400] sm:$0xff]
  %v159 = vld [vmem:[%s1 + $0x408] sm:$0xff]
  %v160 = vld [vmem:[%s1 + $0x410] sm:$0xff]
  %v161 = vld [vmem:[%s1 + $0x418] sm:$0xff]
  %v162 = vld [vmem:[%s1 + $0x420] sm:$0xff]
  %v163 = vld [vmem:[%s1 + $0x428] sm:$0xff]
  %v164 = vld [vmem:[%s1 + $0x430] sm:$0xff]
  %v165 = vld [vmem:[%s1 + $0x438] sm:$0xff]
  %v166 = vld [vmem:[%s1 + $0x440] sm:$0xff]
  %v167 = vld [vmem:[%s1 + $0x448] sm:$0xff]
  %v168 = vld [vmem:[%s1 + $0x450] sm:$0xff]
  %v169 = vld [vmem:[%s1 + $0x458] sm:$0xff]
  %v170 = vld [vmem:[%s1 + $0x460] sm:$0xff]
  %v171 = vld [vmem:[%s1 + $0x468] sm:$0xff]
  %v172 = vld [vmem:[%s1 + $0x470] sm:$0xff]
  %v173 = vld [vmem:[%s1 + $0x478] sm:$0xff]
  %v174 = vld [vmem:[%s1 + $0x480] sm:$0xff]
  %v175 = vld [vmem:[%s1 + $0x488] sm:$0xff]
  %v176 = vld [vmem:[%s1 + $0x490] sm:$0xff]
  %v177 = vld [vmem:[%s1 + $0x498] sm:$0xff]
  %v178 = vld [vmem:[%s1 + $0x4a0] sm:$0xff]
  %v179 = vld [vmem:[%s1 + $0x4a8] sm:$0xff]
  %v180 = vld [vmem:[%s1 + $0x4b0] sm:$0xff]
  %v181 = vld [vmem:[%s1 + $0x4b8] sm:$0xff]
  %v182 = vld [vmem:[%s1 + $0x4c0] sm:$0xff]
  %v183 = vld [vmem:[%s1 + $0x4c8] sm:$0xff]
  %v184 = vld [vmem:[%s1 + $0x4d0] sm:$0xff]
  %v185 = vld [vmem:[%s1 + $0x4d8] sm:$0xff]
  %v186 = vld [vmem:[%s1 + $0x4e0] sm:$0xff]
  %v187 = vld [vmem:[%s1 + $0x4e8] sm:$0xff]
  %v188 = vld [vmem:[%s1 + $0x4f0] sm:$0xff]
  %v189 = vld [vmem:[%s1 + $0x4f8] sm:$0xff]
  %v190 = vld [vmem:[%s1 + $0x500] sm:$0xff]
  %v191 = vld [vmem:[%s1 + $0x508] sm:$0xff]
  %v192 = vld [vmem:[%s1 + $0x510] sm:$0xff]
  %v193 = vld [vmem:[%s1 + $0x518] sm:$0xff]
  %v194 = vld [vmem:[%s1 + $0x520] sm:$0xff]
  %v195 = vld [vmem:[%s1 + $0x528] sm:$0xff]
  %v196 = vld [vmem:[%s1 + $0x530] sm:$0xff]
  %v197 = vld [vmem:[%s1 + $0x538] sm:$0xff]
  %v198 = vld [vmem:[%s1 + $0x540] sm:$0xff]
  %v199 = vld [vmem:[%s1 + $0x548] sm:$0xff]
  %v200 = vld [vmem:[%s1 + $0x550] sm:$0xff]
  %v201 = vld [vmem:[%s1 + $0x558] sm:$0xff]
  %v202 = vld [vmem:[%s1 + $0x560] sm:$0xff]
  %v203 = vld [vmem:[%s1 + $0x568] sm:$0xff]
  %v204 = vld [vmem:[%s1 + $0x570] sm:$0xff]
  %v205 = vld [vmem:[%s1 + $0x578] sm:$0xff]
  %v206 = vld [vmem:[%s1 + $0x580] sm:$0xff]
  %v207 = vld [vmem:[%s1 + $0x588] sm:$0xff]
  %v208 = vld [vmem:[%s1 + $0x590] sm:$0xff]
  %v209 = vld [vmem:[%s1 + $0x598] sm:$0xff]
  %v210 = vld [vmem:[%s1 + $0x5a0] sm:$0xff]
  %v211 = vld [vmem:[%s1 + $0x5a8] sm:$0xff]
  %v212 = vld [vmem:[%s1 + $0x5b0] sm:$0xff]
  %v213 = vld [vmem:[%s1 + $0x5b8] sm:$0xff]
  %v214 = vld [vmem:[%s1 + $0x5c0] sm:$0xff]
  %v215 = vld [vmem:[%s1 + $0x5c8] sm:$0xff]
  %v216 = vld [vmem:[%s1 + $0x5d0] sm:$0xff]
  %v217 = vld [vmem:[%s1 + $0x5d8] sm:$0xff]
  %v218 = vld [vmem:[%s1 + $0x5e0] sm:$0xff]
  %v219 = vld [vmem:[%s1 + $0x5e8] sm:$0xff]
  %v220 = vld [vmem:[%s1 + $0x5f0] sm:$0xff]
  %v221 = vld [vmem:[%s1 + $0x5f8] sm:$0xff]
  %v222 = vld [vmem:[%s1 + $0x600] sm:$0xff]
  %v223 = vld [vmem:[%s1 + $0x608] sm:$0xff]
  %v224 = vld [vmem:[%s1 + $0x610] sm:$0xff]
  %v225 = vld [vmem:[%s1 + $0x618] sm:$0xff]
  %v226 = vld [vmem:[%s1 + $0x620] sm:$0xff]
  %v227 = vld [vmem:[%s1 + $0x628] sm:$0xff]
  %v228 = vld [vmem:[%s1 + $0x630] sm:$0xff]
  %v229 = vld [vmem:[%s1 + $0x638] sm:$0xff]
  %v230 = vld [vmem:[%s1 + $0x640] sm:$0xff]
  %v231 = vld [vmem:[%s1 + $0x648] sm:$0xff]
  %v232 = vld [vmem:[%s1 + $0x650] sm:$0xff]
  %v233 = vld [vmem:[%s1 + $0x658] sm:$0xff]
  %v234 = vld [vmem:[%s1 + $0x660] sm:$0xff]
  %v235 = vld [vmem:[%s1 + $0x668] sm:$0xff]
  %v236 = vld [vmem:[%s1 + $0x670] sm:$0xff]
  %v237 = vld [vmem:[%s1 + $0x678] sm:$0xff]
  %v238 = vld [vmem:[%s1 + $0x680] sm:$0xff]
  %v239 = vld [vmem:[%s1 + $0x688] sm:$0xff]
  %v240 = vld [vmem:[%s1 + $0x690] sm:$0xff]
  %v241 = vld [vmem:[%s1 + $0x698] sm:$0xff]
  %v242 = vld [vmem:[%s1 + $0x6a0] sm:$0xff]
  %v243 = vld [vmem:[%s1 + $0x6a8] sm:$0xff]
  %v244 = vld [vmem:[%s1 + $0x6b0] sm:$0xff]
  %v245 = vld [vmem:[%s1 + $0x6b8] sm:$0xff]
  %v246 = vld [vmem:[%s1 + $0x6c0] sm:$0xff]
  %v247 = vld [vmem:[%s1 + $0x6c8] sm:$0xff]
  %v248 = vld [vmem:[%s1 + $0x6d0] sm:$0xff]
  %v249 = vld [vmem:[%s1 + $0x6d8] sm:$0xff]
  %v250 = vld [vmem:[%s1 + $0x6e0] sm:$0xff]
  %v251 = vld [vmem:[%s1 + $0x6e8] sm:$0xff]
  %v252 = vld [vmem:[%s1 + $0x6f0] sm:$0xff]
  %v253 = vld [vmem:[%s1 + $0x6f8] sm:$0xff]
  %v254 = vld [vmem:[%s1 + $0x700] sm:$0xff]
  %v255 = vld [vmem:[%s1 + $0x708] sm:$0xff]
  %v256 = vld [vmem:[%s1 + $0x710] sm:$0xff]
  %v257 = vld [vmem:[%s1 + $0x718] sm:$0xff]
  %v258 = vld [vmem:[%s1 + $0x720] sm:$0xff]
  %v259 = vld [vmem:[%s1 + $0x728] sm:$0xff]
  %v260 = vld [vmem:[%s1 + $0x730] sm:$0xff]
  %v261 = vld [vmem:[%s1 + $0x738] sm:$0xff]
  %v262 = vld [vmem:[%s1 + $0x740] sm:$0xff]
  %v263 = vld [vmem:[%s1 + $0x748] sm:$0xff]
  %v264 = vld [vmem:[%s1 + $0x750] sm:$0xff]
  %v265 = vld [vmem:[%s1 + $0x758] sm:$0xff]
  %v266 = vld [vmem:[%s1 + $0x760] sm:$0xff]
  %v267 = vld [vmem:[%s1 + $0x768] sm:$0xff]
  %v268 = vld [vmem:[%s1 + $0x770] sm:$0xff]
  %v269 = vld [vmem:[%s1 + $0x778] sm:$0xff]
  %v270 = vld [vmem:[%s1 + $0x780] sm:$0xff]
  %v271 = vld [vmem:[%s1 + $0x788] sm:$0xff]
  %v272 = vld [vmem:[%s1 + $0x790] sm:$0xff]
  %v273 = vld [vmem:[%s1 + $0x798] sm:$0xff]
  %v274 = vld [vmem:[%s1 + $0x7a0] sm:$0xff]
  %v275 = vld [vmem:[%s1 + $0x7a8] sm:$0xff]
  %v276 = vld [vmem:[%s1 + $0x7b0] sm:$0xff]
  %v277 = vld [vmem:[%s1 + $0x7b8] sm:$0xff]
  %v278 = vld [vmem:[%s1 + $0x7c0] sm:$0xff]
  %v279 = vld [vmem:[%s1 + $0x7c8] sm:$0xff]
  %v280 = vld [vmem:[%s1 + $0x7d0] sm:$0xff]
  %v281 = vld [vmem:[%s1 + $0x7d8] sm:$0xff]
  %v282 = vld [vmem:[%s1 + $0x7e0] sm:$0xff]
  %v283 = vld [vmem:[%s1 + $0x7e8] sm:$0xff]
  %v284 = vld [vmem:[%s1 + $0x7f0] sm:$0xff]
  %v285 = vld [vmem:[%s1 + $0x7f8] sm:$0xff]
  %286 = vmatprep.subr.mxu0 %v31
  %287 = vmatpush1.msra.mxu0 %v30
  %288 = vmatprep.subr.mxu0 %v35
  %289 = vmatpush1.msra.mxu0 %v34
  %290 = vmatprep.subr.mxu0 %v39
  %291 = vmatpush1.msra.mxu0 %v38
  %292 = vmatprep.subr.mxu0 %v43
  %293 = vmatpush1.msra.mxu0 %v42
  %294 = vmatprep.subr.mxu0 %v47
  %295 = vmatpush1.msra.mxu0 %v46
  %296 = vmatprep.subr.mxu0 %v51
  %297 = vmatpush1.msra.mxu0 %v50
  %298 = vmatprep.subr.mxu0 %v55
  %299 = vmatpush1.msra.mxu0 %v54
  %300 = vmatprep.subr.mxu0 %v59
  %301 = vmatpush1.msra.mxu0 %v58
  %302 = vmatprep.subr.mxu0 %v63
  %303 = vmatpush1.msra.mxu0 %v62
  %304 = vmatprep.subr.mxu0 %v67
  %305 = vmatpush1.msra.mxu0 %v66
  %306 = vmatprep.subr.mxu0 %v71
  %307 = vmatpush1.msra.mxu0 %v70
  %308 = vmatprep.subr.mxu0 %v75
  %309 = vmatpush1.msra.mxu0 %v74
  %310 = vmatprep.subr.mxu0 %v79
  %311 = vmatpush1.msra.mxu0 %v78
  %312 = vmatprep.subr.mxu0 %v83
  %313 = vmatpush1.msra.mxu0 %v82
  %314 = vmatprep.subr.mxu0 %v87
  %315 = vmatpush1.msra.mxu0 %v86
  %316 = vmatprep.subr.mxu0 %v91
  %317 = vmatpush1.msra.mxu0 %v90
  %318 = vmatprep.subr.mxu0 %v95
  %319 = vmatpush1.msra.mxu0 %v94
  %320 = vmatprep.subr.mxu0 %v99
  %321 = vmatpush1.msra.mxu0 %v98
  %322 = vmatprep.subr.mxu0 %v103
  %323 = vmatpush1.msra.mxu0 %v102
  %324 = vmatprep.subr.mxu0 %v107
  %325 = vmatpush1.msra.mxu0 %v106
  %326 = vmatprep.subr.mxu0 %v111
  %327 = vmatpush1.msra.mxu0 %v110
  %328 = vmatprep.subr.mxu0 %v115
  %329 = vmatpush1.msra.mxu0 %v114
  %330 = vmatprep.subr.mxu0 %v119
  %331 = vmatpush1.msra.mxu0 %v118
  %332 = vmatprep.subr.mxu0 %v123
  %333 = vmatpush1.msra.mxu0 %v122
  %334 = vmatprep.subr.mxu0 %v127
  %335 = vmatpush1.msra.mxu0 %v126
  %336 = vmatprep.subr.mxu0 %v131
  %337 = vmatpush1.msra.mxu0 %v130
  %338 = vmatprep.subr.mxu0 %v135
  %339 = vmatpush1.msra.mxu0 %v134
  %340 = vmatprep.subr.mxu0 %v139
  %341 = vmatpush1.msra.mxu0 %v138
  %342 = vmatprep.subr.mxu0 %v143
  %343 = vmatpush1.msra.mxu0 %v142
  %344 = vmatprep.subr.mxu0 %v147
  %345 = vmatpush1.msra.mxu0 %v146
  %346 = vmatprep.subr.mxu0 %v151
  %347 = vmatpush1.msra.mxu0 %v150
  %348 = vmatprep.subr.mxu0 %v155
  %349 = vmatpush1.msra.mxu0 %v154
  %350 = vmatprep.mubr.f32.mxu0 %v27
  %351 = vmatmul.mubr.f32.gmra.mrb[0].mxu0 %v26
  %v352 = vpop.f32.mrb[0].mxu0
  %v353 = vadd.f32 0.0, %v352
  %v354 = vpop.f32.mrb[0].mxu0
  %v355 = vadd.f32 0.0, %v354
  %356 = vdwg.mxu0
  %357 = vmatprep.subr.mxu0 %v159
  %358 = vmatpush1.msra.mxu0 %v158
  %359 = vmatprep.subr.mxu0 %v163
  %360 = vmatpush1.msra.mxu0 %v162
  %361 = vmatprep.subr.mxu0 %v167
  %362 = vmatpush1.msra.mxu0 %v166
  %363 = vmatprep.subr.mxu0 %v171
  %364 = vmatpush1.msra.mxu0 %v170
  %365 = vmatprep.subr.mxu0 %v175
  %366 = vmatpush1.msra.mxu0 %v174
  %367 = vmatprep.subr.mxu0 %v179
  %368 = vmatpush1.msra.mxu0 %v178
  %369 = vmatprep.subr.mxu0 %v183
  %370 = vmatpush1.msra.mxu0 %v182
  %371 = vmatprep.subr.mxu0 %v187
  %372 = vmatpush1.msra.mxu0 %v186
  %373 = vmatprep.subr.mxu0 %v191
  %374 = vmatpush1.msra.mxu0 %v190
  %375 = vmatprep.subr.mxu0 %v195
  %376 = vmatpush1.msra.mxu0 %v194
  %377 = vmatprep.subr.mxu0 %v199
  %378 = vmatpush1.msra.mxu0 %v198
  %379 = vmatprep.subr.mxu0 %v203
  %380 = vmatpush1.msra.mxu0 %v202
  %381 = vmatprep.subr.mxu0 %v207
  %382 = vmatpush1.msra.mxu0 %v206
  %383 = vmatprep.subr.mxu0 %v211
  %384 = vmatpush1.msra.mxu0 %v210
  %385 = vmatprep.subr.mxu0 %v215
  %386 = vmatpush1.msra.mxu0 %v214
  %387 = vmatprep.subr.mxu0 %v219
  %388 = vmatpush1.msra.mxu0 %v218
  %389 = vmatprep.subr.mxu0 %v223
  %390 = vmatpush1.msra.mxu0 %v222
  %391 = vmatprep.subr.mxu0 %v227
  %392 = vmatpush1.msra.mxu0 %v226
  %393 = vmatprep.subr.mxu0 %v231
  %394 = vmatpush1.msra.mxu0 %v230
  %395 = vmatprep.subr.mxu0 %v235
  %396 = vmatpush1.msra.mxu0 %v234
  %397 = vmatprep.subr.mxu0 %v239
  %398 = vmatpush1.msra.mxu0 %v238
  %399 = vmatprep.subr.mxu0 %v243
  %400 = vmatpush1.msra.mxu0 %v242
  %401 = vmatprep.subr.mxu0 %v247
  %402 = vmatpush1.msra.mxu0 %v246
  %403 = vmatprep.subr.mxu0 %v251
  %404 = vmatpush1.msra.mxu0 %v250
  %405 = vmatprep.subr.mxu0 %v255
  %406 = vmatpush1.msra.mxu0 %v254
  %407 = vmatprep.subr.mxu0 %v259
  %408 = vmatpush1.msra.mxu0 %v258
  %409 = vmatprep.subr.mxu0 %v263
  %410 = vmatpush1.msra.mxu0 %v262
  %411 = vmatprep.subr.mxu0 %v267
  %412 = vmatpush1.msra.mxu0 %v266
  %413 = vmatprep.subr.mxu0 %v271
  %414 = vmatpush1.msra.mxu0 %v270
  %415 = vmatprep.subr.mxu0 %v275
  %416 = vmatpush1.msra.mxu0 %v274
  %417 = vmatprep.subr.mxu0 %v279
  %418 = vmatpush1.msra.mxu0 %v278
  %419 = vmatprep.subr.mxu0 %v283
  %420 = vmatpush1.msra.mxu0 %v282
  %421 = vmatprep.mubr.f32.mxu0 %v29
  %422 = vmatmul.mubr.f32.gmra.mrb[0].mxu0 %v28
  %v423 = vpop.f32.mrb[0].mxu0
  %v424 = vadd.f32 %v353, %v423
  %v425 = vpop.f32.mrb[0].mxu0
  %v426 = vadd.f32 %v355, %v425
  %427 = vdwg.mxu0
  %428 = vmatprep.subr.mxu0 %v33
  %429 = vmatpush1.msra.mxu0 %v32
  %430 = vmatprep.subr.mxu0 %v37
  %431 = vmatpush1.msra.mxu0 %v36
  %432 = vmatprep.subr.mxu0 %v41
  %433 = vmatpush1.msra.mxu0 %v40
  %434 = vmatprep.subr.mxu0 %v45
  %435 = vmatpush1.msra.mxu0 %v44
  %436 = vmatprep.subr.mxu0 %v49
  %437 = vmatpush1.msra.mxu0 %v48
  %438 = vmatprep.subr.mxu0 %v53
  %439 = vmatpush1.msra.mxu0 %v52
  %440 = vmatprep.subr.mxu0 %v57
  %441 = vmatpush1.msra.mxu0 %v56
  %442 = vmatprep.subr.mxu0 %v61
  %443 = vmatpush1.msra.mxu0 %v60
  %444 = vmatprep.subr.mxu0 %v65
  %445 = vmatpush1.msra.mxu0 %v64
  %446 = vmatprep.subr.mxu0 %v69
  %447 = vmatpush1.msra.mxu0 %v68
  %448 = vmatprep.subr.mxu0 %v73
  %449 = vmatpush1.msra.mxu0 %v72
  %450 = vmatprep.subr.mxu0 %v77
  %451 = vmatpush1.msra.mxu0 %v76
  %452 = vmatprep.subr.mxu0 %v81
  %453 = vmatpush1.msra.mxu0 %v80
  %454 = vmatprep.subr.mxu0 %v85
  %455 = vmatpush1.msra.mxu0 %v84
  %456 = vmatprep.subr.mxu0 %v89
  %457 = vmatpush1.msra.mxu0 %v88
  %458 = vmatprep.subr.mxu0 %v93
  %459 = vmatpush1.msra.mxu0 %v92
  %460 = vmatprep.subr.mxu0 %v97
  %461 = vmatpush1.msra.mxu0 %v96
  %462 = vmatprep.subr.mxu0 %v101
  %463 = vmatpush1.msra.mxu0 %v100
  %464 = vmatprep.subr.mxu0 %v105
  %465 = vmatpush1.msra.mxu0 %v104
  %466 = vmatprep.subr.mxu0 %v109
  %467 = vmatpush1.msra.mxu0 %v108
  %468 = vmatprep.subr.mxu0 %v113
  %469 = vmatpush1.msra.mxu0 %v112
  %470 = vmatprep.subr.mxu0 %v117
  %471 = vmatpush1.msra.mxu0 %v116
  %472 = vmatprep.subr.mxu0 %v121
  %473 = vmatpush1.msra.mxu0 %v120
  %474 = vmatprep.subr.mxu0 %v125
  %475 = vmatpush1.msra.mxu0 %v124
  %476 = vmatprep.subr.mxu0 %v129
  %477 = vmatpush1.msra.mxu0 %v128
  %478 = vmatprep.subr.mxu0 %v133
  %479 = vmatpush1.msra.mxu0 %v132
  %480 = vmatprep.subr.mxu0 %v137
  %481 = vmatpush1.msra.mxu0 %v136
  %482 = vmatprep.subr.mxu0 %v141
  %483 = vmatpush1.msra.mxu0 %v140
  %484 = vmatprep.subr.mxu0 %v145
  %485 = vmatpush1.msra.mxu0 %v144
  %486 = vmatprep.subr.mxu0 %v149
  %487 = vmatpush1.msra.mxu0 %v148
  %488 = vmatprep.subr.mxu0 %v153
  %489 = vmatpush1.msra.mxu0 %v152
  %490 = vmatprep.subr.mxu0 %v157
  %491 = vmatpush1.msra.mxu0 %v156
  %492 = vmatprep.mubr.f32.mxu0 %v27
  %493 = vmatmul.mubr.f32.gmra.mrb[0].mxu0 %v26
  %v494 = vpop.f32.mrb[0].mxu0
  %v495 = vadd.f32 0.0, %v494
  %v496 = vpop.f32.mrb[0].mxu0
  %v497 = vadd.f32 0.0, %v496
  %498 = vdwg.mxu0
  %499 = vmatprep.subr.mxu0 %v161
  %500 = vmatpush1.msra.mxu0 %v160
  %501 = vmatprep.subr.mxu0 %v165
  %502 = vmatpush1.msra.mxu0 %v164
  %503 = vmatprep.subr.mxu0 %v169
  %504 = vmatpush1.msra.mxu0 %v168
  %505 = vmatprep.subr.mxu0 %v173
  %506 = vmatpush1.msra.mxu0 %v172
  %507 = vmatprep.subr.mxu0 %v177
  %508 = vmatpush1.msra.mxu0 %v176
  %509 = vmatprep.subr.mxu0 %v181
  %510 = vmatpush1.msra.mxu0 %v180
  %511 = vmatprep.subr.mxu0 %v185
  %512 = vmatpush1.msra.mxu0 %v184
  %513 = vmatprep.subr.mxu0 %v189
  %514 = vmatpush1.msra.mxu0 %v188
  %515 = vmatprep.subr.mxu0 %v193
  %516 = vmatpush1.msra.mxu0 %v192
  %517 = vmatprep.subr.mxu0 %v197
  %518 = vmatpush1.msra.mxu0 %v196
  %519 = vmatprep.subr.mxu0 %v201
  %520 = vmatpush1.msra.mxu0 %v200
  %521 = vmatprep.subr.mxu0 %v205
  %522 = vmatpush1.msra.mxu0 %v204
  %523 = vmatprep.subr.mxu0 %v209
  %524 = vmatpush1.msra.mxu0 %v208
  %525 = vmatprep.subr.mxu0 %v213
  %526 = vmatpush1.msra.mxu0 %v212
  %527 = vmatprep.subr.mxu0 %v217
  %528 = vmatpush1.msra.mxu0 %v216
  %529 = vmatprep.subr.mxu0 %v221
  %530 = vmatpush1.msra.mxu0 %v220
  %531 = vmatprep.subr.mxu0 %v225
  %532 = vmatpush1.msra.mxu0 %v224
  %533 = vmatprep.subr.mxu0 %v229
  %534 = vmatpush1.msra.mxu0 %v228
  %535 = vmatprep.subr.mxu0 %v233
  %536 = vmatpush1.msra.mxu0 %v232
  %537 = vmatprep.subr.mxu0 %v237
  %538 = vmatpush1.msra.mxu0 %v236
  %539 = vmatprep.subr.mxu0 %v241
  %540 = vmatpush1.msra.mxu0 %v240
  %541 = vmatprep.subr.mxu0 %v245
  %542 = vmatpush1.msra.mxu0 %v244
  %543 = vmatprep.subr.mxu0 %v249
  %544 = vmatpush1.msra.mxu0 %v248
  %545 = vmatprep.subr.mxu0 %v253
  %546 = vmatpush1.msra.mxu0 %v252
  %547 = vmatprep.subr.mxu0 %v257
  %548 = vmatpush1.msra.mxu0 %v256
  %549 = vmatprep.subr.mxu0 %v261
  %550 = vmatpush1.msra.mxu0 %v260
  %551 = vmatprep.subr.mxu0 %v265
  %552 = vmatpush1.msra.mxu0 %v264
  %553 = vmatprep.subr.mxu0 %v269
  %554 = vmatpush1.msra.mxu0 %v268
  %555 = vmatprep.subr.mxu0 %v273
  %556 = vmatpush1.msra.mxu0 %v272
  %557 = vmatprep.subr.mxu0 %v277
  %558 = vmatpush1.msra.mxu0 %v276
  %559 = vmatprep.subr.mxu0 %v281
  %560 = vmatpush1.msra.mxu0 %v280
  %561 = vmatprep.subr.mxu0 %v285
  %562 = vmatpush1.msra.mxu0 %v284
  %563 = vmatprep.mubr.f32.mxu0 %v29
  %564 = vmatmul.mubr.f32.gmra.mrb[0].mxu0 %v28
  %v565 = vpop.f32.mrb[0].mxu0
  %v566 = vadd.f32 %v495, %v565
  %v567 = vpop.f32.mrb[0].mxu0
  %v568 = vadd.f32 %v497, %v567
  %569 = vdwg.mxu0
  %v570 = vadd.f32 %v22, %v424
  %v571 = vadd.f32 %v23, %v426
  %v572 = vadd.f32 %v24, %v566
  %v573 = vadd.f32 %v25, %v568
  %574 = vst [vmem:[%s3] sm:$0xff] %v570
  %575 = vst [vmem:[%s3 + $0x8] sm:$0xff] %v571
  %576 = vst [vmem:[%s3 + $0x10] sm:$0xff] %v572
  %577 = vst [vmem:[%s3 + $0x18] sm:$0xff] %v573
  // Predicated region
  $region18: #{model_regression_forward.6} parent=0 // pred_check
    %p578 = pneg %p14
  $region19: #{model_regression_forward.6} parent=0 // pred_check_branch
    %580 = sbr.rel (%p578) target = $region21
  $region20: #{model_regression_forward.6} parent=0 // pred_region
    %v581 = vld [vmem:[%s3] sm:$0xff]
    %v582 = vld [vmem:[%s3 + $0x8] sm:$0xff]
    %v583 = vld [vmem:[%s3 + $0x10] sm:$0xff]
    %v584 = vld [vmem:[%s3 + $0x18] sm:$0xff]
    %v585 = vld [vmem:[%s2] sm:$0xf]
    %v587 = vlaneseq
    %v588 = vshrl.u32 %v587, 7
    %v589 = vsub.s32 0, %v588
    %v590 = vrot.slane %v585, %v589
    %v591 = vlaneseq
    %v592 = vshrl.u32 %v591, 7
    %v593 = vsub.s32 1, %v592
    %v594 = vrot.slane %v585, %v593
    %v595 = vlaneseq
    %v596 = vshrl.u32 %v595, 7
    %v597 = vsub.s32 2, %v596
    %v598 = vrot.slane %v585, %v597
    %v599 = vlaneseq
    %v600 = vshrl.u32 %v599, 7
    %v601 = vsub.s32 3, %v600
    %v602 = vrot.slane %v585, %v601
    %v607 = vadd.f32 %v581, %v590
    %v608 = vadd.f32 %v582, %v594
    %v609 = vadd.f32 %v583, %v598
    %v610 = vadd.f32 %v584, %v602
    %vm611 = vcmp.gt.f32.partialorder %v607, 0.0
    %vm612 = vcmp.gt.f32.partialorder %v608, 0.0
    %vm613 = vcmp.gt.f32.partialorder %v609, 0.0
    %vm614 = vcmp.gt.f32.partialorder %v610, 0.0
    %v615 = vmul.f32 %v607, 0.01
    %v616 = vmul.f32 %v608, 0.01
    %v617 = vmul.f32 %v609, 0.01
    %v618 = vmul.f32 %v610, 0.01
    %v619 = vsel %vm611, %v607, %v615
    %v620 = vsel %vm612, %v608, %v616
    %v621 = vsel %vm613, %v609, %v617
    %v622 = vsel %vm614, %v610, %v618
    %623 = vst [vmem:[%s3] sm:$0xff] %v619
    %624 = vst [vmem:[%s3 + $0x8] sm:$0xff] %v620
    %625 = vst [vmem:[%s3 + $0x10] sm:$0xff] %v621
    %626 = vst [vmem:[%s3 + $0x18] sm:$0xff] %v622
  $region21: #{model_regression_forward.6} parent=0 // pred_fallthru
    _
  // Predicated region
  $region22: #{model_regression_forward.6} parent=0 // pred_check
    _
  $region23: #{model_regression_forward.6} parent=0 // pred_check_branch
    %628 = sbr.rel (0) target = $region25
  $region24: #{model_regression_forward.6} parent=0 // pred_region
    _
  $region25: #{model_regression_forward.6} parent=0 // pred_fallthru
    _
  // Predicated region
  $region26: #{model_regression_forward.6} parent=0 // pred_check
    _
  $region27: #{model_regression_forward.6} parent=0 // pred_check_branch
    %630 = sbr.rel (0) target = $region29
  $region28: #{model_regression_forward.6} parent=0 // pred_region
    _
  $region29: #{model_regression_forward.6} parent=0 // pred_fallthru
    _

// kernel: model_regression_forward.7
$region0: #{model_regression_forward.7}
  #allocation0 [shape = 'u32[]', space=smem, size = 0x4, offset = 0x4, fixed_abs, tag = 'smem constant byte address 0x4 - core index']
  #allocation1 [shape = 'u32[144,128]{1,0:T(1,128)}', space=vmem, size = 0x12000, scoped, tag = 'internal scratch']
  %s0 = inlined_call_operand.vmem [shape: f32[8,512], index: 0, kind: input, shape index: {}]
  %s1 = inlined_call_operand.vmem [shape: f32[512,4224], index: 1, kind: input, shape index: {}]
  %s2 = inlined_call_operand.vmem [shape: f32[1,4224], index: 2, kind: input, shape index: {}]
  %s3 = inlined_call_operand.vmem [shape: f32[8,4224], index: 3, kind: output, shape index: {}]
  %s4 = sld [smem:[#allocation0]]
  $region76: #{model_regression_forward.7} parent=0
    _
  %s6 = ssub.s32 1, %s4
  %s7 = scalar_select 0, %s6, %s4
  $region1: #{model_regression_forward.7} parent=0
    #allocation2 [shape = 'u8[5767168]{0}', space=vmem, size = 0x580000, scoped, tag = 'input window, operand 1']
    loop: start=0, step=1, limit=5
    $region2: #{model_regression_forward.7} parent=1 // loop_pre_header
      _
    $region3: #{model_regression_forward.7} parent=1 // loop_header
      %s9 = sphi 0, %s13
      %p10 = scmp.ge.s32.totalorder %s9, 5
      %s16 = sphi 0, %s35
      %s17 = sphi 0, %s31
      %s18 = sphi 0, %s27
      %s19 = sphi 0, %s16
      %s20 = sphi 0, %s17
      %s21 = sphi 0, %s18
      %s22 = sphi 0, %s19
      %s23 = sphi 0, %s20
      %s24 = sphi 0, %s21
      %s40 = sphi 0, %s42
      %s43 = sphi 0, %s40
      %s44 = sphi 0, %s43
      %s60 = sphi 0, %s44
      %s68 = sphi 0, %s70
      %s71 = sphi 0, %s68
      %s72 = sphi 0, %s71
      %s88 = sphi 0, %s72
      %s94 = sphi 0, %s96
      %s97 = sphi 0, %s94
      %s98 = sphi 0, %s97
      %s114 = sphi 0, %s98
      %s122 = sphi 0, %s124
      %s125 = sphi 0, %s122
      %s126 = sphi 0, %s125
      %s142 = sphi 0, %s126
    $region4: #{model_regression_forward.7} parent=1 // loop_header_branch
      %12 = sbr.rel (%p10) target = $region8
    $region5: #{model_regression_forward.7} parent=1 // loop_body
      %s14 = ssub.s32 %s9, 1
      %s15 = ssub.s32 %s9, 2
      %s25 = sadd.s32 1, %s18
      %p26 = scmp.ge.s32.totalorder %s25, 1
      %s27 = scalar_select %p26, 0, %s25
      %s28 = sadd.s32 1, %s17
      %s29 = scalar_select %p26, %s28, %s17
      %p30 = scmp.ge.s32.totalorder %s29, 3
      %s31 = scalar_select %p30, 0, %s29
      %s32 = sadd.s32 1, %s16
      %s33 = scalar_select %p30, %s32, %s16
      %p34 = scmp.ge.s32.totalorder %s33, 1
      %s35 = scalar_select %p34, 0, %s33
      %s36 = ssub.s32 %s16, %s35
      %s37 = ssub.s32 %s18, %s27
      %s38 = sor.u32 %s36, %s37
      %p39 = scmp.eq.s32.totalorder %s38, 0
      %s41 = sadd.s32 %s40, 1
      %s42 = scalar_select %p39, %s40, %s41
      %p45 = pneg %p39
      %p46 = scmp.eq.s32.totalorder %s9, 2
      %p47 = por %p45, %p46
      %p48 = scmp.ne.s32.totalorder %s40, %s43
      %p49 = scmp.eq.s32.totalorder %s9, 0
      %p50 = por %p48, %p49
      %p51 = scmp.ne.s32.totalorder %s40, %s43
      %p52 = scmp.eq.s32.totalorder %s14, 2
      %p53 = por %p51, %p52
      %p54 = scmp.ne.s32.totalorder %s43, %s44
      %p55 = scmp.eq.s32.totalorder %s14, 0
      %p56 = por %p54, %p55
      %p57 = scmp.ne.s32.totalorder %s43, %s44
      %p58 = scmp.eq.s32.totalorder %s15, 2
      %p59 = por %p57, %p58
      %p61 = scmp.ne.s32.totalorder %s44, %s60
      %p62 = scmp.eq.s32.totalorder %s15, 0
      %p63 = por %p61, %p62
      %s64 = ssub.s32 %s18, %s27
      %s65 = ssub.s32 %s17, %s31
      %s66 = sor.u32 %s64, %s65
      %p67 = scmp.eq.s32.totalorder %s66, 0
      %s69 = sadd.s32 %s68, 1
      %s70 = scalar_select %p67, %s68, %s69
      %p73 = pneg %p67
      %p74 = scmp.eq.s32.totalorder %s9, 2
      %p75 = por %p73, %p74
      %p76 = scmp.ne.s32.totalorder %s68, %s71
      %p77 = scmp.eq.s32.totalorder %s9, 0
      %p78 = por %p76, %p77
      %p79 = scmp.ne.s32.totalorder %s68, %s71
      %p80 = scmp.eq.s32.totalorder %s14, 2
      %p81 = por %p79, %p80
      %p82 = scmp.ne.s32.totalorder %s71, %s72
      %p83 = scmp.eq.s32.totalorder %s14, 0
      %p84 = por %p82, %p83
      %p85 = scmp.ne.s32.totalorder %s71, %s72
      %p86 = scmp.eq.s32.totalorder %s15, 2
      %p87 = por %p85, %p86
      %p89 = scmp.ne.s32.totalorder %s72, %s88
      %p90 = scmp.eq.s32.totalorder %s15, 0
      %p91 = por %p89, %p90
      %s92 = ssub.s32 %s17, %s31
      %p93 = scmp.eq.s32.totalorder %s92, 0
      %s95 = sadd.s32 %s94, 1
      %s96 = scalar_select %p93, %s94, %s95
      %p99 = pneg %p93
      %p100 = scmp.eq.s32.totalorder %s9, 2
      %p101 = por %p99, %p100
      %p102 = scmp.ne.s32.totalorder %s94, %s97
      %p103 = scmp.eq.s32.totalorder %s9, 0
      %p104 = por %p102, %p103
      %p105 = scmp.ne.s32.totalorder %s94, %s97
      %p106 = scmp.eq.s32.totalorder %s14, 2
      %p107 = por %p105, %p106
      %p108 = scmp.ne.s32.totalorder %s97, %s98
      %p109 = scmp.eq.s32.totalorder %s14, 0
      %p110 = por %p108, %p109
      %p111 = scmp.ne.s32.totalorder %s97, %s98
      %p112 = scmp.eq.s32.totalorder %s15, 2
      %p113 = por %p111, %p112
      %p115 = scmp.ne.s32.totalorder %s98, %s114
      %p116 = scmp.eq.s32.totalorder %s15, 0
      %p117 = por %p115, %p116
      %s118 = ssub.s32 %s16, %s35
      %s119 = ssub.s32 %s17, %s31
      %s120 = sor.u32 %s118, %s119
      %p121 = scmp.eq.s32.totalorder %s120, 0
      %s123 = sadd.s32 %s122, 1
      %s124 = scalar_select %p121, %s122, %s123
      %p127 = pneg %p121
      %p128 = scmp.eq.s32.totalorder %s9, 2
      %p129 = por %p127, %p128
      %p130 = scmp.ne.s32.totalorder %s122, %s125
      %p131 = scmp.eq.s32.totalorder %s9, 0
      %p132 = por %p130, %p131
      %p133 = scmp.ne.s32.totalorder %s122, %s125
      %p134 = scmp.eq.s32.totalorder %s14, 2
      %p135 = por %p133, %p134
      %p136 = scmp.ne.s32.totalorder %s125, %s126
      %p137 = scmp.eq.s32.totalorder %s14, 0
      %p138 = por %p136, %p137
      %p139 = scmp.ne.s32.totalorder %s125, %s126
      %p140 = scmp.eq.s32.totalorder %s15, 2
      %p141 = por %p139, %p140
      %p143 = scmp.ne.s32.totalorder %s126, %s142
      %p144 = scmp.eq.s32.totalorder %s15, 0
      %p145 = por %p143, %p144
      %p146 = scmp.le.s32.totalorder 1, %s9
      %p147 = scmp.lt.s32.totalorder %s9, 4
      %p148 = pnand %p146, %p147
      %p149 = pneg %p148
      // Predicated region
      $region9: #{model_regression_forward.7} parent=5 // pred_check
        _
      $region10: #{model_regression_forward.7} parent=5 // pred_check_branch
        %151 = sbr.rel (%p148) target = $region12
      $region11: #{model_regression_forward.7} parent=5 // pred_region
        %s152 = ssub.s32 %s9, 1
        // Predicated region
        $region13: #{model_regression_forward.7} parent=11 // pred_check
          %p153 = pneg %p56
        $region14: #{model_regression_forward.7} parent=11 // pred_check_branch
          %155 = sbr.rel (%p153) target = $region16
        $region15: #{model_regression_forward.7} parent=11 // pred_region
          %s156 = smul.u32 4, %s21
          %p157 = scmp.lt.s32.totalorder %s19, 0
          %s158 = scalar_select %p157, %s19, 0
          %p159 = scmp.lt.s32.totalorder %s156, 3
          %s160 = scalar_select %p159, %s156, 3
          %s161 = smul.addr %s158, 4
          %s162 = sadd.s32 %s160, %s161
          %s163 = smul.addr %s162, 8
          %s164 = scalar_lea.vmem %s0, %s163
          %s165 = smul.u32 4, %s21
        $region16: #{model_regression_forward.7} parent=11 // pred_fallthru
          _
      $region12: #{model_regression_forward.7} parent=5 // pred_fallthru
        _
      %p166 = scmp.lt.s32.totalorder %s9, 3
      // Predicated region
      $region17: #{model_regression_forward.7} parent=5 // pred_check
        %p167 = pneg %p166
      $region18: #{model_regression_forward.7} parent=5 // pred_check_branch
        %169 = sbr.rel (%p167) target = $region20
      $region19: #{model_regression_forward.7} parent=5 // pred_region
        // Predicated region
        $region21: #{model_regression_forward.7} parent=19 // pred_check
          %p170 = pneg %p78
        $region22: #{model_regression_forward.7} parent=19 // pred_check_branch
          %172 = sbr.rel (%p170) target = $region24
        $region23: #{model_regression_forward.7} parent=19 // pred_region
          %s173 = sand.u32 %s68, 1
          %s174 = sand.u32 %s68, 1
          %s175 = smul.addr %s174, 5632
          %s176 = scalar_lea.vmem [#allocation2], %s175
          %s177 = smul.u32 64, %s18
          %s178 = smul.u32 11, %s17
          %s179 = smul.addr %s177, 33
          %s180 = sadd.s32 %s178, %s179
          %s181 = smul.addr %s180, 8
          %s182 = scalar_lea.vmem %s1, %s181
          // Predicated region
          $region25: #{model_regression_forward.7} parent=23 // pred_check
            _
          $region26: #{model_regression_forward.7} parent=23 // pred_check_branch
            %184 = sbr.rel (0) target = $region28
          $region27: #{model_regression_forward.7} parent=23 // pred_region
            // Predicated region
            $region29: #{model_regression_forward.7} parent=27 // pred_check
              _
            $region30: #{model_regression_forward.7} parent=27 // pred_check_branch
              %186 = sbr.rel (0) target = $region32
            $region31: #{model_regression_forward.7} parent=27 // pred_region
              loop: start=0, step=1, limit=1
              $region33: #{model_regression_forward.7} parent=31 // loop_pre_header
                _
              $region34: #{model_regression_forward.7} parent=31 // loop_header
                %s188 = sphi 0, %s192
                %p189 = scmp.ge.s32.totalorder %s188, 1
                %s193 = sphi %s182, %s182
                %s194 = sphi %s176, %s176
              $region35: #{model_regression_forward.7} parent=31 // loop_header_branch
                %191 = sbr.rel (%p189) target = $region39
              $region36: #{model_regression_forward.7} parent=31 // loop_body
                %v195 = vld [vmem:[%s193] sm:$0xff]
                %196 = vst [vmem:[%s194] sm:$0xff] %v195
                %v197 = vld [vmem:[%s193 + $0x8] sm:$0xff]
                %198 = vst [vmem:[%s194 + $0x8] sm:$0xff] %v197
                %v199 = vld [vmem:[%s193 + $0x10] sm:$0xff]
                %200 = vst [vmem:[%s194 + $0x10] sm:$0xff] %v199
                %v201 = vld [vmem:[%s193 + $0x18] sm:$0xff]
                %202 = vst [vmem:[%s194 + $0x18] sm:$0xff] %v201
                %v203 = vld [vmem:[%s193 + $0x20] sm:$0xff]
                %204 = vst [vmem:[%s194 + $0x20] sm:$0xff] %v203
                %v205 = vld [vmem:[%s193 + $0x28] sm:$0xff]
                %206 = vst [vmem:[%s194 + $0x28] sm:$0xff] %v205
                %v207 = vld [vmem:[%s193 + $0x30] sm:$0xff]
                %208 = vst [vmem:[%s194 + $0x30] sm:$0xff] %v207
                %v209 = vld [vmem:[%s193 + $0x38] sm:$0xff]
                %210 = vst [vmem:[%s194 + $0x38] sm:$0xff] %v209
                %v211 = vld [vmem:[%s193 + $0x40] sm:$0xff]
                %212 = vst [vmem:[%s194 + $0x40] sm:$0xff] %v211
                %v213 = vld [vmem:[%s193 + $0x48] sm:$0xff]
                %214 = vst [vmem:[%s194 + $0x48] sm:$0xff] %v213
                %v215 = vld [vmem:[%s193 + $0x50] sm:$0xff]
                %216 = vst [vmem:[%s194 + $0x50] sm:$0xff] %v215
                %v217 = vld [vmem:[%s193 + $0x108] sm:$0xff]
                %218 = vst [vmem:[%s194 + $0x58] sm:$0xff] %v217
                %v219 = vld [vmem:[%s193 + $0x110] sm:$0xff]
                %220 = vst [vmem:[%s194 + $0x60] sm:$0xff] %v219
                %v221 = vld [vmem:[%s193 + $0x118] sm:$0xff]
                %222 = vst [vmem:[%s194 + $0x68] sm:$0xff] %v221
                %v223 = vld [vmem:[%s193 + $0x120] sm:$0xff]
                %224 = vst [vmem:[%s194 + $0x70] sm:$0xff] %v223
                %v225 = vld [vmem:[%s193 + $0x128] sm:$0xff]
                %226 = vst [vmem:[%s194 + $0x78] sm:$0xff] %v225
                %v227 = vld [vmem:[%s193 + $0x130] sm:$0xff]
                %228 = vst [vmem:[%s194 + $0x80] sm:$0xff] %v227
                %v229 = vld [vmem:[%s193 + $0x138] sm:$0xff]
                %230 = vst [vmem:[%s194 + $0x88] sm:$0xff] %v229
                %v231 = vld [vmem:[%s193 + $0x140] sm:$0xff]
                %232 = vst [vmem:[%s194 + $0x90] sm:$0xff] %v231
                %v233 = vld [vmem:[%s193 + $0x148] sm:$0xff]
                %234 = vst [vmem:[%s194 + $0x98] sm:$0xff] %v233
                %v235 = vld [vmem:[%s193 + $0x150] sm:$0xff]
                %236 = vst [vmem:[%s194 + $0xa0] sm:$0xff] %v235
                %v237 = vld [vmem:[%s193 + $0x158] sm:$0xff]
                %238 = vst [vmem:[%s194 + $0xa8] sm:$0xff] %v237
                %v239 = vld [vmem:[%s193 + $0x210] sm:$0xff]
                %240 = vst [vmem:[%s194 + $0xb0] sm:$0xff] %v239
                %v241 = vld [vmem:[%s193 + $0x218] sm:$0xff]
                %242 = vst [vmem:[%s194 + $0xb8] sm:$0xff] %v241
                %v243 = vld [vmem:[%s193 + $0x220] sm:$0xff]
                %244 = vst [vmem:[%s194 + $0xc0] sm:$0xff] %v243
                %v245 = vld [vmem:[%s193 + $0x228] sm:$0xff]
                %246 = vst [vmem:[%s194 + $0xc8] sm:$0xff] %v245
                %v247 = vld [vmem:[%s193 + $0x230] sm:$0xff]
                %248 = vst [vmem:[%s194 + $0xd0] sm:$0xff] %v247
                %v249 = vld [vmem:[%s193 + $0x238] sm:$0xff]
                %250 = vst [vmem:[%s194 + $0xd8] sm:$0xff] %v249
                %v251 = vld [vmem:[%s193 + $0x240] sm:$0xff]
                %252 = vst [vmem:[%s194 + $0xe0] sm:$0xff] %v251
                %v253 = vld [vmem:[%s193 + $0x248] sm:$0xff]
                %254 = vst [vmem:[%s194 + $0xe8] sm:$0xff] %v253
                %v255 = vld [vmem:[%s193 + $0x250] sm:$0xff]
                %256 = vst [vmem:[%s194 + $0xf0] sm:$0xff] %v255
                %v257 = vld [vmem:[%s193 + $0x258] sm:$0xff]
                %258 = vst [vmem:[%s194 + $0xf8] sm:$0xff] %v257
                %v259 = vld [vmem:[%s193 + $0x260] sm:$0xff]
                %260 = vst [vmem:[%s194 + $0x100] sm:$0xff] %v259
                %v261 = vld [vmem:[%s193 + $0x318] sm:$0xff]
                %262 = vst [vmem:[%s194 + $0x108] sm:$0xff] %v261
                %v263 = vld [vmem:[%s193 + $0x320] sm:$0xff]
                %264 = vst [vmem:[%s194 + $0x110] sm:$0xff] %v263
                %v265 = vld [vmem:[%s193 + $0x328] sm:$0xff]
                %266 = vst [vmem:[%s194 + $0x118] sm:$0xff] %v265
                %v267 = vld [vmem:[%s193 + $0x330] sm:$0xff]
                %268 = vst [vmem:[%s194 + $0x120] sm:$0xff] %v267
                %v269 = vld [vmem:[%s193 + $0x338] sm:$0xff]
                %270 = vst [vmem:[%s194 + $0x128] sm:$0xff] %v269
                %v271 = vld [vmem:[%s193 + $0x340] sm:$0xff]
                %272 = vst [vmem:[%s194 + $0x130] sm:$0xff] %v271
                %v273 = vld [vmem:[%s193 + $0x348] sm:$0xff]
                %274 = vst [vmem:[%s194 + $0x138] sm:$0xff] %v273
                %v275 = vld [vmem:[%s193 + $0x350] sm:$0xff]
                %276 = vst [vmem:[%s194 + $0x140] sm:$0xff] %v275
                %v277 = vld [vmem:[%s193 + $0x358] sm:$0xff]
                %278 = vst [vmem:[%s194 + $0x148] sm:$0xff] %v277
                %v279 = vld [vmem:[%s193 + $0x360] sm:$0xff]
                %280 = vst [vmem:[%s194 + $0x150] sm:$0xff] %v279
                %v281 = vld [vmem:[%s193 + $0x368] sm:$0xff]
                %282 = vst [vmem:[%s194 + $0x158] sm:$0xff] %v281
                %v283 = vld [vmem:[%s193 + $0x420] sm:$0xff]
                %284 = vst [vmem:[%s194 + $0x160] sm:$0xff] %v283
                %v285 = vld [vmem:[%s193 + $0x428] sm:$0xff]
                %286 = vst [vmem:[%s194 + $0x168] sm:$0xff] %v285
                %v287 = vld [vmem:[%s193 + $0x430] sm:$0xff]
                %288 = vst [vmem:[%s194 + $0x170] sm:$0xff] %v287
                %v289 = vld [vmem:[%s193 + $0x438] sm:$0xff]
                %290 = vst [vmem:[%s194 + $0x178] sm:$0xff] %v289
                %v291 = vld [vmem:[%s193 + $0x440] sm:$0xff]
                %292 = vst [vmem:[%s194 + $0x180] sm:$0xff] %v291
                %v293 = vld [vmem:[%s193 + $0x448] sm:$0xff]
                %294 = vst [vmem:[%s194 + $0x188] sm:$0xff] %v293
                %v295 = vld [vmem:[%s193 + $0x450] sm:$0xff]
                %296 = vst [vmem:[%s194 + $0x190] sm:$0xff] %v295
                %v297 = vld [vmem:[%s193 + $0x458] sm:$0xff]
                %298 = vst [vmem:[%s194 + $0x198] sm:$0xff] %v297
                %v299 = vld [vmem:[%s193 + $0x460] sm:$0xff]
                %300 = vst [vmem:[%s194 + $0x1a0] sm:$0xff] %v299
                %v301 = vld [vmem:[%s193 + $0x468] sm:$0xff]
                %302 = vst [vmem:[%s194 + $0x1a8] sm:$0xff] %v301
                %v303 = vld [vmem:[%s193 + $0x470] sm:$0xff]
                %304 = vst [vmem:[%s194 + $0x1b0] sm:$0xff] %v303
                %v305 = vld [vmem:[%s193 + $0x528] sm:$0xff]
                %306 = vst [vmem:[%s194 + $0x1b8] sm:$0xff] %v305
                %v307 = vld [vmem:[%s193 + $0x530] sm:$0xff]
                %308 = vst [vmem:[%s194 + $0x1c0] sm:$0xff] %v307
                %v309 = vld [vmem:[%s193 + $0x538] sm:$0xff]
                %310 = vst [vmem:[%s194 + $0x1c8] sm:$0xff] %v309
                %v311 = vld [vmem:[%s193 + $0x540] sm:$0xff]
                %312 = vst [vmem:[%s194 + $0x1d0] sm:$0xff] %v311
                %v313 = vld [vmem:[%s193 + $0x548] sm:$0xff]
                %314 = vst [vmem:[%s194 + $0x1d8] sm:$0xff] %v313
                %v315 = vld [vmem:[%s193 + $0x550] sm:$0xff]
                %316 = vst [vmem:[%s194 + $0x1e0] sm:$0xff] %v315
                %v317 = vld [vmem:[%s193 + $0x558] sm:$0xff]
                %318 = vst [vmem:[%s194 + $0x1e8] sm:$0xff] %v317
                %v319 = vld [vmem:[%s193 + $0x560] sm:$0xff]
                %320 = vst [vmem:[%s194 + $0x1f0] sm:$0xff] %v319
                %v321 = vld [vmem:[%s193 + $0x568] sm:$0xff]
                %322 = vst [vmem:[%s194 + $0x1f8] sm:$0xff] %v321
                %v323 = vld [vmem:[%s193 + $0x570] sm:$0xff]
                %324 = vst [vmem:[%s194 + $0x200] sm:$0xff] %v323
                %v325 = vld [vmem:[%s193 + $0x578] sm:$0xff]
                %326 = vst [vmem:[%s194 + $0x208] sm:$0xff] %v325
                %v327 = vld [vmem:[%s193 + $0x630] sm:$0xff]
                %328 = vst [vmem:[%s194 + $0x210] sm:$0xff] %v327
                %v329 = vld [vmem:[%s193 + $0x638] sm:$0xff]
                %330 = vst [vmem:[%s194 + $0x218] sm:$0xff] %v329
                %v331 = vld [vmem:[%s193 + $0x640] sm:$0xff]
                %332 = vst [vmem:[%s194 + $0x220] sm:$0xff] %v331
                %v333 = vld [vmem:[%s193 + $0x648] sm:$0xff]
                %334 = vst [vmem:[%s194 + $0x228] sm:$0xff] %v333
                %v335 = vld [vmem:[%s193 + $0x650] sm:$0xff]
                %336 = vst [vmem:[%s194 + $0x230] sm:$0xff] %v335
                %v337 = vld [vmem:[%s193 + $0x658] sm:$0xff]
                %338 = vst [vmem:[%s194 + $0x238] sm:$0xff] %v337
                %v339 = vld [vmem:[%s193 + $0x660] sm:$0xff]
                %340 = vst [vmem:[%s194 + $0x240] sm:$0xff] %v339
                %v341 = vld [vmem:[%s193 + $0x668] sm:$0xff]
                %342 = vst [vmem:[%s194 + $0x248] sm:$0xff] %v341
                %v343 = vld [vmem:[%s193 + $0x670] sm:$0xff]
                %344 = vst [vmem:[%s194 + $0x250] sm:$0xff] %v343
                %v345 = vld [vmem:[%s193 + $0x678] sm:$0xff]
                %346 = vst [vmem:[%s194 + $0x258] sm:$0xff] %v345
                %v347 = vld [vmem:[%s193 + $0x680] sm:$0xff]
                %348 = vst [vmem:[%s194 + $0x260] sm:$0xff] %v347
                %v349 = vld [vmem:[%s193 + $0x738] sm:$0xff]
                %350 = vst [vmem:[%s194 + $0x268] sm:$0xff] %v349
                %v351 = vld [vmem:[%s193 + $0x740] sm:$0xff]
                %352 = vst [vmem:[%s194 + $0x270] sm:$0xff] %v351
                %v353 = vld [vmem:[%s193 + $0x748] sm:$0xff]
                %354 = vst [vmem:[%s194 + $0x278] sm:$0xff] %v353
                %v355 = vld [vmem:[%s193 + $0x750] sm:$0xff]
                %356 = vst [vmem:[%s194 + $0x280] sm:$0xff] %v355
                %v357 = vld [vmem:[%s193 + $0x758] sm:$0xff]
                %358 = vst [vmem:[%s194 + $0x288] sm:$0xff] %v357
                %v359 = vld [vmem:[%s193 + $0x760] sm:$0xff]
                %360 = vst [vmem:[%s194 + $0x290] sm:$0xff] %v359
                %v361 = vld [vmem:[%s193 + $0x768] sm:$0xff]
                %362 = vst [vmem:[%s194 + $0x298] sm:$0xff] %v361
                %v363 = vld [vmem:[%s193 + $0x770] sm:$0xff]
                %364 = vst [vmem:[%s194 + $0x2a0] sm:$0xff] %v363
                %v365 = vld [vmem:[%s193 + $0x778] sm:$0xff]
                %366 = vst [vmem:[%s194 + $0x2a8] sm:$0xff] %v365
                %v367 = vld [vmem:[%s193 + $0x780] sm:$0xff]
                %368 = vst [vmem:[%s194 + $0x2b0] sm:$0xff] %v367
                %v369 = vld [vmem:[%s193 + $0x788] sm:$0xff]
                %370 = vst [vmem:[%s194 + $0x2b8] sm:$0xff] %v369
                %v371 = vld [vmem:[%s193 + $0x840] sm:$0xff]
                %372 = vst [vmem:[%s194 + $0x2c0] sm:$0xff] %v371
                %v373 = vld [vmem:[%s193 + $0x848] sm:$0xff]
                %374 = vst [vmem:[%s194 + $0x2c8] sm:$0xff] %v373
                %v375 = vld [vmem:[%s193 + $0x850] sm:$0xff]
                %376 = vst [vmem:[%s194 + $0x2d0] sm:$0xff] %v375
                %v377 = vld [vmem:[%s193 + $0x858] sm:$0xff]
                %378 = vst [vmem:[%s194 + $0x2d8] sm:$0xff] %v377
                %v379 = vld [vmem:[%s193 + $0x860] sm:$0xff]
                %380 = vst [vmem:[%s194 + $0x2e0] sm:$0xff] %v379
                %v381 = vld [vmem:[%s193 + $0x868] sm:$0xff]
                %382 = vst [vmem:[%s194 + $0x2e8] sm:$0xff] %v381
                %v383 = vld [vmem:[%s193 + $0x870] sm:$0xff]
                %384 = vst [vmem:[%s194 + $0x2f0] sm:$0xff] %v383
                %v385 = vld [vmem:[%s193 + $0x878] sm:$0xff]
                %386 = vst [vmem:[%s194 + $0x2f8] sm:$0xff] %v385
                %v387 = vld [vmem:[%s193 + $0x880] sm:$0xff]
                %388 = vst [vmem:[%s194 + $0x300] sm:$0xff] %v387
                %v389 = vld [vmem:[%s193 + $0x888] sm:$0xff]
                %390 = vst [vmem:[%s194 + $0x308] sm:$0xff] %v389
                %v391 = vld [vmem:[%s193 + $0x890] sm:$0xff]
                %392 = vst [vmem:[%s194 + $0x310] sm:$0xff] %v391
                %v393 = vld [vmem:[%s193 + $0x948] sm:$0xff]
                %394 = vst [vmem:[%s194 + $0x318] sm:$0xff] %v393
                %v395 = vld [vmem:[%s193 + $0x950] sm:$0xff]
                %396 = vst [vmem:[%s194 + $0x320] sm:$0xff] %v395
                %v397 = vld [vmem:[%s193 + $0x958] sm:$0xff]
                %398 = vst [vmem:[%s194 + $0x328] sm:$0xff] %v397
                %v399 = vld [vmem:[%s193 + $0x960] sm:$0xff]
                %400 = vst [vmem:[%s194 + $0x330] sm:$0xff] %v399
                %v401 = vld [vmem:[%s193 + $0x968] sm:$0xff]
                %402 = vst [vmem:[%s194 + $0x338] sm:$0xff] %v401
                %v403 = vld [vmem:[%s193 + $0x970] sm:$0xff]
                %404 = vst [vmem:[%s194 + $0x340] sm:$0xff] %v403
                %v405 = vld [vmem:[%s193 + $0x978] sm:$0xff]
                %406 = vst [vmem:[%s194 + $0x348] sm:$0xff] %v405
                %v407 = vld [vmem:[%s193 + $0x980] sm:$0xff]
                %408 = vst [vmem:[%s194 + $0x350] sm:$0xff] %v407
                %v409 = vld [vmem:[%s193 + $0x988] sm:$0xff]
                %410 = vst [vmem:[%s194 + $0x358] sm:$0xff] %v409
                %v411 = vld [vmem:[%s193 + $0x990] sm:$0xff]
                %412 = vst [vmem:[%s194 + $0x360] sm:$0xff] %v411
                %v413 = vld [vmem:[%s193 + $0x998] sm:$0xff]
                %414 = vst [vmem:[%s194 + $0x368] sm:$0xff] %v413
                %v415 = vld [vmem:[%s193 + $0xa50] sm:$0xff]
                %416 = vst [vmem:[%s194 + $0x370] sm:$0xff] %v415
                %v417 = vld [vmem:[%s193 + $0xa58] sm:$0xff]
                %418 = vst [vmem:[%s194 + $0x378] sm:$0xff] %v417
                %v419 = vld [vmem:[%s193 + $0xa60] sm:$0xff]
                %420 = vst [vmem:[%s194 + $0x380] sm:$0xff] %v419
                %v421 = vld [vmem:[%s193 + $0xa68] sm:$0xff]
                %422 = vst [vmem:[%s194 + $0x388] sm:$0xff] %v421
                %v423 = vld [vmem:[%s193 + $0xa70] sm:$0xff]
                %424 = vst [vmem:[%s194 + $0x390] sm:$0xff] %v423
                %v425 = vld [vmem:[%s193 + $0xa78] sm:$0xff]
                %426 = vst [vmem:[%s194 + $0x398] sm:$0xff] %v425
                %v427 = vld [vmem:[%s193 + $0xa80] sm:$0xff]
                %428 = vst [vmem:[%s194 + $0x3a0] sm:$0xff] %v427
                %v429 = vld [vmem:[%s193 + $0xa88] sm:$0xff]
                %430 = vst [vmem:[%s194 + $0x3a8] sm:$0xff] %v429
                %v431 = vld [vmem:[%s193 + $0xa90] sm:$0xff]
                %432 = vst [vmem:[%s194 + $0x3b0] sm:$0xff] %v431
                %v433 = vld [vmem:[%s193 + $0xa98] sm:$0xff]
                %434 = vst [vmem:[%s194 + $0x3b8] sm:$0xff] %v433
                %v435 = vld [vmem:[%s193 + $0xaa0] sm:$0xff]
                %436 = vst [vmem:[%s194 + $0x3c0] sm:$0xff] %v435
                %v437 = vld [vmem:[%s193 + $0xb58] sm:$0xff]
                %438 = vst [vmem:[%s194 + $0x3c8] sm:$0xff] %v437
                %v439 = vld [vmem:[%s193 + $0xb60] sm:$0xff]
                %440 = vst [vmem:[%s194 + $0x3d0] sm:$0xff] %v439
                %v441 = vld [vmem:[%s193 + $0xb68] sm:$0xff]
                %442 = vst [vmem:[%s194 + $0x3d8] sm:$0xff] %v441
                %v443 = vld [vmem:[%s193 + $0xb70] sm:$0xff]
                %444 = vst [vmem:[%s194 + $0x3e0] sm:$0xff] %v443
                %v445 = vld [vmem:[%s193 + $0xb78] sm:$0xff]
                %446 = vst [vmem:[%s194 + $0x3e8] sm:$0xff] %v445
                %v447 = vld [vmem:[%s193 + $0xb80] sm:$0xff]
                %448 = vst [vmem:[%s194 + $0x3f0] sm:$0xff] %v447
                %v449 = vld [vmem:[%s193 + $0xb88] sm:$0xff]
                %450 = vst [vmem:[%s194 + $0x3f8] sm:$0xff] %v449
                %v451 = vld [vmem:[%s193 + $0xb90] sm:$0xff]
                %452 = vst [vmem:[%s194 + $0x400] sm:$0xff] %v451
                %v453 = vld [vmem:[%s193 + $0xb98] sm:$0xff]
                %454 = vst [vmem:[%s194 + $0x408] sm:$0xff] %v453
                %v455 = vld [vmem:[%s193 + $0xba0] sm:$0xff]
                %456 = vst [vmem:[%s194 + $0x410] sm:$0xff] %v455
                %v457 = vld [vmem:[%s193 + $0xba8] sm:$0xff]
                %458 = vst [vmem:[%s194 + $0x418] sm:$0xff] %v457
                %v459 = vld [vmem:[%s193 + $0xc60] sm:$0xff]
                %460 = vst [vmem:[%s194 + $0x420] sm:$0xff] %v459
                %v461 = vld [vmem:[%s193 + $0xc68] sm:$0xff]
                %462 = vst [vmem:[%s194 + $0x428] sm:$0xff] %v461
                %v463 = vld [vmem:[%s193 + $0xc70] sm:$0xff]
                %464 = vst [vmem:[%s194 + $0x430] sm:$0xff] %v463
                %v465 = vld [vmem:[%s193 + $0xc78] sm:$0xff]
                %466 = vst [vmem:[%s194 + $0x438] sm:$0xff] %v465
                %v467 = vld [vmem:[%s193 + $0xc80] sm:$0xff]
                %468 = vst [vmem:[%s194 + $0x440] sm:$0xff] %v467
                %v469 = vld [vmem:[%s193 + $0xc88] sm:$0xff]
                %470 = vst [vmem:[%s194 + $0x448] sm:$0xff] %v469
                %v471 = vld [vmem:[%s193 + $0xc90] sm:$0xff]
                %472 = vst [vmem:[%s194 + $0x450] sm:$0xff] %v471
                %v473 = vld [vmem:[%s193 + $0xc98] sm:$0xff]
                %474 = vst [vmem:[%s194 + $0x458] sm:$0xff] %v473
                %v475 = vld [vmem:[%s193 + $0xca0] sm:$0xff]
                %476 = vst [vmem:[%s194 + $0x460] sm:$0xff] %v475
                %v477 = vld [vmem:[%s193 + $0xca8] sm:$0xff]
                %478 = vst [vmem:[%s194 + $0x468] sm:$0xff] %v477
                %v479 = vld [vmem:[%s193 + $0xcb0] sm:$0xff]
                %480 = vst [vmem:[%s194 + $0x470] sm:$0xff] %v479
                %v481 = vld [vmem:[%s193 + $0xd68] sm:$0xff]
                %482 = vst [vmem:[%s194 + $0x478] sm:$0xff] %v481
                %v483 = vld [vmem:[%s193 + $0xd70] sm:$0xff]
                %484 = vst [vmem:[%s194 + $0x480] sm:$0xff] %v483
                %v485 = vld [vmem:[%s193 + $0xd78] sm:$0xff]
                %486 = vst [vmem:[%s194 + $0x488] sm:$0xff] %v485
                %v487 = vld [vmem:[%s193 + $0xd80] sm:$0xff]
                %488 = vst [vmem:[%s194 + $0x490] sm:$0xff] %v487
                %v489 = vld [vmem:[%s193 + $0xd88] sm:$0xff]
                %490 = vst [vmem:[%s194 + $0x498] sm:$0xff] %v489
                %v491 = vld [vmem:[%s193 + $0xd90] sm:$0xff]
                %492 = vst [vmem:[%s194 + $0x4a0] sm:$0xff] %v491
                %v493 = vld [vmem:[%s193 + $0xd98] sm:$0xff]
                %494 = vst [vmem:[%s194 + $0x4a8] sm:$0xff] %v493
                %v495 = vld [vmem:[%s193 + $0xda0] sm:$0xff]
                %496 = vst [vmem:[%s194 + $0x4b0] sm:$0xff] %v495
                %v497 = vld [vmem:[%s193 + $0xda8] sm:$0xff]
                %498 = vst [vmem:[%s194 + $0x4b8] sm:$0xff] %v497
                %v499 = vld [vmem:[%s193 + $0xdb0] sm:$0xff]
                %500 = vst [vmem:[%s194 + $0x4c0] sm:$0xff] %v499
                %v501 = vld [vmem:[%s193 + $0xdb8] sm:$0xff]
                %502 = vst [vmem:[%s194 + $0x4c8] sm:$0xff] %v501
                %v503 = vld [vmem:[%s193 + $0xe70] sm:$0xff]
                %504 = vst [vmem:[%s194 + $0x4d0] sm:$0xff] %v503
                %v505 = vld [vmem:[%s193 + $0xe78] sm:$0xff]
                %506 = vst [vmem:[%s194 + $0x4d8] sm:$0xff] %v505
                %v507 = vld [vmem:[%s193 + $0xe80] sm:$0xff]
                %508 = vst [vmem:[%s194 + $0x4e0] sm:$0xff] %v507
                %v509 = vld [vmem:[%s193 + $0xe88] sm:$0xff]
                %510 = vst [vmem:[%s194 + $0x4e8] sm:$0xff] %v509
                %v511 = vld [vmem:[%s193 + $0xe90] sm:$0xff]
                %512 = vst [vmem:[%s194 + $0x4f0] sm:$0xff] %v511
                %v513 = vld [vmem:[%s193 + $0xe98] sm:$0xff]
                %514 = vst [vmem:[%s194 + $0x4f8] sm:$0xff] %v513
                %v515 = vld [vmem:[%s193 + $0xea0] sm:$0xff]
                %516 = vst [vmem:[%s194 + $0x500] sm:$0xff] %v515
                %v517 = vld [vmem:[%s193 + $0xea8] sm:$0xff]
                %518 = vst [vmem:[%s194 + $0x508] sm:$0xff] %v517
                %v519 = vld [vmem:[%s193 + $0xeb0] sm:$0xff]
                %520 = vst [vmem:[%s194 + $0x510] sm:$0xff] %v519
                %v521 = vld [vmem:[%s193 + $0xeb8] sm:$0xff]
                %522 = vst [vmem:[%s194 + $0x518] sm:$0xff] %v521
                %v523 = vld [vmem:[%s193 + $0xec0] sm:$0xff]
                %524 = vst [vmem:[%s194 + $0x520] sm:$0xff] %v523
                %v525 = vld [vmem:[%s193 + $0xf78] sm:$0xff]
                %526 = vst [vmem:[%s194 + $0x528] sm:$0xff] %v525
                %v527 = vld [vmem:[%s193 + $0xf80] sm:$0xff]
                %528 = vst [vmem:[%s194 + $0x530] sm:$0xff] %v527
                %v529 = vld [vmem:[%s193 + $0xf88] sm:$0xff]
                %530 = vst [vmem:[%s194 + $0x538] sm:$0xff] %v529
                %v531 = vld [vmem:[%s193 + $0xf90] sm:$0xff]
                %532 = vst [vmem:[%s194 + $0x540] sm:$0xff] %v531
                %v533 = vld [vmem:[%s193 + $0xf98] sm:$0xff]
                %534 = vst [vmem:[%s194 + $0x548] sm:$0xff] %v533
                %v535 = vld [vmem:[%s193 + $0xfa0] sm:$0xff]
                %536 = vst [vmem:[%s194 + $0x550] sm:$0xff] %v535
                %v537 = vld [vmem:[%s193 + $0xfa8] sm:$0xff]
                %538 = vst [vmem:[%s194 + $0x558] sm:$0xff] %v537
                %v539 = vld [vmem:[%s193 + $0xfb0] sm:$0xff]
                %540 = vst [vmem:[%s194 + $0x560] sm:$0xff] %v539
                %v541 = vld [vmem:[%s193 + $0xfb8] sm:$0xff]
                %542 = vst [vmem:[%s194 + $0x568] sm:$0xff] %v541
                %v543 = vld [vmem:[%s193 + $0xfc0] sm:$0xff]
                %544 = vst [vmem:[%s194 + $0x570] sm:$0xff] %v543
                %v545 = vld [vmem:[%s193 + $0xfc8] sm:$0xff]
                %546 = vst [vmem:[%s194 + $0x578] sm:$0xff] %v545
                %v547 = vld [vmem:[%s193 + $0x1080] sm:$0xff]
                %548 = vst [vmem:[%s194 + $0x580] sm:$0xff] %v547
                %v549 = vld [vmem:[%s193 + $0x1088] sm:$0xff]
                %550 = vst [vmem:[%s194 + $0x588] sm:$0xff] %v549
                %v551 = vld [vmem:[%s193 + $0x1090] sm:$0xff]
                %552 = vst [vmem:[%s194 + $0x590] sm:$0xff] %v551
                %v553 = vld [vmem:[%s193 + $0x1098] sm:$0xff]
                %554 = vst [vmem:[%s194 + $0x598] sm:$0xff] %v553
                %v555 = vld [vmem:[%s193 + $0x10a0] sm:$0xff]
                %556 = vst [vmem:[%s194 + $0x5a0] sm:$0xff] %v555
                %v557 = vld [vmem:[%s193 + $0x10a8] sm:$0xff]
                %558 = vst [vmem:[%s194 + $0x5a8] sm:$0xff] %v557
                %v559 = vld [vmem:[%s193 + $0x10b0] sm:$0xff]
                %560 = vst [vmem:[%s194 + $0x5b0] sm:$0xff] %v559
                %v561 = vld [vmem:[%s193 + $0x10b8] sm:$0xff]
                %562 = vst [vmem:[%s194 + $0x5b8] sm:$0xff] %v561
                %v563 = vld [vmem:[%s193 + $0x10c0] sm:$0xff]
                %564 = vst [vmem:[%s194 + $0x5c0] sm:$0xff] %v563
                %v565 = vld [vmem:[%s193 + $0x10c8] sm:$0xff]
                %566 = vst [vmem:[%s194 + $0x5c8] sm:$0xff] %v565
                %v567 = vld [vmem:[%s193 + $0x10d0] sm:$0xff]
                %568 = vst [vmem:[%s194 + $0x5d0] sm:$0xff] %v567
                %v569 = vld [vmem:[%s193 + $0x1188] sm:$0xff]
                %570 = vst [vmem:[%s194 + $0x5d8] sm:$0xff] %v569
                %v571 = vld [vmem:[%s193 + $0x1190] sm:$0xff]
                %572 = vst [vmem:[%s194 + $0x5e0] sm:$0xff] %v571
                %v573 = vld [vmem:[%s193 + $0x1198] sm:$0xff]
                %574 = vst [vmem:[%s194 + $0x5e8] sm:$0xff] %v573
                %v575 = vld [vmem:[%s193 + $0x11a0] sm:$0xff]
                %576 = vst [vmem:[%s194 + $0x5f0] sm:$0xff] %v575
                %v577 = vld [vmem:[%s193 + $0x11a8] sm:$0xff]
                %578 = vst [vmem:[%s194 + $0x5f8] sm:$0xff] %v577
                %v579 = vld [vmem:[%s193 + $0x11b0] sm:$0xff]
                %580 = vst [vmem:[%s194 + $0x600] sm:$0xff] %v579
                %v581 = vld [vmem:[%s193 + $0x11b8] sm:$0xff]
                %582 = vst [vmem:[%s194 + $0x608] sm:$0xff] %v581
                %v583 = vld [vmem:[%s193 + $0x11c0] sm:$0xff]
                %584 = vst [vmem:[%s194 + $0x610] sm:$0xff] %v583
                %v585 = vld [vmem:[%s193 + $0x11c8] sm:$0xff]
                %586 = vst [vmem:[%s194 + $0x618] sm:$0xff] %v585
                %v587 = vld [vmem:[%s193 + $0x11d0] sm:$0xff]
                %588 = vst [vmem:[%s194 + $0x620] sm:$0xff] %v587
                %v589 = vld [vmem:[%s193 + $0x11d8] sm:$0xff]
                %590 = vst [vmem:[%s194 + $0x628] sm:$0xff] %v589
                %v591 = vld [vmem:[%s193 + $0x1290] sm:$0xff]
                %592 = vst [vmem:[%s194 + $0x630] sm:$0xff] %v591
                %v593 = vld [vmem:[%s193 + $0x1298] sm:$0xff]
                %594 = vst [vmem:[%s194 + $0x638] sm:$0xff] %v593
                %v595 = vld [vmem:[%s193 + $0x12a0] sm:$0xff]
                %596 = vst [vmem:[%s194 + $0x640] sm:$0xff] %v595
                %v597 = vld [vmem:[%s193 + $0x12a8] sm:$0xff]
                %598 = vst [vmem:[%s194 + $0x648] sm:$0xff] %v597
                %v599 = vld [vmem:[%s193 + $0x12b0] sm:$0xff]
                %600 = vst [vmem:[%s194 + $0x650] sm:$0xff] %v599
                %v601 = vld [vmem:[%s193 + $0x12b8] sm:$0xff]
                %602 = vst [vmem:[%s194 + $0x658] sm:$0xff] %v601
                %v603 = vld [vmem:[%s193 + $0x12c0] sm:$0xff]
                %604 = vst [vmem:[%s194 + $0x660] sm:$0xff] %v603
                %v605 = vld [vmem:[%s193 + $0x12c8] sm:$0xff]
                %606 = vst [vmem:[%s194 + $0x668] sm:$0xff] %v605
                %v607 = vld [vmem:[%s193 + $0x12d0] sm:$0xff]
                %608 = vst [vmem:[%s194 + $0x670] sm:$0xff] %v607
                %v609 = vld [vmem:[%s193 + $0x12d8] sm:$0xff]
                %610 = vst [vmem:[%s194 + $0x678] sm:$0xff] %v609
                %v611 = vld [vmem:[%s193 + $0x12e0] sm:$0xff]
                %612 = vst [vmem:[%s194 + $0x680] sm:$0xff] %v611
                %v613 = vld [vmem:[%s193 + $0x1398] sm:$0xff]
                %614 = vst [vmem:[%s194 + $0x688] sm:$0xff] %v613
                %v615 = vld [vmem:[%s193 + $0x13a0] sm:$0xff]
                %616 = vst [vmem:[%s194 + $0x690] sm:$0xff] %v615
                %v617 = vld [vmem:[%s193 + $0x13a8] sm:$0xff]
                %618 = vst [vmem:[%s194 + $0x698] sm:$0xff] %v617
                %v619 = vld [vmem:[%s193 + $0x13b0] sm:$0xff]
                %620 = vst [vmem:[%s194 + $0x6a0] sm:$0xff] %v619
                %v621 = vld [vmem:[%s193 + $0x13b8] sm:$0xff]
                %622 = vst [vmem:[%s194 + $0x6a8] sm:$0xff] %v621
                %v623 = vld [vmem:[%s193 + $0x13c0] sm:$0xff]
                %624 = vst [vmem:[%s194 + $0x6b0] sm:$0xff] %v623
                %v625 = vld [vmem:[%s193 + $0x13c8] sm:$0xff]
                %626 = vst [vmem:[%s194 + $0x6b8] sm:$0xff] %v625
                %v627 = vld [vmem:[%s193 + $0x13d0] sm:$0xff]
                %628 = vst [vmem:[%s194 + $0x6c0] sm:$0xff] %v627
                %v629 = vld [vmem:[%s193 + $0x13d8] sm:$0xff]
                %630 = vst [vmem:[%s194 + $0x6c8] sm:$0xff] %v629
                %v631 = vld [vmem:[%s193 + $0x13e0] sm:$0xff]
                %632 = vst [vmem:[%s194 + $0x6d0] sm:$0xff] %v631
                %v633 = vld [vmem:[%s193 + $0x13e8] sm:$0xff]
                %634 = vst [vmem:[%s194 + $0x6d8] sm:$0xff] %v633
                %v635 = vld [vmem:[%s193 + $0x14a0] sm:$0xff]
                %636 = vst [vmem:[%s194 + $0x6e0] sm:$0xff] %v635
                %v637 = vld [vmem:[%s193 + $0x14a8] sm:$0xff]
                %638 = vst [vmem:[%s194 + $0x6e8] sm:$0xff] %v637
                %v639 = vld [vmem:[%s193 + $0x14b0] sm:$0xff]
                %640 = vst [vmem:[%s194 + $0x6f0] sm:$0xff] %v639
                %v641 = vld [vmem:[%s193 + $0x14b8] sm:$0xff]
                %642 = vst [vmem:[%s194 + $0x6f8] sm:$0xff] %v641
                %v643 = vld [vmem:[%s193 + $0x14c0] sm:$0xff]
                %644 = vst [vmem:[%s194 + $0x700] sm:$0xff] %v643
                %v645 = vld [vmem:[%s193 + $0x14c8] sm:$0xff]
                %646 = vst [vmem:[%s194 + $0x708] sm:$0xff] %v645
                %v647 = vld [vmem:[%s193 + $0x14d0] sm:$0xff]
                %648 = vst [vmem:[%s194 + $0x710] sm:$0xff] %v647
                %v649 = vld [vmem:[%s193 + $0x14d8] sm:$0xff]
                %650 = vst [vmem:[%s194 + $0x718] sm:$0xff] %v649
                %v651 = vld [vmem:[%s193 + $0x14e0] sm:$0xff]
                %652 = vst [vmem:[%s194 + $0x720] sm:$0xff] %v651
                %v653 = vld [vmem:[%s193 + $0x14e8] sm:$0xff]
                %654 = vst [vmem:[%s194 + $0x728] sm:$0xff] %v653
                %v655 = vld [vmem:[%s193 + $0x14f0] sm:$0xff]
                %656 = vst [vmem:[%s194 + $0x730] sm:$0xff] %v655
                %v657 = vld [vmem:[%s193 + $0x15a8] sm:$0xff]
                %658 = vst [vmem:[%s194 + $0x738] sm:$0xff] %v657
                %v659 = vld [vmem:[%s193 + $0x15b0] sm:$0xff]
                %660 = vst [vmem:[%s194 + $0x740] sm:$0xff] %v659
                %v661 = vld [vmem:[%s193 + $0x15b8] sm:$0xff]
                %662 = vst [vmem:[%s194 + $0x748] sm:$0xff] %v661
                %v663 = vld [vmem:[%s193 + $0x15c0] sm:$0xff]
                %664 = vst [vmem:[%s194 + $0x750] sm:$0xff] %v663
                %v665 = vld [vmem:[%s193 + $0x15c8] sm:$0xff]
                %666 = vst [vmem:[%s194 + $0x758] sm:$0xff] %v665
                %v667 = vld [vmem:[%s193 + $0x15d0] sm:$0xff]
                %668 = vst [vmem:[%s194 + $0x760] sm:$0xff] %v667
                %v669 = vld [vmem:[%s193 + $0x15d8] sm:$0xff]
                %670 = vst [vmem:[%s194 + $0x768] sm:$0xff] %v669
                %v671 = vld [vmem:[%s193 + $0x15e0] sm:$0xff]
                %672 = vst [vmem:[%s194 + $0x770] sm:$0xff] %v671
                %v673 = vld [vmem:[%s193 + $0x15e8] sm:$0xff]
                %674 = vst [vmem:[%s194 + $0x778] sm:$0xff] %v673
                %v675 = vld [vmem:[%s193 + $0x15f0] sm:$0xff]
                %676 = vst [vmem:[%s194 + $0x780] sm:$0xff] %v675
                %v677 = vld [vmem:[%s193 + $0x15f8] sm:$0xff]
                %678 = vst [vmem:[%s194 + $0x788] sm:$0xff] %v677
                %v679 = vld [vmem:[%s193 + $0x16b0] sm:$0xff]
                %680 = vst [vmem:[%s194 + $0x790] sm:$0xff] %v679
                %v681 = vld [vmem:[%s193 + $0x16b8] sm:$0xff]
                %682 = vst [vmem:[%s194 + $0x798] sm:$0xff] %v681
                %v683 = vld [vmem:[%s193 + $0x16c0] sm:$0xff]
                %684 = vst [vmem:[%s194 + $0x7a0] sm:$0xff] %v683
                %v685 = vld [vmem:[%s193 + $0x16c8] sm:$0xff]
                %686 = vst [vmem:[%s194 + $0x7a8] sm:$0xff] %v685
                %v687 = vld [vmem:[%s193 + $0x16d0] sm:$0xff]
                %688 = vst [vmem:[%s194 + $0x7b0] sm:$0xff] %v687
                %v689 = vld [vmem:[%s193 + $0x16d8] sm:$0xff]
                %690 = vst [vmem:[%s194 + $0x7b8] sm:$0xff] %v689
                %v691 = vld [vmem:[%s193 + $0x16e0] sm:$0xff]
                %692 = vst [vmem:[%s194 + $0x7c0] sm:$0xff] %v691
                %v693 = vld [vmem:[%s193 + $0x16e8] sm:$0xff]
                %694 = vst [vmem:[%s194 + $0x7c8] sm:$0xff] %v693
                %v695 = vld [vmem:[%s193 + $0x16f0] sm:$0xff]
                %696 = vst [vmem:[%s194 + $0x7d0] sm:$0xff] %v695
                %v697 = vld [vmem:[%s193 + $0x16f8] sm:$0xff]
                %698 = vst [vmem:[%s194 + $0x7d8] sm:$0xff] %v697
                %v699 = vld [vmem:[%s193 + $0x1700] sm:$0xff]
                %700 = vst [vmem:[%s194 + $0x7e0] sm:$0xff] %v699
                %v701 = vld [vmem:[%s193 + $0x17b8] sm:$0xff]
                %702 = vst [vmem:[%s194 + $0x7e8] sm:$0xff] %v701
                %v703 = vld [vmem:[%s193 + $0x17c0] sm:$0xff]
                %704 = vst [vmem:[%s194 + $0x7f0] sm:$0xff] %v703
                %v705 = vld [vmem:[%s193 + $0x17c8] sm:$0xff]
                %706 = vst [vmem:[%s194 + $0x7f8] sm:$0xff] %v705
                %v707 = vld [vmem:[%s193 + $0x17d0] sm:$0xff]
                %708 = vst [vmem:[%s194 + $0x800] sm:$0xff] %v707
                %v709 = vld [vmem:[%s193 + $0x17d8] sm:$0xff]
                %710 = vst [vmem:[%s194 + $0x808] sm:$0xff] %v709
                %v711 = vld [vmem:[%s193 + $0x17e0] sm:$0xff]
                %712 = vst [vmem:[%s194 + $0x810] sm:$0xff] %v711
                %v713 = vld [vmem:[%s193 + $0x17e8] sm:$0xff]
                %714 = vst [vmem:[%s194 + $0x818] sm:$0xff] %v713
                %v715 = vld [vmem:[%s193 + $0x17f0] sm:$0xff]
                %716 = vst [vmem:[%s194 + $0x820] sm:$0xff] %v715
                %v717 = vld [vmem:[%s193 + $0x17f8] sm:$0xff]
                %718 = vst [vmem:[%s194 + $0x828] sm:$0xff] %v717
                %v719 = vld [vmem:[%s193 + $0x1800] sm:$0xff]
                %720 = vst [vmem:[%s194 + $0x830] sm:$0xff] %v719
                %v721 = vld [vmem:[%s193 + $0x1808] sm:$0xff]
                %722 = vst [vmem:[%s194 + $0x838] sm:$0xff] %v721
                %v723 = vld [vmem:[%s193 + $0x18c0] sm:$0xff]
                %724 = vst [vmem:[%s194 + $0x840] sm:$0xff] %v723
                %v725 = vld [vmem:[%s193 + $0x18c8] sm:$0xff]
                %726 = vst [vmem:[%s194 + $0x848] sm:$0xff] %v725
                %v727 = vld [vmem:[%s193 + $0x18d0] sm:$0xff]
                %728 = vst [vmem:[%s194 + $0x850] sm:$0xff] %v727
                %v729 = vld [vmem:[%s193 + $0x18d8] sm:$0xff]
                %730 = vst [vmem:[%s194 + $0x858] sm:$0xff] %v729
                %v731 = vld [vmem:[%s193 + $0x18e0] sm:$0xff]
                %732 = vst [vmem:[%s194 + $0x860] sm:$0xff] %v731
                %v733 = vld [vmem:[%s193 + $0x18e8] sm:$0xff]
                %734 = vst [vmem:[%s194 + $0x868] sm:$0xff] %v733
                %v735 = vld [vmem:[%s193 + $0x18f0] sm:$0xff]
                %736 = vst [vmem:[%s194 + $0x870] sm:$0xff] %v735
                %v737 = vld [vmem:[%s193 + $0x18f8] sm:$0xff]
                %738 = vst [vmem:[%s194 + $0x878] sm:$0xff] %v737
                %v739 = vld [vmem:[%s193 + $0x1900] sm:$0xff]
                %740 = vst [vmem:[%s194 + $0x880] sm:$0xff] %v739
                %v741 = vld [vmem:[%s193 + $0x1908] sm:$0xff]
                %742 = vst [vmem:[%s194 + $0x888] sm:$0xff] %v741
                %v743 = vld [vmem:[%s193 + $0x1910] sm:$0xff]
                %744 = vst [vmem:[%s194 + $0x890] sm:$0xff] %v743
                %v745 = vld [vmem:[%s193 + $0x19c8] sm:$0xff]
                %746 = vst [vmem:[%s194 + $0x898] sm:$0xff] %v745
                %v747 = vld [vmem:[%s193 + $0x19d0] sm:$0xff]
                %748 = vst [vmem:[%s194 + $0x8a0] sm:$0xff] %v747
                %v749 = vld [vmem:[%s193 + $0x19d8] sm:$0xff]
                %750 = vst [vmem:[%s194 + $0x8a8] sm:$0xff] %v749
                %v751 = vld [vmem:[%s193 + $0x19e0] sm:$0xff]
                %752 = vst [vmem:[%s194 + $0x8b0] sm:$0xff] %v751
                %v753 = vld [vmem:[%s193 + $0x19e8] sm:$0xff]
                %754 = vst [vmem:[%s194 + $0x8b8] sm:$0xff] %v753
                %v755 = vld [vmem:[%s193 + $0x19f0] sm:$0xff]
                %756 = vst [vmem:[%s194 + $0x8c0] sm:$0xff] %v755
                %v757 = vld [vmem:[%s193 + $0x19f8] sm:$0xff]
                %758 = vst [vmem:[%s194 + $0x8c8] sm:$0xff] %v757
                %v759 = vld [vmem:[%s193 + $0x1a00] sm:$0xff]
                %760 = vst [vmem:[%s194 + $0x8d0] sm:$0xff] %v759
                %v761 = vld [vmem:[%s193 + $0x1a08] sm:$0xff]
                %762 = vst [vmem:[%s194 + $0x8d8] sm:$0xff] %v761
                %v763 = vld [vmem:[%s193 + $0x1a10] sm:$0xff]
                %764 = vst [vmem:[%s194 + $0x8e0] sm:$0xff] %v763
                %v765 = vld [vmem:[%s193 + $0x1a18] sm:$0xff]
                %766 = vst [vmem:[%s194 + $0x8e8] sm:$0xff] %v765
                %v767 = vld [vmem:[%s193 + $0x1ad0] sm:$0xff]
                %768 = vst [vmem:[%s194 + $0x8f0] sm:$0xff] %v767
                %v769 = vld [vmem:[%s193 + $0x1ad8] sm:$0xff]
                %770 = vst [vmem:[%s194 + $0x8f8] sm:$0xff] %v769
                %v771 = vld [vmem:[%s193 + $0x1ae0] sm:$0xff]
                %772 = vst [vmem:[%s194 + $0x900] sm:$0xff] %v771
                %v773 = vld [vmem:[%s193 + $0x1ae8] sm:$0xff]
                %774 = vst [vmem:[%s194 + $0x908] sm:$0xff] %v773
                %v775 = vld [vmem:[%s193 + $0x1af0] sm:$0xff]
                %776 = vst [vmem:[%s194 + $0x910] sm:$0xff] %v775
                %v777 = vld [vmem:[%s193 + $0x1af8] sm:$0xff]
                %778 = vst [vmem:[%s194 + $0x918] sm:$0xff] %v777
                %v779 = vld [vmem:[%s193 + $0x1b00] sm:$0xff]
                %780 = vst [vmem:[%s194 + $0x920] sm:$0xff] %v779
                %v781 = vld [vmem:[%s193 + $0x1b08] sm:$0xff]
                %782 = vst [vmem:[%s194 + $0x928] sm:$0xff] %v781
                %v783 = vld [vmem:[%s193 + $0x1b10] sm:$0xff]
                %784 = vst [vmem:[%s194 + $0x930] sm:$0xff] %v783
                %v785 = vld [vmem:[%s193 + $0x1b18] sm:$0xff]
                %786 = vst [vmem:[%s194 + $0x938] sm:$0xff] %v785
                %v787 = vld [vmem:[%s193 + $0x1b20] sm:$0xff]
                %788 = vst [vmem:[%s194 + $0x940] sm:$0xff] %v787
                %v789 = vld [vmem:[%s193 + $0x1bd8] sm:$0xff]
                %790 = vst [vmem:[%s194 + $0x948] sm:$0xff] %v789
                %v791 = vld [vmem:[%s193 + $0x1be0] sm:$0xff]
                %792 = vst [vmem:[%s194 + $0x950] sm:$0xff] %v791
                %v793 = vld [vmem:[%s193 + $0x1be8] sm:$0xff]
                %794 = vst [vmem:[%s194 + $0x958] sm:$0xff] %v793
                %v795 = vld [vmem:[%s193 + $0x1bf0] sm:$0xff]
                %796 = vst [vmem:[%s194 + $0x960] sm:$0xff] %v795
                %v797 = vld [vmem:[%s193 + $0x1bf8] sm:$0xff]
                %798 = vst [vmem:[%s194 + $0x968] sm:$0xff] %v797
                %v799 = vld [vmem:[%s193 + $0x1c00] sm:$0xff]
                %800 = vst [vmem:[%s194 + $0x970] sm:$0xff] %v799
                %v801 = vld [vmem:[%s193 + $0x1c08] sm:$0xff]
                %802 = vst [vmem:[%s194 + $0x978] sm:$0xff] %v801
                %v803 = vld [vmem:[%s193 + $0x1c10] sm:$0xff]
                %804 = vst [vmem:[%s194 + $0x980] sm:$0xff] %v803
                %v805 = vld [vmem:[%s193 + $0x1c18] sm:$0xff]
                %806 = vst [vmem:[%s194 + $0x988] sm:$0xff] %v805
                %v807 = vld [vmem:[%s193 + $0x1c20] sm:$0xff]
                %808 = vst [vmem:[%s194 + $0x990] sm:$0xff] %v807
                %v809 = vld [vmem:[%s193 + $0x1c28] sm:$0xff]
                %810 = vst [vmem:[%s194 + $0x998] sm:$0xff] %v809
                %v811 = vld [vmem:[%s193 + $0x1ce0] sm:$0xff]
                %812 = vst [vmem:[%s194 + $0x9a0] sm:$0xff] %v811
                %v813 = vld [vmem:[%s193 + $0x1ce8] sm:$0xff]
                %814 = vst [vmem:[%s194 + $0x9a8] sm:$0xff] %v813
                %v815 = vld [vmem:[%s193 + $0x1cf0] sm:$0xff]
                %816 = vst [vmem:[%s194 + $0x9b0] sm:$0xff] %v815
                %v817 = vld [vmem:[%s193 + $0x1cf8] sm:$0xff]
                %818 = vst [vmem:[%s194 + $0x9b8] sm:$0xff] %v817
                %v819 = vld [vmem:[%s193 + $0x1d00] sm:$0xff]
                %820 = vst [vmem:[%s194 + $0x9c0] sm:$0xff] %v819
                %v821 = vld [vmem:[%s193 + $0x1d08] sm:$0xff]
                %822 = vst [vmem:[%s194 + $0x9c8] sm:$0xff] %v821
                %v823 = vld [vmem:[%s193 + $0x1d10] sm:$0xff]
                %824 = vst [vmem:[%s194 + $0x9d0] sm:$0xff] %v823
                %v825 = vld [vmem:[%s193 + $0x1d18] sm:$0xff]
                %826 = vst [vmem:[%s194 + $0x9d8] sm:$0xff] %v825
                %v827 = vld [vmem:[%s193 + $0x1d20] sm:$0xff]
                %828 = vst [vmem:[%s194 + $0x9e0] sm:$0xff] %v827
                %v829 = vld [vmem:[%s193 + $0x1d28] sm:$0xff]
                %830 = vst [vmem:[%s194 + $0x9e8] sm:$0xff] %v829
                %v831 = vld [vmem:[%s193 + $0x1d30] sm:$0xff]
                %832 = vst [vmem:[%s194 + $0x9f0] sm:$0xff] %v831
                %v833 = vld [vmem:[%s193 + $0x1de8] sm:$0xff]
                %834 = vst [vmem:[%s194 + $0x9f8] sm:$0xff] %v833
                %v835 = vld [vmem:[%s193 + $0x1df0] sm:$0xff]
                %836 = vst [vmem:[%s194 + $0xa00] sm:$0xff] %v835
                %v837 = vld [vmem:[%s193 + $0x1df8] sm:$0xff]
                %838 = vst [vmem:[%s194 + $0xa08] sm:$0xff] %v837
                %v839 = vld [vmem:[%s193 + $0x1e00] sm:$0xff]
                %840 = vst [vmem:[%s194 + $0xa10] sm:$0xff] %v839
                %v841 = vld [vmem:[%s193 + $0x1e08] sm:$0xff]
                %842 = vst [vmem:[%s194 + $0xa18] sm:$0xff] %v841
                %v843 = vld [vmem:[%s193 + $0x1e10] sm:$0xff]
                %844 = vst [vmem:[%s194 + $0xa20] sm:$0xff] %v843
                %v845 = vld [vmem:[%s193 + $0x1e18] sm:$0xff]
                %846 = vst [vmem:[%s194 + $0xa28] sm:$0xff] %v845
                %v847 = vld [vmem:[%s193 + $0x1e20] sm:$0xff]
                %848 = vst [vmem:[%s194 + $0xa30] sm:$0xff] %v847
                %v849 = vld [vmem:[%s193 + $0x1e28] sm:$0xff]
                %850 = vst [vmem:[%s194 + $0xa38] sm:$0xff] %v849
                %v851 = vld [vmem:[%s193 + $0x1e30] sm:$0xff]
                %852 = vst [vmem:[%s194 + $0xa40] sm:$0xff] %v851
                %v853 = vld [vmem:[%s193 + $0x1e38] sm:$0xff]
                %854 = vst [vmem:[%s194 + $0xa48] sm:$0xff] %v853
                %v855 = vld [vmem:[%s193 + $0x1ef0] sm:$0xff]
                %856 = vst [vmem:[%s194 + $0xa50] sm:$0xff] %v855
                %v857 = vld [vmem:[%s193 + $0x1ef8] sm:$0xff]
                %858 = vst [vmem:[%s194 + $0xa58] sm:$0xff] %v857
                %v859 = vld [vmem:[%s193 + $0x1f00] sm:$0xff]
                %860 = vst [vmem:[%s194 + $0xa60] sm:$0xff] %v859
                %v861 = vld [vmem:[%s193 + $0x1f08] sm:$0xff]
                %862 = vst [vmem:[%s194 + $0xa68] sm:$0xff] %v861
                %v863 = vld [vmem:[%s193 + $0x1f10] sm:$0xff]
                %864 = vst [vmem:[%s194 + $0xa70] sm:$0xff] %v863
                %v865 = vld [vmem:[%s193 + $0x1f18] sm:$0xff]
                %866 = vst [vmem:[%s194 + $0xa78] sm:$0xff] %v865
                %v867 = vld [vmem:[%s193 + $0x1f20] sm:$0xff]
                %868 = vst [vmem:[%s194 + $0xa80] sm:$0xff] %v867
                %v869 = vld [vmem:[%s193 + $0x1f28] sm:$0xff]
                %870 = vst [vmem:[%s194 + $0xa88] sm:$0xff] %v869
                %v871 = vld [vmem:[%s193 + $0x1f30] sm:$0xff]
                %872 = vst [vmem:[%s194 + $0xa90] sm:$0xff] %v871
                %v873 = vld [vmem:[%s193 + $0x1f38] sm:$0xff]
                %874 = vst [vmem:[%s194 + $0xa98] sm:$0xff] %v873
                %v875 = vld [vmem:[%s193 + $0x1f40] sm:$0xff]
                %876 = vst [vmem:[%s194 + $0xaa0] sm:$0xff] %v875
                %v877 = vld [vmem:[%s193 + $0x1ff8] sm:$0xff]
                %878 = vst [vmem:[%s194 + $0xaa8] sm:$0xff] %v877
                %v879 = vld [vmem:[%s193 + $0x2000] sm:$0xff]
                %880 = vst [vmem:[%s194 + $0xab0] sm:$0xff] %v879
                %v881 = vld [vmem:[%s193 + $0x2008] sm:$0xff]
                %882 = vst [vmem:[%s194 + $0xab8] sm:$0xff] %v881
                %v883 = vld [vmem:[%s193 + $0x2010] sm:$0xff]
                %884 = vst [vmem:[%s194 + $0xac0] sm:$0xff] %v883
                %v885 = vld [vmem:[%s193 + $0x2018] sm:$0xff]
                %886 = vst [vmem:[%s194 + $0xac8] sm:$0xff] %v885
                %v887 = vld [vmem:[%s193 + $0x2020] sm:$0xff]
                %888 = vst [vmem:[%s194 + $0xad0] sm:$0xff] %v887
                %v889 = vld [vmem:[%s193 + $0x2028] sm:$0xff]
                %890 = vst [vmem:[%s194 + $0xad8] sm:$0xff] %v889
                %v891 = vld [vmem:[%s193 + $0x2030] sm:$0xff]
                %892 = vst [vmem:[%s194 + $0xae0] sm:$0xff] %v891
                %v893 = vld [vmem:[%s193 + $0x2038] sm:$0xff]
                %894 = vst [vmem:[%s194 + $0xae8] sm:$0xff] %v893
                %v895 = vld [vmem:[%s193 + $0x2040] sm:$0xff]
                %896 = vst [vmem:[%s194 + $0xaf0] sm:$0xff] %v895
                %v897 = vld [vmem:[%s193 + $0x2048] sm:$0xff]
                %898 = vst [vmem:[%s194 + $0xaf8] sm:$0xff] %v897
                %v899 = vld [vmem:[%s193 + $0x2100] sm:$0xff]
                %900 = vst [vmem:[%s194 + $0xb00] sm:$0xff] %v899
                %v901 = vld [vmem:[%s193 + $0x2108] sm:$0xff]
                %902 = vst [vmem:[%s194 + $0xb08] sm:$0xff] %v901
                %v903 = vld [vmem:[%s193 + $0x2110] sm:$0xff]
                %904 = vst [vmem:[%s194 + $0xb10] sm:$0xff] %v903
                %v905 = vld [vmem:[%s193 + $0x2118] sm:$0xff]
                %906 = vst [vmem:[%s194 + $0xb18] sm:$0xff] %v905
                %v907 = vld [vmem:[%s193 + $0x2120] sm:$0xff]
                %908 = vst [vmem:[%s194 + $0xb20] sm:$0xff] %v907
                %v909 = vld [vmem:[%s193 + $0x2128] sm:$0xff]
                %910 = vst [vmem:[%s194 + $0xb28] sm:$0xff] %v909
                %v911 = vld [vmem:[%s193 + $0x2130] sm:$0xff]
                %912 = vst [vmem:[%s194 + $0xb30] sm:$0xff] %v911
                %v913 = vld [vmem:[%s193 + $0x2138] sm:$0xff]
                %914 = vst [vmem:[%s194 + $0xb38] sm:$0xff] %v913
                %v915 = vld [vmem:[%s193 + $0x2140] sm:$0xff]
                %916 = vst [vmem:[%s194 + $0xb40] sm:$0xff] %v915
                %v917 = vld [vmem:[%s193 + $0x2148] sm:$0xff]
                %918 = vst [vmem:[%s194 + $0xb48] sm:$0xff] %v917
                %v919 = vld [vmem:[%s193 + $0x2150] sm:$0xff]
                %920 = vst [vmem:[%s194 + $0xb50] sm:$0xff] %v919
                %v921 = vld [vmem:[%s193 + $0x2208] sm:$0xff]
                %922 = vst [vmem:[%s194 + $0xb58] sm:$0xff] %v921
                %v923 = vld [vmem:[%s193 + $0x2210] sm:$0xff]
                %924 = vst [vmem:[%s194 + $0xb60] sm:$0xff] %v923
                %v925 = vld [vmem:[%s193 + $0x2218] sm:$0xff]
                %926 = vst [vmem:[%s194 + $0xb68] sm:$0xff] %v925
                %v927 = vld [vmem:[%s193 + $0x2220] sm:$0xff]
                %928 = vst [vmem:[%s194 + $0xb70] sm:$0xff] %v927
                %v929 = vld [vmem:[%s193 + $0x2228] sm:$0xff]
                %930 = vst [vmem:[%s194 + $0xb78] sm:$0xff] %v929
                %v931 = vld [vmem:[%s193 + $0x2230] sm:$0xff]
                %932 = vst [vmem:[%s194 + $0xb80] sm:$0xff] %v931
                %v933 = vld [vmem:[%s193 + $0x2238] sm:$0xff]
                %934 = vst [vmem:[%s194 + $0xb88] sm:$0xff] %v933
                %v935 = vld [vmem:[%s193 + $0x2240] sm:$0xff]
                %936 = vst [vmem:[%s194 + $0xb90] sm:$0xff] %v935
                %v937 = vld [vmem:[%s193 + $0x2248] sm:$0xff]
                %938 = vst [vmem:[%s194 + $0xb98] sm:$0xff] %v937
                %v939 = vld [vmem:[%s193 + $0x2250] sm:$0xff]
                %940 = vst [vmem:[%s194 + $0xba0] sm:$0xff] %v939
                %v941 = vld [vmem:[%s193 + $0x2258] sm:$0xff]
                %942 = vst [vmem:[%s194 + $0xba8] sm:$0xff] %v941
                %v943 = vld [vmem:[%s193 + $0x2310] sm:$0xff]
                %944 = vst [vmem:[%s194 + $0xbb0] sm:$0xff] %v943
                %v945 = vld [vmem:[%s193 + $0x2318] sm:$0xff]
                %946 = vst [vmem:[%s194 + $0xbb8] sm:$0xff] %v945
                %v947 = vld [vmem:[%s193 + $0x2320] sm:$0xff]
                %948 = vst [vmem:[%s194 + $0xbc0] sm:$0xff] %v947
                %v949 = vld [vmem:[%s193 + $0x2328] sm:$0xff]
                %950 = vst [vmem:[%s194 + $0xbc8] sm:$0xff] %v949
                %v951 = vld [vmem:[%s193 + $0x2330] sm:$0xff]
                %952 = vst [vmem:[%s194 + $0xbd0] sm:$0xff] %v951
                %v953 = vld [vmem:[%s193 + $0x2338] sm:$0xff]
                %954 = vst [vmem:[%s194 + $0xbd8] sm:$0xff] %v953
                %v955 = vld [vmem:[%s193 + $0x2340] sm:$0xff]
                %956 = vst [vmem:[%s194 + $0xbe0] sm:$0xff] %v955
                %v957 = vld [vmem:[%s193 + $0x2348] sm:$0xff]
                %958 = vst [vmem:[%s194 + $0xbe8] sm:$0xff] %v957
                %v959 = vld [vmem:[%s193 + $0x2350] sm:$0xff]
                %960 = vst [vmem:[%s194 + $0xbf0] sm:$0xff] %v959
                %v961 = vld [vmem:[%s193 + $0x2358] sm:$0xff]
                %962 = vst [vmem:[%s194 + $0xbf8] sm:$0xff] %v961
                %v963 = vld [vmem:[%s193 + $0x2360] sm:$0xff]
                %964 = vst [vmem:[%s194 + $0xc00] sm:$0xff] %v963
                %v965 = vld [vmem:[%s193 + $0x2418] sm:$0xff]
                %966 = vst [vmem:[%s194 + $0xc08] sm:$0xff] %v965
                %v967 = vld [vmem:[%s193 + $0x2420] sm:$0xff]
                %968 = vst [vmem:[%s194 + $0xc10] sm:$0xff] %v967
                %v969 = vld [vmem:[%s193 + $0x2428] sm:$0xff]
                %970 = vst [vmem:[%s194 + $0xc18] sm:$0xff] %v969
                %v971 = vld [vmem:[%s193 + $0x2430] sm:$0xff]
                %972 = vst [vmem:[%s194 + $0xc20] sm:$0xff] %v971
                %v973 = vld [vmem:[%s193 + $0x2438] sm:$0xff]
                %974 = vst [vmem:[%s194 + $0xc28] sm:$0xff] %v973
                %v975 = vld [vmem:[%s193 + $0x2440] sm:$0xff]
                %976 = vst [vmem:[%s194 + $0xc30] sm:$0xff] %v975
                %v977 = vld [vmem:[%s193 + $0x2448] sm:$0xff]
                %978 = vst [vmem:[%s194 + $0xc38] sm:$0xff] %v977
                %v979 = vld [vmem:[%s193 + $0x2450] sm:$0xff]
                %980 = vst [vmem:[%s194 + $0xc40] sm:$0xff] %v979
                %v981 = vld [vmem:[%s193 + $0x2458] sm:$0xff]
                %982 = vst [vmem:[%s194 + $0xc48] sm:$0xff] %v981
                %v983 = vld [vmem:[%s193 + $0x2460] sm:$0xff]
                %984 = vst [vmem:[%s194 + $0xc50] sm:$0xff] %v983
                %v985 = vld [vmem:[%s193 + $0x2468] sm:$0xff]
                %986 = vst [vmem:[%s194 + $0xc58] sm:$0xff] %v985
                %v987 = vld [vmem:[%s193 + $0x2520] sm:$0xff]
                %988 = vst [vmem:[%s194 + $0xc60] sm:$0xff] %v987
                %v989 = vld [vmem:[%s193 + $0x2528] sm:$0xff]
                %990 = vst [vmem:[%s194 + $0xc68] sm:$0xff] %v989
                %v991 = vld [vmem:[%s193 + $0x2530] sm:$0xff]
                %992 = vst [vmem:[%s194 + $0xc70] sm:$0xff] %v991
                %v993 = vld [vmem:[%s193 + $0x2538] sm:$0xff]
                %994 = vst [vmem:[%s194 + $0xc78] sm:$0xff] %v993
                %v995 = vld [vmem:[%s193 + $0x2540] sm:$0xff]
                %996 = vst [vmem:[%s194 + $0xc80] sm:$0xff] %v995
                %v997 = vld [vmem:[%s193 + $0x2548] sm:$0xff]
                %998 = vst [vmem:[%s194 + $0xc88] sm:$0xff] %v997
                %v999 = vld [vmem:[%s193 + $0x2550] sm:$0xff]
                %1000 = vst [vmem:[%s194 + $0xc90] sm:$0xff] %v999
                %v1001 = vld [vmem:[%s193 + $0x2558] sm:$0xff]
                %1002 = vst [vmem:[%s194 + $0xc98] sm:$0xff] %v1001
                %v1003 = vld [vmem:[%s193 + $0x2560] sm:$0xff]
                %1004 = vst [vmem:[%s194 + $0xca0] sm:$0xff] %v1003
                %v1005 = vld [vmem:[%s193 + $0x2568] sm:$0xff]
                %1006 = vst [vmem:[%s194 + $0xca8] sm:$0xff] %v1005
                %v1007 = vld [vmem:[%s193 + $0x2570] sm:$0xff]
                %1008 = vst [vmem:[%s194 + $0xcb0] sm:$0xff] %v1007
                %v1009 = vld [vmem:[%s193 + $0x2628] sm:$0xff]
                %1010 = vst [vmem:[%s194 + $0xcb8] sm:$0xff] %v1009
                %v1011 = vld [vmem:[%s193 + $0x2630] sm:$0xff]
                %1012 = vst [vmem:[%s194 + $0xcc0] sm:$0xff] %v1011
                %v1013 = vld [vmem:[%s193 + $0x2638] sm:$0xff]
                %1014 = vst [vmem:[%s194 + $0xcc8] sm:$0xff] %v1013
                %v1015 = vld [vmem:[%s193 + $0x2640] sm:$0xff]
                %1016 = vst [vmem:[%s194 + $0xcd0] sm:$0xff] %v1015
                %v1017 = vld [vmem:[%s193 + $0x2648] sm:$0xff]
                %1018 = vst [vmem:[%s194 + $0xcd8] sm:$0xff] %v1017
                %v1019 = vld [vmem:[%s193 + $0x2650] sm:$0xff]
                %1020 = vst [vmem:[%s194 + $0xce0] sm:$0xff] %v1019
                %v1021 = vld [vmem:[%s193 + $0x2658] sm:$0xff]
                %1022 = vst [vmem:[%s194 + $0xce8] sm:$0xff] %v1021
                %v1023 = vld [vmem:[%s193 + $0x2660] sm:$0xff]
                %1024 = vst [vmem:[%s194 + $0xcf0] sm:$0xff] %v1023
                %v1025 = vld [vmem:[%s193 + $0x2668] sm:$0xff]
                %1026 = vst [vmem:[%s194 + $0xcf8] sm:$0xff] %v1025
                %v1027 = vld [vmem:[%s193 + $0x2670] sm:$0xff]
                %1028 = vst [vmem:[%s194 + $0xd00] sm:$0xff] %v1027
                %v1029 = vld [vmem:[%s193 + $0x2678] sm:$0xff]
                %1030 = vst [vmem:[%s194 + $0xd08] sm:$0xff] %v1029
                %v1031 = vld [vmem:[%s193 + $0x2730] sm:$0xff]
                %1032 = vst [vmem:[%s194 + $0xd10] sm:$0xff] %v1031
                %v1033 = vld [vmem:[%s193 + $0x2738] sm:$0xff]
                %1034 = vst [vmem:[%s194 + $0xd18] sm:$0xff] %v1033
                %v1035 = vld [vmem:[%s193 + $0x2740] sm:$0xff]
                %1036 = vst [vmem:[%s194 + $0xd20] sm:$0xff] %v1035
                %v1037 = vld [vmem:[%s193 + $0x2748] sm:$0xff]
                %1038 = vst [vmem:[%s194 + $0xd28] sm:$0xff] %v1037
                %v1039 = vld [vmem:[%s193 + $0x2750] sm:$0xff]
                %1040 = vst [vmem:[%s194 + $0xd30] sm:$0xff] %v1039
                %v1041 = vld [vmem:[%s193 + $0x2758] sm:$0xff]
                %1042 = vst [vmem:[%s194 + $0xd38] sm:$0xff] %v1041
                %v1043 = vld [vmem:[%s193 + $0x2760] sm:$0xff]
                %1044 = vst [vmem:[%s194 + $0xd40] sm:$0xff] %v1043
                %v1045 = vld [vmem:[%s193 + $0x2768] sm:$0xff]
                %1046 = vst [vmem:[%s194 + $0xd48] sm:$0xff] %v1045
                %v1047 = vld [vmem:[%s193 + $0x2770] sm:$0xff]
                %1048 = vst [vmem:[%s194 + $0xd50] sm:$0xff] %v1047
                %v1049 = vld [vmem:[%s193 + $0x2778] sm:$0xff]
                %1050 = vst [vmem:[%s194 + $0xd58] sm:$0xff] %v1049
                %v1051 = vld [vmem:[%s193 + $0x2780] sm:$0xff]
                %1052 = vst [vmem:[%s194 + $0xd60] sm:$0xff] %v1051
                %v1053 = vld [vmem:[%s193 + $0x2838] sm:$0xff]
                %1054 = vst [vmem:[%s194 + $0xd68] sm:$0xff] %v1053
                %v1055 = vld [vmem:[%s193 + $0x2840] sm:$0xff]
                %1056 = vst [vmem:[%s194 + $0xd70] sm:$0xff] %v1055
                %v1057 = vld [vmem:[%s193 + $0x2848] sm:$0xff]
                %1058 = vst [vmem:[%s194 + $0xd78] sm:$0xff] %v1057
                %v1059 = vld [vmem:[%s193 + $0x2850] sm:$0xff]
                %1060 = vst [vmem:[%s194 + $0xd80] sm:$0xff] %v1059
                %v1061 = vld [vmem:[%s193 + $0x2858] sm:$0xff]
                %1062 = vst [vmem:[%s194 + $0xd88] sm:$0xff] %v1061
                %v1063 = vld [vmem:[%s193 + $0x2860] sm:$0xff]
                %1064 = vst [vmem:[%s194 + $0xd90] sm:$0xff] %v1063
                %v1065 = vld [vmem:[%s193 + $0x2868] sm:$0xff]
                %1066 = vst [vmem:[%s194 + $0xd98] sm:$0xff] %v1065
                %v1067 = vld [vmem:[%s193 + $0x2870] sm:$0xff]
                %1068 = vst [vmem:[%s194 + $0xda0] sm:$0xff] %v1067
                %v1069 = vld [vmem:[%s193 + $0x2878] sm:$0xff]
                %1070 = vst [vmem:[%s194 + $0xda8] sm:$0xff] %v1069
                %v1071 = vld [vmem:[%s193 + $0x2880] sm:$0xff]
                %1072 = vst [vmem:[%s194 + $0xdb0] sm:$0xff] %v1071
                %v1073 = vld [vmem:[%s193 + $0x2888] sm:$0xff]
                %1074 = vst [vmem:[%s194 + $0xdb8] sm:$0xff] %v1073
                %v1075 = vld [vmem:[%s193 + $0x2940] sm:$0xff]
                %1076 = vst [vmem:[%s194 + $0xdc0] sm:$0xff] %v1075
                %v1077 = vld [vmem:[%s193 + $0x2948] sm:$0xff]
                %1078 = vst [vmem:[%s194 + $0xdc8] sm:$0xff] %v1077
                %v1079 = vld [vmem:[%s193 + $0x2950] sm:$0xff]
                %1080 = vst [vmem:[%s194 + $0xdd0] sm:$0xff] %v1079
                %v1081 = vld [vmem:[%s193 + $0x2958] sm:$0xff]
                %1082 = vst [vmem:[%s194 + $0xdd8] sm:$0xff] %v1081
                %v1083 = vld [vmem:[%s193 + $0x2960] sm:$0xff]
                %1084 = vst [vmem:[%s194 + $0xde0] sm:$0xff] %v1083
                %v1085 = vld [vmem:[%s193 + $0x2968] sm:$0xff]
                %1086 = vst [vmem:[%s194 + $0xde8] sm:$0xff] %v1085
                %v1087 = vld [vmem:[%s193 + $0x2970] sm:$0xff]
                %1088 = vst [vmem:[%s194 + $0xdf0] sm:$0xff] %v1087
                %v1089 = vld [vmem:[%s193 + $0x2978] sm:$0xff]
                %1090 = vst [vmem:[%s194 + $0xdf8] sm:$0xff] %v1089
                %v1091 = vld [vmem:[%s193 + $0x2980] sm:$0xff]
                %1092 = vst [vmem:[%s194 + $0xe00] sm:$0xff] %v1091
                %v1093 = vld [vmem:[%s193 + $0x2988] sm:$0xff]
                %1094 = vst [vmem:[%s194 + $0xe08] sm:$0xff] %v1093
                %v1095 = vld [vmem:[%s193 + $0x2990] sm:$0xff]
                %1096 = vst [vmem:[%s194 + $0xe10] sm:$0xff] %v1095
                %v1097 = vld [vmem:[%s193 + $0x2a48] sm:$0xff]
                %1098 = vst [vmem:[%s194 + $0xe18] sm:$0xff] %v1097
                %v1099 = vld [vmem:[%s193 + $0x2a50] sm:$0xff]
                %1100 = vst [vmem:[%s194 + $0xe20] sm:$0xff] %v1099
                %v1101 = vld [vmem:[%s193 + $0x2a58] sm:$0xff]
                %1102 = vst [vmem:[%s194 + $0xe28] sm:$0xff] %v1101
                %v1103 = vld [vmem:[%s193 + $0x2a60] sm:$0xff]
                %1104 = vst [vmem:[%s194 + $0xe30] sm:$0xff] %v1103
                %v1105 = vld [vmem:[%s193 + $0x2a68] sm:$0xff]
                %1106 = vst [vmem:[%s194 + $0xe38] sm:$0xff] %v1105
                %v1107 = vld [vmem:[%s193 + $0x2a70] sm:$0xff]
                %1108 = vst [vmem:[%s194 + $0xe40] sm:$0xff] %v1107
                %v1109 = vld [vmem:[%s193 + $0x2a78] sm:$0xff]
                %1110 = vst [vmem:[%s194 + $0xe48] sm:$0xff] %v1109
                %v1111 = vld [vmem:[%s193 + $0x2a80] sm:$0xff]
                %1112 = vst [vmem:[%s194 + $0xe50] sm:$0xff] %v1111
                %v1113 = vld [vmem:[%s193 + $0x2a88] sm:$0xff]
                %1114 = vst [vmem:[%s194 + $0xe58] sm:$0xff] %v1113
                %v1115 = vld [vmem:[%s193 + $0x2a90] sm:$0xff]
                %1116 = vst [vmem:[%s194 + $0xe60] sm:$0xff] %v1115
                %v1117 = vld [vmem:[%s193 + $0x2a98] sm:$0xff]
                %1118 = vst [vmem:[%s194 + $0xe68] sm:$0xff] %v1117
                %v1119 = vld [vmem:[%s193 + $0x2b50] sm:$0xff]
                %1120 = vst [vmem:[%s194 + $0xe70] sm:$0xff] %v1119
                %v1121 = vld [vmem:[%s193 + $0x2b58] sm:$0xff]
                %1122 = vst [vmem:[%s194 + $0xe78] sm:$0xff] %v1121
                %v1123 = vld [vmem:[%s193 + $0x2b60] sm:$0xff]
                %1124 = vst [vmem:[%s194 + $0xe80] sm:$0xff] %v1123
                %v1125 = vld [vmem:[%s193 + $0x2b68] sm:$0xff]
                %1126 = vst [vmem:[%s194 + $0xe88] sm:$0xff] %v1125
                %v1127 = vld [vmem:[%s193 + $0x2b70] sm:$0xff]
                %1128 = vst [vmem:[%s194 + $0xe90] sm:$0xff] %v1127
                %v1129 = vld [vmem:[%s193 + $0x2b78] sm:$0xff]
                %1130 = vst [vmem:[%s194 + $0xe98] sm:$0xff] %v1129
                %v1131 = vld [vmem:[%s193 + $0x2b80] sm:$0xff]
                %1132 = vst [vmem:[%s194 + $0xea0] sm:$0xff] %v1131
                %v1133 = vld [vmem:[%s193 + $0x2b88] sm:$0xff]
                %1134 = vst [vmem:[%s194 + $0xea8] sm:$0xff] %v1133
                %v1135 = vld [vmem:[%s193 + $0x2b90] sm:$0xff]
                %1136 = vst [vmem:[%s194 + $0xeb0] sm:$0xff] %v1135
                %v1137 = vld [vmem:[%s193 + $0x2b98] sm:$0xff]
                %1138 = vst [vmem:[%s194 + $0xeb8] sm:$0xff] %v1137
                %v1139 = vld [vmem:[%s193 + $0x2ba0] sm:$0xff]
                %1140 = vst [vmem:[%s194 + $0xec0] sm:$0xff] %v1139
                %v1141 = vld [vmem:[%s193 + $0x2c58] sm:$0xff]
                %1142 = vst [vmem:[%s194 + $0xec8] sm:$0xff] %v1141
                %v1143 = vld [vmem:[%s193 + $0x2c60] sm:$0xff]
                %1144 = vst [vmem:[%s194 + $0xed0] sm:$0xff] %v1143
                %v1145 = vld [vmem:[%s193 + $0x2c68] sm:$0xff]
                %1146 = vst [vmem:[%s194 + $0xed8] sm:$0xff] %v1145
                %v1147 = vld [vmem:[%s193 + $0x2c70] sm:$0xff]
                %1148 = vst [vmem:[%s194 + $0xee0] sm:$0xff] %v1147
                %v1149 = vld [vmem:[%s193 + $0x2c78] sm:$0xff]
                %1150 = vst [vmem:[%s194 + $0xee8] sm:$0xff] %v1149
                %v1151 = vld [vmem:[%s193 + $0x2c80] sm:$0xff]
                %1152 = vst [vmem:[%s194 + $0xef0] sm:$0xff] %v1151
                %v1153 = vld [vmem:[%s193 + $0x2c88] sm:$0xff]
                %1154 = vst [vmem:[%s194 + $0xef8] sm:$0xff] %v1153
                %v1155 = vld [vmem:[%s193 + $0x2c90] sm:$0xff]
                %1156 = vst [vmem:[%s194 + $0xf00] sm:$0xff] %v1155
                %v1157 = vld [vmem:[%s193 + $0x2c98] sm:$0xff]
                %1158 = vst [vmem:[%s194 + $0xf08] sm:$0xff] %v1157
                %v1159 = vld [vmem:[%s193 + $0x2ca0] sm:$0xff]
                %1160 = vst [vmem:[%s194 + $0xf10] sm:$0xff] %v1159
                %v1161 = vld [vmem:[%s193 + $0x2ca8] sm:$0xff]
                %1162 = vst [vmem:[%s194 + $0xf18] sm:$0xff] %v1161
                %v1163 = vld [vmem:[%s193 + $0x2d60] sm:$0xff]
                %1164 = vst [vmem:[%s194 + $0xf20] sm:$0xff] %v1163
                %v1165 = vld [vmem:[%s193 + $0x2d68] sm:$0xff]
                %1166 = vst [vmem:[%s194 + $0xf28] sm:$0xff] %v1165
                %v1167 = vld [vmem:[%s193 + $0x2d70] sm:$0xff]
                %1168 = vst [vmem:[%s194 + $0xf30] sm:$0xff] %v1167
                %v1169 = vld [vmem:[%s193 + $0x2d78] sm:$0xff]
                %1170 = vst [vmem:[%s194 + $0xf38] sm:$0xff] %v1169
                %v1171 = vld [vmem:[%s193 + $0x2d80] sm:$0xff]
                %1172 = vst [vmem:[%s194 + $0xf40] sm:$0xff] %v1171
                %v1173 = vld [vmem:[%s193 + $0x2d88] sm:$0xff]
                %1174 = vst [vmem:[%s194 + $0xf48] sm:$0xff] %v1173
                %v1175 = vld [vmem:[%s193 + $0x2d90] sm:$0xff]
                %1176 = vst [vmem:[%s194 + $0xf50] sm:$0xff] %v1175
                %v1177 = vld [vmem:[%s193 + $0x2d98] sm:$0xff]
                %1178 = vst [vmem:[%s194 + $0xf58] sm:$0xff] %v1177
                %v1179 = vld [vmem:[%s193 + $0x2da0] sm:$0xff]
                %1180 = vst [vmem:[%s194 + $0xf60] sm:$0xff] %v1179
                %v1181 = vld [vmem:[%s193 + $0x2da8] sm:$0xff]
                %1182 = vst [vmem:[%s194 + $0xf68] sm:$0xff] %v1181
                %v1183 = vld [vmem:[%s193 + $0x2db0] sm:$0xff]
                %1184 = vst [vmem:[%s194 + $0xf70] sm:$0xff] %v1183
                %v1185 = vld [vmem:[%s193 + $0x2e68] sm:$0xff]
                %1186 = vst [vmem:[%s194 + $0xf78] sm:$0xff] %v1185
                %v1187 = vld [vmem:[%s193 + $0x2e70] sm:$0xff]
                %1188 = vst [vmem:[%s194 + $0xf80] sm:$0xff] %v1187
                %v1189 = vld [vmem:[%s193 + $0x2e78] sm:$0xff]
                %1190 = vst [vmem:[%s194 + $0xf88] sm:$0xff] %v1189
                %v1191 = vld [vmem:[%s193 + $0x2e80] sm:$0xff]
                %1192 = vst [vmem:[%s194 + $0xf90] sm:$0xff] %v1191
                %v1193 = vld [vmem:[%s193 + $0x2e88] sm:$0xff]
                %1194 = vst [vmem:[%s194 + $0xf98] sm:$0xff] %v1193
                %v1195 = vld [vmem:[%s193 + $0x2e90] sm:$0xff]
                %1196 = vst [vmem:[%s194 + $0xfa0] sm:$0xff] %v1195
                %v1197 = vld [vmem:[%s193 + $0x2e98] sm:$0xff]
                %1198 = vst [vmem:[%s194 + $0xfa8] sm:$0xff] %v1197
                %v1199 = vld [vmem:[%s193 + $0x2ea0] sm:$0xff]
                %1200 = vst [vmem:[%s194 + $0xfb0] sm:$0xff] %v1199
                %v1201 = vld [vmem:[%s193 + $0x2ea8] sm:$0xff]
                %1202 = vst [vmem:[%s194 + $0xfb8] sm:$0xff] %v1201
                %v1203 = vld [vmem:[%s193 + $0x2eb0] sm:$0xff]
                %1204 = vst [vmem:[%s194 + $0xfc0] sm:$0xff] %v1203
                %v1205 = vld [vmem:[%s193 + $0x2eb8] sm:$0xff]
                %1206 = vst [vmem:[%s194 + $0xfc8] sm:$0xff] %v1205
                %v1207 = vld [vmem:[%s193 + $0x2f70] sm:$0xff]
                %1208 = vst [vmem:[%s194 + $0xfd0] sm:$0xff] %v1207
                %v1209 = vld [vmem:[%s193 + $0x2f78] sm:$0xff]
                %1210 = vst [vmem:[%s194 + $0xfd8] sm:$0xff] %v1209
                %v1211 = vld [vmem:[%s193 + $0x2f80] sm:$0xff]
                %1212 = vst [vmem:[%s194 + $0xfe0] sm:$0xff] %v1211
                %v1213 = vld [vmem:[%s193 + $0x2f88] sm:$0xff]
                %1214 = vst [vmem:[%s194 + $0xfe8] sm:$0xff] %v1213
                %v1215 = vld [vmem:[%s193 + $0x2f90] sm:$0xff]
                %1216 = vst [vmem:[%s194 + $0xff0] sm:$0xff] %v1215
                %v1217 = vld [vmem:[%s193 + $0x2f98] sm:$0xff]
                %1218 = vst [vmem:[%s194 + $0xff8] sm:$0xff] %v1217
                %v1219 = vld [vmem:[%s193 + $0x2fa0] sm:$0xff]
                %1220 = vst [vmem:[%s194 + $0x1000] sm:$0xff] %v1219
                %v1221 = vld [vmem:[%s193 + $0x2fa8] sm:$0xff]
                %1222 = vst [vmem:[%s194 + $0x1008] sm:$0xff] %v1221
                %v1223 = vld [vmem:[%s193 + $0x2fb0] sm:$0xff]
                %1224 = vst [vmem:[%s194 + $0x1010] sm:$0xff] %v1223
                %v1225 = vld [vmem:[%s193 + $0x2fb8] sm:$0xff]
                %1226 = vst [vmem:[%s194 + $0x1018] sm:$0xff] %v1225
                %v1227 = vld [vmem:[%s193 + $0x2fc0] sm:$0xff]
                %1228 = vst [vmem:[%s194 + $0x1020] sm:$0xff] %v1227
                %v1229 = vld [vmem:[%s193 + $0x3078] sm:$0xff]
                %1230 = vst [vmem:[%s194 + $0x1028] sm:$0xff] %v1229
                %v1231 = vld [vmem:[%s193 + $0x3080] sm:$0xff]
                %1232 = vst [vmem:[%s194 + $0x1030] sm:$0xff] %v1231
                %v1233 = vld [vmem:[%s193 + $0x3088] sm:$0xff]
                %1234 = vst [vmem:[%s194 + $0x1038] sm:$0xff] %v1233
                %v1235 = vld [vmem:[%s193 + $0x3090] sm:$0xff]
                %1236 = vst [vmem:[%s194 + $0x1040] sm:$0xff] %v1235
                %v1237 = vld [vmem:[%s193 + $0x3098] sm:$0xff]
                %1238 = vst [vmem:[%s194 + $0x1048] sm:$0xff] %v1237
                %v1239 = vld [vmem:[%s193 + $0x30a0] sm:$0xff]
                %1240 = vst [vmem:[%s194 + $0x1050] sm:$0xff] %v1239
                %v1241 = vld [vmem:[%s193 + $0x30a8] sm:$0xff]
                %1242 = vst [vmem:[%s194 + $0x1058] sm:$0xff] %v1241
                %v1243 = vld [vmem:[%s193 + $0x30b0] sm:$0xff]
                %1244 = vst [vmem:[%s194 + $0x1060] sm:$0xff] %v1243
                %v1245 = vld [vmem:[%s193 + $0x30b8] sm:$0xff]
                %1246 = vst [vmem:[%s194 + $0x1068] sm:$0xff] %v1245
                %v1247 = vld [vmem:[%s193 + $0x30c0] sm:$0xff]
                %1248 = vst [vmem:[%s194 + $0x1070] sm:$0xff] %v1247
                %v1249 = vld [vmem:[%s193 + $0x30c8] sm:$0xff]
                %1250 = vst [vmem:[%s194 + $0x1078] sm:$0xff] %v1249
                %v1251 = vld [vmem:[%s193 + $0x3180] sm:$0xff]
                %1252 = vst [vmem:[%s194 + $0x1080] sm:$0xff] %v1251
                %v1253 = vld [vmem:[%s193 + $0x3188] sm:$0xff]
                %1254 = vst [vmem:[%s194 + $0x1088] sm:$0xff] %v1253
                %v1255 = vld [vmem:[%s193 + $0x3190] sm:$0xff]
                %1256 = vst [vmem:[%s194 + $0x1090] sm:$0xff] %v1255
                %v1257 = vld [vmem:[%s193 + $0x3198] sm:$0xff]
                %1258 = vst [vmem:[%s194 + $0x1098] sm:$0xff] %v1257
                %v1259 = vld [vmem:[%s193 + $0x31a0] sm:$0xff]
                %1260 = vst [vmem:[%s194 + $0x10a0] sm:$0xff] %v1259
                %v1261 = vld [vmem:[%s193 + $0x31a8] sm:$0xff]
                %1262 = vst [vmem:[%s194 + $0x10a8] sm:$0xff] %v1261
                %v1263 = vld [vmem:[%s193 + $0x31b0] sm:$0xff]
                %1264 = vst [vmem:[%s194 + $0x10b0] sm:$0xff] %v1263
                %v1265 = vld [vmem:[%s193 + $0x31b8] sm:$0xff]
                %1266 = vst [vmem:[%s194 + $0x10b8] sm:$0xff] %v1265
                %v1267 = vld [vmem:[%s193 + $0x31c0] sm:$0xff]
                %1268 = vst [vmem:[%s194 + $0x10c0] sm:$0xff] %v1267
                %v1269 = vld [vmem:[%s193 + $0x31c8] sm:$0xff]
                %1270 = vst [vmem:[%s194 + $0x10c8] sm:$0xff] %v1269
                %v1271 = vld [vmem:[%s193 + $0x31d0] sm:$0xff]
                %1272 = vst [vmem:[%s194 + $0x10d0] sm:$0xff] %v1271
                %v1273 = vld [vmem:[%s193 + $0x3288] sm:$0xff]
                %1274 = vst [vmem:[%s194 + $0x10d8] sm:$0xff] %v1273
                %v1275 = vld [vmem:[%s193 + $0x3290] sm:$0xff]
                %1276 = vst [vmem:[%s194 + $0x10e0] sm:$0xff] %v1275
                %v1277 = vld [vmem:[%s193 + $0x3298] sm:$0xff]
                %1278 = vst [vmem:[%s194 + $0x10e8] sm:$0xff] %v1277
                %v1279 = vld [vmem:[%s193 + $0x32a0] sm:$0xff]
                %1280 = vst [vmem:[%s194 + $0x10f0] sm:$0xff] %v1279
                %v1281 = vld [vmem:[%s193 + $0x32a8] sm:$0xff]
                %1282 = vst [vmem:[%s194 + $0x10f8] sm:$0xff] %v1281
                %v1283 = vld [vmem:[%s193 + $0x32b0] sm:$0xff]
                %1284 = vst [vmem:[%s194 + $0x1100] sm:$0xff] %v1283
                %v1285 = vld [vmem:[%s193 + $0x32b8] sm:$0xff]
                %1286 = vst [vmem:[%s194 + $0x1108] sm:$0xff] %v1285
                %v1287 = vld [vmem:[%s193 + $0x32c0] sm:$0xff]
                %1288 = vst [vmem:[%s194 + $0x1110] sm:$0xff] %v1287
                %v1289 = vld [vmem:[%s193 + $0x32c8] sm:$0xff]
                %1290 = vst [vmem:[%s194 + $0x1118] sm:$0xff] %v1289
                %v1291 = vld [vmem:[%s193 + $0x32d0] sm:$0xff]
                %1292 = vst [vmem:[%s194 + $0x1120] sm:$0xff] %v1291
                %v1293 = vld [vmem:[%s193 + $0x32d8] sm:$0xff]
                %1294 = vst [vmem:[%s194 + $0x1128] sm:$0xff] %v1293
                %v1295 = vld [vmem:[%s193 + $0x3390] sm:$0xff]
                %1296 = vst [vmem:[%s194 + $0x1130] sm:$0xff] %v1295
                %v1297 = vld [vmem:[%s193 + $0x3398] sm:$0xff]
                %1298 = vst [vmem:[%s194 + $0x1138] sm:$0xff] %v1297
                %v1299 = vld [vmem:[%s193 + $0x33a0] sm:$0xff]
                %1300 = vst [vmem:[%s194 + $0x1140] sm:$0xff] %v1299
                %v1301 = vld [vmem:[%s193 + $0x33a8] sm:$0xff]
                %1302 = vst [vmem:[%s194 + $0x1148] sm:$0xff] %v1301
                %v1303 = vld [vmem:[%s193 + $0x33b0] sm:$0xff]
                %1304 = vst [vmem:[%s194 + $0x1150] sm:$0xff] %v1303
                %v1305 = vld [vmem:[%s193 + $0x33b8] sm:$0xff]
                %1306 = vst [vmem:[%s194 + $0x1158] sm:$0xff] %v1305
                %v1307 = vld [vmem:[%s193 + $0x33c0] sm:$0xff]
                %1308 = vst [vmem:[%s194 + $0x1160] sm:$0xff] %v1307
                %v1309 = vld [vmem:[%s193 + $0x33c8] sm:$0xff]
                %1310 = vst [vmem:[%s194 + $0x1168] sm:$0xff] %v1309
                %v1311 = vld [vmem:[%s193 + $0x33d0] sm:$0xff]
                %1312 = vst [vmem:[%s194 + $0x1170] sm:$0xff] %v1311
                %v1313 = vld [vmem:[%s193 + $0x33d8] sm:$0xff]
                %1314 = vst [vmem:[%s194 + $0x1178] sm:$0xff] %v1313
                %v1315 = vld [vmem:[%s193 + $0x33e0] sm:$0xff]
                %1316 = vst [vmem:[%s194 + $0x1180] sm:$0xff] %v1315
                %v1317 = vld [vmem:[%s193 + $0x3498] sm:$0xff]
                %1318 = vst [vmem:[%s194 + $0x1188] sm:$0xff] %v1317
                %v1319 = vld [vmem:[%s193 + $0x34a0] sm:$0xff]
                %1320 = vst [vmem:[%s194 + $0x1190] sm:$0xff] %v1319
                %v1321 = vld [vmem:[%s193 + $0x34a8] sm:$0xff]
                %1322 = vst [vmem:[%s194 + $0x1198] sm:$0xff] %v1321
                %v1323 = vld [vmem:[%s193 + $0x34b0] sm:$0xff]
                %1324 = vst [vmem:[%s194 + $0x11a0] sm:$0xff] %v1323
                %v1325 = vld [vmem:[%s193 + $0x34b8] sm:$0xff]
                %1326 = vst [vmem:[%s194 + $0x11a8] sm:$0xff] %v1325
                %v1327 = vld [vmem:[%s193 + $0x34c0] sm:$0xff]
                %1328 = vst [vmem:[%s194 + $0x11b0] sm:$0xff] %v1327
                %v1329 = vld [vmem:[%s193 + $0x34c8] sm:$0xff]
                %1330 = vst [vmem:[%s194 + $0x11b8] sm:$0xff] %v1329
                %v1331 = vld [vmem:[%s193 + $0x34d0] sm:$0xff]
                %1332 = vst [vmem:[%s194 + $0x11c0] sm:$0xff] %v1331
                %v1333 = vld [vmem:[%s193 + $0x34d8] sm:$0xff]
                %1334 = vst [vmem:[%s194 + $0x11c8] sm:$0xff] %v1333
                %v1335 = vld [vmem:[%s193 + $0x34e0] sm:$0xff]
                %1336 = vst [vmem:[%s194 + $0x11d0] sm:$0xff] %v1335
                %v1337 = vld [vmem:[%s193 + $0x34e8] sm:$0xff]
                %1338 = vst [vmem:[%s194 + $0x11d8] sm:$0xff] %v1337
                %v1339 = vld [vmem:[%s193 + $0x35a0] sm:$0xff]
                %1340 = vst [vmem:[%s194 + $0x11e0] sm:$0xff] %v1339
                %v1341 = vld [vmem:[%s193 + $0x35a8] sm:$0xff]
                %1342 = vst [vmem:[%s194 + $0x11e8] sm:$0xff] %v1341
                %v1343 = vld [vmem:[%s193 + $0x35b0] sm:$0xff]
                %1344 = vst [vmem:[%s194 + $0x11f0] sm:$0xff] %v1343
                %v1345 = vld [vmem:[%s193 + $0x35b8] sm:$0xff]
                %1346 = vst [vmem:[%s194 + $0x11f8] sm:$0xff] %v1345
                %v1347 = vld [vmem:[%s193 + $0x35c0] sm:$0xff]
                %1348 = vst [vmem:[%s194 + $0x1200] sm:$0xff] %v1347
                %v1349 = vld [vmem:[%s193 + $0x35c8] sm:$0xff]
                %1350 = vst [vmem:[%s194 + $0x1208] sm:$0xff] %v1349
                %v1351 = vld [vmem:[%s193 + $0x35d0] sm:$0xff]
                %1352 = vst [vmem:[%s194 + $0x1210] sm:$0xff] %v1351
                %v1353 = vld [vmem:[%s193 + $0x35d8] sm:$0xff]
                %1354 = vst [vmem:[%s194 + $0x1218] sm:$0xff] %v1353
                %v1355 = vld [vmem:[%s193 + $0x35e0] sm:$0xff]
                %1356 = vst [vmem:[%s194 + $0x1220] sm:$0xff] %v1355
                %v1357 = vld [vmem:[%s193 + $0x35e8] sm:$0xff]
                %1358 = vst [vmem:[%s194 + $0x1228] sm:$0xff] %v1357
                %v1359 = vld [vmem:[%s193 + $0x35f0] sm:$0xff]
                %1360 = vst [vmem:[%s194 + $0x1230] sm:$0xff] %v1359
                %v1361 = vld [vmem:[%s193 + $0x36a8] sm:$0xff]
                %1362 = vst [vmem:[%s194 + $0x1238] sm:$0xff] %v1361
                %v1363 = vld [vmem:[%s193 + $0x36b0] sm:$0xff]
                %1364 = vst [vmem:[%s194 + $0x1240] sm:$0xff] %v1363
                %v1365 = vld [vmem:[%s193 + $0x36b8] sm:$0xff]
                %1366 = vst [vmem:[%s194 + $0x1248] sm:$0xff] %v1365
                %v1367 = vld [vmem:[%s193 + $0x36c0] sm:$0xff]
                %1368 = vst [vmem:[%s194 + $0x1250] sm:$0xff] %v1367
                %v1369 = vld [vmem:[%s193 + $0x36c8] sm:$0xff]
                %1370 = vst [vmem:[%s194 + $0x1258] sm:$0xff] %v1369
                %v1371 = vld [vmem:[%s193 + $0x36d0] sm:$0xff]
                %1372 = vst [vmem:[%s194 + $0x1260] sm:$0xff] %v1371
                %v1373 = vld [vmem:[%s193 + $0x36d8] sm:$0xff]
                %1374 = vst [vmem:[%s194 + $0x1268] sm:$0xff] %v1373
                %v1375 = vld [vmem:[%s193 + $0x36e0] sm:$0xff]
                %1376 = vst [vmem:[%s194 + $0x1270] sm:$0xff] %v1375
                %v1377 = vld [vmem:[%s193 + $0x36e8] sm:$0xff]
                %1378 = vst [vmem:[%s194 + $0x1278] sm:$0xff] %v1377
                %v1379 = vld [vmem:[%s193 + $0x36f0] sm:$0xff]
                %1380 = vst [vmem:[%s194 + $0x1280] sm:$0xff] %v1379
                %v1381 = vld [vmem:[%s193 + $0x36f8] sm:$0xff]
                %1382 = vst [vmem:[%s194 + $0x1288] sm:$0xff] %v1381
                %v1383 = vld [vmem:[%s193 + $0x37b0] sm:$0xff]
                %1384 = vst [vmem:[%s194 + $0x1290] sm:$0xff] %v1383
                %v1385 = vld [vmem:[%s193 + $0x37b8] sm:$0xff]
                %1386 = vst [vmem:[%s194 + $0x1298] sm:$0xff] %v1385
                %v1387 = vld [vmem:[%s193 + $0x37c0] sm:$0xff]
                %1388 = vst [vmem:[%s194 + $0x12a0] sm:$0xff] %v1387
                %v1389 = vld [vmem:[%s193 + $0x37c8] sm:$0xff]
                %1390 = vst [vmem:[%s194 + $0x12a8] sm:$0xff] %v1389
                %v1391 = vld [vmem:[%s193 + $0x37d0] sm:$0xff]
                %1392 = vst [vmem:[%s194 + $0x12b0] sm:$0xff] %v1391
                %v1393 = vld [vmem:[%s193 + $0x37d8] sm:$0xff]
                %1394 = vst [vmem:[%s194 + $0x12b8] sm:$0xff] %v1393
                %v1395 = vld [vmem:[%s193 + $0x37e0] sm:$0xff]
                %1396 = vst [vmem:[%s194 + $0x12c0] sm:$0xff] %v1395
                %v1397 = vld [vmem:[%s193 + $0x37e8] sm:$0xff]
                %1398 = vst [vmem:[%s194 + $0x12c8] sm:$0xff] %v1397
                %v1399 = vld [vmem:[%s193 + $0x37f0] sm:$0xff]
                %1400 = vst [vmem:[%s194 + $0x12d0] sm:$0xff] %v1399
                %v1401 = vld [vmem:[%s193 + $0x37f8] sm:$0xff]
                %1402 = vst [vmem:[%s194 + $0x12d8] sm:$0xff] %v1401
                %v1403 = vld [vmem:[%s193 + $0x3800] sm:$0xff]
                %1404 = vst [vmem:[%s194 + $0x12e0] sm:$0xff] %v1403
                %v1405 = vld [vmem:[%s193 + $0x38b8] sm:$0xff]
                %1406 = vst [vmem:[%s194 + $0x12e8] sm:$0xff] %v1405
                %v1407 = vld [vmem:[%s193 + $0x38c0] sm:$0xff]
                %1408 = vst [vmem:[%s194 + $0x12f0] sm:$0xff] %v1407
                %v1409 = vld [vmem:[%s193 + $0x38c8] sm:$0xff]
                %1410 = vst [vmem:[%s194 + $0x12f8] sm:$0xff] %v1409
                %v1411 = vld [vmem:[%s193 + $0x38d0] sm:$0xff]
                %1412 = vst [vmem:[%s194 + $0x1300] sm:$0xff] %v1411
                %v1413 = vld [vmem:[%s193 + $0x38d8] sm:$0xff]
                %1414 = vst [vmem:[%s194 + $0x1308] sm:$0xff] %v1413
                %v1415 = vld [vmem:[%s193 + $0x38e0] sm:$0xff]
                %1416 = vst [vmem:[%s194 + $0x1310] sm:$0xff] %v1415
                %v1417 = vld [vmem:[%s193 + $0x38e8] sm:$0xff]
                %1418 = vst [vmem:[%s194 + $0x1318] sm:$0xff] %v1417
                %v1419 = vld [vmem:[%s193 + $0x38f0] sm:$0xff]
                %1420 = vst [vmem:[%s194 + $0x1320] sm:$0xff] %v1419
                %v1421 = vld [vmem:[%s193 + $0x38f8] sm:$0xff]
                %1422 = vst [vmem:[%s194 + $0x1328] sm:$0xff] %v1421
                %v1423 = vld [vmem:[%s193 + $0x3900] sm:$0xff]
                %1424 = vst [vmem:[%s194 + $0x1330] sm:$0xff] %v1423
                %v1425 = vld [vmem:[%s193 + $0x3908] sm:$0xff]
                %1426 = vst [vmem:[%s194 + $0x1338] sm:$0xff] %v1425
                %v1427 = vld [vmem:[%s193 + $0x39c0] sm:$0xff]
                %1428 = vst [vmem:[%s194 + $0x1340] sm:$0xff] %v1427
                %v1429 = vld [vmem:[%s193 + $0x39c8] sm:$0xff]
                %1430 = vst [vmem:[%s194 + $0x1348] sm:$0xff] %v1429
                %v1431 = vld [vmem:[%s193 + $0x39d0] sm:$0xff]
                %1432 = vst [vmem:[%s194 + $0x1350] sm:$0xff] %v1431
                %v1433 = vld [vmem:[%s193 + $0x39d8] sm:$0xff]
                %1434 = vst [vmem:[%s194 + $0x1358] sm:$0xff] %v1433
                %v1435 = vld [vmem:[%s193 + $0x39e0] sm:$0xff]
                %1436 = vst [vmem:[%s194 + $0x1360] sm:$0xff] %v1435
                %v1437 = vld [vmem:[%s193 + $0x39e8] sm:$0xff]
                %1438 = vst [vmem:[%s194 + $0x1368] sm:$0xff] %v1437
                %v1439 = vld [vmem:[%s193 + $0x39f0] sm:$0xff]
                %1440 = vst [vmem:[%s194 + $0x1370] sm:$0xff] %v1439
                %v1441 = vld [vmem:[%s193 + $0x39f8] sm:$0xff]
                %1442 = vst [vmem:[%s194 + $0x1378] sm:$0xff] %v1441
                %v1443 = vld [vmem:[%s193 + $0x3a00] sm:$0xff]
                %1444 = vst [vmem:[%s194 + $0x1380] sm:$0xff] %v1443
                %v1445 = vld [vmem:[%s193 + $0x3a08] sm:$0xff]
                %1446 = vst [vmem:[%s194 + $0x1388] sm:$0xff] %v1445
                %v1447 = vld [vmem:[%s193 + $0x3a10] sm:$0xff]
                %1448 = vst [vmem:[%s194 + $0x1390] sm:$0xff] %v1447
                %v1449 = vld [vmem:[%s193 + $0x3ac8] sm:$0xff]
                %1450 = vst [vmem:[%s194 + $0x1398] sm:$0xff] %v1449
                %v1451 = vld [vmem:[%s193 + $0x3ad0] sm:$0xff]
                %1452 = vst [vmem:[%s194 + $0x13a0] sm:$0xff] %v1451
                %v1453 = vld [vmem:[%s193 + $0x3ad8] sm:$0xff]
                %1454 = vst [vmem:[%s194 + $0x13a8] sm:$0xff] %v1453
                %v1455 = vld [vmem:[%s193 + $0x3ae0] sm:$0xff]
                %1456 = vst [vmem:[%s194 + $0x13b0] sm:$0xff] %v1455
                %v1457 = vld [vmem:[%s193 + $0x3ae8] sm:$0xff]
                %1458 = vst [vmem:[%s194 + $0x13b8] sm:$0xff] %v1457
                %v1459 = vld [vmem:[%s193 + $0x3af0] sm:$0xff]
                %1460 = vst [vmem:[%s194 + $0x13c0] sm:$0xff] %v1459
                %v1461 = vld [vmem:[%s193 + $0x3af8] sm:$0xff]
                %1462 = vst [vmem:[%s194 + $0x13c8] sm:$0xff] %v1461
                %v1463 = vld [vmem:[%s193 + $0x3b00] sm:$0xff]
                %1464 = vst [vmem:[%s194 + $0x13d0] sm:$0xff] %v1463
                %v1465 = vld [vmem:[%s193 + $0x3b08] sm:$0xff]
                %1466 = vst [vmem:[%s194 + $0x13d8] sm:$0xff] %v1465
                %v1467 = vld [vmem:[%s193 + $0x3b10] sm:$0xff]
                %1468 = vst [vmem:[%s194 + $0x13e0] sm:$0xff] %v1467
                %v1469 = vld [vmem:[%s193 + $0x3b18] sm:$0xff]
                %1470 = vst [vmem:[%s194 + $0x13e8] sm:$0xff] %v1469
                %v1471 = vld [vmem:[%s193 + $0x3bd0] sm:$0xff]
                %1472 = vst [vmem:[%s194 + $0x13f0] sm:$0xff] %v1471
                %v1473 = vld [vmem:[%s193 + $0x3bd8] sm:$0xff]
                %1474 = vst [vmem:[%s194 + $0x13f8] sm:$0xff] %v1473
                %v1475 = vld [vmem:[%s193 + $0x3be0] sm:$0xff]
                %1476 = vst [vmem:[%s194 + $0x1400] sm:$0xff] %v1475
                %v1477 = vld [vmem:[%s193 + $0x3be8] sm:$0xff]
                %1478 = vst [vmem:[%s194 + $0x1408] sm:$0xff] %v1477
                %v1479 = vld [vmem:[%s193 + $0x3bf0] sm:$0xff]
                %1480 = vst [vmem:[%s194 + $0x1410] sm:$0xff] %v1479
                %v1481 = vld [vmem:[%s193 + $0x3bf8] sm:$0xff]
                %1482 = vst [vmem:[%s194 + $0x1418] sm:$0xff] %v1481
                %v1483 = vld [vmem:[%s193 + $0x3c00] sm:$0xff]
                %1484 = vst [vmem:[%s194 + $0x1420] sm:$0xff] %v1483
                %v1485 = vld [vmem:[%s193 + $0x3c08] sm:$0xff]
                %1486 = vst [vmem:[%s194 + $0x1428] sm:$0xff] %v1485
                %v1487 = vld [vmem:[%s193 + $0x3c10] sm:$0xff]
                %1488 = vst [vmem:[%s194 + $0x1430] sm:$0xff] %v1487
                %v1489 = vld [vmem:[%s193 + $0x3c18] sm:$0xff]
                %1490 = vst [vmem:[%s194 + $0x1438] sm:$0xff] %v1489
                %v1491 = vld [vmem:[%s193 + $0x3c20] sm:$0xff]
                %1492 = vst [vmem:[%s194 + $0x1440] sm:$0xff] %v1491
                %v1493 = vld [vmem:[%s193 + $0x3cd8] sm:$0xff]
                %1494 = vst [vmem:[%s194 + $0x1448] sm:$0xff] %v1493
                %v1495 = vld [vmem:[%s193 + $0x3ce0] sm:$0xff]
                %1496 = vst [vmem:[%s194 + $0x1450] sm:$0xff] %v1495
                %v1497 = vld [vmem:[%s193 + $0x3ce8] sm:$0xff]
                %1498 = vst [vmem:[%s194 + $0x1458] sm:$0xff] %v1497
                %v1499 = vld [vmem:[%s193 + $0x3cf0] sm:$0xff]
                %1500 = vst [vmem:[%s194 + $0x1460] sm:$0xff] %v1499
                %v1501 = vld [vmem:[%s193 + $0x3cf8] sm:$0xff]
                %1502 = vst [vmem:[%s194 + $0x1468] sm:$0xff] %v1501
                %v1503 = vld [vmem:[%s193 + $0x3d00] sm:$0xff]
                %1504 = vst [vmem:[%s194 + $0x1470] sm:$0xff] %v1503
                %v1505 = vld [vmem:[%s193 + $0x3d08] sm:$0xff]
                %1506 = vst [vmem:[%s194 + $0x1478] sm:$0xff] %v1505
                %v1507 = vld [vmem:[%s193 + $0x3d10] sm:$0xff]
                %1508 = vst [vmem:[%s194 + $0x1480] sm:$0xff] %v1507
                %v1509 = vld [vmem:[%s193 + $0x3d18] sm:$0xff]
                %1510 = vst [vmem:[%s194 + $0x1488] sm:$0xff] %v1509
                %v1511 = vld [vmem:[%s193 + $0x3d20] sm:$0xff]
                %1512 = vst [vmem:[%s194 + $0x1490] sm:$0xff] %v1511
                %v1513 = vld [vmem:[%s193 + $0x3d28] sm:$0xff]
                %1514 = vst [vmem:[%s194 + $0x1498] sm:$0xff] %v1513
                %v1515 = vld [vmem:[%s193 + $0x3de0] sm:$0xff]
                %1516 = vst [vmem:[%s194 + $0x14a0] sm:$0xff] %v1515
                %v1517 = vld [vmem:[%s193 + $0x3de8] sm:$0xff]
                %1518 = vst [vmem:[%s194 + $0x14a8] sm:$0xff] %v1517
                %v1519 = vld [vmem:[%s193 + $0x3df0] sm:$0xff]
                %1520 = vst [vmem:[%s194 + $0x14b0] sm:$0xff] %v1519
                %v1521 = vld [vmem:[%s193 + $0x3df8] sm:$0xff]
                %1522 = vst [vmem:[%s194 + $0x14b8] sm:$0xff] %v1521
                %v1523 = vld [vmem:[%s193 + $0x3e00] sm:$0xff]
                %1524 = vst [vmem:[%s194 + $0x14c0] sm:$0xff] %v1523
                %v1525 = vld [vmem:[%s193 + $0x3e08] sm:$0xff]
                %1526 = vst [vmem:[%s194 + $0x14c8] sm:$0xff] %v1525
                %v1527 = vld [vmem:[%s193 + $0x3e10] sm:$0xff]
                %1528 = vst [vmem:[%s194 + $0x14d0] sm:$0xff] %v1527
                %v1529 = vld [vmem:[%s193 + $0x3e18] sm:$0xff]
                %1530 = vst [vmem:[%s194 + $0x14d8] sm:$0xff] %v1529
                %v1531 = vld [vmem:[%s193 + $0x3e20] sm:$0xff]
                %1532 = vst [vmem:[%s194 + $0x14e0] sm:$0xff] %v1531
                %v1533 = vld [vmem:[%s193 + $0x3e28] sm:$0xff]
                %1534 = vst [vmem:[%s194 + $0x14e8] sm:$0xff] %v1533
                %v1535 = vld [vmem:[%s193 + $0x3e30] sm:$0xff]
                %1536 = vst [vmem:[%s194 + $0x14f0] sm:$0xff] %v1535
                %v1537 = vld [vmem:[%s193 + $0x3ee8] sm:$0xff]
                %1538 = vst [vmem:[%s194 + $0x14f8] sm:$0xff] %v1537
                %v1539 = vld [vmem:[%s193 + $0x3ef0] sm:$0xff]
                %1540 = vst [vmem:[%s194 + $0x1500] sm:$0xff] %v1539
                %v1541 = vld [vmem:[%s193 + $0x3ef8] sm:$0xff]
                %1542 = vst [vmem:[%s194 + $0x1508] sm:$0xff] %v1541
                %v1543 = vld [vmem:[%s193 + $0x3f00] sm:$0xff]
                %1544 = vst [vmem:[%s194 + $0x1510] sm:$0xff] %v1543
                %v1545 = vld [vmem:[%s193 + $0x3f08] sm:$0xff]
                %1546 = vst [vmem:[%s194 + $0x1518] sm:$0xff] %v1545
                %v1547 = vld [vmem:[%s193 + $0x3f10] sm:$0xff]
                %1548 = vst [vmem:[%s194 + $0x1520] sm:$0xff] %v1547
                %v1549 = vld [vmem:[%s193 + $0x3f18] sm:$0xff]
                %1550 = vst [vmem:[%s194 + $0x1528] sm:$0xff] %v1549
                %v1551 = vld [vmem:[%s193 + $0x3f20] sm:$0xff]
                %1552 = vst [vmem:[%s194 + $0x1530] sm:$0xff] %v1551
                %v1553 = vld [vmem:[%s193 + $0x3f28] sm:$0xff]
                %1554 = vst [vmem:[%s194 + $0x1538] sm:$0xff] %v1553
                %v1555 = vld [vmem:[%s193 + $0x3f30] sm:$0xff]
                %1556 = vst [vmem:[%s194 + $0x1540] sm:$0xff] %v1555
                %v1557 = vld [vmem:[%s193 + $0x3f38] sm:$0xff]
                %1558 = vst [vmem:[%s194 + $0x1548] sm:$0xff] %v1557
                %v1559 = vld [vmem:[%s193 + $0x3ff0] sm:$0xff]
                %1560 = vst [vmem:[%s194 + $0x1550] sm:$0xff] %v1559
                %v1561 = vld [vmem:[%s193 + $0x3ff8] sm:$0xff]
                %1562 = vst [vmem:[%s194 + $0x1558] sm:$0xff] %v1561
                %v1563 = vld [vmem:[%s193 + $0x4000] sm:$0xff]
                %1564 = vst [vmem:[%s194 + $0x1560] sm:$0xff] %v1563
                %v1565 = vld [vmem:[%s193 + $0x4008] sm:$0xff]
                %1566 = vst [vmem:[%s194 + $0x1568] sm:$0xff] %v1565
                %v1567 = vld [vmem:[%s193 + $0x4010] sm:$0xff]
                %1568 = vst [vmem:[%s194 + $0x1570] sm:$0xff] %v1567
                %v1569 = vld [vmem:[%s193 + $0x4018] sm:$0xff]
                %1570 = vst [vmem:[%s194 + $0x1578] sm:$0xff] %v1569
                %v1571 = vld [vmem:[%s193 + $0x4020] sm:$0xff]
                %1572 = vst [vmem:[%s194 + $0x1580] sm:$0xff] %v1571
                %v1573 = vld [vmem:[%s193 + $0x4028] sm:$0xff]
                %1574 = vst [vmem:[%s194 + $0x1588] sm:$0xff] %v1573
                %v1575 = vld [vmem:[%s193 + $0x4030] sm:$0xff]
                %1576 = vst [vmem:[%s194 + $0x1590] sm:$0xff] %v1575
                %v1577 = vld [vmem:[%s193 + $0x4038] sm:$0xff]
                %1578 = vst [vmem:[%s194 + $0x1598] sm:$0xff] %v1577
                %v1579 = vld [vmem:[%s193 + $0x4040] sm:$0xff]
                %1580 = vst [vmem:[%s194 + $0x15a0] sm:$0xff] %v1579
                %v1581 = vld [vmem:[%s193 + $0x40f8] sm:$0xff]
                %1582 = vst [vmem:[%s194 + $0x15a8] sm:$0xff] %v1581
                %v1583 = vld [vmem:[%s193 + $0x4100] sm:$0xff]
                %1584 = vst [vmem:[%s194 + $0x15b0] sm:$0xff] %v1583
                %v1585 = vld [vmem:[%s193 + $0x4108] sm:$0xff]
                %1586 = vst [vmem:[%s194 + $0x15b8] sm:$0xff] %v1585
                %v1587 = vld [vmem:[%s193 + $0x4110] sm:$0xff]
                %1588 = vst [vmem:[%s194 + $0x15c0] sm:$0xff] %v1587
                %v1589 = vld [vmem:[%s193 + $0x4118] sm:$0xff]
                %1590 = vst [vmem:[%s194 + $0x15c8] sm:$0xff] %v1589
                %v1591 = vld [vmem:[%s193 + $0x4120] sm:$0xff]
                %1592 = vst [vmem:[%s194 + $0x15d0] sm:$0xff] %v1591
                %v1593 = vld [vmem:[%s193 + $0x4128] sm:$0xff]
                %1594 = vst [vmem:[%s194 + $0x15d8] sm:$0xff] %v1593
                %v1595 = vld [vmem:[%s193 + $0x4130] sm:$0xff]
                %1596 = vst [vmem:[%s194 + $0x15e0] sm:$0xff] %v1595
                %v1597 = vld [vmem:[%s193 + $0x4138] sm:$0xff]
                %1598 = vst [vmem:[%s194 + $0x15e8] sm:$0xff] %v1597
                %v1599 = vld [vmem:[%s193 + $0x4140] sm:$0xff]
                %1600 = vst [vmem:[%s194 + $0x15f0] sm:$0xff] %v1599
                %v1601 = vld [vmem:[%s193 + $0x4148] sm:$0xff]
                %1602 = vst [vmem:[%s194 + $0x15f8] sm:$0xff] %v1601
              $region37: #{model_regression_forward.7} parent=31 // loop_footer
                %s192 = sadd.s32 1, %s188
              $region38: #{model_regression_forward.7} parent=31 // loop_footer_branch
                %187 = sbr.rel target = $region34
              $region39: #{model_regression_forward.7} parent=31 // loop_exit
                _
            $region32: #{model_regression_forward.7} parent=27 // pred_fallthru
              _
            // Predicated region
            $region40: #{model_regression_forward.7} parent=27 // pred_check
              _
            $region41: #{model_regression_forward.7} parent=27 // pred_check_branch
              %1604 = sbr.rel target = $region43
            $region42: #{model_regression_forward.7} parent=27 // pred_region
              _
            $region43: #{model_regression_forward.7} parent=27 // pred_fallthru
              _
          $region28: #{model_regression_forward.7} parent=23 // pred_fallthru
            _
          %1605 = vnop
        $region24: #{model_regression_forward.7} parent=19 // pred_fallthru
          _
        // Predicated region
        $region44: #{model_regression_forward.7} parent=19 // pred_check
          %p1606 = pneg %p104
        $region45: #{model_regression_forward.7} parent=19 // pred_check_branch
          %1608 = sbr.rel (%p1606) target = $region47
        $region46: #{model_regression_forward.7} parent=19 // pred_region
          %s1609 = smul.u32 11, %s17
          %p1610 = scmp.lt.s32.totalorder %s1609, 32
          %s1611 = scalar_select %p1610, %s1609, 32
          %s1612 = scalar_lea.vmem %s2, %s1611
          %s1613 = smul.u32 11, %s17
        $region47: #{model_regression_forward.7} parent=19 // pred_fallthru
          _
      $region20: #{model_regression_forward.7} parent=5 // pred_fallthru
        _
      %p1614 = scmp.le.s32.totalorder 1, %s9
      %p1615 = scmp.lt.s32.totalorder %s9, 4
      %p1616 = pnand %p1614, %p1615
      %p1617 = pneg %p1616
      // Predicated region
      $region48: #{model_regression_forward.7} parent=5 // pred_check
        _
      $region49: #{model_regression_forward.7} parent=5 // pred_check_branch
        %1619 = sbr.rel (%p1616) target = $region51
      $region50: #{model_regression_forward.7} parent=5 // pred_region
        %s1620 = ssub.s32 %s9, 1
        %s1621 = sand.u32 %s71, 1
        %s1622 = sand.u32 %s71, 1
        %s1623 = smul.addr %s1622, 5632
        %s1624 = scalar_lea.vmem [#allocation2], %s1623
        // Predicated region
        $region52: #{model_regression_forward.7} parent=50 // pred_check
          %p1625 = pneg %p84
        $region53: #{model_regression_forward.7} parent=50 // pred_check_branch
          %1627 = sbr.rel (%p1625) target = $region55
        $region54: #{model_regression_forward.7} parent=50 // pred_region
          _
        $region55: #{model_regression_forward.7} parent=50 // pred_fallthru
          _
        %s1628 = smul.u32 4, %s21
        %p1629 = scmp.lt.s32.totalorder %s19, 0
        %s1630 = scalar_select %p1629, %s19, 0
        %p1631 = scmp.lt.s32.totalorder %s1628, 3
        %s1632 = scalar_select %p1631, %s1628, 3
        %s1633 = smul.addr %s1630, 4
        %s1634 = sadd.s32 %s1632, %s1633
        %s1635 = smul.addr %s1634, 8
        %s1636 = scalar_lea.vmem %s0, %s1635
        %p1637 = pneg %p56
        %p1638 = pneg %p53
        %s1639 = sand.u32 %s71, 1
        %s1640 = sand.u32 %s71, 1
        %s1641 = smul.addr %s1640, 5632
        %s1642 = scalar_lea.vmem [#allocation2], %s1641
        %p1643 = pneg %p84
        %p1644 = pneg %p81
        %s1645 = smul.u32 11, %s20
        %p1646 = scmp.lt.s32.totalorder %s1645, 32
        %s1647 = scalar_select %p1646, %s1645, 32
        %s1648 = scalar_lea.vmem %s2, %s1647
        %p1649 = pneg %p110
        %p1650 = pneg %p107
        %p1651 = pneg %p138
        %p1652 = pneg %p135
        %s1653 = smul.u32 11, %s20
        %p1654 = scmp.lt.s32.totalorder %s19, 0
        %s1655 = scalar_select %p1654, %s19, 0
        %p1656 = scmp.lt.s32.totalorder %s1653, 32
        %s1657 = scalar_select %p1656, %s1653, 32
        %s1658 = smul.addr %s1655, 33
        %s1659 = sadd.s32 %s1657, %s1658
        %s1660 = smul.addr %s1659, 8
        %s1661 = scalar_lea.vmem %s3, %s1660
        %s1662 = smul.u32 4, %s21
        %p1663 = scmp.lt.s32.totalorder %s19, 0
        %s1664 = scalar_select %p1663, %s19, 0
        %p1665 = scmp.lt.s32.totalorder %s1662, 3
        %s1666 = scalar_select %p1665, %s1662, 3
        %s1667 = smul.addr %s1664, 4
        %s1668 = sadd.s32 %s1666, %s1667
        %s1669 = smul.addr %s1668, 8
        %s1670 = scalar_lea.vmem %s0, %s1669
        %s1671 = smul.u32 4, %s21
        %s1672 = smul.u32 64, %s21
        %s1673 = smul.u32 11, %s20
        %s1674 = smul.u32 11, %s20
        %p1675 = scmp.lt.s32.totalorder %s1674, 32
        %s1676 = scalar_select %p1675, %s1674, 32
        %s1677 = scalar_lea.vmem %s2, %s1676
        %s1678 = smul.u32 11, %s20
        %s1679 = smul.u32 11, %s20
        %p1680 = scmp.lt.s32.totalorder %s19, 0
        %s1681 = scalar_select %p1680, %s19, 0
        %p1682 = scmp.lt.s32.totalorder %s1679, 32
        %s1683 = scalar_select %p1682, %s1679, 32
        %s1684 = smul.addr %s1681, 33
        %s1685 = sadd.s32 %s1683, %s1684
        %s1686 = smul.addr %s1685, 8
        %s1687 = scalar_lea.vmem %s3, %s1686
        %s1688 = smul.u32 11, %s20
        %p1689 = scmp.eq.s32.totalorder %s21, 0
        // Predicated region
        $region56: #{model_regression_forward.7} parent=50 // pred_check
          %p1690 = pneg %p1689
        $region57: #{model_regression_forward.7} parent=50 // pred_check_branch
          %1692 = sbr.rel (%p1690) target = $region59
        $region58: #{model_regression_forward.7} parent=50 // pred_region
          %1693 = vst [vmem:[%s1687] sm:$0xff] 0.0
          %1694 = vst [vmem:[%s1687 + $0x8] sm:$0xff] 0.0
          %1695 = vst [vmem:[%s1687 + $0x10] sm:$0xff] 0.0
          %1696 = vst [vmem:[%s1687 + $0x18] sm:$0xff] 0.0
          %1697 = vst [vmem:[%s1687 + $0x20] sm:$0xff] 0.0
          %1698 = vst [vmem:[%s1687 + $0x28] sm:$0xff] 0.0
          %1699 = vst [vmem:[%s1687 + $0x30] sm:$0xff] 0.0
          %1700 = vst [vmem:[%s1687 + $0x38] sm:$0xff] 0.0
          %1701 = vst [vmem:[%s1687 + $0x40] sm:$0xff] 0.0
          %1702 = vst [vmem:[%s1687 + $0x48] sm:$0xff] 0.0
          %1703 = vst [vmem:[%s1687 + $0x50] sm:$0xff] 0.0
        $region59: #{model_regression_forward.7} parent=50 // pred_fallthru
          _
        %v1704 = vld [vmem:[%s1687] sm:$0xff]
        %v1705 = vld [vmem:[%s1687 + $0x8] sm:$0xff]
        %v1706 = vld [vmem:[%s1687 + $0x10] sm:$0xff]
        %v1707 = vld [vmem:[%s1687 + $0x18] sm:$0xff]
        %v1708 = vld [vmem:[%s1687 + $0x20] sm:$0xff]
        %v1709 = vld [vmem:[%s1687 + $0x28] sm:$0xff]
        %v1710 = vld [vmem:[%s1687 + $0x30] sm:$0xff]
        %v1711 = vld [vmem:[%s1687 + $0x38] sm:$0xff]
        %v1712 = vld [vmem:[%s1687 + $0x40] sm:$0xff]
        %v1713 = vld [vmem:[%s1687 + $0x48] sm:$0xff]
        %v1714 = vld [vmem:[%s1687 + $0x50] sm:$0xff]
        %v1715 = vld [vmem:[%s1670] sm:$0xff]
        %v1716 = vld [vmem:[%s1670 + $0x8] sm:$0xff]
        %v1717 = vld [vmem:[%s1670 + $0x10] sm:$0xff]
        %v1718 = vld [vmem:[%s1670 + $0x18] sm:$0xff]
        %v1719 = vld [vmem:[%s1624] sm:$0xff]
        %v1720 = vld [vmem:[%s1624 + $0x8] sm:$0xff]
        %v1721 = vld [vmem:[%s1624 + $0x10] sm:$0xff]
        %v1722 = vld [vmem:[%s1624 + $0x18] sm:$0xff]
        %v1723 = vld [vmem:[%s1624 + $0x20] sm:$0xff]
        %v1724 = vld [vmem:[%s1624 + $0x28] sm:$0xff]
        %v1725 = vld [vmem:[%s1624 + $0x30] sm:$0xff]
        %v1726 = vld [vmem:[%s1624 + $0x38] sm:$0xff]
        %v1727 = vld [vmem:[%s1624 + $0x40] sm:$0xff]
        %v1728 = vld [vmem:[%s1624 + $0x48] sm:$0xff]
        %v1729 = vld [vmem:[%s1624 + $0x50] sm:$0xff]
        %v1730 = vld [vmem:[%s1624 + $0x58] sm:$0xff]
        %v1731 = vld [vmem:[%s1624 + $0x60] sm:$0xff]
        %v1732 = vld [vmem:[%s1624 + $0x68] sm:$0xff]
        %v1733 = vld [vmem:[%s1624 + $0x70] sm:$0xff]
        %v1734 = vld [vmem:[%s1624 + $0x78] sm:$0xff]
        %v1735 = vld [vmem:[%s1624 + $0x80] sm:$0xff]
        %v1736 = vld [vmem:[%s1624 + $0x88] sm:$0xff]
        %v1737 = vld [vmem:[%s1624 + $0x90] sm:$0xff]
        %v1738 = vld [vmem:[%s1624 + $0x98] sm:$0xff]
        %v1739 = vld [vmem:[%s1624 + $0xa0] sm:$0xff]
        %v1740 = vld [vmem:[%s1624 + $0xa8] sm:$0xff]
        %v1741 = vld [vmem:[%s1624 + $0xb0] sm:$0xff]
        %v1742 = vld [vmem:[%s1624 + $0xb8] sm:$0xff]
        %v1743 = vld [vmem:[%s1624 + $0xc0] sm:$0xff]
        %v1744 = vld [vmem:[%s1624 + $0xc8] sm:$0xff]
        %v1745 = vld [vmem:[%s1624 + $0xd0] sm:$0xff]
        %v1746 = vld [vmem:[%s1624 + $0xd8] sm:$0xff]
        %v1747 = vld [vmem:[%s1624 + $0xe0] sm:$0xff]
        %v1748 = vld [vmem:[%s1624 + $0xe8] sm:$0xff]
        %v1749 = vld [vmem:[%s1624 + $0xf0] sm:$0xff]
        %v1750 = vld [vmem:[%s1624 + $0xf8] sm:$0xff]
        %v1751 = vld [vmem:[%s1624 + $0x100] sm:$0xff]
        %v1752 = vld [vmem:[%s1624 + $0x108] sm:$0xff]
        %v1753 = vld [vmem:[%s1624 + $0x110] sm:$0xff]
        %v1754 = vld [vmem:[%s1624 + $0x118] sm:$0xff]
        %v1755 = vld [vmem:[%s1624 + $0x120] sm:$0xff]
        %v1756 = vld [vmem:[%s1624 + $0x128] sm:$0xff]
        %v1757 = vld [vmem:[%s1624 + $0x130] sm:$0xff]
        %v1758 = vld [vmem:[%s1624 + $0x138] sm:$0xff]
        %v1759 = vld [vmem:[%s1624 + $0x140] sm:$0xff]
        %v1760 = vld [vmem:[%s1624 + $0x148] sm:$0xff]
        %v1761 = vld [vmem:[%s1624 + $0x150] sm:$0xff]
        %v1762 = vld [vmem:[%s1624 + $0x158] sm:$0xff]
        %v1763 = vld [vmem:[%s1624 + $0x160] sm:$0xff]
        %v1764 = vld [vmem:[%s1624 + $0x168] sm:$0xff]
        %v1765 = vld [vmem:[%s1624 + $0x170] sm:$0xff]
        %v1766 = vld [vmem:[%s1624 + $0x178] sm:$0xff]
        %v1767 = vld [vmem:[%s1624 + $0x180] sm:$0xff]
        %v1768 = vld [vmem:[%s1624 + $0x188] sm:$0xff]
        %v1769 = vld [vmem:[%s1624 + $0x190] sm:$0xff]
        %v1770 = vld [vmem:[%s1624 + $0x198] sm:$0xff]
        %v1771 = vld [vmem:[%s1624 + $0x1a0] sm:$0xff]
        %v1772 = vld [vmem:[%s1624 + $0x1a8] sm:$0xff]
        %v1773 = vld [vmem:[%s1624 + $0x1b0] sm:$0xff]
        %v1774 = vld [vmem:[%s1624 + $0x1b8] sm:$0xff]
        %v1775 = vld [vmem:[%s1624 + $0x1c0] sm:$0xff]
        %v1776 = vld [vmem:[%s1624 + $0x1c8] sm:$0xff]
        %v1777 = vld [vmem:[%s1624 + $0x1d0] sm:$0xff]
        %v1778 = vld [vmem:[%s1624 + $0x1d8] sm:$0xff]
        %v1779 = vld [vmem:[%s1624 + $0x1e0] sm:$0xff]
        %v1780 = vld [vmem:[%s1624 + $0x1e8] sm:$0xff]
        %v1781 = vld [vmem:[%s1624 + $0x1f0] sm:$0xff]
        %v1782 = vld [vmem:[%s1624 + $0x1f8] sm:$0xff]
        %v1783 = vld [vmem:[%s1624 + $0x200] sm:$0xff]
        %v1784 = vld [vmem:[%s1624 + $0x208] sm:$0xff]
        %v1785 = vld [vmem:[%s1624 + $0x210] sm:$0xff]
        %v1786 = vld [vmem:[%s1624 + $0x218] sm:$0xff]
        %v1787 = vld [vmem:[%s1624 + $0x220] sm:$0xff]
        %v1788 = vld [vmem:[%s1624 + $0x228] sm:$0xff]
        %v1789 = vld [vmem:[%s1624 + $0x230] sm:$0xff]
        %v1790 = vld [vmem:[%s1624 + $0x238] sm:$0xff]
        %v1791 = vld [vmem:[%s1624 + $0x240] sm:$0xff]
        %v1792 = vld [vmem:[%s1624 + $0x248] sm:$0xff]
        %v1793 = vld [vmem:[%s1624 + $0x250] sm:$0xff]
        %v1794 = vld [vmem:[%s1624 + $0x258] sm:$0xff]
        %v1795 = vld [vmem:[%s1624 + $0x260] sm:$0xff]
        %v1796 = vld [vmem:[%s1624 + $0x268] sm:$0xff]
        %v1797 = vld [vmem:[%s1624 + $0x270] sm:$0xff]
        %v1798 = vld [vmem:[%s1624 + $0x278] sm:$0xff]
        %v1799 = vld [vmem:[%s1624 + $0x280] sm:$0xff]
        %v1800 = vld [vmem:[%s1624 + $0x288] sm:$0xff]
        %v1801 = vld [vmem:[%s1624 + $0x290] sm:$0xff]
        %v1802 = vld [vmem:[%s1624 + $0x298] sm:$0xff]
        %v1803 = vld [vmem:[%s1624 + $0x2a0] sm:$0xff]
        %v1804 = vld [vmem:[%s1624 + $0x2a8] sm:$0xff]
        %v1805 = vld [vmem:[%s1624 + $0x2b0] sm:$0xff]
        %v1806 = vld [vmem:[%s1624 + $0x2b8] sm:$0xff]
        %v1807 = vld [vmem:[%s1624 + $0x2c0] sm:$0xff]
        %v1808 = vld [vmem:[%s1624 + $0x2c8] sm:$0xff]
        %v1809 = vld [vmem:[%s1624 + $0x2d0] sm:$0xff]
        %v1810 = vld [vmem:[%s1624 + $0x2d8] sm:$0xff]
        %v1811 = vld [vmem:[%s1624 + $0x2e0] sm:$0xff]
        %v1812 = vld [vmem:[%s1624 + $0x2e8] sm:$0xff]
        %v1813 = vld [vmem:[%s1624 + $0x2f0] sm:$0xff]
        %v1814 = vld [vmem:[%s1624 + $0x2f8] sm:$0xff]
        %v1815 = vld [vmem:[%s1624 + $0x300] sm:$0xff]
        %v1816 = vld [vmem:[%s1624 + $0x308] sm:$0xff]
        %v1817 = vld [vmem:[%s1624 + $0x310] sm:$0xff]
        %v1818 = vld [vmem:[%s1624 + $0x318] sm:$0xff]
        %v1819 = vld [vmem:[%s1624 + $0x320] sm:$0xff]
        %v1820 = vld [vmem:[%s1624 + $0x328] sm:$0xff]
        %v1821 = vld [vmem:[%s1624 + $0x330] sm:$0xff]
        %v1822 = vld [vmem:[%s1624 + $0x338] sm:$0xff]
        %v1823 = vld [vmem:[%s1624 + $0x340] sm:$0xff]
        %v1824 = vld [vmem:[%s1624 + $0x348] sm:$0xff]
        %v1825 = vld [vmem:[%s1624 + $0x350] sm:$0xff]
        %v1826 = vld [vmem:[%s1624 + $0x358] sm:$0xff]
        %v1827 = vld [vmem:[%s1624 + $0x360] sm:$0xff]
        %v1828 = vld [vmem:[%s1624 + $0x368] sm:$0xff]
        %v1829 = vld [vmem:[%s1624 + $0x370] sm:$0xff]
        %v1830 = vld [vmem:[%s1624 + $0x378] sm:$0xff]
        %v1831 = vld [vmem:[%s1624 + $0x380] sm:$0xff]
        %v1832 = vld [vmem:[%s1624 + $0x388] sm:$0xff]
        %v1833 = vld [vmem:[%s1624 + $0x390] sm:$0xff]
        %v1834 = vld [vmem:[%s1624 + $0x398] sm:$0xff]
        %v1835 = vld [vmem:[%s1624 + $0x3a0] sm:$0xff]
        %v1836 = vld [vmem:[%s1624 + $0x3a8] sm:$0xff]
        %v1837 = vld [vmem:[%s1624 + $0x3b0] sm:$0xff]
        %v1838 = vld [vmem:[%s1624 + $0x3b8] sm:$0xff]
        %v1839 = vld [vmem:[%s1624 + $0x3c0] sm:$0xff]
        %v1840 = vld [vmem:[%s1624 + $0x3c8] sm:$0xff]
        %v1841 = vld [vmem:[%s1624 + $0x3d0] sm:$0xff]
        %v1842 = vld [vmem:[%s1624 + $0x3d8] sm:$0xff]
        %v1843 = vld [vmem:[%s1624 + $0x3e0] sm:$0xff]
        %v1844 = vld [vmem:[%s1624 + $0x3e8] sm:$0xff]
        %v1845 = vld [vmem:[%s1624 + $0x3f0] sm:$0xff]
        %v1846 = vld [vmem:[%s1624 + $0x3f8] sm:$0xff]
        %v1847 = vld [vmem:[%s1624 + $0x400] sm:$0xff]
        %v1848 = vld [vmem:[%s1624 + $0x408] sm:$0xff]
        %v1849 = vld [vmem:[%s1624 + $0x410] sm:$0xff]
        %v1850 = vld [vmem:[%s1624 + $0x418] sm:$0xff]
        %v1851 = vld [vmem:[%s1624 + $0x420] sm:$0xff]
        %v1852 = vld [vmem:[%s1624 + $0x428] sm:$0xff]
        %v1853 = vld [vmem:[%s1624 + $0x430] sm:$0xff]
        %v1854 = vld [vmem:[%s1624 + $0x438] sm:$0xff]
        %v1855 = vld [vmem:[%s1624 + $0x440] sm:$0xff]
        %v1856 = vld [vmem:[%s1624 + $0x448] sm:$0xff]
        %v1857 = vld [vmem:[%s1624 + $0x450] sm:$0xff]
        %v1858 = vld [vmem:[%s1624 + $0x458] sm:$0xff]
        %v1859 = vld [vmem:[%s1624 + $0x460] sm:$0xff]
        %v1860 = vld [vmem:[%s1624 + $0x468] sm:$0xff]
        %v1861 = vld [vmem:[%s1624 + $0x470] sm:$0xff]
        %v1862 = vld [vmem:[%s1624 + $0x478] sm:$0xff]
        %v1863 = vld [vmem:[%s1624 + $0x480] sm:$0xff]
        %v1864 = vld [vmem:[%s1624 + $0x488] sm:$0xff]
        %v1865 = vld [vmem:[%s1624 + $0x490] sm:$0xff]
        %v1866 = vld [vmem:[%s1624 + $0x498] sm:$0xff]
        %v1867 = vld [vmem:[%s1624 + $0x4a0] sm:$0xff]
        %v1868 = vld [vmem:[%s1624 + $0x4a8] sm:$0xff]
        %v1869 = vld [vmem:[%s1624 + $0x4b0] sm:$0xff]
        %v1870 = vld [vmem:[%s1624 + $0x4b8] sm:$0xff]
        %v1871 = vld [vmem:[%s1624 + $0x4c0] sm:$0xff]
        %v1872 = vld [vmem:[%s1624 + $0x4c8] sm:$0xff]
        %v1873 = vld [vmem:[%s1624 + $0x4d0] sm:$0xff]
        %v1874 = vld [vmem:[%s1624 + $0x4d8] sm:$0xff]
        %v1875 = vld [vmem:[%s1624 + $0x4e0] sm:$0xff]
        %v1876 = vld [vmem:[%s1624 + $0x4e8] sm:$0xff]
        %v1877 = vld [vmem:[%s1624 + $0x4f0] sm:$0xff]
        %v1878 = vld [vmem:[%s1624 + $0x4f8] sm:$0xff]
        %v1879 = vld [vmem:[%s1624 + $0x500] sm:$0xff]
        %v1880 = vld [vmem:[%s1624 + $0x508] sm:$0xff]
        %v1881 = vld [vmem:[%s1624 + $0x510] sm:$0xff]
        %v1882 = vld [vmem:[%s1624 + $0x518] sm:$0xff]
        %v1883 = vld [vmem:[%s1624 + $0x520] sm:$0xff]
        %v1884 = vld [vmem:[%s1624 + $0x528] sm:$0xff]
        %v1885 = vld [vmem:[%s1624 + $0x530] sm:$0xff]
        %v1886 = vld [vmem:[%s1624 + $0x538] sm:$0xff]
        %v1887 = vld [vmem:[%s1624 + $0x540] sm:$0xff]
        %v1888 = vld [vmem:[%s1624 + $0x548] sm:$0xff]
        %v1889 = vld [vmem:[%s1624 + $0x550] sm:$0xff]
        %v1890 = vld [vmem:[%s1624 + $0x558] sm:$0xff]
        %v1891 = vld [vmem:[%s1624 + $0x560] sm:$0xff]
        %v1892 = vld [vmem:[%s1624 + $0x568] sm:$0xff]
        %v1893 = vld [vmem:[%s1624 + $0x570] sm:$0xff]
        %v1894 = vld [vmem:[%s1624 + $0x578] sm:$0xff]
        %v1895 = vld [vmem:[%s1624 + $0x580] sm:$0xff]
        %v1896 = vld [vmem:[%s1624 + $0x588] sm:$0xff]
        %v1897 = vld [vmem:[%s1624 + $0x590] sm:$0xff]
        %v1898 = vld [vmem:[%s1624 + $0x598] sm:$0xff]
        %v1899 = vld [vmem:[%s1624 + $0x5a0] sm:$0xff]
        %v1900 = vld [vmem:[%s1624 + $0x5a8] sm:$0xff]
        %v1901 = vld [vmem:[%s1624 + $0x5b0] sm:$0xff]
        %v1902 = vld [vmem:[%s1624 + $0x5b8] sm:$0xff]
        %v1903 = vld [vmem:[%s1624 + $0x5c0] sm:$0xff]
        %v1904 = vld [vmem:[%s1624 + $0x5c8] sm:$0xff]
        %v1905 = vld [vmem:[%s1624 + $0x5d0] sm:$0xff]
        %v1906 = vld [vmem:[%s1624 + $0x5d8] sm:$0xff]
        %v1907 = vld [vmem:[%s1624 + $0x5e0] sm:$0xff]
        %v1908 = vld [vmem:[%s1624 + $0x5e8] sm:$0xff]
        %v1909 = vld [vmem:[%s1624 + $0x5f0] sm:$0xff]
        %v1910 = vld [vmem:[%s1624 + $0x5f8] sm:$0xff]
        %v1911 = vld [vmem:[%s1624 + $0x600] sm:$0xff]
        %v1912 = vld [vmem:[%s1624 + $0x608] sm:$0xff]
        %v1913 = vld [vmem:[%s1624 + $0x610] sm:$0xff]
        %v1914 = vld [vmem:[%s1624 + $0x618] sm:$0xff]
        %v1915 = vld [vmem:[%s1624 + $0x620] sm:$0xff]
        %v1916 = vld [vmem:[%s1624 + $0x628] sm:$0xff]
        %v1917 = vld [vmem:[%s1624 + $0x630] sm:$0xff]
        %v1918 = vld [vmem:[%s1624 + $0x638] sm:$0xff]
        %v1919 = vld [vmem:[%s1624 + $0x640] sm:$0xff]
        %v1920 = vld [vmem:[%s1624 + $0x648] sm:$0xff]
        %v1921 = vld [vmem:[%s1624 + $0x650] sm:$0xff]
        %v1922 = vld [vmem:[%s1624 + $0x658] sm:$0xff]
        %v1923 = vld [vmem:[%s1624 + $0x660] sm:$0xff]
        %v1924 = vld [vmem:[%s1624 + $0x668] sm:$0xff]
        %v1925 = vld [vmem:[%s1624 + $0x670] sm:$0xff]
        %v1926 = vld [vmem:[%s1624 + $0x678] sm:$0xff]
        %v1927 = vld [vmem:[%s1624 + $0x680] sm:$0xff]
        %v1928 = vld [vmem:[%s1624 + $0x688] sm:$0xff]
        %v1929 = vld [vmem:[%s1624 + $0x690] sm:$0xff]
        %v1930 = vld [vmem:[%s1624 + $0x698] sm:$0xff]
        %v1931 = vld [vmem:[%s1624 + $0x6a0] sm:$0xff]
        %v1932 = vld [vmem:[%s1624 + $0x6a8] sm:$0xff]
        %v1933 = vld [vmem:[%s1624 + $0x6b0] sm:$0xff]
        %v1934 = vld [vmem:[%s1624 + $0x6b8] sm:$0xff]
        %v1935 = vld [vmem:[%s1624 + $0x6c0] sm:$0xff]
        %v1936 = vld [vmem:[%s1624 + $0x6c8] sm:$0xff]
        %v1937 = vld [vmem:[%s1624 + $0x6d0] sm:$0xff]
        %v1938 = vld [vmem:[%s1624 + $0x6d8] sm:$0xff]
        %v1939 = vld [vmem:[%s1624 + $0x6e0] sm:$0xff]
        %v1940 = vld [vmem:[%s1624 + $0x6e8] sm:$0xff]
        %v1941 = vld [vmem:[%s1624 + $0x6f0] sm:$0xff]
        %v1942 = vld [vmem:[%s1624 + $0x6f8] sm:$0xff]
        %v1943 = vld [vmem:[%s1624 + $0x700] sm:$0xff]
        %v1944 = vld [vmem:[%s1624 + $0x708] sm:$0xff]
        %v1945 = vld [vmem:[%s1624 + $0x710] sm:$0xff]
        %v1946 = vld [vmem:[%s1624 + $0x718] sm:$0xff]
        %v1947 = vld [vmem:[%s1624 + $0x720] sm:$0xff]
        %v1948 = vld [vmem:[%s1624 + $0x728] sm:$0xff]
        %v1949 = vld [vmem:[%s1624 + $0x730] sm:$0xff]
        %v1950 = vld [vmem:[%s1624 + $0x738] sm:$0xff]
        %v1951 = vld [vmem:[%s1624 + $0x740] sm:$0xff]
        %v1952 = vld [vmem:[%s1624 + $0x748] sm:$0xff]
        %v1953 = vld [vmem:[%s1624 + $0x750] sm:$0xff]
        %v1954 = vld [vmem:[%s1624 + $0x758] sm:$0xff]
        %v1955 = vld [vmem:[%s1624 + $0x760] sm:$0xff]
        %v1956 = vld [vmem:[%s1624 + $0x768] sm:$0xff]
        %v1957 = vld [vmem:[%s1624 + $0x770] sm:$0xff]
        %v1958 = vld [vmem:[%s1624 + $0x778] sm:$0xff]
        %v1959 = vld [vmem:[%s1624 + $0x780] sm:$0xff]
        %v1960 = vld [vmem:[%s1624 + $0x788] sm:$0xff]
        %v1961 = vld [vmem:[%s1624 + $0x790] sm:$0xff]
        %v1962 = vld [vmem:[%s1624 + $0x798] sm:$0xff]
        %v1963 = vld [vmem:[%s1624 + $0x7a0] sm:$0xff]
        %v1964 = vld [vmem:[%s1624 + $0x7a8] sm:$0xff]
        %v1965 = vld [vmem:[%s1624 + $0x7b0] sm:$0xff]
        %v1966 = vld [vmem:[%s1624 + $0x7b8] sm:$0xff]
        %v1967 = vld [vmem:[%s1624 + $0x7c0] sm:$0xff]
        %v1968 = vld [vmem:[%s1624 + $0x7c8] sm:$0xff]
        %v1969 = vld [vmem:[%s1624 + $0x7d0] sm:$0xff]
        %v1970 = vld [vmem:[%s1624 + $0x7d8] sm:$0xff]
        %v1971 = vld [vmem:[%s1624 + $0x7e0] sm:$0xff]
        %v1972 = vld [vmem:[%s1624 + $0x7e8] sm:$0xff]
        %v1973 = vld [vmem:[%s1624 + $0x7f0] sm:$0xff]
        %v1974 = vld [vmem:[%s1624 + $0x7f8] sm:$0xff]
        %v1975 = vld [vmem:[%s1624 + $0x800] sm:$0xff]
        %v1976 = vld [vmem:[%s1624 + $0x808] sm:$0xff]
        %v1977 = vld [vmem:[%s1624 + $0x810] sm:$0xff]
        %v1978 = vld [vmem:[%s1624 + $0x818] sm:$0xff]
        %v1979 = vld [vmem:[%s1624 + $0x820] sm:$0xff]
        %v1980 = vld [vmem:[%s1624 + $0x828] sm:$0xff]
        %v1981 = vld [vmem:[%s1624 + $0x830] sm:$0xff]
        %v1982 = vld [vmem:[%s1624 + $0x838] sm:$0xff]
        %v1983 = vld [vmem:[%s1624 + $0x840] sm:$0xff]
        %v1984 = vld [vmem:[%s1624 + $0x848] sm:$0xff]
        %v1985 = vld [vmem:[%s1624 + $0x850] sm:$0xff]
        %v1986 = vld [vmem:[%s1624 + $0x858] sm:$0xff]
        %v1987 = vld [vmem:[%s1624 + $0x860] sm:$0xff]
        %v1988 = vld [vmem:[%s1624 + $0x868] sm:$0xff]
        %v1989 = vld [vmem:[%s1624 + $0x870] sm:$0xff]
        %v1990 = vld [vmem:[%s1624 + $0x878] sm:$0xff]
        %v1991 = vld [vmem:[%s1624 + $0x880] sm:$0xff]
        %v1992 = vld [vmem:[%s1624 + $0x888] sm:$0xff]
        %v1993 = vld [vmem:[%s1624 + $0x890] sm:$0xff]
        %v1994 = vld [vmem:[%s1624 + $0x898] sm:$0xff]
        %v1995 = vld [vmem:[%s1624 + $0x8a0] sm:$0xff]
        %v1996 = vld [vmem:[%s1624 + $0x8a8] sm:$0xff]
        %v1997 = vld [vmem:[%s1624 + $0x8b0] sm:$0xff]
        %v1998 = vld [vmem:[%s1624 + $0x8b8] sm:$0xff]
        %v1999 = vld [vmem:[%s1624 + $0x8c0] sm:$0xff]
        %v2000 = vld [vmem:[%s1624 + $0x8c8] sm:$0xff]
        %v2001 = vld [vmem:[%s1624 + $0x8d0] sm:$0xff]
        %v2002 = vld [vmem:[%s1624 + $0x8d8] sm:$0xff]
        %v2003 = vld [vmem:[%s1624 + $0x8e0] sm:$0xff]
        %v2004 = vld [vmem:[%s1624 + $0x8e8] sm:$0xff]
        %v2005 = vld [vmem:[%s1624 + $0x8f0] sm:$0xff]
        %v2006 = vld [vmem:[%s1624 + $0x8f8] sm:$0xff]
        %v2007 = vld [vmem:[%s1624 + $0x900] sm:$0xff]
        %v2008 = vld [vmem:[%s1624 + $0x908] sm:$0xff]
        %v2009 = vld [vmem:[%s1624 + $0x910] sm:$0xff]
        %v2010 = vld [vmem:[%s1624 + $0x918] sm:$0xff]
        %v2011 = vld [vmem:[%s1624 + $0x920] sm:$0xff]
        %v2012 = vld [vmem:[%s1624 + $0x928] sm:$0xff]
        %v2013 = vld [vmem:[%s1624 + $0x930] sm:$0xff]
        %v2014 = vld [vmem:[%s1624 + $0x938] sm:$0xff]
        %v2015 = vld [vmem:[%s1624 + $0x940] sm:$0xff]
        %v2016 = vld [vmem:[%s1624 + $0x948] sm:$0xff]
        %v2017 = vld [vmem:[%s1624 + $0x950] sm:$0xff]
        %v2018 = vld [vmem:[%s1624 + $0x958] sm:$0xff]
        %v2019 = vld [vmem:[%s1624 + $0x960] sm:$0xff]
        %v2020 = vld [vmem:[%s1624 + $0x968] sm:$0xff]
        %v2021 = vld [vmem:[%s1624 + $0x970] sm:$0xff]
        %v2022 = vld [vmem:[%s1624 + $0x978] sm:$0xff]
        %v2023 = vld [vmem:[%s1624 + $0x980] sm:$0xff]
        %v2024 = vld [vmem:[%s1624 + $0x988] sm:$0xff]
        %v2025 = vld [vmem:[%s1624 + $0x990] sm:$0xff]
        %v2026 = vld [vmem:[%s1624 + $0x998] sm:$0xff]
        %v2027 = vld [vmem:[%s1624 + $0x9a0] sm:$0xff]
        %v2028 = vld [vmem:[%s1624 + $0x9a8] sm:$0xff]
        %v2029 = vld [vmem:[%s1624 + $0x9b0] sm:$0xff]
        %v2030 = vld [vmem:[%s1624 + $0x9b8] sm:$0xff]
        %v2031 = vld [vmem:[%s1624 + $0x9c0] sm:$0xff]
        %v2032 = vld [vmem:[%s1624 + $0x9c8] sm:$0xff]
        %v2033 = vld [vmem:[%s1624 + $0x9d0] sm:$0xff]
        %v2034 = vld [vmem:[%s1624 + $0x9d8] sm:$0xff]
        %v2035 = vld [vmem:[%s1624 + $0x9e0] sm:$0xff]
        %v2036 = vld [vmem:[%s1624 + $0x9e8] sm:$0xff]
        %v2037 = vld [vmem:[%s1624 + $0x9f0] sm:$0xff]
        %v2038 = vld [vmem:[%s1624 + $0x9f8] sm:$0xff]
        %v2039 = vld [vmem:[%s1624 + $0xa00] sm:$0xff]
        %v2040 = vld [vmem:[%s1624 + $0xa08] sm:$0xff]
        %v2041 = vld [vmem:[%s1624 + $0xa10] sm:$0xff]
        %v2042 = vld [vmem:[%s1624 + $0xa18] sm:$0xff]
        %v2043 = vld [vmem:[%s1624 + $0xa20] sm:$0xff]
        %v2044 = vld [vmem:[%s1624 + $0xa28] sm:$0xff]
        %v2045 = vld [vmem:[%s1624 + $0xa30] sm:$0xff]
        %v2046 = vld [vmem:[%s1624 + $0xa38] sm:$0xff]
        %v2047 = vld [vmem:[%s1624 + $0xa40] sm:$0xff]
        %v2048 = vld [vmem:[%s1624 + $0xa48] sm:$0xff]
        %v2049 = vld [vmem:[%s1624 + $0xa50] sm:$0xff]
        %v2050 = vld [vmem:[%s1624 + $0xa58] sm:$0xff]
        %v2051 = vld [vmem:[%s1624 + $0xa60] sm:$0xff]
        %v2052 = vld [vmem:[%s1624 + $0xa68] sm:$0xff]
        %v2053 = vld [vmem:[%s1624 + $0xa70] sm:$0xff]
        %v2054 = vld [vmem:[%s1624 + $0xa78] sm:$0xff]
        %v2055 = vld [vmem:[%s1624 + $0xa80] sm:$0xff]
        %v2056 = vld [vmem:[%s1624 + $0xa88] sm:$0xff]
        %v2057 = vld [vmem:[%s1624 + $0xa90] sm:$0xff]
        %v2058 = vld [vmem:[%s1624 + $0xa98] sm:$0xff]
        %v2059 = vld [vmem:[%s1624 + $0xaa0] sm:$0xff]
        %v2060 = vld [vmem:[%s1624 + $0xaa8] sm:$0xff]
        %v2061 = vld [vmem:[%s1624 + $0xab0] sm:$0xff]
        %v2062 = vld [vmem:[%s1624 + $0xab8] sm:$0xff]
        %v2063 = vld [vmem:[%s1624 + $0xac0] sm:$0xff]
        %v2064 = vld [vmem:[%s1624 + $0xac8] sm:$0xff]
        %v2065 = vld [vmem:[%s1624 + $0xad0] sm:$0xff]
        %v2066 = vld [vmem:[%s1624 + $0xad8] sm:$0xff]
        %v2067 = vld [vmem:[%s1624 + $0xae0] sm:$0xff]
        %v2068 = vld [vmem:[%s1624 + $0xae8] sm:$0xff]
        %v2069 = vld [vmem:[%s1624 + $0xaf0] sm:$0xff]
        %v2070 = vld [vmem:[%s1624 + $0xaf8] sm:$0xff]
        %v2071 = vld [vmem:[%s1624 + $0xb00] sm:$0xff]
        %v2072 = vld [vmem:[%s1624 + $0xb08] sm:$0xff]
        %v2073 = vld [vmem:[%s1624 + $0xb10] sm:$0xff]
        %v2074 = vld [vmem:[%s1624 + $0xb18] sm:$0xff]
        %v2075 = vld [vmem:[%s1624 + $0xb20] sm:$0xff]
        %v2076 = vld [vmem:[%s1624 + $0xb28] sm:$0xff]
        %v2077 = vld [vmem:[%s1624 + $0xb30] sm:$0xff]
        %v2078 = vld [vmem:[%s1624 + $0xb38] sm:$0xff]
        %v2079 = vld [vmem:[%s1624 + $0xb40] sm:$0xff]
        %v2080 = vld [vmem:[%s1624 + $0xb48] sm:$0xff]
        %v2081 = vld [vmem:[%s1624 + $0xb50] sm:$0xff]
        %v2082 = vld [vmem:[%s1624 + $0xb58] sm:$0xff]
        %v2083 = vld [vmem:[%s1624 + $0xb60] sm:$0xff]
        %v2084 = vld [vmem:[%s1624 + $0xb68] sm:$0xff]
        %v2085 = vld [vmem:[%s1624 + $0xb70] sm:$0xff]
        %v2086 = vld [vmem:[%s1624 + $0xb78] sm:$0xff]
        %v2087 = vld [vmem:[%s1624 + $0xb80] sm:$0xff]
        %v2088 = vld [vmem:[%s1624 + $0xb88] sm:$0xff]
        %v2089 = vld [vmem:[%s1624 + $0xb90] sm:$0xff]
        %v2090 = vld [vmem:[%s1624 + $0xb98] sm:$0xff]
        %v2091 = vld [vmem:[%s1624 + $0xba0] sm:$0xff]
        %v2092 = vld [vmem:[%s1624 + $0xba8] sm:$0xff]
        %v2093 = vld [vmem:[%s1624 + $0xbb0] sm:$0xff]
        %v2094 = vld [vmem:[%s1624 + $0xbb8] sm:$0xff]
        %v2095 = vld [vmem:[%s1624 + $0xbc0] sm:$0xff]
        %v2096 = vld [vmem:[%s1624 + $0xbc8] sm:$0xff]
        %v2097 = vld [vmem:[%s1624 + $0xbd0] sm:$0xff]
        %v2098 = vld [vmem:[%s1624 + $0xbd8] sm:$0xff]
        %v2099 = vld [vmem:[%s1624 + $0xbe0] sm:$0xff]
        %v2100 = vld [vmem:[%s1624 + $0xbe8] sm:$0xff]
        %v2101 = vld [vmem:[%s1624 + $0xbf0] sm:$0xff]
        %v2102 = vld [vmem:[%s1624 + $0xbf8] sm:$0xff]
        %v2103 = vld [vmem:[%s1624 + $0xc00] sm:$0xff]
        %v2104 = vld [vmem:[%s1624 + $0xc08] sm:$0xff]
        %v2105 = vld [vmem:[%s1624 + $0xc10] sm:$0xff]
        %v2106 = vld [vmem:[%s1624 + $0xc18] sm:$0xff]
        %v2107 = vld [vmem:[%s1624 + $0xc20] sm:$0xff]
        %v2108 = vld [vmem:[%s1624 + $0xc28] sm:$0xff]
        %v2109 = vld [vmem:[%s1624 + $0xc30] sm:$0xff]
        %v2110 = vld [vmem:[%s1624 + $0xc38] sm:$0xff]
        %v2111 = vld [vmem:[%s1624 + $0xc40] sm:$0xff]
        %v2112 = vld [vmem:[%s1624 + $0xc48] sm:$0xff]
        %v2113 = vld [vmem:[%s1624 + $0xc50] sm:$0xff]
        %v2114 = vld [vmem:[%s1624 + $0xc58] sm:$0xff]
        %v2115 = vld [vmem:[%s1624 + $0xc60] sm:$0xff]
        %v2116 = vld [vmem:[%s1624 + $0xc68] sm:$0xff]
        %v2117 = vld [vmem:[%s1624 + $0xc70] sm:$0xff]
        %v2118 = vld [vmem:[%s1624 + $0xc78] sm:$0xff]
        %v2119 = vld [vmem:[%s1624 + $0xc80] sm:$0xff]
        %v2120 = vld [vmem:[%s1624 + $0xc88] sm:$0xff]
        %v2121 = vld [vmem:[%s1624 + $0xc90] sm:$0xff]
        %v2122 = vld [vmem:[%s1624 + $0xc98] sm:$0xff]
        %v2123 = vld [vmem:[%s1624 + $0xca0] sm:$0xff]
        %v2124 = vld [vmem:[%s1624 + $0xca8] sm:$0xff]
        %v2125 = vld [vmem:[%s1624 + $0xcb0] sm:$0xff]
        %v2126 = vld [vmem:[%s1624 + $0xcb8] sm:$0xff]
        %v2127 = vld [vmem:[%s1624 + $0xcc0] sm:$0xff]
        %v2128 = vld [vmem:[%s1624 + $0xcc8] sm:$0xff]
        %v2129 = vld [vmem:[%s1624 + $0xcd0] sm:$0xff]
        %v2130 = vld [vmem:[%s1624 + $0xcd8] sm:$0xff]
        %v2131 = vld [vmem:[%s1624 + $0xce0] sm:$0xff]
        %v2132 = vld [vmem:[%s1624 + $0xce8] sm:$0xff]
        %v2133 = vld [vmem:[%s1624 + $0xcf0] sm:$0xff]
        %v2134 = vld [vmem:[%s1624 + $0xcf8] sm:$0xff]
        %v2135 = vld [vmem:[%s1624 + $0xd00] sm:$0xff]
        %v2136 = vld [vmem:[%s1624 + $0xd08] sm:$0xff]
        %v2137 = vld [vmem:[%s1624 + $0xd10] sm:$0xff]
        %v2138 = vld [vmem:[%s1624 + $0xd18] sm:$0xff]
        %v2139 = vld [vmem:[%s1624 + $0xd20] sm:$0xff]
        %v2140 = vld [vmem:[%s1624 + $0xd28] sm:$0xff]
        %v2141 = vld [vmem:[%s1624 + $0xd30] sm:$0xff]
        %v2142 = vld [vmem:[%s1624 + $0xd38] sm:$0xff]
        %v2143 = vld [vmem:[%s1624 + $0xd40] sm:$0xff]
        %v2144 = vld [vmem:[%s1624 + $0xd48] sm:$0xff]
        %v2145 = vld [vmem:[%s1624 + $0xd50] sm:$0xff]
        %v2146 = vld [vmem:[%s1624 + $0xd58] sm:$0xff]
        %v2147 = vld [vmem:[%s1624 + $0xd60] sm:$0xff]
        %v2148 = vld [vmem:[%s1624 + $0xd68] sm:$0xff]
        %v2149 = vld [vmem:[%s1624 + $0xd70] sm:$0xff]
        %v2150 = vld [vmem:[%s1624 + $0xd78] sm:$0xff]
        %v2151 = vld [vmem:[%s1624 + $0xd80] sm:$0xff]
        %v2152 = vld [vmem:[%s1624 + $0xd88] sm:$0xff]
        %v2153 = vld [vmem:[%s1624 + $0xd90] sm:$0xff]
        %v2154 = vld [vmem:[%s1624 + $0xd98] sm:$0xff]
        %v2155 = vld [vmem:[%s1624 + $0xda0] sm:$0xff]
        %v2156 = vld [vmem:[%s1624 + $0xda8] sm:$0xff]
        %v2157 = vld [vmem:[%s1624 + $0xdb0] sm:$0xff]
        %v2158 = vld [vmem:[%s1624 + $0xdb8] sm:$0xff]
        %v2159 = vld [vmem:[%s1624 + $0xdc0] sm:$0xff]
        %v2160 = vld [vmem:[%s1624 + $0xdc8] sm:$0xff]
        %v2161 = vld [vmem:[%s1624 + $0xdd0] sm:$0xff]
        %v2162 = vld [vmem:[%s1624 + $0xdd8] sm:$0xff]
        %v2163 = vld [vmem:[%s1624 + $0xde0] sm:$0xff]
        %v2164 = vld [vmem:[%s1624 + $0xde8] sm:$0xff]
        %v2165 = vld [vmem:[%s1624 + $0xdf0] sm:$0xff]
        %v2166 = vld [vmem:[%s1624 + $0xdf8] sm:$0xff]
        %v2167 = vld [vmem:[%s1624 + $0xe00] sm:$0xff]
        %v2168 = vld [vmem:[%s1624 + $0xe08] sm:$0xff]
        %v2169 = vld [vmem:[%s1624 + $0xe10] sm:$0xff]
        %v2170 = vld [vmem:[%s1624 + $0xe18] sm:$0xff]
        %v2171 = vld [vmem:[%s1624 + $0xe20] sm:$0xff]
        %v2172 = vld [vmem:[%s1624 + $0xe28] sm:$0xff]
        %v2173 = vld [vmem:[%s1624 + $0xe30] sm:$0xff]
        %v2174 = vld [vmem:[%s1624 + $0xe38] sm:$0xff]
        %v2175 = vld [vmem:[%s1624 + $0xe40] sm:$0xff]
        %v2176 = vld [vmem:[%s1624 + $0xe48] sm:$0xff]
        %v2177 = vld [vmem:[%s1624 + $0xe50] sm:$0xff]
        %v2178 = vld [vmem:[%s1624 + $0xe58] sm:$0xff]
        %v2179 = vld [vmem:[%s1624 + $0xe60] sm:$0xff]
        %v2180 = vld [vmem:[%s1624 + $0xe68] sm:$0xff]
        %v2181 = vld [vmem:[%s1624 + $0xe70] sm:$0xff]
        %v2182 = vld [vmem:[%s1624 + $0xe78] sm:$0xff]
        %v2183 = vld [vmem:[%s1624 + $0xe80] sm:$0xff]
        %v2184 = vld [vmem:[%s1624 + $0xe88] sm:$0xff]
        %v2185 = vld [vmem:[%s1624 + $0xe90] sm:$0xff]
        %v2186 = vld [vmem:[%s1624 + $0xe98] sm:$0xff]
        %v2187 = vld [vmem:[%s1624 + $0xea0] sm:$0xff]
        %v2188 = vld [vmem:[%s1624 + $0xea8] sm:$0xff]
        %v2189 = vld [vmem:[%s1624 + $0xeb0] sm:$0xff]
        %v2190 = vld [vmem:[%s1624 + $0xeb8] sm:$0xff]
        %v2191 = vld [vmem:[%s1624 + $0xec0] sm:$0xff]
        %v2192 = vld [vmem:[%s1624 + $0xec8] sm:$0xff]
        %v2193 = vld [vmem:[%s1624 + $0xed0] sm:$0xff]
        %v2194 = vld [vmem:[%s1624 + $0xed8] sm:$0xff]
        %v2195 = vld [vmem:[%s1624 + $0xee0] sm:$0xff]
        %v2196 = vld [vmem:[%s1624 + $0xee8] sm:$0xff]
        %v2197 = vld [vmem:[%s1624 + $0xef0] sm:$0xff]
        %v2198 = vld [vmem:[%s1624 + $0xef8] sm:$0xff]
        %v2199 = vld [vmem:[%s1624 + $0xf00] sm:$0xff]
        %v2200 = vld [vmem:[%s1624 + $0xf08] sm:$0xff]
        %v2201 = vld [vmem:[%s1624 + $0xf10] sm:$0xff]
        %v2202 = vld [vmem:[%s1624 + $0xf18] sm:$0xff]
        %v2203 = vld [vmem:[%s1624 + $0xf20] sm:$0xff]
        %v2204 = vld [vmem:[%s1624 + $0xf28] sm:$0xff]
        %v2205 = vld [vmem:[%s1624 + $0xf30] sm:$0xff]
        %v2206 = vld [vmem:[%s1624 + $0xf38] sm:$0xff]
        %v2207 = vld [vmem:[%s1624 + $0xf40] sm:$0xff]
        %v2208 = vld [vmem:[%s1624 + $0xf48] sm:$0xff]
        %v2209 = vld [vmem:[%s1624 + $0xf50] sm:$0xff]
        %v2210 = vld [vmem:[%s1624 + $0xf58] sm:$0xff]
        %v2211 = vld [vmem:[%s1624 + $0xf60] sm:$0xff]
        %v2212 = vld [vmem:[%s1624 + $0xf68] sm:$0xff]
        %v2213 = vld [vmem:[%s1624 + $0xf70] sm:$0xff]
        %v2214 = vld [vmem:[%s1624 + $0xf78] sm:$0xff]
        %v2215 = vld [vmem:[%s1624 + $0xf80] sm:$0xff]
        %v2216 = vld [vmem:[%s1624 + $0xf88] sm:$0xff]
        %v2217 = vld [vmem:[%s1624 + $0xf90] sm:$0xff]
        %v2218 = vld [vmem:[%s1624 + $0xf98] sm:$0xff]
        %v2219 = vld [vmem:[%s1624 + $0xfa0] sm:$0xff]
        %v2220 = vld [vmem:[%s1624 + $0xfa8] sm:$0xff]
        %v2221 = vld [vmem:[%s1624 + $0xfb0] sm:$0xff]
        %v2222 = vld [vmem:[%s1624 + $0xfb8] sm:$0xff]
        %v2223 = vld [vmem:[%s1624 + $0xfc0] sm:$0xff]
        %v2224 = vld [vmem:[%s1624 + $0xfc8] sm:$0xff]
        %v2225 = vld [vmem:[%s1624 + $0xfd0] sm:$0xff]
        %v2226 = vld [vmem:[%s1624 + $0xfd8] sm:$0xff]
        %v2227 = vld [vmem:[%s1624 + $0xfe0] sm:$0xff]
        %v2228 = vld [vmem:[%s1624 + $0xfe8] sm:$0xff]
        %v2229 = vld [vmem:[%s1624 + $0xff0] sm:$0xff]
        %v2230 = vld [vmem:[%s1624 + $0xff8] sm:$0xff]
        %v2231 = vld [vmem:[%s1624 + $0x1000] sm:$0xff]
        %v2232 = vld [vmem:[%s1624 + $0x1008] sm:$0xff]
        %v2233 = vld [vmem:[%s1624 + $0x1010] sm:$0xff]
        %v2234 = vld [vmem:[%s1624 + $0x1018] sm:$0xff]
        %v2235 = vld [vmem:[%s1624 + $0x1020] sm:$0xff]
        %v2236 = vld [vmem:[%s1624 + $0x1028] sm:$0xff]
        %v2237 = vld [vmem:[%s1624 + $0x1030] sm:$0xff]
        %v2238 = vld [vmem:[%s1624 + $0x1038] sm:$0xff]
        %v2239 = vld [vmem:[%s1624 + $0x1040] sm:$0xff]
        %v2240 = vld [vmem:[%s1624 + $0x1048] sm:$0xff]
        %v2241 = vld [vmem:[%s1624 + $0x1050] sm:$0xff]
        %v2242 = vld [vmem:[%s1624 + $0x1058] sm:$0xff]
        %v2243 = vld [vmem:[%s1624 + $0x1060] sm:$0xff]
        %v2244 = vld [vmem:[%s1624 + $0x1068] sm:$0xff]
        %v2245 = vld [vmem:[%s1624 + $0x1070] sm:$0xff]
        %v2246 = vld [vmem:[%s1624 + $0x1078] sm:$0xff]
        %v2247 = vld [vmem:[%s1624 + $0x1080] sm:$0xff]
        %v2248 = vld [vmem:[%s1624 + $0x1088] sm:$0xff]
        %v2249 = vld [vmem:[%s1624 + $0x1090] sm:$0xff]
        %v2250 = vld [vmem:[%s1624 + $0x1098] sm:$0xff]
        %v2251 = vld [vmem:[%s1624 + $0x10a0] sm:$0xff]
        %v2252 = vld [vmem:[%s1624 + $0x10a8] sm:$0xff]
        %v2253 = vld [vmem:[%s1624 + $0x10b0] sm:$0xff]
        %v2254 = vld [vmem:[%s1624 + $0x10b8] sm:$0xff]
        %v2255 = vld [vmem:[%s1624 + $0x10c0] sm:$0xff]
        %v2256 = vld [vmem:[%s1624 + $0x10c8] sm:$0xff]
        %v2257 = vld [vmem:[%s1624 + $0x10d0] sm:$0xff]
        %v2258 = vld [vmem:[%s1624 + $0x10d8] sm:$0xff]
        %v2259 = vld [vmem:[%s1624 + $0x10e0] sm:$0xff]
        %v2260 = vld [vmem:[%s1624 + $0x10e8] sm:$0xff]
        %v2261 = vld [vmem:[%s1624 + $0x10f0] sm:$0xff]
        %v2262 = vld [vmem:[%s1624 + $0x10f8] sm:$0xff]
        %v2263 = vld [vmem:[%s1624 + $0x1100] sm:$0xff]
        %v2264 = vld [vmem:[%s1624 + $0x1108] sm:$0xff]
        %v2265 = vld [vmem:[%s1624 + $0x1110] sm:$0xff]
        %v2266 = vld [vmem:[%s1624 + $0x1118] sm:$0xff]
        %v2267 = vld [vmem:[%s1624 + $0x1120] sm:$0xff]
        %v2268 = vld [vmem:[%s1624 + $0x1128] sm:$0xff]
        %v2269 = vld [vmem:[%s1624 + $0x1130] sm:$0xff]
        %v2270 = vld [vmem:[%s1624 + $0x1138] sm:$0xff]
        %v2271 = vld [vmem:[%s1624 + $0x1140] sm:$0xff]
        %v2272 = vld [vmem:[%s1624 + $0x1148] sm:$0xff]
        %v2273 = vld [vmem:[%s1624 + $0x1150] sm:$0xff]
        %v2274 = vld [vmem:[%s1624 + $0x1158] sm:$0xff]
        %v2275 = vld [vmem:[%s1624 + $0x1160] sm:$0xff]
        %v2276 = vld [vmem:[%s1624 + $0x1168] sm:$0xff]
        %v2277 = vld [vmem:[%s1624 + $0x1170] sm:$0xff]
        %v2278 = vld [vmem:[%s1624 + $0x1178] sm:$0xff]
        %v2279 = vld [vmem:[%s1624 + $0x1180] sm:$0xff]
        %v2280 = vld [vmem:[%s1624 + $0x1188] sm:$0xff]
        %v2281 = vld [vmem:[%s1624 + $0x1190] sm:$0xff]
        %v2282 = vld [vmem:[%s1624 + $0x1198] sm:$0xff]
        %v2283 = vld [vmem:[%s1624 + $0x11a0] sm:$0xff]
        %v2284 = vld [vmem:[%s1624 + $0x11a8] sm:$0xff]
        %v2285 = vld [vmem:[%s1624 + $0x11b0] sm:$0xff]
        %v2286 = vld [vmem:[%s1624 + $0x11b8] sm:$0xff]
        %v2287 = vld [vmem:[%s1624 + $0x11c0] sm:$0xff]
        %v2288 = vld [vmem:[%s1624 + $0x11c8] sm:$0xff]
        %v2289 = vld [vmem:[%s1624 + $0x11d0] sm:$0xff]
        %v2290 = vld [vmem:[%s1624 + $0x11d8] sm:$0xff]
        %v2291 = vld [vmem:[%s1624 + $0x11e0] sm:$0xff]
        %v2292 = vld [vmem:[%s1624 + $0x11e8] sm:$0xff]
        %v2293 = vld [vmem:[%s1624 + $0x11f0] sm:$0xff]
        %v2294 = vld [vmem:[%s1624 + $0x11f8] sm:$0xff]
        %v2295 = vld [vmem:[%s1624 + $0x1200] sm:$0xff]
        %v2296 = vld [vmem:[%s1624 + $0x1208] sm:$0xff]
        %v2297 = vld [vmem:[%s1624 + $0x1210] sm:$0xff]
        %v2298 = vld [vmem:[%s1624 + $0x1218] sm:$0xff]
        %v2299 = vld [vmem:[%s1624 + $0x1220] sm:$0xff]
        %v2300 = vld [vmem:[%s1624 + $0x1228] sm:$0xff]
        %v2301 = vld [vmem:[%s1624 + $0x1230] sm:$0xff]
        %v2302 = vld [vmem:[%s1624 + $0x1238] sm:$0xff]
        %v2303 = vld [vmem:[%s1624 + $0x1240] sm:$0xff]
        %v2304 = vld [vmem:[%s1624 + $0x1248] sm:$0xff]
        %v2305 = vld [vmem:[%s1624 + $0x1250] sm:$0xff]
        %v2306 = vld [vmem:[%s1624 + $0x1258] sm:$0xff]
        %v2307 = vld [vmem:[%s1624 + $0x1260] sm:$0xff]
        %v2308 = vld [vmem:[%s1624 + $0x1268] sm:$0xff]
        %v2309 = vld [vmem:[%s1624 + $0x1270] sm:$0xff]
        %v2310 = vld [vmem:[%s1624 + $0x1278] sm:$0xff]
        %v2311 = vld [vmem:[%s1624 + $0x1280] sm:$0xff]
        %v2312 = vld [vmem:[%s1624 + $0x1288] sm:$0xff]
        %v2313 = vld [vmem:[%s1624 + $0x1290] sm:$0xff]
        %v2314 = vld [vmem:[%s1624 + $0x1298] sm:$0xff]
        %v2315 = vld [vmem:[%s1624 + $0x12a0] sm:$0xff]
        %v2316 = vld [vmem:[%s1624 + $0x12a8] sm:$0xff]
        %v2317 = vld [vmem:[%s1624 + $0x12b0] sm:$0xff]
        %v2318 = vld [vmem:[%s1624 + $0x12b8] sm:$0xff]
        %v2319 = vld [vmem:[%s1624 + $0x12c0] sm:$0xff]
        %v2320 = vld [vmem:[%s1624 + $0x12c8] sm:$0xff]
        %v2321 = vld [vmem:[%s1624 + $0x12d0] sm:$0xff]
        %v2322 = vld [vmem:[%s1624 + $0x12d8] sm:$0xff]
        %v2323 = vld [vmem:[%s1624 + $0x12e0] sm:$0xff]
        %v2324 = vld [vmem:[%s1624 + $0x12e8] sm:$0xff]
        %v2325 = vld [vmem:[%s1624 + $0x12f0] sm:$0xff]
        %v2326 = vld [vmem:[%s1624 + $0x12f8] sm:$0xff]
        %v2327 = vld [vmem:[%s1624 + $0x1300] sm:$0xff]
        %v2328 = vld [vmem:[%s1624 + $0x1308] sm:$0xff]
        %v2329 = vld [vmem:[%s1624 + $0x1310] sm:$0xff]
        %v2330 = vld [vmem:[%s1624 + $0x1318] sm:$0xff]
        %v2331 = vld [vmem:[%s1624 + $0x1320] sm:$0xff]
        %v2332 = vld [vmem:[%s1624 + $0x1328] sm:$0xff]
        %v2333 = vld [vmem:[%s1624 + $0x1330] sm:$0xff]
        %v2334 = vld [vmem:[%s1624 + $0x1338] sm:$0xff]
        %v2335 = vld [vmem:[%s1624 + $0x1340] sm:$0xff]
        %v2336 = vld [vmem:[%s1624 + $0x1348] sm:$0xff]
        %v2337 = vld [vmem:[%s1624 + $0x1350] sm:$0xff]
        %v2338 = vld [vmem:[%s1624 + $0x1358] sm:$0xff]
        %v2339 = vld [vmem:[%s1624 + $0x1360] sm:$0xff]
        %v2340 = vld [vmem:[%s1624 + $0x1368] sm:$0xff]
        %v2341 = vld [vmem:[%s1624 + $0x1370] sm:$0xff]
        %v2342 = vld [vmem:[%s1624 + $0x1378] sm:$0xff]
        %v2343 = vld [vmem:[%s1624 + $0x1380] sm:$0xff]
        %v2344 = vld [vmem:[%s1624 + $0x1388] sm:$0xff]
        %v2345 = vld [vmem:[%s1624 + $0x1390] sm:$0xff]
        %v2346 = vld [vmem:[%s1624 + $0x1398] sm:$0xff]
        %v2347 = vld [vmem:[%s1624 + $0x13a0] sm:$0xff]
        %v2348 = vld [vmem:[%s1624 + $0x13a8] sm:$0xff]
        %v2349 = vld [vmem:[%s1624 + $0x13b0] sm:$0xff]
        %v2350 = vld [vmem:[%s1624 + $0x13b8] sm:$0xff]
        %v2351 = vld [vmem:[%s1624 + $0x13c0] sm:$0xff]
        %v2352 = vld [vmem:[%s1624 + $0x13c8] sm:$0xff]
        %v2353 = vld [vmem:[%s1624 + $0x13d0] sm:$0xff]
        %v2354 = vld [vmem:[%s1624 + $0x13d8] sm:$0xff]
        %v2355 = vld [vmem:[%s1624 + $0x13e0] sm:$0xff]
        %v2356 = vld [vmem:[%s1624 + $0x13e8] sm:$0xff]
        %v2357 = vld [vmem:[%s1624 + $0x13f0] sm:$0xff]
        %v2358 = vld [vmem:[%s1624 + $0x13f8] sm:$0xff]
        %v2359 = vld [vmem:[%s1624 + $0x1400] sm:$0xff]
        %v2360 = vld [vmem:[%s1624 + $0x1408] sm:$0xff]
        %v2361 = vld [vmem:[%s1624 + $0x1410] sm:$0xff]
        %v2362 = vld [vmem:[%s1624 + $0x1418] sm:$0xff]
        %v2363 = vld [vmem:[%s1624 + $0x1420] sm:$0xff]
        %v2364 = vld [vmem:[%s1624 + $0x1428] sm:$0xff]
        %v2365 = vld [vmem:[%s1624 + $0x1430] sm:$0xff]
        %v2366 = vld [vmem:[%s1624 + $0x1438] sm:$0xff]
        %v2367 = vld [vmem:[%s1624 + $0x1440] sm:$0xff]
        %v2368 = vld [vmem:[%s1624 + $0x1448] sm:$0xff]
        %v2369 = vld [vmem:[%s1624 + $0x1450] sm:$0xff]
        %v2370 = vld [vmem:[%s1624 + $0x1458] sm:$0xff]
        %v2371 = vld [vmem:[%s1624 + $0x1460] sm:$0xff]
        %v2372 = vld [vmem:[%s1624 + $0x1468] sm:$0xff]
        %v2373 = vld [vmem:[%s1624 + $0x1470] sm:$0xff]
        %v2374 = vld [vmem:[%s1624 + $0x1478] sm:$0xff]
        %v2375 = vld [vmem:[%s1624 + $0x1480] sm:$0xff]
        %v2376 = vld [vmem:[%s1624 + $0x1488] sm:$0xff]
        %v2377 = vld [vmem:[%s1624 + $0x1490] sm:$0xff]
        %v2378 = vld [vmem:[%s1624 + $0x1498] sm:$0xff]
        %v2379 = vld [vmem:[%s1624 + $0x14a0] sm:$0xff]
        %v2380 = vld [vmem:[%s1624 + $0x14a8] sm:$0xff]
        %v2381 = vld [vmem:[%s1624 + $0x14b0] sm:$0xff]
        %v2382 = vld [vmem:[%s1624 + $0x14b8] sm:$0xff]
        %v2383 = vld [vmem:[%s1624 + $0x14c0] sm:$0xff]
        %v2384 = vld [vmem:[%s1624 + $0x14c8] sm:$0xff]
        %v2385 = vld [vmem:[%s1624 + $0x14d0] sm:$0xff]
        %v2386 = vld [vmem:[%s1624 + $0x14d8] sm:$0xff]
        %v2387 = vld [vmem:[%s1624 + $0x14e0] sm:$0xff]
        %v2388 = vld [vmem:[%s1624 + $0x14e8] sm:$0xff]
        %v2389 = vld [vmem:[%s1624 + $0x14f0] sm:$0xff]
        %v2390 = vld [vmem:[%s1624 + $0x14f8] sm:$0xff]
        %v2391 = vld [vmem:[%s1624 + $0x1500] sm:$0xff]
        %v2392 = vld [vmem:[%s1624 + $0x1508] sm:$0xff]
        %v2393 = vld [vmem:[%s1624 + $0x1510] sm:$0xff]
        %v2394 = vld [vmem:[%s1624 + $0x1518] sm:$0xff]
        %v2395 = vld [vmem:[%s1624 + $0x1520] sm:$0xff]
        %v2396 = vld [vmem:[%s1624 + $0x1528] sm:$0xff]
        %v2397 = vld [vmem:[%s1624 + $0x1530] sm:$0xff]
        %v2398 = vld [vmem:[%s1624 + $0x1538] sm:$0xff]
        %v2399 = vld [vmem:[%s1624 + $0x1540] sm:$0xff]
        %v2400 = vld [vmem:[%s1624 + $0x1548] sm:$0xff]
        %v2401 = vld [vmem:[%s1624 + $0x1550] sm:$0xff]
        %v2402 = vld [vmem:[%s1624 + $0x1558] sm:$0xff]
        %v2403 = vld [vmem:[%s1624 + $0x1560] sm:$0xff]
        %v2404 = vld [vmem:[%s1624 + $0x1568] sm:$0xff]
        %v2405 = vld [vmem:[%s1624 + $0x1570] sm:$0xff]
        %v2406 = vld [vmem:[%s1624 + $0x1578] sm:$0xff]
        %v2407 = vld [vmem:[%s1624 + $0x1580] sm:$0xff]
        %v2408 = vld [vmem:[%s1624 + $0x1588] sm:$0xff]
        %v2409 = vld [vmem:[%s1624 + $0x1590] sm:$0xff]
        %v2410 = vld [vmem:[%s1624 + $0x1598] sm:$0xff]
        %v2411 = vld [vmem:[%s1624 + $0x15a0] sm:$0xff]
        %v2412 = vld [vmem:[%s1624 + $0x15a8] sm:$0xff]
        %v2413 = vld [vmem:[%s1624 + $0x15b0] sm:$0xff]
        %v2414 = vld [vmem:[%s1624 + $0x15b8] sm:$0xff]
        %v2415 = vld [vmem:[%s1624 + $0x15c0] sm:$0xff]
        %v2416 = vld [vmem:[%s1624 + $0x15c8] sm:$0xff]
        %v2417 = vld [vmem:[%s1624 + $0x15d0] sm:$0xff]
        %v2418 = vld [vmem:[%s1624 + $0x15d8] sm:$0xff]
        %v2419 = vld [vmem:[%s1624 + $0x15e0] sm:$0xff]
        %v2420 = vld [vmem:[%s1624 + $0x15e8] sm:$0xff]
        %v2421 = vld [vmem:[%s1624 + $0x15f0] sm:$0xff]
        %v2422 = vld [vmem:[%s1624 + $0x15f8] sm:$0xff]
        %2423 = vmatprep.subr.mxu0 %v1720
        %2424 = vmatpush1.msra.mxu0 %v1719
        %2425 = vmatprep.subr.mxu0 %v1731
        %2426 = vmatpush1.msra.mxu0 %v1730
        %2427 = vmatprep.subr.mxu0 %v1742
        %2428 = vmatpush1.msra.mxu0 %v1741
        %2429 = vmatprep.subr.mxu0 %v1753
        %2430 = vmatpush1.msra.mxu0 %v1752
        %2431 = vmatprep.subr.mxu0 %v1764
        %2432 = vmatpush1.msra.mxu0 %v1763
        %2433 = vmatprep.subr.mxu0 %v1775
        %2434 = vmatpush1.msra.mxu0 %v1774
        %2435 = vmatprep.subr.mxu0 %v1786
        %2436 = vmatpush1.msra.mxu0 %v1785
        %2437 = vmatprep.subr.mxu0 %v1797
        %2438 = vmatpush1.msra.mxu0 %v1796
        %2439 = vmatprep.subr.mxu0 %v1808
        %2440 = vmatpush1.msra.mxu0 %v1807
        %2441 = vmatprep.subr.mxu0 %v1819
        %2442 = vmatpush1.msra.mxu0 %v1818
        %2443 = vmatprep.subr.mxu0 %v1830
        %2444 = vmatpush1.msra.mxu0 %v1829
        %2445 = vmatprep.subr.mxu0 %v1841
        %2446 = vmatpush1.msra.mxu0 %v1840
        %2447 = vmatprep.subr.mxu0 %v1852
        %2448 = vmatpush1.msra.mxu0 %v1851
        %2449 = vmatprep.subr.mxu0 %v1863
        %2450 = vmatpush1.msra.mxu0 %v1862
        %2451 = vmatprep.subr.mxu0 %v1874
        %2452 = vmatpush1.msra.mxu0 %v1873
        %2453 = vmatprep.subr.mxu0 %v1885
        %2454 = vmatpush1.msra.mxu0 %v1884
        %2455 = vmatprep.subr.mxu0 %v1896
        %2456 = vmatpush1.msra.mxu0 %v1895
        %2457 = vmatprep.subr.mxu0 %v1907
        %2458 = vmatpush1.msra.mxu0 %v1906
        %2459 = vmatprep.subr.mxu0 %v1918
        %2460 = vmatpush1.msra.mxu0 %v1917
        %2461 = vmatprep.subr.mxu0 %v1929
        %2462 = vmatpush1.msra.mxu0 %v1928
        %2463 = vmatprep.subr.mxu0 %v1940
        %2464 = vmatpush1.msra.mxu0 %v1939
        %2465 = vmatprep.subr.mxu0 %v1951
        %2466 = vmatpush1.msra.mxu0 %v1950
        %2467 = vmatprep.subr.mxu0 %v1962
        %2468 = vmatpush1.msra.mxu0 %v1961
        %2469 = vmatprep.subr.mxu0 %v1973
        %2470 = vmatpush1.msra.mxu0 %v1972
        %2471 = vmatprep.subr.mxu0 %v1984
        %2472 = vmatpush1.msra.mxu0 %v1983
        %2473 = vmatprep.subr.mxu0 %v1995
        %2474 = vmatpush1.msra.mxu0 %v1994
        %2475 = vmatprep.subr.mxu0 %v2006
        %2476 = vmatpush1.msra.mxu0 %v2005
        %2477 = vmatprep.subr.mxu0 %v2017
        %2478 = vmatpush1.msra.mxu0 %v2016
        %2479 = vmatprep.subr.mxu0 %v2028
        %2480 = vmatpush1.msra.mxu0 %v2027
        %2481 = vmatprep.subr.mxu0 %v2039
        %2482 = vmatpush1.msra.mxu0 %v2038
        %2483 = vmatprep.subr.mxu0 %v2050
        %2484 = vmatpush1.msra.mxu0 %v2049
        %2485 = vmatprep.subr.mxu0 %v2061
        %2486 = vmatpush1.msra.mxu0 %v2060
        %2487 = vmatprep.mubr.f32.mxu0 %v1716
        %2488 = vmatmul.mubr.f32.gmra.mrb[0].mxu0 %v1715
        %v2489 = vpop.f32.mrb[0].mxu0
        %v2490 = vadd.f32 0.0, %v2489
        %v2491 = vpop.f32.mrb[0].mxu0
        %v2492 = vadd.f32 0.0, %v2491
        %2493 = vdwg.mxu0
        %2494 = vmatprep.subr.mxu0 %v2072
        %2495 = vmatpush1.msra.mxu0 %v2071
        %2496 = vmatprep.subr.mxu0 %v2083
        %2497 = vmatpush1.msra.mxu0 %v2082
        %2498 = vmatprep.subr.mxu0 %v2094
        %2499 = vmatpush1.msra.mxu0 %v2093
        %2500 = vmatprep.subr.mxu0 %v2105
        %2501 = vmatpush1.msra.mxu0 %v2104
        %2502 = vmatprep.subr.mxu0 %v2116
        %2503 = vmatpush1.msra.mxu0 %v2115
        %2504 = vmatprep.subr.mxu0 %v2127
        %2505 = vmatpush1.msra.mxu0 %v2126
        %2506 = vmatprep.subr.mxu0 %v2138
        %2507 = vmatpush1.msra.mxu0 %v2137
        %2508 = vmatprep.subr.mxu0 %v2149
        %2509 = vmatpush1.msra.mxu0 %v2148
        %2510 = vmatprep.subr.mxu0 %v2160
        %2511 = vmatpush1.msra.mxu0 %v2159
        %2512 = vmatprep.subr.mxu0 %v2171
        %2513 = vmatpush1.msra.mxu0 %v2170
        %2514 = vmatprep.subr.mxu0 %v2182
        %2515 = vmatpush1.msra.mxu0 %v2181
        %2516 = vmatprep.subr.mxu0 %v2193
        %2517 = vmatpush1.msra.mxu0 %v2192
        %2518 = vmatprep.subr.mxu0 %v2204
        %2519 = vmatpush1.msra.mxu0 %v2203
        %2520 = vmatprep.subr.mxu0 %v2215
        %2521 = vmatpush1.msra.mxu0 %v2214
        %2522 = vmatprep.subr.mxu0 %v2226
        %2523 = vmatpush1.msra.mxu0 %v2225
        %2524 = vmatprep.subr.mxu0 %v2237
        %2525 = vmatpush1.msra.mxu0 %v2236
        %2526 = vmatprep.subr.mxu0 %v2248
        %2527 = vmatpush1.msra.mxu0 %v2247
        %2528 = vmatprep.subr.mxu0 %v2259
        %2529 = vmatpush1.msra.mxu0 %v2258
        %2530 = vmatprep.subr.mxu0 %v2270
        %2531 = vmatpush1.msra.mxu0 %v2269
        %2532 = vmatprep.subr.mxu0 %v2281
        %2533 = vmatpush1.msra.mxu0 %v2280
        %2534 = vmatprep.subr.mxu0 %v2292
        %2535 = vmatpush1.msra.mxu0 %v2291
        %2536 = vmatprep.subr.mxu0 %v2303
        %2537 = vmatpush1.msra.mxu0 %v2302
        %2538 = vmatprep.subr.mxu0 %v2314
        %2539 = vmatpush1.msra.mxu0 %v2313
        %2540 = vmatprep.subr.mxu0 %v2325
        %2541 = vmatpush1.msra.mxu0 %v2324
        %2542 = vmatprep.subr.mxu0 %v2336
        %2543 = vmatpush1.msra.mxu0 %v2335
        %2544 = vmatprep.subr.mxu0 %v2347
        %2545 = vmatpush1.msra.mxu0 %v2346
        %2546 = vmatprep.subr.mxu0 %v2358
        %2547 = vmatpush1.msra.mxu0 %v2357
        %2548 = vmatprep.subr.mxu0 %v2369
        %2549 = vmatpush1.msra.mxu0 %v2368
        %2550 = vmatprep.subr.mxu0 %v2380
        %2551 = vmatpush1.msra.mxu0 %v2379
        %2552 = vmatprep.subr.mxu0 %v2391
        %2553 = vmatpush1.msra.mxu0 %v2390
        %2554 = vmatprep.subr.mxu0 %v2402
        %2555 = vmatpush1.msra.mxu0 %v2401
        %2556 = vmatprep.subr.mxu0 %v2413
        %2557 = vmatpush1.msra.mxu0 %v2412
        %2558 = vmatprep.mubr.f32.mxu0 %v1718
        %2559 = vmatmul.mubr.f32.gmra.mrb[0].mxu0 %v1717
        %v2560 = vpop.f32.mrb[0].mxu0
        %v2561 = vadd.f32 %v2490, %v2560
        %v2562 = vpop.f32.mrb[0].mxu0
        %v2563 = vadd.f32 %v2492, %v2562
        %2564 = vdwg.mxu0
        %2565 = vmatprep.subr.mxu0 %v1722
        %2566 = vmatpush1.msra.mxu0 %v1721
        %2567 = vmatprep.subr.mxu0 %v1733
        %2568 = vmatpush1.msra.mxu0 %v1732
        %2569 = vmatprep.subr.mxu0 %v1744
        %2570 = vmatpush1.msra.mxu0 %v1743
        %2571 = vmatprep.subr.mxu0 %v1755
        %2572 = vmatpush1.msra.mxu0 %v1754
        %2573 = vmatprep.subr.mxu0 %v1766
        %2574 = vmatpush1.msra.mxu0 %v1765
        %2575 = vmatprep.subr.mxu0 %v1777
        %2576 = vmatpush1.msra.mxu0 %v1776
        %2577 = vmatprep.subr.mxu0 %v1788
        %2578 = vmatpush1.msra.mxu0 %v1787
        %2579 = vmatprep.subr.mxu0 %v1799
        %2580 = vmatpush1.msra.mxu0 %v1798
        %2581 = vmatprep.subr.mxu0 %v1810
        %2582 = vmatpush1.msra.mxu0 %v1809
        %2583 = vmatprep.subr.mxu0 %v1821
        %2584 = vmatpush1.msra.mxu0 %v1820
        %2585 = vmatprep.subr.mxu0 %v1832
        %2586 = vmatpush1.msra.mxu0 %v1831
        %2587 = vmatprep.subr.mxu0 %v1843
        %2588 = vmatpush1.msra.mxu0 %v1842
        %2589 = vmatprep.subr.mxu0 %v1854
        %2590 = vmatpush1.msra.mxu0 %v1853
        %2591 = vmatprep.subr.mxu0 %v1865
        %2592 = vmatpush1.msra.mxu0 %v1864
        %2593 = vmatprep.subr.mxu0 %v1876
        %2594 = vmatpush1.msra.mxu0 %v1875
        %2595 = vmatprep.subr.mxu0 %v1887
        %2596 = vmatpush1.msra.mxu0 %v1886
        %2597 = vmatprep.subr.mxu0 %v1898
        %2598 = vmatpush1.msra.mxu0 %v1897
        %2599 = vmatprep.subr.mxu0 %v1909
        %2600 = vmatpush1.msra.mxu0 %v1908
        %2601 = vmatprep.subr.mxu0 %v1920
        %2602 = vmatpush1.msra.mxu0 %v1919
        %2603 = vmatprep.subr.mxu0 %v1931
        %2604 = vmatpush1.msra.mxu0 %v1930
        %2605 = vmatprep.subr.mxu0 %v1942
        %2606 = vmatpush1.msra.mxu0 %v1941
        %2607 = vmatprep.subr.mxu0 %v1953
        %2608 = vmatpush1.msra.mxu0 %v1952
        %2609 = vmatprep.subr.mxu0 %v1964
        %2610 = vmatpush1.msra.mxu0 %v1963
        %2611 = vmatprep.subr.mxu0 %v1975
        %2612 = vmatpush1.msra.mxu0 %v1974
        %2613 = vmatprep.subr.mxu0 %v1986
        %2614 = vmatpush1.msra.mxu0 %v1985
        %2615 = vmatprep.subr.mxu0 %v1997
        %2616 = vmatpush1.msra.mxu0 %v1996
        %2617 = vmatprep.subr.mxu0 %v2008
        %2618 = vmatpush1.msra.mxu0 %v2007
        %2619 = vmatprep.subr.mxu0 %v2019
        %2620 = vmatpush1.msra.mxu0 %v2018
        %2621 = vmatprep.subr.mxu0 %v2030
        %2622 = vmatpush1.msra.mxu0 %v2029
        %2623 = vmatprep.subr.mxu0 %v2041
        %2624 = vmatpush1.msra.mxu0 %v2040
        %2625 = vmatprep.subr.mxu0 %v2052
        %2626 = vmatpush1.msra.mxu0 %v2051
        %2627 = vmatprep.subr.mxu0 %v2063
        %2628 = vmatpush1.msra.mxu0 %v2062
        %2629 = vmatprep.mubr.f32.mxu0 %v1716
        %2630 = vmatmul.mubr.f32.gmra.mrb[0].mxu0 %v1715
        %v2631 = vpop.f32.mrb[0].mxu0
        %v2632 = vadd.f32 0.0, %v2631
        %v2633 = vpop.f32.mrb[0].mxu0
        %v2634 = vadd.f32 0.0, %v2633
        %2635 = vdwg.mxu0
        %2636 = vmatprep.subr.mxu0 %v2074
        %2637 = vmatpush1.msra.mxu0 %v2073
        %2638 = vmatprep.subr.mxu0 %v2085
        %2639 = vmatpush1.msra.mxu0 %v2084
        %2640 = vmatprep.subr.mxu0 %v2096
        %2641 = vmatpush1.msra.mxu0 %v2095
        %2642 = vmatprep.subr.mxu0 %v2107
        %2643 = vmatpush1.msra.mxu0 %v2106
        %2644 = vmatprep.subr.mxu0 %v2118
        %2645 = vmatpush1.msra.mxu0 %v2117
        %2646 = vmatprep.subr.mxu0 %v2129
        %2647 = vmatpush1.msra.mxu0 %v2128
        %2648 = vmatprep.subr.mxu0 %v2140
        %2649 = vmatpush1.msra.mxu0 %v2139
        %2650 = vmatprep.subr.mxu0 %v2151
        %2651 = vmatpush1.msra.mxu0 %v2150
        %2652 = vmatprep.subr.mxu0 %v2162
        %2653 = vmatpush1.msra.mxu0 %v2161
        %2654 = vmatprep.subr.mxu0 %v2173
        %2655 = vmatpush1.msra.mxu0 %v2172
        %2656 = vmatprep.subr.mxu0 %v2184
        %2657 = vmatpush1.msra.mxu0 %v2183
        %2658 = vmatprep.subr.mxu0 %v2195
        %2659 = vmatpush1.msra.mxu0 %v2194
        %2660 = vmatprep.subr.mxu0 %v2206
        %2661 = vmatpush1.msra.mxu0 %v2205
        %2662 = vmatprep.subr.mxu0 %v2217
        %2663 = vmatpush1.msra.mxu0 %v2216
        %2664 = vmatprep.subr.mxu0 %v2228
        %2665 = vmatpush1.msra.mxu0 %v2227
        %2666 = vmatprep.subr.mxu0 %v2239
        %2667 = vmatpush1.msra.mxu0 %v2238
        %2668 = vmatprep.subr.mxu0 %v2250
        %2669 = vmatpush1.msra.mxu0 %v2249
        %2670 = vmatprep.subr.mxu0 %v2261
        %2671 = vmatpush1.msra.mxu0 %v2260
        %2672 = vmatprep.subr.mxu0 %v2272
        %2673 = vmatpush1.msra.mxu0 %v2271
        %2674 = vmatprep.subr.mxu0 %v2283
        %2675 = vmatpush1.msra.mxu0 %v2282
        %2676 = vmatprep.subr.mxu0 %v2294
        %2677 = vmatpush1.msra.mxu0 %v2293
        %2678 = vmatprep.subr.mxu0 %v2305
        %2679 = vmatpush1.msra.mxu0 %v2304
        %2680 = vmatprep.subr.mxu0 %v2316
        %2681 = vmatpush1.msra.mxu0 %v2315
        %2682 = vmatprep.subr.mxu0 %v2327
        %2683 = vmatpush1.msra.mxu0 %v2326
        %2684 = vmatprep.subr.mxu0 %v2338
        %2685 = vmatpush1.msra.mxu0 %v2337
        %2686 = vmatprep.subr.mxu0 %v2349
        %2687 = vmatpush1.msra.mxu0 %v2348
        %2688 = vmatprep.subr.mxu0 %v2360
        %2689 = vmatpush1.msra.mxu0 %v2359
        %2690 = vmatprep.subr.mxu0 %v2371
        %2691 = vmatpush1.msra.mxu0 %v2370
        %2692 = vmatprep.subr.mxu0 %v2382
        %2693 = vmatpush1.msra.mxu0 %v2381
        %2694 = vmatprep.subr.mxu0 %v2393
        %2695 = vmatpush1.msra.mxu0 %v2392
        %2696 = vmatprep.subr.mxu0 %v2404
        %2697 = vmatpush1.msra.mxu0 %v2403
        %2698 = vmatprep.subr.mxu0 %v2415
        %2699 = vmatpush1.msra.mxu0 %v2414
        %2700 = vmatprep.mubr.f32.mxu0 %v1718
        %2701 = vmatmul.mubr.f32.gmra.mrb[0].mxu0 %v1717
        %v2702 = vpop.f32.mrb[0].mxu0
        %v2703 = vadd.f32 %v2632, %v2702
        %v2704 = vpop.f32.mrb[0].mxu0
        %v2705 = vadd.f32 %v2634, %v2704
        %2706 = vdwg.mxu0
        %2707 = vmatprep.subr.mxu0 %v1724
        %2708 = vmatpush1.msra.mxu0 %v1723
        %2709 = vmatprep.subr.mxu0 %v1735
        %2710 = vmatpush1.msra.mxu0 %v1734
        %2711 = vmatprep.subr.mxu0 %v1746
        %2712 = vmatpush1.msra.mxu0 %v1745
        %2713 = vmatprep.subr.mxu0 %v1757
        %2714 = vmatpush1.msra.mxu0 %v1756
        %2715 = vmatprep.subr.mxu0 %v1768
        %2716 = vmatpush1.msra.mxu0 %v1767
        %2717 = vmatprep.subr.mxu0 %v1779
        %2718 = vmatpush1.msra.mxu0 %v1778
        %2719 = vmatprep.subr.mxu0 %v1790
        %2720 = vmatpush1.msra.mxu0 %v1789
        %2721 = vmatprep.subr.mxu0 %v1801
        %2722 = vmatpush1.msra.mxu0 %v1800
        %2723 = vmatprep.subr.mxu0 %v1812
        %2724 = vmatpush1.msra.mxu0 %v1811
        %2725 = vmatprep.subr.mxu0 %v1823
        %2726 = vmatpush1.msra.mxu0 %v1822
        %2727 = vmatprep.subr.mxu0 %v1834
        %2728 = vmatpush1.msra.mxu0 %v1833
        %2729 = vmatprep.subr.mxu0 %v1845
        %2730 = vmatpush1.msra.mxu0 %v1844
        %2731 = vmatprep.subr.mxu0 %v1856
        %2732 = vmatpush1.msra.mxu0 %v1855
        %2733 = vmatprep.subr.mxu0 %v1867
        %2734 = vmatpush1.msra.mxu0 %v1866
        %2735 = vmatprep.subr.mxu0 %v1878
        %2736 = vmatpush1.msra.mxu0 %v1877
        %2737 = vmatprep.subr.mxu0 %v1889
        %2738 = vmatpush1.msra.mxu0 %v1888
        %2739 = vmatprep.subr.mxu0 %v1900
        %2740 = vmatpush1.msra.mxu0 %v1899
        %2741 = vmatprep.subr.mxu0 %v1911
        %2742 = vmatpush1.msra.mxu0 %v1910
        %2743 = vmatprep.subr.mxu0 %v1922
        %2744 = vmatpush1.msra.mxu0 %v1921
        %2745 = vmatprep.subr.mxu0 %v1933
        %2746 = vmatpush1.msra.mxu0 %v1932
        %2747 = vmatprep.subr.mxu0 %v1944
        %2748 = vmatpush1.msra.mxu0 %v1943
        %2749 = vmatprep.subr.mxu0 %v1955
        %2750 = vmatpush1.msra.mxu0 %v1954
        %2751 = vmatprep.subr.mxu0 %v1966
        %2752 = vmatpush1.msra.mxu0 %v1965
        %2753 = vmatprep.subr.mxu0 %v1977
        %2754 = vmatpush1.msra.mxu0 %v1976
        %2755 = vmatprep.subr.mxu0 %v1988
        %2756 = vmatpush1.msra.mxu0 %v1987
        %2757 = vmatprep.subr.mxu0 %v1999
        %2758 = vmatpush1.msra.mxu0 %v1998
        %2759 = vmatprep.subr.mxu0 %v2010
        %2760 = vmatpush1.msra.mxu0 %v2009
        %2761 = vmatprep.subr.mxu0 %v2021
        %2762 = vmatpush1.msra.mxu0 %v2020
        %2763 = vmatprep.subr.mxu0 %v2032
        %2764 = vmatpush1.msra.mxu0 %v2031
        %2765 = vmatprep.subr.mxu0 %v2043
        %2766 = vmatpush1.msra.mxu0 %v2042
        %2767 = vmatprep.subr.mxu0 %v2054
        %2768 = vmatpush1.msra.mxu0 %v2053
        %2769 = vmatprep.subr.mxu0 %v2065
        %2770 = vmatpush1.msra.mxu0 %v2064
        %2771 = vmatprep.mubr.f32.mxu0 %v1716
        %2772 = vmatmul.mubr.f32.gmra.mrb[0].mxu0 %v1715
        %v2773 = vpop.f32.mrb[0].mxu0
        %v2774 = vadd.f32 0.0, %v2773
        %v2775 = vpop.f32.mrb[0].mxu0
        %v2776 = vadd.f32 0.0, %v2775
        %2777 = vdwg.mxu0
        %2778 = vmatprep.subr.mxu0 %v2076
        %2779 = vmatpush1.msra.mxu0 %v2075
        %2780 = vmatprep.subr.mxu0 %v2087
        %2781 = vmatpush1.msra.mxu0 %v2086
        %2782 = vmatprep.subr.mxu0 %v2098
        %2783 = vmatpush1.msra.mxu0 %v2097
        %2784 = vmatprep.subr.mxu0 %v2109
        %2785 = vmatpush1.msra.mxu0 %v2108
        %2786 = vmatprep.subr.mxu0 %v2120
        %2787 = vmatpush1.msra.mxu0 %v2119
        %2788 = vmatprep.subr.mxu0 %v2131
        %2789 = vmatpush1.msra.mxu0 %v2130
        %2790 = vmatprep.subr.mxu0 %v2142
        %2791 = vmatpush1.msra.mxu0 %v2141
        %2792 = vmatprep.subr.mxu0 %v2153
        %2793 = vmatpush1.msra.mxu0 %v2152
        %2794 = vmatprep.subr.mxu0 %v2164
        %2795 = vmatpush1.msra.mxu0 %v2163
        %2796 = vmatprep.subr.mxu0 %v2175
        %2797 = vmatpush1.msra.mxu0 %v2174
        %2798 = vmatprep.subr.mxu0 %v2186
        %2799 = vmatpush1.msra.mxu0 %v2185
        %2800 = vmatprep.subr.mxu0 %v2197
        %2801 = vmatpush1.msra.mxu0 %v2196
        %2802 = vmatprep.subr.mxu0 %v2208
        %2803 = vmatpush1.msra.mxu0 %v2207
        %2804 = vmatprep.subr.mxu0 %v2219
        %2805 = vmatpush1.msra.mxu0 %v2218
        %2806 = vmatprep.subr.mxu0 %v2230
        %2807 = vmatpush1.msra.mxu0 %v2229
        %2808 = vmatprep.subr.mxu0 %v2241
        %2809 = vmatpush1.msra.mxu0 %v2240
        %2810 = vmatprep.subr.mxu0 %v2252
        %2811 = vmatpush1.msra.mxu0 %v2251
        %2812 = vmatprep.subr.mxu0 %v2263
        %2813 = vmatpush1.msra.mxu0 %v2262
        %2814 = vmatprep.subr.mxu0 %v2274
        %2815 = vmatpush1.msra.mxu0 %v2273
        %2816 = vmatprep.subr.mxu0 %v2285
        %2817 = vmatpush1.msra.mxu0 %v2284
        %2818 = vmatprep.subr.mxu0 %v2296
        %2819 = vmatpush1.msra.mxu0 %v2295
        %2820 = vmatprep.subr.mxu0 %v2307
        %2821 = vmatpush1.msra.mxu0 %v2306
        %2822 = vmatprep.subr.mxu0 %v2318
        %2823 = vmatpush1.msra.mxu0 %v2317
        %2824 = vmatprep.subr.mxu0 %v2329
        %2825 = vmatpush1.msra.mxu0 %v2328
        %2826 = vmatprep.subr.mxu0 %v2340
        %2827 = vmatpush1.msra.mxu0 %v2339
        %2828 = vmatprep.subr.mxu0 %v2351
        %2829 = vmatpush1.msra.mxu0 %v2350
        %2830 = vmatprep.subr.mxu0 %v2362
        %2831 = vmatpush1.msra.mxu0 %v2361
        %2832 = vmatprep.subr.mxu0 %v2373
        %2833 = vmatpush1.msra.mxu0 %v2372
        %2834 = vmatprep.subr.mxu0 %v2384
        %2835 = vmatpush1.msra.mxu0 %v2383
        %2836 = vmatprep.subr.mxu0 %v2395
        %2837 = vmatpush1.msra.mxu0 %v2394
        %2838 = vmatprep.subr.mxu0 %v2406
        %2839 = vmatpush1.msra.mxu0 %v2405
        %2840 = vmatprep.subr.mxu0 %v2417
        %2841 = vmatpush1.msra.mxu0 %v2416
        %2842 = vmatprep.mubr.f32.mxu0 %v1718
        %2843 = vmatmul.mubr.f32.gmra.mrb[0].mxu0 %v1717
        %v2844 = vpop.f32.mrb[0].mxu0
        %v2845 = vadd.f32 %v2774, %v2844
        %v2846 = vpop.f32.mrb[0].mxu0
        %v2847 = vadd.f32 %v2776, %v2846
        %2848 = vdwg.mxu0
        %2849 = vmatprep.subr.mxu0 %v1726
        %2850 = vmatpush1.msra.mxu0 %v1725
        %2851 = vmatprep.subr.mxu0 %v1737
        %2852 = vmatpush1.msra.mxu0 %v1736
        %2853 = vmatprep.subr.mxu0 %v1748
        %2854 = vmatpush1.msra.mxu0 %v1747
        %2855 = vmatprep.subr.mxu0 %v1759
        %2856 = vmatpush1.msra.mxu0 %v1758
        %2857 = vmatprep.subr.mxu0 %v1770
        %2858 = vmatpush1.msra.mxu0 %v1769
        %2859 = vmatprep.subr.mxu0 %v1781
        %2860 = vmatpush1.msra.mxu0 %v1780
        %2861 = vmatprep.subr.mxu0 %v1792
        %2862 = vmatpush1.msra.mxu0 %v1791
        %2863 = vmatprep.subr.mxu0 %v1803
        %2864 = vmatpush1.msra.mxu0 %v1802
        %2865 = vmatprep.subr.mxu0 %v1814
        %2866 = vmatpush1.msra.mxu0 %v1813
        %2867 = vmatprep.subr.mxu0 %v1825
        %2868 = vmatpush1.msra.mxu0 %v1824
        %2869 = vmatprep.subr.mxu0 %v1836
        %2870 = vmatpush1.msra.mxu0 %v1835
        %2871 = vmatprep.subr.mxu0 %v1847
        %2872 = vmatpush1.msra.mxu0 %v1846
        %2873 = vmatprep.subr.mxu0 %v1858
        %2874 = vmatpush1.msra.mxu0 %v1857
        %2875 = vmatprep.subr.mxu0 %v1869
        %2876 = vmatpush1.msra.mxu0 %v1868
        %2877 = vmatprep.subr.mxu0 %v1880
        %2878 = vmatpush1.msra.mxu0 %v1879
        %2879 = vmatprep.subr.mxu0 %v1891
        %2880 = vmatpush1.msra.mxu0 %v1890
        %2881 = vmatprep.subr.mxu0 %v1902
        %2882 = vmatpush1.msra.mxu0 %v1901
        %2883 = vmatprep.subr.mxu0 %v1913
        %2884 = vmatpush1.msra.mxu0 %v1912
        %2885 = vmatprep.subr.mxu0 %v1924
        %2886 = vmatpush1.msra.mxu0 %v1923
        %2887 = vmatprep.subr.mxu0 %v1935
        %2888 = vmatpush1.msra.mxu0 %v1934
        %2889 = vmatprep.subr.mxu0 %v1946
        %2890 = vmatpush1.msra.mxu0 %v1945
        %2891 = vmatprep.subr.mxu0 %v1957
        %2892 = vmatpush1.msra.mxu0 %v1956
        %2893 = vmatprep.subr.mxu0 %v1968
        %2894 = vmatpush1.msra.mxu0 %v1967
        %2895 = vmatprep.subr.mxu0 %v1979
        %2896 = vmatpush1.msra.mxu0 %v1978
        %2897 = vmatprep.subr.mxu0 %v1990
        %2898 = vmatpush1.msra.mxu0 %v1989
        %2899 = vmatprep.subr.mxu0 %v2001
        %2900 = vmatpush1.msra.mxu0 %v2000
        %2901 = vmatprep.subr.mxu0 %v2012
        %2902 = vmatpush1.msra.mxu0 %v2011
        %2903 = vmatprep.subr.mxu0 %v2023
        %2904 = vmatpush1.msra.mxu0 %v2022
        %2905 = vmatprep.subr.mxu0 %v2034
        %2906 = vmatpush1.msra.mxu0 %v2033
        %2907 = vmatprep.subr.mxu0 %v2045
        %2908 = vmatpush1.msra.mxu0 %v2044
        %2909 = vmatprep.subr.mxu0 %v2056
        %2910 = vmatpush1.msra.mxu0 %v2055
        %2911 = vmatprep.subr.mxu0 %v2067
        %2912 = vmatpush1.msra.mxu0 %v2066
        %2913 = vmatprep.mubr.f32.mxu0 %v1716
        %2914 = vmatmul.mubr.f32.gmra.mrb[0].mxu0 %v1715
        %v2915 = vpop.f32.mrb[0].mxu0
        %v2916 = vadd.f32 0.0, %v2915
        %v2917 = vpop.f32.mrb[0].mxu0
        %v2918 = vadd.f32 0.0, %v2917
        %2919 = vdwg.mxu0
        %2920 = vmatprep.subr.mxu0 %v2078
        %2921 = vmatpush1.msra.mxu0 %v2077
        %2922 = vmatprep.subr.mxu0 %v2089
        %2923 = vmatpush1.msra.mxu0 %v2088
        %2924 = vmatprep.subr.mxu0 %v2100
        %2925 = vmatpush1.msra.mxu0 %v2099
        %2926 = vmatprep.subr.mxu0 %v2111
        %2927 = vmatpush1.msra.mxu0 %v2110
        %2928 = vmatprep.subr.mxu0 %v2122
        %2929 = vmatpush1.msra.mxu0 %v2121
        %2930 = vmatprep.subr.mxu0 %v2133
        %2931 = vmatpush1.msra.mxu0 %v2132
        %2932 = vmatprep.subr.mxu0 %v2144
        %2933 = vmatpush1.msra.mxu0 %v2143
        %2934 = vmatprep.subr.mxu0 %v2155
        %2935 = vmatpush1.msra.mxu0 %v2154
        %2936 = vmatprep.subr.mxu0 %v2166
        %2937 = vmatpush1.msra.mxu0 %v2165
        %2938 = vmatprep.subr.mxu0 %v2177
        %2939 = vmatpush1.msra.mxu0 %v2176
        %2940 = vmatprep.subr.mxu0 %v2188
        %2941 = vmatpush1.msra.mxu0 %v2187
        %2942 = vmatprep.subr.mxu0 %v2199
        %2943 = vmatpush1.msra.mxu0 %v2198
        %2944 = vmatprep.subr.mxu0 %v2210
        %2945 = vmatpush1.msra.mxu0 %v2209
        %2946 = vmatprep.subr.mxu0 %v2221
        %2947 = vmatpush1.msra.mxu0 %v2220
        %2948 = vmatprep.subr.mxu0 %v2232
        %2949 = vmatpush1.msra.mxu0 %v2231
        %2950 = vmatprep.subr.mxu0 %v2243
        %2951 = vmatpush1.msra.mxu0 %v2242
        %2952 = vmatprep.subr.mxu0 %v2254
        %2953 = vmatpush1.msra.mxu0 %v2253
        %2954 = vmatprep.subr.mxu0 %v2265
        %2955 = vmatpush1.msra.mxu0 %v2264
        %2956 = vmatprep.subr.mxu0 %v2276
        %2957 = vmatpush1.msra.mxu0 %v2275
        %2958 = vmatprep.subr.mxu0 %v2287
        %2959 = vmatpush1.msra.mxu0 %v2286
        %2960 = vmatprep.subr.mxu0 %v2298
        %2961 = vmatpush1.msra.mxu0 %v2297
        %2962 = vmatprep.subr.mxu0 %v2309
        %2963 = vmatpush1.msra.mxu0 %v2308
        %2964 = vmatprep.subr.mxu0 %v2320
        %2965 = vmatpush1.msra.mxu0 %v2319
        %2966 = vmatprep.subr.mxu0 %v2331
        %2967 = vmatpush1.msra.mxu0 %v2330
        %2968 = vmatprep.subr.mxu0 %v2342
        %2969 = vmatpush1.msra.mxu0 %v2341
        %2970 = vmatprep.subr.mxu0 %v2353
        %2971 = vmatpush1.msra.mxu0 %v2352
        %2972 = vmatprep.subr.mxu0 %v2364
        %2973 = vmatpush1.msra.mxu0 %v2363
        %2974 = vmatprep.subr.mxu0 %v2375
        %2975 = vmatpush1.msra.mxu0 %v2374
        %2976 = vmatprep.subr.mxu0 %v2386
        %2977 = vmatpush1.msra.mxu0 %v2385
        %2978 = vmatprep.subr.mxu0 %v2397
        %2979 = vmatpush1.msra.mxu0 %v2396
        %2980 = vmatprep.subr.mxu0 %v2408
        %2981 = vmatpush1.msra.mxu0 %v2407
        %2982 = vmatprep.subr.mxu0 %v2419
        %2983 = vmatpush1.msra.mxu0 %v2418
        %2984 = vmatprep.mubr.f32.mxu0 %v1718
        %2985 = vmatmul.mubr.f32.gmra.mrb[0].mxu0 %v1717
        %v2986 = vpop.f32.mrb[0].mxu0
        %v2987 = vadd.f32 %v2916, %v2986
        %v2988 = vpop.f32.mrb[0].mxu0
        %v2989 = vadd.f32 %v2918, %v2988
        %2990 = vdwg.mxu0
        %2991 = vmatprep.subr.mxu0 %v1728
        %2992 = vmatpush1.msra.mxu0 %v1727
        %2993 = vmatprep.subr.mxu0 %v1739
        %2994 = vmatpush1.msra.mxu0 %v1738
        %2995 = vmatprep.subr.mxu0 %v1750
        %2996 = vmatpush1.msra.mxu0 %v1749
        %2997 = vmatprep.subr.mxu0 %v1761
        %2998 = vmatpush1.msra.mxu0 %v1760
        %2999 = vmatprep.subr.mxu0 %v1772
        %3000 = vmatpush1.msra.mxu0 %v1771
        %3001 = vmatprep.subr.mxu0 %v1783
        %3002 = vmatpush1.msra.mxu0 %v1782
        %3003 = vmatprep.subr.mxu0 %v1794
        %3004 = vmatpush1.msra.mxu0 %v1793
        %3005 = vmatprep.subr.mxu0 %v1805
        %3006 = vmatpush1.msra.mxu0 %v1804
        %3007 = vmatprep.subr.mxu0 %v1816
        %3008 = vmatpush1.msra.mxu0 %v1815
        %3009 = vmatprep.subr.mxu0 %v1827
        %3010 = vmatpush1.msra.mxu0 %v1826
        %3011 = vmatprep.subr.mxu0 %v1838
        %3012 = vmatpush1.msra.mxu0 %v1837
        %3013 = vmatprep.subr.mxu0 %v1849
        %3014 = vmatpush1.msra.mxu0 %v1848
        %3015 = vmatprep.subr.mxu0 %v1860
        %3016 = vmatpush1.msra.mxu0 %v1859
        %3017 = vmatprep.subr.mxu0 %v1871
        %3018 = vmatpush1.msra.mxu0 %v1870
        %3019 = vmatprep.subr.mxu0 %v1882
        %3020 = vmatpush1.msra.mxu0 %v1881
        %3021 = vmatprep.subr.mxu0 %v1893
        %3022 = vmatpush1.msra.mxu0 %v1892
        %3023 = vmatprep.subr.mxu0 %v1904
        %3024 = vmatpush1.msra.mxu0 %v1903
        %3025 = vmatprep.subr.mxu0 %v1915
        %3026 = vmatpush1.msra.mxu0 %v1914
        %3027 = vmatprep.subr.mxu0 %v1926
        %3028 = vmatpush1.msra.mxu0 %v1925
        %3029 = vmatprep.subr.mxu0 %v1937
        %3030 = vmatpush1.msra.mxu0 %v1936
        %3031 = vmatprep.subr.mxu0 %v1948
        %3032 = vmatpush1.msra.mxu0 %v1947
        %3033 = vmatprep.subr.mxu0 %v1959
        %3034 = vmatpush1.msra.mxu0 %v1958
        %3035 = vmatprep.subr.mxu0 %v1970
        %3036 = vmatpush1.msra.mxu0 %v1969
        %3037 = vmatprep.subr.mxu0 %v1981
        %3038 = vmatpush1.msra.mxu0 %v1980
        %3039 = vmatprep.subr.mxu0 %v1992
        %3040 = vmatpush1.msra.mxu0 %v1991
        %3041 = vmatprep.subr.mxu0 %v2003
        %3042 = vmatpush1.msra.mxu0 %v2002
        %3043 = vmatprep.subr.mxu0 %v2014
        %3044 = vmatpush1.msra.mxu0 %v2013
        %3045 = vmatprep.subr.mxu0 %v2025
        %3046 = vmatpush1.msra.mxu0 %v2024
        %3047 = vmatprep.subr.mxu0 %v2036
        %3048 = vmatpush1.msra.mxu0 %v2035
        %3049 = vmatprep.subr.mxu0 %v2047
        %3050 = vmatpush1.msra.mxu0 %v2046
        %3051 = vmatprep.subr.mxu0 %v2058
        %3052 = vmatpush1.msra.mxu0 %v2057
        %3053 = vmatprep.subr.mxu0 %v2069
        %3054 = vmatpush1.msra.mxu0 %v2068
        %3055 = vmatprep.mubr.f32.mxu0 %v1716
        %3056 = vmatmul.mubr.f32.gmra.mrb[0].mxu0 %v1715
        %v3057 = vpop.f32.mrb[0].mxu0
        %v3058 = vadd.f32 0.0, %v3057
        %v3059 = vpop.f32.mrb[0].mxu0
        %v3060 = vadd.f32 0.0, %v3059
        %3061 = vdwg.mxu0
        %3062 = vmatprep.subr.mxu0 %v2080
        %3063 = vmatpush1.msra.mxu0 %v2079
        %3064 = vmatprep.subr.mxu0 %v2091
        %3065 = vmatpush1.msra.mxu0 %v2090
        %3066 = vmatprep.subr.mxu0 %v2102
        %3067 = vmatpush1.msra.mxu0 %v2101
        %3068 = vmatprep.subr.mxu0 %v2113
        %3069 = vmatpush1.msra.mxu0 %v2112
        %3070 = vmatprep.subr.mxu0 %v2124
        %3071 = vmatpush1.msra.mxu0 %v2123
        %3072 = vmatprep.subr.mxu0 %v2135
        %3073 = vmatpush1.msra.mxu0 %v2134
        %3074 = vmatprep.subr.mxu0 %v2146
        %3075 = vmatpush1.msra.mxu0 %v2145
        %3076 = vmatprep.subr.mxu0 %v2157
        %3077 = vmatpush1.msra.mxu0 %v2156
        %3078 = vmatprep.subr.mxu0 %v2168
        %3079 = vmatpush1.msra.mxu0 %v2167
        %3080 = vmatprep.subr.mxu0 %v2179
        %3081 = vmatpush1.msra.mxu0 %v2178
        %3082 = vmatprep.subr.mxu0 %v2190
        %3083 = vmatpush1.msra.mxu0 %v2189
        %3084 = vmatprep.subr.mxu0 %v2201
        %3085 = vmatpush1.msra.mxu0 %v2200
        %3086 = vmatprep.subr.mxu0 %v2212
        %3087 = vmatpush1.msra.mxu0 %v2211
        %3088 = vmatprep.subr.mxu0 %v2223
        %3089 = vmatpush1.msra.mxu0 %v2222
        %3090 = vmatprep.subr.mxu0 %v2234
        %3091 = vmatpush1.msra.mxu0 %v2233
        %3092 = vmatprep.subr.mxu0 %v2245
        %3093 = vmatpush1.msra.mxu0 %v2244
        %3094 = vmatprep.subr.mxu0 %v2256
        %3095 = vmatpush1.msra.mxu0 %v2255
        %3096 = vmatprep.subr.mxu0 %v2267
        %3097 = vmatpush1.msra.mxu0 %v2266
        %3098 = vmatprep.subr.mxu0 %v2278
        %3099 = vmatpush1.msra.mxu0 %v2277
        %3100 = vmatprep.subr.mxu0 %v2289
        %3101 = vmatpush1.msra.mxu0 %v2288
        %3102 = vmatprep.subr.mxu0 %v2300
        %3103 = vmatpush1.msra.mxu0 %v2299
        %3104 = vmatprep.subr.mxu0 %v2311
        %3105 = vmatpush1.msra.mxu0 %v2310
        %3106 = vmatprep.subr.mxu0 %v2322
        %3107 = vmatpush1.msra.mxu0 %v2321
        %3108 = vmatprep.subr.mxu0 %v2333
        %3109 = vmatpush1.msra.mxu0 %v2332
        %3110 = vmatprep.subr.mxu0 %v2344
        %3111 = vmatpush1.msra.mxu0 %v2343
        %3112 = vmatprep.subr.mxu0 %v2355
        %3113 = vmatpush1.msra.mxu0 %v2354
        %3114 = vmatprep.subr.mxu0 %v2366
        %3115 = vmatpush1.msra.mxu0 %v2365
        %3116 = vmatprep.subr.mxu0 %v2377
        %3117 = vmatpush1.msra.mxu0 %v2376
        %3118 = vmatprep.subr.mxu0 %v2388
        %3119 = vmatpush1.msra.mxu0 %v2387
        %3120 = vmatprep.subr.mxu0 %v2399
        %3121 = vmatpush1.msra.mxu0 %v2398
        %3122 = vmatprep.subr.mxu0 %v2410
        %3123 = vmatpush1.msra.mxu0 %v2409
        %3124 = vmatprep.subr.mxu0 %v2421
        %3125 = vmatpush1.msra.mxu0 %v2420
        %3126 = vmatprep.mubr.f32.mxu0 %v1718
        %3127 = vmatmul.mubr.f32.gmra.mrb[0].mxu0 %v1717
        %v3128 = vpop.f32.mrb[0].mxu0
        %v3129 = vadd.f32 %v3058, %v3128
        %v3130 = vpop.f32.mrb[0].mxu0
        %v3131 = vadd.f32 %v3060, %v3130
        %3132 = vdwg.mxu0
        %3133 = vmatprep.subr.mxu0 0.0
        %3134 = vmatpush1.msra.mxu0 %v1729
        %3135 = vmatprep.subr.mxu0 0.0
        %3136 = vmatpush1.msra.mxu0 %v1740
        %3137 = vmatprep.subr.mxu0 0.0
        %3138 = vmatpush1.msra.mxu0 %v1751
        %3139 = vmatprep.subr.mxu0 0.0
        %3140 = vmatpush1.msra.mxu0 %v1762
        %3141 = vmatprep.subr.mxu0 0.0
        %3142 = vmatpush1.msra.mxu0 %v1773
        %3143 = vmatprep.subr.mxu0 0.0
        %3144 = vmatpush1.msra.mxu0 %v1784
        %3145 = vmatprep.subr.mxu0 0.0
        %3146 = vmatpush1.msra.mxu0 %v1795
        %3147 = vmatprep.subr.mxu0 0.0
        %3148 = vmatpush1.msra.mxu0 %v1806
        %3149 = vmatprep.subr.mxu0 0.0
        %3150 = vmatpush1.msra.mxu0 %v1817
        %3151 = vmatprep.subr.mxu0 0.0
        %3152 = vmatpush1.msra.mxu0 %v1828
        %3153 = vmatprep.subr.mxu0 0.0
        %3154 = vmatpush1.msra.mxu0 %v1839
        %3155 = vmatprep.subr.mxu0 0.0
        %3156 = vmatpush1.msra.mxu0 %v1850
        %3157 = vmatprep.subr.mxu0 0.0
        %3158 = vmatpush1.msra.mxu0 %v1861
        %3159 = vmatprep.subr.mxu0 0.0
        %3160 = vmatpush1.msra.mxu0 %v1872
        %3161 = vmatprep.subr.mxu0 0.0
        %3162 = vmatpush1.msra.mxu0 %v1883
        %3163 = vmatprep.subr.mxu0 0.0
        %3164 = vmatpush1.msra.mxu0 %v1894
        %3165 = vmatprep.subr.mxu0 0.0
        %3166 = vmatpush1.msra.mxu0 %v1905
        %3167 = vmatprep.subr.mxu0 0.0
        %3168 = vmatpush1.msra.mxu0 %v1916
        %3169 = vmatprep.subr.mxu0 0.0
        %3170 = vmatpush1.msra.mxu0 %v1927
        %3171 = vmatprep.subr.mxu0 0.0
        %3172 = vmatpush1.msra.mxu0 %v1938
        %3173 = vmatprep.subr.mxu0 0.0
        %3174 = vmatpush1.msra.mxu0 %v1949
        %3175 = vmatprep.subr.mxu0 0.0
        %3176 = vmatpush1.msra.mxu0 %v1960
        %3177 = vmatprep.subr.mxu0 0.0
        %3178 = vmatpush1.msra.mxu0 %v1971
        %3179 = vmatprep.subr.mxu0 0.0
        %3180 = vmatpush1.msra.mxu0 %v1982
        %3181 = vmatprep.subr.mxu0 0.0
        %3182 = vmatpush1.msra.mxu0 %v1993
        %3183 = vmatprep.subr.mxu0 0.0
        %3184 = vmatpush1.msra.mxu0 %v2004
        %3185 = vmatprep.subr.mxu0 0.0
        %3186 = vmatpush1.msra.mxu0 %v2015
        %3187 = vmatprep.subr.mxu0 0.0
        %3188 = vmatpush1.msra.mxu0 %v2026
        %3189 = vmatprep.subr.mxu0 0.0
        %3190 = vmatpush1.msra.mxu0 %v2037
        %3191 = vmatprep.subr.mxu0 0.0
        %3192 = vmatpush1.msra.mxu0 %v2048
        %3193 = vmatprep.subr.mxu0 0.0
        %3194 = vmatpush1.msra.mxu0 %v2059
        %3195 = vmatprep.subr.mxu0 0.0
        %3196 = vmatpush1.msra.mxu0 %v2070
        %3197 = vmatprep.mubr.f32.mxu0 %v1716
        %3198 = vmatmul.mubr.f32.gmra.mrb[0].mxu0 %v1715
        %v3199 = vpop.f32.mrb[0].mxu0
        %v3200 = vadd.f32 0.0, %v3199
        %v3201 = vpop.f32.mrb[0].mxu0
        %3202 = vdwg.mxu0
        %3203 = vmatprep.subr.mxu0 0.0
        %3204 = vmatpush1.msra.mxu0 %v2081
        %3205 = vmatprep.subr.mxu0 0.0
        %3206 = vmatpush1.msra.mxu0 %v2092
        %3207 = vmatprep.subr.mxu0 0.0
        %3208 = vmatpush1.msra.mxu0 %v2103
        %3209 = vmatprep.subr.mxu0 0.0
        %3210 = vmatpush1.msra.mxu0 %v2114
        %3211 = vmatprep.subr.mxu0 0.0
        %3212 = vmatpush1.msra.mxu0 %v2125
        %3213 = vmatprep.subr.mxu0 0.0
        %3214 = vmatpush1.msra.mxu0 %v2136
        %3215 = vmatprep.subr.mxu0 0.0
        %3216 = vmatpush1.msra.mxu0 %v2147
        %3217 = vmatprep.subr.mxu0 0.0
        %3218 = vmatpush1.msra.mxu0 %v2158
        %3219 = vmatprep.subr.mxu0 0.0
        %3220 = vmatpush1.msra.mxu0 %v2169
        %3221 = vmatprep.subr.mxu0 0.0
        %3222 = vmatpush1.msra.mxu0 %v2180
        %3223 = vmatprep.subr.mxu0 0.0
        %3224 = vmatpush1.msra.mxu0 %v2191
        %3225 = vmatprep.subr.mxu0 0.0
        %3226 = vmatpush1.msra.mxu0 %v2202
        %3227 = vmatprep.subr.mxu0 0.0
        %3228 = vmatpush1.msra.mxu0 %v2213
        %3229 = vmatprep.subr.mxu0 0.0
        %3230 = vmatpush1.msra.mxu0 %v2224
        %3231 = vmatprep.subr.mxu0 0.0
        %3232 = vmatpush1.msra.mxu0 %v2235
        %3233 = vmatprep.subr.mxu0 0.0
        %3234 = vmatpush1.msra.mxu0 %v2246
        %3235 = vmatprep.subr.mxu0 0.0
        %3236 = vmatpush1.msra.mxu0 %v2257
        %3237 = vmatprep.subr.mxu0 0.0
        %3238 = vmatpush1.msra.mxu0 %v2268
        %3239 = vmatprep.subr.mxu0 0.0
        %3240 = vmatpush1.msra.mxu0 %v2279
        %3241 = vmatprep.subr.mxu0 0.0
        %3242 = vmatpush1.msra.mxu0 %v2290
        %3243 = vmatprep.subr.mxu0 0.0
        %3244 = vmatpush1.msra.mxu0 %v2301
        %3245 = vmatprep.subr.mxu0 0.0
        %3246 = vmatpush1.msra.mxu0 %v2312
        %3247 = vmatprep.subr.mxu0 0.0
        %3248 = vmatpush1.msra.mxu0 %v2323
        %3249 = vmatprep.subr.mxu0 0.0
        %3250 = vmatpush1.msra.mxu0 %v2334
        %3251 = vmatprep.subr.mxu0 0.0
        %3252 = vmatpush1.msra.mxu0 %v2345
        %3253 = vmatprep.subr.mxu0 0.0
        %3254 = vmatpush1.msra.mxu0 %v2356
        %3255 = vmatprep.subr.mxu0 0.0
        %3256 = vmatpush1.msra.mxu0 %v2367
        %3257 = vmatprep.subr.mxu0 0.0
        %3258 = vmatpush1.msra.mxu0 %v2378
        %3259 = vmatprep.subr.mxu0 0.0
        %3260 = vmatpush1.msra.mxu0 %v2389
        %3261 = vmatprep.subr.mxu0 0.0
        %3262 = vmatpush1.msra.mxu0 %v2400
        %3263 = vmatprep.subr.mxu0 0.0
        %3264 = vmatpush1.msra.mxu0 %v2411
        %3265 = vmatprep.subr.mxu0 0.0
        %3266 = vmatpush1.msra.mxu0 %v2422
        %3267 = vmatprep.mubr.f32.mxu0 %v1718
        %3268 = vmatmul.mubr.f32.gmra.mrb[0].mxu0 %v1717
        %v3269 = vpop.f32.mrb[0].mxu0
        %v3270 = vadd.f32 %v3200, %v3269
        %v3271 = vpop.f32.mrb[0].mxu0
        %3272 = vdwg.mxu0
        %v3273 = vadd.f32 %v1704, %v2561
        %v3274 = vadd.f32 %v1705, %v2563
        %v3275 = vadd.f32 %v1706, %v2703
        %v3276 = vadd.f32 %v1707, %v2705
        %v3277 = vadd.f32 %v1708, %v2845
        %v3278 = vadd.f32 %v1709, %v2847
        %v3279 = vadd.f32 %v1710, %v2987
        %v3280 = vadd.f32 %v1711, %v2989
        %v3281 = vadd.f32 %v1712, %v3129
        %v3282 = vadd.f32 %v1713, %v3131
        %v3283 = vadd.f32 %v1714, %v3270
        %3284 = vst [vmem:[%s1687] sm:$0xff] %v3273
        %3285 = vst [vmem:[%s1687 + $0x8] sm:$0xff] %v3274
        %3286 = vst [vmem:[%s1687 + $0x10] sm:$0xff] %v3275
        %3287 = vst [vmem:[%s1687 + $0x18] sm:$0xff] %v3276
        %3288 = vst [vmem:[%s1687 + $0x20] sm:$0xff] %v3277
        %3289 = vst [vmem:[%s1687 + $0x28] sm:$0xff] %v3278
        %3290 = vst [vmem:[%s1687 + $0x30] sm:$0xff] %v3279
        %3291 = vst [vmem:[%s1687 + $0x38] sm:$0xff] %v3280
        %3292 = vst [vmem:[%s1687 + $0x40] sm:$0xff] %v3281
        %3293 = vst [vmem:[%s1687 + $0x48] sm:$0xff] %v3282
        %3294 = vst [vmem:[%s1687 + $0x50] sm:$0xff] %v3283
        // Predicated region
        $region60: #{model_regression_forward.7} parent=50 // pred_check
          %p3295 = pneg %p1689
        $region61: #{model_regression_forward.7} parent=50 // pred_check_branch
          %3297 = sbr.rel (%p3295) target = $region63
        $region62: #{model_regression_forward.7} parent=50 // pred_region
          %v3298 = vld [vmem:[%s1687] sm:$0xff]
          %v3299 = vld [vmem:[%s1687 + $0x8] sm:$0xff]
          %v3300 = vld [vmem:[%s1687 + $0x10] sm:$0xff]
          %v3301 = vld [vmem:[%s1687 + $0x18] sm:$0xff]
          %v3302 = vld [vmem:[%s1687 + $0x20] sm:$0xff]
          %v3303 = vld [vmem:[%s1687 + $0x28] sm:$0xff]
          %v3304 = vld [vmem:[%s1687 + $0x30] sm:$0xff]
          %v3305 = vld [vmem:[%s1687 + $0x38] sm:$0xff]
          %v3306 = vld [vmem:[%s1687 + $0x40] sm:$0xff]
          %v3307 = vld [vmem:[%s1687 + $0x48] sm:$0xff]
          %v3308 = vld [vmem:[%s1687 + $0x50] sm:$0xff]
          %v3309 = vld [vmem:[%s1677] sm:$0xff]
          %v3310 = vld [vmem:[%s1677 + $0x8] sm:$0x7]
          %v3313 = vlaneseq
          %v3314 = vshrl.u32 %v3313, 7
          %v3315 = vsub.s32 0, %v3314
          %v3316 = vrot.slane %v3309, %v3315
          %v3317 = vlaneseq
          %v3318 = vshrl.u32 %v3317, 7
          %v3319 = vsub.s32 1, %v3318
          %v3320 = vrot.slane %v3309, %v3319
          %v3321 = vlaneseq
          %v3322 = vshrl.u32 %v3321, 7
          %v3323 = vsub.s32 2, %v3322
          %v3324 = vrot.slane %v3309, %v3323
          %v3325 = vlaneseq
          %v3326 = vshrl.u32 %v3325, 7
          %v3327 = vsub.s32 3, %v3326
          %v3328 = vrot.slane %v3309, %v3327
          %v3329 = vlaneseq
          %v3330 = vshrl.u32 %v3329, 7
          %v3331 = vsub.s32 4, %v3330
          %v3332 = vrot.slane %v3309, %v3331
          %v3333 = vlaneseq
          %v3334 = vshrl.u32 %v3333, 7
          %v3335 = vsub.s32 5, %v3334
          %v3336 = vrot.slane %v3309, %v3335
          %v3337 = vlaneseq
          %v3338 = vshrl.u32 %v3337, 7
          %v3339 = vsub.s32 6, %v3338
          %v3340 = vrot.slane %v3309, %v3339
          %v3341 = vlaneseq
          %v3342 = vshrl.u32 %v3341, 7
          %v3343 = vsub.s32 7, %v3342
          %v3344 = vrot.slane %v3309, %v3343
          %v3345 = vlaneseq
          %v3346 = vshrl.u32 %v3345, 7
          %v3347 = vsub.s32 0, %v3346
          %v3348 = vrot.slane %v3310, %v3347
          %v3349 = vlaneseq
          %v3350 = vshrl.u32 %v3349, 7
          %v3351 = vsub.s32 1, %v3350
          %v3352 = vrot.slane %v3310, %v3351
          %v3353 = vlaneseq
          %v3354 = vshrl.u32 %v3353, 7
          %v3355 = vsub.s32 2, %v3354
          %v3356 = vrot.slane %v3310, %v3355
          %v3368 = vadd.f32 %v3298, %v3316
          %v3369 = vadd.f32 %v3299, %v3320
          %v3370 = vadd.f32 %v3300, %v3324
          %v3371 = vadd.f32 %v3301, %v3328
          %v3372 = vadd.f32 %v3302, %v3332
          %v3373 = vadd.f32 %v3303, %v3336
          %v3374 = vadd.f32 %v3304, %v3340
          %v3375 = vadd.f32 %v3305, %v3344
          %v3376 = vadd.f32 %v3306, %v3348
          %v3377 = vadd.f32 %v3307, %v3352
          %v3378 = vadd.f32 %v3308, %v3356
          %3379 = vst [vmem:[%s1687] sm:$0xff] %v3368
          %3380 = vst [vmem:[%s1687 + $0x8] sm:$0xff] %v3369
          %3381 = vst [vmem:[%s1687 + $0x10] sm:$0xff] %v3370
          %3382 = vst [vmem:[%s1687 + $0x18] sm:$0xff] %v3371
          %3383 = vst [vmem:[%s1687 + $0x20] sm:$0xff] %v3372
          %3384 = vst [vmem:[%s1687 + $0x28] sm:$0xff] %v3373
          %3385 = vst [vmem:[%s1687 + $0x30] sm:$0xff] %v3374
          %3386 = vst [vmem:[%s1687 + $0x38] sm:$0xff] %v3375
          %3387 = vst [vmem:[%s1687 + $0x40] sm:$0xff] %v3376
          %3388 = vst [vmem:[%s1687 + $0x48] sm:$0xff] %v3377
          %3389 = vst [vmem:[%s1687 + $0x50] sm:$0xff] %v3378
        $region63: #{model_regression_forward.7} parent=50 // pred_fallthru
          _
        %s3390 = smul.u32 11, %s20
        %p3391 = scmp.lt.s32.totalorder %s19, 0
        %s3392 = scalar_select %p3391, %s19, 0
        %p3393 = scmp.lt.s32.totalorder %s3390, 32
        %s3394 = scalar_select %p3393, %s3390, 32
        %s3395 = smul.addr %s3392, 33
        %s3396 = sadd.s32 %s3394, %s3395
        %s3397 = smul.addr %s3396, 8
        %s3398 = scalar_lea.vmem %s3, %s3397
        // Predicated region
        $region64: #{model_regression_forward.7} parent=50 // pred_check
          %p3399 = pneg %p135
        $region65: #{model_regression_forward.7} parent=50 // pred_check_branch
          %3401 = sbr.rel (%p3399) target = $region67
        $region66: #{model_regression_forward.7} parent=50 // pred_region
          %s3402 = smul.u32 11, %s20
        $region67: #{model_regression_forward.7} parent=50 // pred_fallthru
          _
      $region51: #{model_regression_forward.7} parent=5 // pred_fallthru
        _
      %p3403 = scmp.le.s32.totalorder 2, %s9
      // Predicated region
      $region68: #{model_regression_forward.7} parent=5 // pred_check
        %p3404 = pneg %p3403
      $region69: #{model_regression_forward.7} parent=5 // pred_check_branch
        %3406 = sbr.rel (%p3404) target = $region71
      $region70: #{model_regression_forward.7} parent=5 // pred_region
        %s3407 = ssub.s32 %s9, 2
        // Predicated region
        $region72: #{model_regression_forward.7} parent=70 // pred_check
          %p3408 = pneg %p141
        $region73: #{model_regression_forward.7} parent=70 // pred_check_branch
          %3410 = sbr.rel (%p3408) target = $region75
        $region74: #{model_regression_forward.7} parent=70 // pred_region
          %s3411 = smul.u32 11, %s23
          %p3412 = scmp.lt.s32.totalorder %s22, 0
          %s3413 = scalar_select %p3412, %s22, 0
          %p3414 = scmp.lt.s32.totalorder %s3411, 32
          %s3415 = scalar_select %p3414, %s3411, 32
          %s3416 = smul.addr %s3413, 33
          %s3417 = sadd.s32 %s3415, %s3416
          %s3418 = smul.addr %s3417, 8
          %s3419 = scalar_lea.vmem %s3, %s3418
        $region75: #{model_regression_forward.7} parent=70 // pred_fallthru
          _
      $region71: #{model_regression_forward.7} parent=5 // pred_fallthru
        _
    $region6: #{model_regression_forward.7} parent=1 // loop_footer
      %s13 = sadd.s32 1, %s9
    $region7: #{model_regression_forward.7} parent=1 // loop_footer_branch
      %8 = sbr.rel target = $region3
    $region8: #{model_regression_forward.7} parent=1 // loop_exit
      _

// kernel: model_regression_forward.4
$region0: #{model_regression_forward.4}
  #allocation0 [shape = 'u32[]', space=smem, size = 0x4, offset = 0x4, fixed_abs, tag = 'smem constant byte address 0x4 - core index']
  #allocation1 [shape = 'u32[144,128]{1,0:T(1,128)}', space=vmem, size = 0x12000, scoped, tag = 'internal scratch']
  %s0 = inlined_call_operand.vmem [shape: f32[8,4224], index: 0, kind: input, shape index: {}]
  %s1 = inlined_call_operand.hbm [shape: f32[4224,512], index: 1, kind: input, shape index: {}]
  %s2 = inlined_call_operand.hbm [shape: f32[1,512], index: 2, kind: input, shape index: {}]
  %s3 = inlined_call_operand.vmem [shape: f32[8,512], index: 3, kind: output, shape index: {}]
  %s4 = sld [smem:[#allocation0]]
  $region61: #{model_regression_forward.4} parent=0
    _
  %s6 = ssub.s32 1, %s4
  %s7 = scalar_select 0, %s6, %s4
  $region1: #{model_regression_forward.4} parent=0
    #allocation2 [shape = 'u8[5767168]{0}', space=vmem, size = 0x580000, scoped, tag = 'input window, operand 1']
    #allocation3 [shape = 's32[2]{0}', space=sflag, size = 0x8, scoped, tag = 'scoped memory for model_regression_forward.4']
    #allocation4 [shape = 'u8[2048]{0}', space=vmem, size = 0x800, scoped, tag = 'input window, operand 2, single buffered']
    #allocation5 [shape = 's32[1]{0}', space=sflag, size = 0x4, scoped, tag = 'scoped memory for model_regression_forward.4']
    %8 = vsyncpa [#allocation3], 0
    %s9 = scalar_lea.sflag [#allocation3], 1
    %10 = vsyncpa %s9, 0
    %11 = vsyncpa [#allocation5], 0
    loop: start=0, step=1, limit=5
    $region2: #{model_regression_forward.4} parent=1 // loop_pre_header
      _
    $region3: #{model_regression_forward.4} parent=1 // loop_header
      %s13 = sphi 0, %s17
      %p14 = scmp.ge.s32.totalorder %s13, 5
      %s20 = sphi 0, %s39
      %s21 = sphi 0, %s35
      %s22 = sphi 0, %s31
      %s23 = sphi 0, %s20
      %s24 = sphi 0, %s21
      %s25 = sphi 0, %s22
      %s26 = sphi 0, %s23
      %s27 = sphi 0, %s24
      %s28 = sphi 0, %s25
      %s44 = sphi 0, %s46
      %s47 = sphi 0, %s44
      %s48 = sphi 0, %s47
      %s64 = sphi 0, %s48
      %s72 = sphi 0, %s74
      %s75 = sphi 0, %s72
      %s76 = sphi 0, %s75
      %s92 = sphi 0, %s76
      %s98 = sphi 0, %s100
      %s101 = sphi 0, %s98
      %s102 = sphi 0, %s101
      %s118 = sphi 0, %s102
      %s126 = sphi 0, %s128
      %s129 = sphi 0, %s126
      %s130 = sphi 0, %s129
      %s146 = sphi 0, %s130
    $region4: #{model_regression_forward.4} parent=1 // loop_header_branch
      %16 = sbr.rel (%p14) target = $region8
    $region5: #{model_regression_forward.4} parent=1 // loop_body
      %s18 = ssub.s32 %s13, 1
      %s19 = ssub.s32 %s13, 2
      %s29 = sadd.s32 1, %s22
      %p30 = scmp.ge.s32.totalorder %s29, 3
      %s31 = scalar_select %p30, 0, %s29
      %s32 = sadd.s32 1, %s21
      %s33 = scalar_select %p30, %s32, %s21
      %p34 = scmp.ge.s32.totalorder %s33, 1
      %s35 = scalar_select %p34, 0, %s33
      %s36 = sadd.s32 1, %s20
      %s37 = scalar_select %p34, %s36, %s20
      %p38 = scmp.ge.s32.totalorder %s37, 1
      %s39 = scalar_select %p38, 0, %s37
      %s40 = ssub.s32 %s20, %s39
      %s41 = ssub.s32 %s22, %s31
      %s42 = sor.u32 %s40, %s41
      %p43 = scmp.eq.s32.totalorder %s42, 0
      %s45 = sadd.s32 %s44, 1
      %s46 = scalar_select %p43, %s44, %s45
      %p49 = pneg %p43
      %p50 = scmp.eq.s32.totalorder %s13, 2
      %p51 = por %p49, %p50
      %p52 = scmp.ne.s32.totalorder %s44, %s47
      %p53 = scmp.eq.s32.totalorder %s13, 0
      %p54 = por %p52, %p53
      %p55 = scmp.ne.s32.totalorder %s44, %s47
      %p56 = scmp.eq.s32.totalorder %s18, 2
      %p57 = por %p55, %p56
      %p58 = scmp.ne.s32.totalorder %s47, %s48
      %p59 = scmp.eq.s32.totalorder %s18, 0
      %p60 = por %p58, %p59
      %p61 = scmp.ne.s32.totalorder %s47, %s48
      %p62 = scmp.eq.s32.totalorder %s19, 2
      %p63 = por %p61, %p62
      %p65 = scmp.ne.s32.totalorder %s48, %s64
      %p66 = scmp.eq.s32.totalorder %s19, 0
      %p67 = por %p65, %p66
      %s68 = ssub.s32 %s22, %s31
      %s69 = ssub.s32 %s21, %s35
      %s70 = sor.u32 %s68, %s69
      %p71 = scmp.eq.s32.totalorder %s70, 0
      %s73 = sadd.s32 %s72, 1
      %s74 = scalar_select %p71, %s72, %s73
      %p77 = pneg %p71
      %p78 = scmp.eq.s32.totalorder %s13, 2
      %p79 = por %p77, %p78
      %p80 = scmp.ne.s32.totalorder %s72, %s75
      %p81 = scmp.eq.s32.totalorder %s13, 0
      %p82 = por %p80, %p81
      %p83 = scmp.ne.s32.totalorder %s72, %s75
      %p84 = scmp.eq.s32.totalorder %s18, 2
      %p85 = por %p83, %p84
      %p86 = scmp.ne.s32.totalorder %s75, %s76
      %p87 = scmp.eq.s32.totalorder %s18, 0
      %p88 = por %p86, %p87
      %p89 = scmp.ne.s32.totalorder %s75, %s76
      %p90 = scmp.eq.s32.totalorder %s19, 2
      %p91 = por %p89, %p90
      %p93 = scmp.ne.s32.totalorder %s76, %s92
      %p94 = scmp.eq.s32.totalorder %s19, 0
      %p95 = por %p93, %p94
      %s96 = ssub.s32 %s21, %s35
      %p97 = scmp.eq.s32.totalorder %s96, 0
      %s99 = sadd.s32 %s98, 1
      %s100 = scalar_select %p97, %s98, %s99
      %p103 = pneg %p97
      %p104 = scmp.eq.s32.totalorder %s13, 2
      %p105 = por %p103, %p104
      %p106 = scmp.ne.s32.totalorder %s98, %s101
      %p107 = scmp.eq.s32.totalorder %s13, 0
      %p108 = por %p106, %p107
      %p109 = scmp.ne.s32.totalorder %s98, %s101
      %p110 = scmp.eq.s32.totalorder %s18, 2
      %p111 = por %p109, %p110
      %p112 = scmp.ne.s32.totalorder %s101, %s102
      %p113 = scmp.eq.s32.totalorder %s18, 0
      %p114 = por %p112, %p113
      %p115 = scmp.ne.s32.totalorder %s101, %s102
      %p116 = scmp.eq.s32.totalorder %s19, 2
      %p117 = por %p115, %p116
      %p119 = scmp.ne.s32.totalorder %s102, %s118
      %p120 = scmp.eq.s32.totalorder %s19, 0
      %p121 = por %p119, %p120
      %s122 = ssub.s32 %s20, %s39
      %s123 = ssub.s32 %s21, %s35
      %s124 = sor.u32 %s122, %s123
      %p125 = scmp.eq.s32.totalorder %s124, 0
      %s127 = sadd.s32 %s126, 1
      %s128 = scalar_select %p125, %s126, %s127
      %p131 = pneg %p125
      %p132 = scmp.eq.s32.totalorder %s13, 2
      %p133 = por %p131, %p132
      %p134 = scmp.ne.s32.totalorder %s126, %s129
      %p135 = scmp.eq.s32.totalorder %s13, 0
      %p136 = por %p134, %p135
      %p137 = scmp.ne.s32.totalorder %s126, %s129
      %p138 = scmp.eq.s32.totalorder %s18, 2
      %p139 = por %p137, %p138
      %p140 = scmp.ne.s32.totalorder %s129, %s130
      %p141 = scmp.eq.s32.totalorder %s18, 0
      %p142 = por %p140, %p141
      %p143 = scmp.ne.s32.totalorder %s129, %s130
      %p144 = scmp.eq.s32.totalorder %s19, 2
      %p145 = por %p143, %p144
      %p147 = scmp.ne.s32.totalorder %s130, %s146
      %p148 = scmp.eq.s32.totalorder %s19, 0
      %p149 = por %p147, %p148
      %p150 = scmp.le.s32.totalorder 1, %s13
      %p151 = scmp.lt.s32.totalorder %s13, 4
      %p152 = pnand %p150, %p151
      %p153 = pneg %p152
      // Predicated region
      $region9: #{model_regression_forward.4} parent=5 // pred_check
        _
      $region10: #{model_regression_forward.4} parent=5 // pred_check_branch
        %155 = sbr.rel (%p152) target = $region12
      $region11: #{model_regression_forward.4} parent=5 // pred_region
        %s156 = ssub.s32 %s13, 1
        // Predicated region
        $region13: #{model_regression_forward.4} parent=11 // pred_check
          %p157 = pneg %p114
        $region14: #{model_regression_forward.4} parent=11 // pred_check_branch
          %159 = sbr.rel (%p157) target = $region16
        $region15: #{model_regression_forward.4} parent=11 // pred_region
          %s160 = smul.u32 4, %s24
          %s162 = ssub.s32 64, 64
          %163 = vsyncadd [#allocation5], %s162
          %s164 = smul.addr %s160, 16
          %s165 = scalar_lea.hbm %s2, %s164
          %s167 = sshll.u32 [#allocation4], 4
          %s168 = int_to_ptr.vmem [resolvable:$true] %s167
          %170 = dma.hbm_to_vmem [thread:$0]  %s165, 64, %s168, [#allocation5]
        $region16: #{model_regression_forward.4} parent=11 // pred_fallthru
          _
      $region12: #{model_regression_forward.4} parent=5 // pred_fallthru
        _
      %p171 = scmp.lt.s32.totalorder %s13, 3
      // Predicated region
      $region17: #{model_regression_forward.4} parent=5 // pred_check
        %p172 = pneg %p171
      $region18: #{model_regression_forward.4} parent=5 // pred_check_branch
        %174 = sbr.rel (%p172) target = $region20
      $region19: #{model_regression_forward.4} parent=5 // pred_region
        // Predicated region
        $region21: #{model_regression_forward.4} parent=19 // pred_check
          %p175 = pneg %p54
        $region22: #{model_regression_forward.4} parent=19 // pred_check_branch
          %177 = sbr.rel (%p175) target = $region24
        $region23: #{model_regression_forward.4} parent=19 // pred_region
          %s178 = smul.u32 11, %s22
          %p179 = scmp.lt.s32.totalorder %s20, 0
          %s180 = scalar_select %p179, %s20, 0
          %p181 = scmp.lt.s32.totalorder %s178, 32
          %s182 = scalar_select %p181, %s178, 32
          %s183 = smul.addr %s180, 33
          %s184 = sadd.s32 %s182, %s183
          %s185 = smul.addr %s184, 8
          %s186 = scalar_lea.vmem %s0, %s185
          %s187 = smul.u32 11, %s22
        $region24: #{model_regression_forward.4} parent=19 // pred_fallthru
          _
        // Predicated region
        $region25: #{model_regression_forward.4} parent=19 // pred_check
          %p188 = pneg %p82
        $region26: #{model_regression_forward.4} parent=19 // pred_check_branch
          %190 = sbr.rel (%p188) target = $region28
        $region27: #{model_regression_forward.4} parent=19 // pred_region
          %s191 = sand.u32 %s72, 1
          %s192 = scalar_lea.sflag [#allocation3], %s191
          %s193 = sand.u32 %s72, 1
          %s194 = smul.addr %s193, 5632
          %s195 = scalar_lea.vmem [#allocation2], %s194
          %s196 = smul.u32 176, %s22
          %s197 = smul.u32 4, %s21
          %s199 = ssub.s32 90112, 90112
          %200 = vsyncadd %s192, %s199
          %s201 = smul.addr %s196, 4
          %s202 = sadd.s32 %s197, %s201
          %s203 = smul.addr %s202, 128
          %s204 = scalar_lea.hbm %s1, %s203
          %s205 = sshll.u32 %s195, 4
          %s206 = int_to_ptr.vmem [resolvable:$true] %s205
          %211 = dma.hbm_to_vmem [thread:$0]  %s204, 90112, %s206, %s192, 512, 512, 32
        $region28: #{model_regression_forward.4} parent=19 // pred_fallthru
          _
      $region20: #{model_regression_forward.4} parent=5 // pred_fallthru
        _
      %p212 = scmp.le.s32.totalorder 1, %s13
      %p213 = scmp.lt.s32.totalorder %s13, 4
      %p214 = pnand %p212, %p213
      %p215 = pneg %p214
      // Predicated region
      $region29: #{model_regression_forward.4} parent=5 // pred_check
        _
      $region30: #{model_regression_forward.4} parent=5 // pred_check_branch
        %217 = sbr.rel (%p214) target = $region32
      $region31: #{model_regression_forward.4} parent=5 // pred_region
        %s218 = ssub.s32 %s13, 1
        %s219 = sand.u32 %s75, 1
        %s220 = scalar_lea.sflag [#allocation3], %s219
        %s221 = sand.u32 %s75, 1
        %s222 = smul.addr %s221, 5632
        %s223 = scalar_lea.vmem [#allocation2], %s222
        // Predicated region
        $region33: #{model_regression_forward.4} parent=31 // pred_check
          %p224 = pneg %p88
        $region34: #{model_regression_forward.4} parent=31 // pred_check_branch
          %226 = sbr.rel (%p224) target = $region36
        $region35: #{model_regression_forward.4} parent=31 // pred_region
          %227 = dma.done %s220, 90112
        $region36: #{model_regression_forward.4} parent=31 // pred_fallthru
          _
        // Predicated region
        $region37: #{model_regression_forward.4} parent=31 // pred_check
          %p228 = pneg %p114
        $region38: #{model_regression_forward.4} parent=31 // pred_check_branch
          %230 = sbr.rel (%p228) target = $region40
        $region39: #{model_regression_forward.4} parent=31 // pred_region
          %231 = dma.done [#allocation5], 64
        $region40: #{model_regression_forward.4} parent=31 // pred_fallthru
          _
        %s232 = smul.u32 11, %s25
        %p233 = scmp.lt.s32.totalorder %s23, 0
        %s234 = scalar_select %p233, %s23, 0
        %p235 = scmp.lt.s32.totalorder %s232, 32
        %s236 = scalar_select %p235, %s232, 32
        %s237 = smul.addr %s234, 33
        %s238 = sadd.s32 %s236, %s237
        %s239 = smul.addr %s238, 8
        %s240 = scalar_lea.vmem %s0, %s239
        %p241 = pneg %p60
        %p242 = pneg %p57
        %s243 = sand.u32 %s75, 1
        %s244 = scalar_lea.sflag [#allocation3], %s243
        %s245 = sand.u32 %s75, 1
        %s246 = smul.addr %s245, 5632
        %s247 = scalar_lea.vmem [#allocation2], %s246
        %p248 = pneg %p88
        %p249 = pneg %p85
        %p250 = pneg %p114
        %p251 = pneg %p111
        %p252 = pneg %p142
        %p253 = pneg %p139
        %s254 = smul.u32 4, %s24
        %p255 = scmp.lt.s32.totalorder %s23, 0
        %s256 = scalar_select %p255, %s23, 0
        %p257 = scmp.lt.s32.totalorder %s254, 3
        %s258 = scalar_select %p257, %s254, 3
        %s259 = smul.addr %s256, 4
        %s260 = sadd.s32 %s258, %s259
        %s261 = smul.addr %s260, 8
        %s262 = scalar_lea.vmem %s3, %s261
        %s263 = smul.u32 11, %s25
        %p264 = scmp.lt.s32.totalorder %s23, 0
        %s265 = scalar_select %p264, %s23, 0
        %p266 = scmp.lt.s32.totalorder %s263, 32
        %s267 = scalar_select %p266, %s263, 32
        %s268 = smul.addr %s265, 33
        %s269 = sadd.s32 %s267, %s268
        %s270 = smul.addr %s269, 8
        %s271 = scalar_lea.vmem %s0, %s270
        %s272 = smul.u32 11, %s25
        %s273 = smul.u32 176, %s25
        %s274 = smul.u32 4, %s24
        %s275 = smul.u32 4, %s24
        %s276 = smul.u32 4, %s24
        %p277 = scmp.lt.s32.totalorder %s23, 0
        %s278 = scalar_select %p277, %s23, 0
        %p279 = scmp.lt.s32.totalorder %s276, 3
        %s280 = scalar_select %p279, %s276, 3
        %s281 = smul.addr %s278, 4
        %s282 = sadd.s32 %s280, %s281
        %s283 = smul.addr %s282, 8
        %s284 = scalar_lea.vmem %s3, %s283
        %s285 = smul.u32 4, %s24
        %p286 = scmp.eq.s32.totalorder %s25, 0
        // Predicated region
        $region41: #{model_regression_forward.4} parent=31 // pred_check
          %p287 = pneg %p286
        $region42: #{model_regression_forward.4} parent=31 // pred_check_branch
          %289 = sbr.rel (%p287) target = $region44
        $region43: #{model_regression_forward.4} parent=31 // pred_region
          %290 = vst [vmem:[%s284] sm:$0xff] 0.0
          %291 = vst [vmem:[%s284 + $0x8] sm:$0xff] 0.0
          %292 = vst [vmem:[%s284 + $0x10] sm:$0xff] 0.0
          %293 = vst [vmem:[%s284 + $0x18] sm:$0xff] 0.0
        $region44: #{model_regression_forward.4} parent=31 // pred_fallthru
          _
        %v294 = vld [vmem:[%s284] sm:$0xff]
        %v295 = vld [vmem:[%s284 + $0x8] sm:$0xff]
        %v296 = vld [vmem:[%s284 + $0x10] sm:$0xff]
        %v297 = vld [vmem:[%s284 + $0x18] sm:$0xff]
        %v298 = vld [vmem:[%s271] sm:$0xff]
        %v299 = vld [vmem:[%s271 + $0x8] sm:$0xff]
        %v300 = vld [vmem:[%s271 + $0x10] sm:$0xff]
        %v301 = vld [vmem:[%s271 + $0x18] sm:$0xff]
        %v302 = vld [vmem:[%s271 + $0x20] sm:$0xff]
        %v303 = vld [vmem:[%s271 + $0x28] sm:$0xff]
        %v304 = vld [vmem:[%s271 + $0x30] sm:$0xff]
        %v305 = vld [vmem:[%s271 + $0x38] sm:$0xff]
        %v306 = vld [vmem:[%s271 + $0x40] sm:$0xff]
        %v307 = vld [vmem:[%s271 + $0x48] sm:$0xff]
        %v308 = vld [vmem:[%s271 + $0x50] sm:$0xff]
        %v309 = vld [vmem:[%s223] sm:$0xff]
        %v310 = vld [vmem:[%s223 + $0x8] sm:$0xff]
        %v311 = vld [vmem:[%s223 + $0x10] sm:$0xff]
        %v312 = vld [vmem:[%s223 + $0x18] sm:$0xff]
        %v313 = vld [vmem:[%s223 + $0x20] sm:$0xff]
        %v314 = vld [vmem:[%s223 + $0x28] sm:$0xff]
        %v315 = vld [vmem:[%s223 + $0x30] sm:$0xff]
        %v316 = vld [vmem:[%s223 + $0x38] sm:$0xff]
        %v317 = vld [vmem:[%s223 + $0x40] sm:$0xff]
        %v318 = vld [vmem:[%s223 + $0x48] sm:$0xff]
        %v319 = vld [vmem:[%s223 + $0x50] sm:$0xff]
        %v320 = vld [vmem:[%s223 + $0x58] sm:$0xff]
        %v321 = vld [vmem:[%s223 + $0x60] sm:$0xff]
        %v322 = vld [vmem:[%s223 + $0x68] sm:$0xff]
        %v323 = vld [vmem:[%s223 + $0x70] sm:$0xff]
        %v324 = vld [vmem:[%s223 + $0x78] sm:$0xff]
        %v325 = vld [vmem:[%s223 + $0x80] sm:$0xff]
        %v326 = vld [vmem:[%s223 + $0x88] sm:$0xff]
        %v327 = vld [vmem:[%s223 + $0x90] sm:$0xff]
        %v328 = vld [vmem:[%s223 + $0x98] sm:$0xff]
        %v329 = vld [vmem:[%s223 + $0xa0] sm:$0xff]
        %v330 = vld [vmem:[%s223 + $0xa8] sm:$0xff]
        %v331 = vld [vmem:[%s223 + $0xb0] sm:$0xff]
        %v332 = vld [vmem:[%s223 + $0xb8] sm:$0xff]
        %v333 = vld [vmem:[%s223 + $0xc0] sm:$0xff]
        %v334 = vld [vmem:[%s223 + $0xc8] sm:$0xff]
        %v335 = vld [vmem:[%s223 + $0xd0] sm:$0xff]
        %v336 = vld [vmem:[%s223 + $0xd8] sm:$0xff]
        %v337 = vld [vmem:[%s223 + $0xe0] sm:$0xff]
        %v338 = vld [vmem:[%s223 + $0xe8] sm:$0xff]
        %v339 = vld [vmem:[%s223 + $0xf0] sm:$0xff]
        %v340 = vld [vmem:[%s223 + $0xf8] sm:$0xff]
        %v341 = vld [vmem:[%s223 + $0x100] sm:$0xff]
        %v342 = vld [vmem:[%s223 + $0x108] sm:$0xff]
        %v343 = vld [vmem:[%s223 + $0x110] sm:$0xff]
        %v344 = vld [vmem:[%s223 + $0x118] sm:$0xff]
        %v345 = vld [vmem:[%s223 + $0x120] sm:$0xff]
        %v346 = vld [vmem:[%s223 + $0x128] sm:$0xff]
        %v347 = vld [vmem:[%s223 + $0x130] sm:$0xff]
        %v348 = vld [vmem:[%s223 + $0x138] sm:$0xff]
        %v349 = vld [vmem:[%s223 + $0x140] sm:$0xff]
        %v350 = vld [vmem:[%s223 + $0x148] sm:$0xff]
        %v351 = vld [vmem:[%s223 + $0x150] sm:$0xff]
        %v352 = vld [vmem:[%s223 + $0x158] sm:$0xff]
        %v353 = vld [vmem:[%s223 + $0x160] sm:$0xff]
        %v354 = vld [vmem:[%s223 + $0x168] sm:$0xff]
        %v355 = vld [vmem:[%s223 + $0x170] sm:$0xff]
        %v356 = vld [vmem:[%s223 + $0x178] sm:$0xff]
        %v357 = vld [vmem:[%s223 + $0x180] sm:$0xff]
        %v358 = vld [vmem:[%s223 + $0x188] sm:$0xff]
        %v359 = vld [vmem:[%s223 + $0x190] sm:$0xff]
        %v360 = vld [vmem:[%s223 + $0x198] sm:$0xff]
        %v361 = vld [vmem:[%s223 + $0x1a0] sm:$0xff]
        %v362 = vld [vmem:[%s223 + $0x1a8] sm:$0xff]
        %v363 = vld [vmem:[%s223 + $0x1b0] sm:$0xff]
        %v364 = vld [vmem:[%s223 + $0x1b8] sm:$0xff]
        %v365 = vld [vmem:[%s223 + $0x1c0] sm:$0xff]
        %v366 = vld [vmem:[%s223 + $0x1c8] sm:$0xff]
        %v367 = vld [vmem:[%s223 + $0x1d0] sm:$0xff]
        %v368 = vld [vmem:[%s223 + $0x1d8] sm:$0xff]
        %v369 = vld [vmem:[%s223 + $0x1e0] sm:$0xff]
        %v370 = vld [vmem:[%s223 + $0x1e8] sm:$0xff]
        %v371 = vld [vmem:[%s223 + $0x1f0] sm:$0xff]
        %v372 = vld [vmem:[%s223 + $0x1f8] sm:$0xff]
        %v373 = vld [vmem:[%s223 + $0x200] sm:$0xff]
        %v374 = vld [vmem:[%s223 + $0x208] sm:$0xff]
        %v375 = vld [vmem:[%s223 + $0x210] sm:$0xff]
        %v376 = vld [vmem:[%s223 + $0x218] sm:$0xff]
        %v377 = vld [vmem:[%s223 + $0x220] sm:$0xff]
        %v378 = vld [vmem:[%s223 + $0x228] sm:$0xff]
        %v379 = vld [vmem:[%s223 + $0x230] sm:$0xff]
        %v380 = vld [vmem:[%s223 + $0x238] sm:$0xff]
        %v381 = vld [vmem:[%s223 + $0x240] sm:$0xff]
        %v382 = vld [vmem:[%s223 + $0x248] sm:$0xff]
        %v383 = vld [vmem:[%s223 + $0x250] sm:$0xff]
        %v384 = vld [vmem:[%s223 + $0x258] sm:$0xff]
        %v385 = vld [vmem:[%s223 + $0x260] sm:$0xff]
        %v386 = vld [vmem:[%s223 + $0x268] sm:$0xff]
        %v387 = vld [vmem:[%s223 + $0x270] sm:$0xff]
        %v388 = vld [vmem:[%s223 + $0x278] sm:$0xff]
        %v389 = vld [vmem:[%s223 + $0x280] sm:$0xff]
        %v390 = vld [vmem:[%s223 + $0x288] sm:$0xff]
        %v391 = vld [vmem:[%s223 + $0x290] sm:$0xff]
        %v392 = vld [vmem:[%s223 + $0x298] sm:$0xff]
        %v393 = vld [vmem:[%s223 + $0x2a0] sm:$0xff]
        %v394 = vld [vmem:[%s223 + $0x2a8] sm:$0xff]
        %v395 = vld [vmem:[%s223 + $0x2b0] sm:$0xff]
        %v396 = vld [vmem:[%s223 + $0x2b8] sm:$0xff]
        %v397 = vld [vmem:[%s223 + $0x2c0] sm:$0xff]
        %v398 = vld [vmem:[%s223 + $0x2c8] sm:$0xff]
        %v399 = vld [vmem:[%s223 + $0x2d0] sm:$0xff]
        %v400 = vld [vmem:[%s223 + $0x2d8] sm:$0xff]
        %v401 = vld [vmem:[%s223 + $0x2e0] sm:$0xff]
        %v402 = vld [vmem:[%s223 + $0x2e8] sm:$0xff]
        %v403 = vld [vmem:[%s223 + $0x2f0] sm:$0xff]
        %v404 = vld [vmem:[%s223 + $0x2f8] sm:$0xff]
        %v405 = vld [vmem:[%s223 + $0x300] sm:$0xff]
        %v406 = vld [vmem:[%s223 + $0x308] sm:$0xff]
        %v407 = vld [vmem:[%s223 + $0x310] sm:$0xff]
        %v408 = vld [vmem:[%s223 + $0x318] sm:$0xff]
        %v409 = vld [vmem:[%s223 + $0x320] sm:$0xff]
        %v410 = vld [vmem:[%s223 + $0x328] sm:$0xff]
        %v411 = vld [vmem:[%s223 + $0x330] sm:$0xff]
        %v412 = vld [vmem:[%s223 + $0x338] sm:$0xff]
        %v413 = vld [vmem:[%s223 + $0x340] sm:$0xff]
        %v414 = vld [vmem:[%s223 + $0x348] sm:$0xff]
        %v415 = vld [vmem:[%s223 + $0x350] sm:$0xff]
        %v416 = vld [vmem:[%s223 + $0x358] sm:$0xff]
        %v417 = vld [vmem:[%s223 + $0x360] sm:$0xff]
        %v418 = vld [vmem:[%s223 + $0x368] sm:$0xff]
        %v419 = vld [vmem:[%s223 + $0x370] sm:$0xff]
        %v420 = vld [vmem:[%s223 + $0x378] sm:$0xff]
        %v421 = vld [vmem:[%s223 + $0x380] sm:$0xff]
        %v422 = vld [vmem:[%s223 + $0x388] sm:$0xff]
        %v423 = vld [vmem:[%s223 + $0x390] sm:$0xff]
        %v424 = vld [vmem:[%s223 + $0x398] sm:$0xff]
        %v425 = vld [vmem:[%s223 + $0x3a0] sm:$0xff]
        %v426 = vld [vmem:[%s223 + $0x3a8] sm:$0xff]
        %v427 = vld [vmem:[%s223 + $0x3b0] sm:$0xff]
        %v428 = vld [vmem:[%s223 + $0x3b8] sm:$0xff]
        %v429 = vld [vmem:[%s223 + $0x3c0] sm:$0xff]
        %v430 = vld [vmem:[%s223 + $0x3c8] sm:$0xff]
        %v431 = vld [vmem:[%s223 + $0x3d0] sm:$0xff]
        %v432 = vld [vmem:[%s223 + $0x3d8] sm:$0xff]
        %v433 = vld [vmem:[%s223 + $0x3e0] sm:$0xff]
        %v434 = vld [vmem:[%s223 + $0x3e8] sm:$0xff]
        %v435 = vld [vmem:[%s223 + $0x3f0] sm:$0xff]
        %v436 = vld [vmem:[%s223 + $0x3f8] sm:$0xff]
        %v437 = vld [vmem:[%s223 + $0x400] sm:$0xff]
        %v438 = vld [vmem:[%s223 + $0x408] sm:$0xff]
        %v439 = vld [vmem:[%s223 + $0x410] sm:$0xff]
        %v440 = vld [vmem:[%s223 + $0x418] sm:$0xff]
        %v441 = vld [vmem:[%s223 + $0x420] sm:$0xff]
        %v442 = vld [vmem:[%s223 + $0x428] sm:$0xff]
        %v443 = vld [vmem:[%s223 + $0x430] sm:$0xff]
        %v444 = vld [vmem:[%s223 + $0x438] sm:$0xff]
        %v445 = vld [vmem:[%s223 + $0x440] sm:$0xff]
        %v446 = vld [vmem:[%s223 + $0x448] sm:$0xff]
        %v447 = vld [vmem:[%s223 + $0x450] sm:$0xff]
        %v448 = vld [vmem:[%s223 + $0x458] sm:$0xff]
        %v449 = vld [vmem:[%s223 + $0x460] sm:$0xff]
        %v450 = vld [vmem:[%s223 + $0x468] sm:$0xff]
        %v451 = vld [vmem:[%s223 + $0x470] sm:$0xff]
        %v452 = vld [vmem:[%s223 + $0x478] sm:$0xff]
        %v453 = vld [vmem:[%s223 + $0x480] sm:$0xff]
        %v454 = vld [vmem:[%s223 + $0x488] sm:$0xff]
        %v455 = vld [vmem:[%s223 + $0x490] sm:$0xff]
        %v456 = vld [vmem:[%s223 + $0x498] sm:$0xff]
        %v457 = vld [vmem:[%s223 + $0x4a0] sm:$0xff]
        %v458 = vld [vmem:[%s223 + $0x4a8] sm:$0xff]
        %v459 = vld [vmem:[%s223 + $0x4b0] sm:$0xff]
        %v460 = vld [vmem:[%s223 + $0x4b8] sm:$0xff]
        %v461 = vld [vmem:[%s223 + $0x4c0] sm:$0xff]
        %v462 = vld [vmem:[%s223 + $0x4c8] sm:$0xff]
        %v463 = vld [vmem:[%s223 + $0x4d0] sm:$0xff]
        %v464 = vld [vmem:[%s223 + $0x4d8] sm:$0xff]
        %v465 = vld [vmem:[%s223 + $0x4e0] sm:$0xff]
        %v466 = vld [vmem:[%s223 + $0x4e8] sm:$0xff]
        %v467 = vld [vmem:[%s223 + $0x4f0] sm:$0xff]
        %v468 = vld [vmem:[%s223 + $0x4f8] sm:$0xff]
        %v469 = vld [vmem:[%s223 + $0x500] sm:$0xff]
        %v470 = vld [vmem:[%s223 + $0x508] sm:$0xff]
        %v471 = vld [vmem:[%s223 + $0x510] sm:$0xff]
        %v472 = vld [vmem:[%s223 + $0x518] sm:$0xff]
        %v473 = vld [vmem:[%s223 + $0x520] sm:$0xff]
        %v474 = vld [vmem:[%s223 + $0x528] sm:$0xff]
        %v475 = vld [vmem:[%s223 + $0x530] sm:$0xff]
        %v476 = vld [vmem:[%s223 + $0x538] sm:$0xff]
        %v477 = vld [vmem:[%s223 + $0x540] sm:$0xff]
        %v478 = vld [vmem:[%s223 + $0x548] sm:$0xff]
        %v479 = vld [vmem:[%s223 + $0x550] sm:$0xff]
        %v480 = vld [vmem:[%s223 + $0x558] sm:$0xff]
        %v481 = vld [vmem:[%s223 + $0x560] sm:$0xff]
        %v482 = vld [vmem:[%s223 + $0x568] sm:$0xff]
        %v483 = vld [vmem:[%s223 + $0x570] sm:$0xff]
        %v484 = vld [vmem:[%s223 + $0x578] sm:$0xff]
        %v485 = vld [vmem:[%s223 + $0x580] sm:$0xff]
        %v486 = vld [vmem:[%s223 + $0x588] sm:$0xff]
        %v487 = vld [vmem:[%s223 + $0x590] sm:$0xff]
        %v488 = vld [vmem:[%s223 + $0x598] sm:$0xff]
        %v489 = vld [vmem:[%s223 + $0x5a0] sm:$0xff]
        %v490 = vld [vmem:[%s223 + $0x5a8] sm:$0xff]
        %v491 = vld [vmem:[%s223 + $0x5b0] sm:$0xff]
        %v492 = vld [vmem:[%s223 + $0x5b8] sm:$0xff]
        %v493 = vld [vmem:[%s223 + $0x5c0] sm:$0xff]
        %v494 = vld [vmem:[%s223 + $0x5c8] sm:$0xff]
        %v495 = vld [vmem:[%s223 + $0x5d0] sm:$0xff]
        %v496 = vld [vmem:[%s223 + $0x5d8] sm:$0xff]
        %v497 = vld [vmem:[%s223 + $0x5e0] sm:$0xff]
        %v498 = vld [vmem:[%s223 + $0x5e8] sm:$0xff]
        %v499 = vld [vmem:[%s223 + $0x5f0] sm:$0xff]
        %v500 = vld [vmem:[%s223 + $0x5f8] sm:$0xff]
        %v501 = vld [vmem:[%s223 + $0x600] sm:$0xff]
        %v502 = vld [vmem:[%s223 + $0x608] sm:$0xff]
        %v503 = vld [vmem:[%s223 + $0x610] sm:$0xff]
        %v504 = vld [vmem:[%s223 + $0x618] sm:$0xff]
        %v505 = vld [vmem:[%s223 + $0x620] sm:$0xff]
        %v506 = vld [vmem:[%s223 + $0x628] sm:$0xff]
        %v507 = vld [vmem:[%s223 + $0x630] sm:$0xff]
        %v508 = vld [vmem:[%s223 + $0x638] sm:$0xff]
        %v509 = vld [vmem:[%s223 + $0x640] sm:$0xff]
        %v510 = vld [vmem:[%s223 + $0x648] sm:$0xff]
        %v511 = vld [vmem:[%s223 + $0x650] sm:$0xff]
        %v512 = vld [vmem:[%s223 + $0x658] sm:$0xff]
        %v513 = vld [vmem:[%s223 + $0x660] sm:$0xff]
        %v514 = vld [vmem:[%s223 + $0x668] sm:$0xff]
        %v515 = vld [vmem:[%s223 + $0x670] sm:$0xff]
        %v516 = vld [vmem:[%s223 + $0x678] sm:$0xff]
        %v517 = vld [vmem:[%s223 + $0x680] sm:$0xff]
        %v518 = vld [vmem:[%s223 + $0x688] sm:$0xff]
        %v519 = vld [vmem:[%s223 + $0x690] sm:$0xff]
        %v520 = vld [vmem:[%s223 + $0x698] sm:$0xff]
        %v521 = vld [vmem:[%s223 + $0x6a0] sm:$0xff]
        %v522 = vld [vmem:[%s223 + $0x6a8] sm:$0xff]
        %v523 = vld [vmem:[%s223 + $0x6b0] sm:$0xff]
        %v524 = vld [vmem:[%s223 + $0x6b8] sm:$0xff]
        %v525 = vld [vmem:[%s223 + $0x6c0] sm:$0xff]
        %v526 = vld [vmem:[%s223 + $0x6c8] sm:$0xff]
        %v527 = vld [vmem:[%s223 + $0x6d0] sm:$0xff]
        %v528 = vld [vmem:[%s223 + $0x6d8] sm:$0xff]
        %v529 = vld [vmem:[%s223 + $0x6e0] sm:$0xff]
        %v530 = vld [vmem:[%s223 + $0x6e8] sm:$0xff]
        %v531 = vld [vmem:[%s223 + $0x6f0] sm:$0xff]
        %v532 = vld [vmem:[%s223 + $0x6f8] sm:$0xff]
        %v533 = vld [vmem:[%s223 + $0x700] sm:$0xff]
        %v534 = vld [vmem:[%s223 + $0x708] sm:$0xff]
        %v535 = vld [vmem:[%s223 + $0x710] sm:$0xff]
        %v536 = vld [vmem:[%s223 + $0x718] sm:$0xff]
        %v537 = vld [vmem:[%s223 + $0x720] sm:$0xff]
        %v538 = vld [vmem:[%s223 + $0x728] sm:$0xff]
        %v539 = vld [vmem:[%s223 + $0x730] sm:$0xff]
        %v540 = vld [vmem:[%s223 + $0x738] sm:$0xff]
        %v541 = vld [vmem:[%s223 + $0x740] sm:$0xff]
        %v542 = vld [vmem:[%s223 + $0x748] sm:$0xff]
        %v543 = vld [vmem:[%s223 + $0x750] sm:$0xff]
        %v544 = vld [vmem:[%s223 + $0x758] sm:$0xff]
        %v545 = vld [vmem:[%s223 + $0x760] sm:$0xff]
        %v546 = vld [vmem:[%s223 + $0x768] sm:$0xff]
        %v547 = vld [vmem:[%s223 + $0x770] sm:$0xff]
        %v548 = vld [vmem:[%s223 + $0x778] sm:$0xff]
        %v549 = vld [vmem:[%s223 + $0x780] sm:$0xff]
        %v550 = vld [vmem:[%s223 + $0x788] sm:$0xff]
        %v551 = vld [vmem:[%s223 + $0x790] sm:$0xff]
        %v552 = vld [vmem:[%s223 + $0x798] sm:$0xff]
        %v553 = vld [vmem:[%s223 + $0x7a0] sm:$0xff]
        %v554 = vld [vmem:[%s223 + $0x7a8] sm:$0xff]
        %v555 = vld [vmem:[%s223 + $0x7b0] sm:$0xff]
        %v556 = vld [vmem:[%s223 + $0x7b8] sm:$0xff]
        %v557 = vld [vmem:[%s223 + $0x7c0] sm:$0xff]
        %v558 = vld [vmem:[%s223 + $0x7c8] sm:$0xff]
        %v559 = vld [vmem:[%s223 + $0x7d0] sm:$0xff]
        %v560 = vld [vmem:[%s223 + $0x7d8] sm:$0xff]
        %v561 = vld [vmem:[%s223 + $0x7e0] sm:$0xff]
        %v562 = vld [vmem:[%s223 + $0x7e8] sm:$0xff]
        %v563 = vld [vmem:[%s223 + $0x7f0] sm:$0xff]
        %v564 = vld [vmem:[%s223 + $0x7f8] sm:$0xff]
        %v565 = vld [vmem:[%s223 + $0x800] sm:$0xff]
        %v566 = vld [vmem:[%s223 + $0x808] sm:$0xff]
        %v567 = vld [vmem:[%s223 + $0x810] sm:$0xff]
        %v568 = vld [vmem:[%s223 + $0x818] sm:$0xff]
        %v569 = vld [vmem:[%s223 + $0x820] sm:$0xff]
        %v570 = vld [vmem:[%s223 + $0x828] sm:$0xff]
        %v571 = vld [vmem:[%s223 + $0x830] sm:$0xff]
        %v572 = vld [vmem:[%s223 + $0x838] sm:$0xff]
        %v573 = vld [vmem:[%s223 + $0x840] sm:$0xff]
        %v574 = vld [vmem:[%s223 + $0x848] sm:$0xff]
        %v575 = vld [vmem:[%s223 + $0x850] sm:$0xff]
        %v576 = vld [vmem:[%s223 + $0x858] sm:$0xff]
        %v577 = vld [vmem:[%s223 + $0x860] sm:$0xff]
        %v578 = vld [vmem:[%s223 + $0x868] sm:$0xff]
        %v579 = vld [vmem:[%s223 + $0x870] sm:$0xff]
        %v580 = vld [vmem:[%s223 + $0x878] sm:$0xff]
        %v581 = vld [vmem:[%s223 + $0x880] sm:$0xff]
        %v582 = vld [vmem:[%s223 + $0x888] sm:$0xff]
        %v583 = vld [vmem:[%s223 + $0x890] sm:$0xff]
        %v584 = vld [vmem:[%s223 + $0x898] sm:$0xff]
        %v585 = vld [vmem:[%s223 + $0x8a0] sm:$0xff]
        %v586 = vld [vmem:[%s223 + $0x8a8] sm:$0xff]
        %v587 = vld [vmem:[%s223 + $0x8b0] sm:$0xff]
        %v588 = vld [vmem:[%s223 + $0x8b8] sm:$0xff]
        %v589 = vld [vmem:[%s223 + $0x8c0] sm:$0xff]
        %v590 = vld [vmem:[%s223 + $0x8c8] sm:$0xff]
        %v591 = vld [vmem:[%s223 + $0x8d0] sm:$0xff]
        %v592 = vld [vmem:[%s223 + $0x8d8] sm:$0xff]
        %v593 = vld [vmem:[%s223 + $0x8e0] sm:$0xff]
        %v594 = vld [vmem:[%s223 + $0x8e8] sm:$0xff]
        %v595 = vld [vmem:[%s223 + $0x8f0] sm:$0xff]
        %v596 = vld [vmem:[%s223 + $0x8f8] sm:$0xff]
        %v597 = vld [vmem:[%s223 + $0x900] sm:$0xff]
        %v598 = vld [vmem:[%s223 + $0x908] sm:$0xff]
        %v599 = vld [vmem:[%s223 + $0x910] sm:$0xff]
        %v600 = vld [vmem:[%s223 + $0x918] sm:$0xff]
        %v601 = vld [vmem:[%s223 + $0x920] sm:$0xff]
        %v602 = vld [vmem:[%s223 + $0x928] sm:$0xff]
        %v603 = vld [vmem:[%s223 + $0x930] sm:$0xff]
        %v604 = vld [vmem:[%s223 + $0x938] sm:$0xff]
        %v605 = vld [vmem:[%s223 + $0x940] sm:$0xff]
        %v606 = vld [vmem:[%s223 + $0x948] sm:$0xff]
        %v607 = vld [vmem:[%s223 + $0x950] sm:$0xff]
        %v608 = vld [vmem:[%s223 + $0x958] sm:$0xff]
        %v609 = vld [vmem:[%s223 + $0x960] sm:$0xff]
        %v610 = vld [vmem:[%s223 + $0x968] sm:$0xff]
        %v611 = vld [vmem:[%s223 + $0x970] sm:$0xff]
        %v612 = vld [vmem:[%s223 + $0x978] sm:$0xff]
        %v613 = vld [vmem:[%s223 + $0x980] sm:$0xff]
        %v614 = vld [vmem:[%s223 + $0x988] sm:$0xff]
        %v615 = vld [vmem:[%s223 + $0x990] sm:$0xff]
        %v616 = vld [vmem:[%s223 + $0x998] sm:$0xff]
        %v617 = vld [vmem:[%s223 + $0x9a0] sm:$0xff]
        %v618 = vld [vmem:[%s223 + $0x9a8] sm:$0xff]
        %v619 = vld [vmem:[%s223 + $0x9b0] sm:$0xff]
        %v620 = vld [vmem:[%s223 + $0x9b8] sm:$0xff]
        %v621 = vld [vmem:[%s223 + $0x9c0] sm:$0xff]
        %v622 = vld [vmem:[%s223 + $0x9c8] sm:$0xff]
        %v623 = vld [vmem:[%s223 + $0x9d0] sm:$0xff]
        %v624 = vld [vmem:[%s223 + $0x9d8] sm:$0xff]
        %v625 = vld [vmem:[%s223 + $0x9e0] sm:$0xff]
        %v626 = vld [vmem:[%s223 + $0x9e8] sm:$0xff]
        %v627 = vld [vmem:[%s223 + $0x9f0] sm:$0xff]
        %v628 = vld [vmem:[%s223 + $0x9f8] sm:$0xff]
        %v629 = vld [vmem:[%s223 + $0xa00] sm:$0xff]
        %v630 = vld [vmem:[%s223 + $0xa08] sm:$0xff]
        %v631 = vld [vmem:[%s223 + $0xa10] sm:$0xff]
        %v632 = vld [vmem:[%s223 + $0xa18] sm:$0xff]
        %v633 = vld [vmem:[%s223 + $0xa20] sm:$0xff]
        %v634 = vld [vmem:[%s223 + $0xa28] sm:$0xff]
        %v635 = vld [vmem:[%s223 + $0xa30] sm:$0xff]
        %v636 = vld [vmem:[%s223 + $0xa38] sm:$0xff]
        %v637 = vld [vmem:[%s223 + $0xa40] sm:$0xff]
        %v638 = vld [vmem:[%s223 + $0xa48] sm:$0xff]
        %v639 = vld [vmem:[%s223 + $0xa50] sm:$0xff]
        %v640 = vld [vmem:[%s223 + $0xa58] sm:$0xff]
        %v641 = vld [vmem:[%s223 + $0xa60] sm:$0xff]
        %v642 = vld [vmem:[%s223 + $0xa68] sm:$0xff]
        %v643 = vld [vmem:[%s223 + $0xa70] sm:$0xff]
        %v644 = vld [vmem:[%s223 + $0xa78] sm:$0xff]
        %v645 = vld [vmem:[%s223 + $0xa80] sm:$0xff]
        %v646 = vld [vmem:[%s223 + $0xa88] sm:$0xff]
        %v647 = vld [vmem:[%s223 + $0xa90] sm:$0xff]
        %v648 = vld [vmem:[%s223 + $0xa98] sm:$0xff]
        %v649 = vld [vmem:[%s223 + $0xaa0] sm:$0xff]
        %v650 = vld [vmem:[%s223 + $0xaa8] sm:$0xff]
        %v651 = vld [vmem:[%s223 + $0xab0] sm:$0xff]
        %v652 = vld [vmem:[%s223 + $0xab8] sm:$0xff]
        %v653 = vld [vmem:[%s223 + $0xac0] sm:$0xff]
        %v654 = vld [vmem:[%s223 + $0xac8] sm:$0xff]
        %v655 = vld [vmem:[%s223 + $0xad0] sm:$0xff]
        %v656 = vld [vmem:[%s223 + $0xad8] sm:$0xff]
        %v657 = vld [vmem:[%s223 + $0xae0] sm:$0xff]
        %v658 = vld [vmem:[%s223 + $0xae8] sm:$0xff]
        %v659 = vld [vmem:[%s223 + $0xaf0] sm:$0xff]
        %v660 = vld [vmem:[%s223 + $0xaf8] sm:$0xff]
        %v661 = vld [vmem:[%s223 + $0xb00] sm:$0xff]
        %v662 = vld [vmem:[%s223 + $0xb08] sm:$0xff]
        %v663 = vld [vmem:[%s223 + $0xb10] sm:$0xff]
        %v664 = vld [vmem:[%s223 + $0xb18] sm:$0xff]
        %v665 = vld [vmem:[%s223 + $0xb20] sm:$0xff]
        %v666 = vld [vmem:[%s223 + $0xb28] sm:$0xff]
        %v667 = vld [vmem:[%s223 + $0xb30] sm:$0xff]
        %v668 = vld [vmem:[%s223 + $0xb38] sm:$0xff]
        %v669 = vld [vmem:[%s223 + $0xb40] sm:$0xff]
        %v670 = vld [vmem:[%s223 + $0xb48] sm:$0xff]
        %v671 = vld [vmem:[%s223 + $0xb50] sm:$0xff]
        %v672 = vld [vmem:[%s223 + $0xb58] sm:$0xff]
        %v673 = vld [vmem:[%s223 + $0xb60] sm:$0xff]
        %v674 = vld [vmem:[%s223 + $0xb68] sm:$0xff]
        %v675 = vld [vmem:[%s223 + $0xb70] sm:$0xff]
        %v676 = vld [vmem:[%s223 + $0xb78] sm:$0xff]
        %v677 = vld [vmem:[%s223 + $0xb80] sm:$0xff]
        %v678 = vld [vmem:[%s223 + $0xb88] sm:$0xff]
        %v679 = vld [vmem:[%s223 + $0xb90] sm:$0xff]
        %v680 = vld [vmem:[%s223 + $0xb98] sm:$0xff]
        %v681 = vld [vmem:[%s223 + $0xba0] sm:$0xff]
        %v682 = vld [vmem:[%s223 + $0xba8] sm:$0xff]
        %v683 = vld [vmem:[%s223 + $0xbb0] sm:$0xff]
        %v684 = vld [vmem:[%s223 + $0xbb8] sm:$0xff]
        %v685 = vld [vmem:[%s223 + $0xbc0] sm:$0xff]
        %v686 = vld [vmem:[%s223 + $0xbc8] sm:$0xff]
        %v687 = vld [vmem:[%s223 + $0xbd0] sm:$0xff]
        %v688 = vld [vmem:[%s223 + $0xbd8] sm:$0xff]
        %v689 = vld [vmem:[%s223 + $0xbe0] sm:$0xff]
        %v690 = vld [vmem:[%s223 + $0xbe8] sm:$0xff]
        %v691 = vld [vmem:[%s223 + $0xbf0] sm:$0xff]
        %v692 = vld [vmem:[%s223 + $0xbf8] sm:$0xff]
        %v693 = vld [vmem:[%s223 + $0xc00] sm:$0xff]
        %v694 = vld [vmem:[%s223 + $0xc08] sm:$0xff]
        %v695 = vld [vmem:[%s223 + $0xc10] sm:$0xff]
        %v696 = vld [vmem:[%s223 + $0xc18] sm:$0xff]
        %v697 = vld [vmem:[%s223 + $0xc20] sm:$0xff]
        %v698 = vld [vmem:[%s223 + $0xc28] sm:$0xff]
        %v699 = vld [vmem:[%s223 + $0xc30] sm:$0xff]
        %v700 = vld [vmem:[%s223 + $0xc38] sm:$0xff]
        %v701 = vld [vmem:[%s223 + $0xc40] sm:$0xff]
        %v702 = vld [vmem:[%s223 + $0xc48] sm:$0xff]
        %v703 = vld [vmem:[%s223 + $0xc50] sm:$0xff]
        %v704 = vld [vmem:[%s223 + $0xc58] sm:$0xff]
        %v705 = vld [vmem:[%s223 + $0xc60] sm:$0xff]
        %v706 = vld [vmem:[%s223 + $0xc68] sm:$0xff]
        %v707 = vld [vmem:[%s223 + $0xc70] sm:$0xff]
        %v708 = vld [vmem:[%s223 + $0xc78] sm:$0xff]
        %v709 = vld [vmem:[%s223 + $0xc80] sm:$0xff]
        %v710 = vld [vmem:[%s223 + $0xc88] sm:$0xff]
        %v711 = vld [vmem:[%s223 + $0xc90] sm:$0xff]
        %v712 = vld [vmem:[%s223 + $0xc98] sm:$0xff]
        %v713 = vld [vmem:[%s223 + $0xca0] sm:$0xff]
        %v714 = vld [vmem:[%s223 + $0xca8] sm:$0xff]
        %v715 = vld [vmem:[%s223 + $0xcb0] sm:$0xff]
        %v716 = vld [vmem:[%s223 + $0xcb8] sm:$0xff]
        %v717 = vld [vmem:[%s223 + $0xcc0] sm:$0xff]
        %v718 = vld [vmem:[%s223 + $0xcc8] sm:$0xff]
        %v719 = vld [vmem:[%s223 + $0xcd0] sm:$0xff]
        %v720 = vld [vmem:[%s223 + $0xcd8] sm:$0xff]
        %v721 = vld [vmem:[%s223 + $0xce0] sm:$0xff]
        %v722 = vld [vmem:[%s223 + $0xce8] sm:$0xff]
        %v723 = vld [vmem:[%s223 + $0xcf0] sm:$0xff]
        %v724 = vld [vmem:[%s223 + $0xcf8] sm:$0xff]
        %v725 = vld [vmem:[%s223 + $0xd00] sm:$0xff]
        %v726 = vld [vmem:[%s223 + $0xd08] sm:$0xff]
        %v727 = vld [vmem:[%s223 + $0xd10] sm:$0xff]
        %v728 = vld [vmem:[%s223 + $0xd18] sm:$0xff]
        %v729 = vld [vmem:[%s223 + $0xd20] sm:$0xff]
        %v730 = vld [vmem:[%s223 + $0xd28] sm:$0xff]
        %v731 = vld [vmem:[%s223 + $0xd30] sm:$0xff]
        %v732 = vld [vmem:[%s223 + $0xd38] sm:$0xff]
        %v733 = vld [vmem:[%s223 + $0xd40] sm:$0xff]
        %v734 = vld [vmem:[%s223 + $0xd48] sm:$0xff]
        %v735 = vld [vmem:[%s223 + $0xd50] sm:$0xff]
        %v736 = vld [vmem:[%s223 + $0xd58] sm:$0xff]
        %v737 = vld [vmem:[%s223 + $0xd60] sm:$0xff]
        %v738 = vld [vmem:[%s223 + $0xd68] sm:$0xff]
        %v739 = vld [vmem:[%s223 + $0xd70] sm:$0xff]
        %v740 = vld [vmem:[%s223 + $0xd78] sm:$0xff]
        %v741 = vld [vmem:[%s223 + $0xd80] sm:$0xff]
        %v742 = vld [vmem:[%s223 + $0xd88] sm:$0xff]
        %v743 = vld [vmem:[%s223 + $0xd90] sm:$0xff]
        %v744 = vld [vmem:[%s223 + $0xd98] sm:$0xff]
        %v745 = vld [vmem:[%s223 + $0xda0] sm:$0xff]
        %v746 = vld [vmem:[%s223 + $0xda8] sm:$0xff]
        %v747 = vld [vmem:[%s223 + $0xdb0] sm:$0xff]
        %v748 = vld [vmem:[%s223 + $0xdb8] sm:$0xff]
        %v749 = vld [vmem:[%s223 + $0xdc0] sm:$0xff]
        %v750 = vld [vmem:[%s223 + $0xdc8] sm:$0xff]
        %v751 = vld [vmem:[%s223 + $0xdd0] sm:$0xff]
        %v752 = vld [vmem:[%s223 + $0xdd8] sm:$0xff]
        %v753 = vld [vmem:[%s223 + $0xde0] sm:$0xff]
        %v754 = vld [vmem:[%s223 + $0xde8] sm:$0xff]
        %v755 = vld [vmem:[%s223 + $0xdf0] sm:$0xff]
        %v756 = vld [vmem:[%s223 + $0xdf8] sm:$0xff]
        %v757 = vld [vmem:[%s223 + $0xe00] sm:$0xff]
        %v758 = vld [vmem:[%s223 + $0xe08] sm:$0xff]
        %v759 = vld [vmem:[%s223 + $0xe10] sm:$0xff]
        %v760 = vld [vmem:[%s223 + $0xe18] sm:$0xff]
        %v761 = vld [vmem:[%s223 + $0xe20] sm:$0xff]
        %v762 = vld [vmem:[%s223 + $0xe28] sm:$0xff]
        %v763 = vld [vmem:[%s223 + $0xe30] sm:$0xff]
        %v764 = vld [vmem:[%s223 + $0xe38] sm:$0xff]
        %v765 = vld [vmem:[%s223 + $0xe40] sm:$0xff]
        %v766 = vld [vmem:[%s223 + $0xe48] sm:$0xff]
        %v767 = vld [vmem:[%s223 + $0xe50] sm:$0xff]
        %v768 = vld [vmem:[%s223 + $0xe58] sm:$0xff]
        %v769 = vld [vmem:[%s223 + $0xe60] sm:$0xff]
        %v770 = vld [vmem:[%s223 + $0xe68] sm:$0xff]
        %v771 = vld [vmem:[%s223 + $0xe70] sm:$0xff]
        %v772 = vld [vmem:[%s223 + $0xe78] sm:$0xff]
        %v773 = vld [vmem:[%s223 + $0xe80] sm:$0xff]
        %v774 = vld [vmem:[%s223 + $0xe88] sm:$0xff]
        %v775 = vld [vmem:[%s223 + $0xe90] sm:$0xff]
        %v776 = vld [vmem:[%s223 + $0xe98] sm:$0xff]
        %v777 = vld [vmem:[%s223 + $0xea0] sm:$0xff]
        %v778 = vld [vmem:[%s223 + $0xea8] sm:$0xff]
        %v779 = vld [vmem:[%s223 + $0xeb0] sm:$0xff]
        %v780 = vld [vmem:[%s223 + $0xeb8] sm:$0xff]
        %v781 = vld [vmem:[%s223 + $0xec0] sm:$0xff]
        %v782 = vld [vmem:[%s223 + $0xec8] sm:$0xff]
        %v783 = vld [vmem:[%s223 + $0xed0] sm:$0xff]
        %v784 = vld [vmem:[%s223 + $0xed8] sm:$0xff]
        %v785 = vld [vmem:[%s223 + $0xee0] sm:$0xff]
        %v786 = vld [vmem:[%s223 + $0xee8] sm:$0xff]
        %v787 = vld [vmem:[%s223 + $0xef0] sm:$0xff]
        %v788 = vld [vmem:[%s223 + $0xef8] sm:$0xff]
        %v789 = vld [vmem:[%s223 + $0xf00] sm:$0xff]
        %v790 = vld [vmem:[%s223 + $0xf08] sm:$0xff]
        %v791 = vld [vmem:[%s223 + $0xf10] sm:$0xff]
        %v792 = vld [vmem:[%s223 + $0xf18] sm:$0xff]
        %v793 = vld [vmem:[%s223 + $0xf20] sm:$0xff]
        %v794 = vld [vmem:[%s223 + $0xf28] sm:$0xff]
        %v795 = vld [vmem:[%s223 + $0xf30] sm:$0xff]
        %v796 = vld [vmem:[%s223 + $0xf38] sm:$0xff]
        %v797 = vld [vmem:[%s223 + $0xf40] sm:$0xff]
        %v798 = vld [vmem:[%s223 + $0xf48] sm:$0xff]
        %v799 = vld [vmem:[%s223 + $0xf50] sm:$0xff]
        %v800 = vld [vmem:[%s223 + $0xf58] sm:$0xff]
        %v801 = vld [vmem:[%s223 + $0xf60] sm:$0xff]
        %v802 = vld [vmem:[%s223 + $0xf68] sm:$0xff]
        %v803 = vld [vmem:[%s223 + $0xf70] sm:$0xff]
        %v804 = vld [vmem:[%s223 + $0xf78] sm:$0xff]
        %v805 = vld [vmem:[%s223 + $0xf80] sm:$0xff]
        %v806 = vld [vmem:[%s223 + $0xf88] sm:$0xff]
        %v807 = vld [vmem:[%s223 + $0xf90] sm:$0xff]
        %v808 = vld [vmem:[%s223 + $0xf98] sm:$0xff]
        %v809 = vld [vmem:[%s223 + $0xfa0] sm:$0xff]
        %v810 = vld [vmem:[%s223 + $0xfa8] sm:$0xff]
        %v811 = vld [vmem:[%s223 + $0xfb0] sm:$0xff]
        %v812 = vld [vmem:[%s223 + $0xfb8] sm:$0xff]
        %v813 = vld [vmem:[%s223 + $0xfc0] sm:$0xff]
        %v814 = vld [vmem:[%s223 + $0xfc8] sm:$0xff]
        %v815 = vld [vmem:[%s223 + $0xfd0] sm:$0xff]
        %v816 = vld [vmem:[%s223 + $0xfd8] sm:$0xff]
        %v817 = vld [vmem:[%s223 + $0xfe0] sm:$0xff]
        %v818 = vld [vmem:[%s223 + $0xfe8] sm:$0xff]
        %v819 = vld [vmem:[%s223 + $0xff0] sm:$0xff]
        %v820 = vld [vmem:[%s223 + $0xff8] sm:$0xff]
        %v821 = vld [vmem:[%s223 + $0x1000] sm:$0xff]
        %v822 = vld [vmem:[%s223 + $0x1008] sm:$0xff]
        %v823 = vld [vmem:[%s223 + $0x1010] sm:$0xff]
        %v824 = vld [vmem:[%s223 + $0x1018] sm:$0xff]
        %v825 = vld [vmem:[%s223 + $0x1020] sm:$0xff]
        %v826 = vld [vmem:[%s223 + $0x1028] sm:$0xff]
        %v827 = vld [vmem:[%s223 + $0x1030] sm:$0xff]
        %v828 = vld [vmem:[%s223 + $0x1038] sm:$0xff]
        %v829 = vld [vmem:[%s223 + $0x1040] sm:$0xff]
        %v830 = vld [vmem:[%s223 + $0x1048] sm:$0xff]
        %v831 = vld [vmem:[%s223 + $0x1050] sm:$0xff]
        %v832 = vld [vmem:[%s223 + $0x1058] sm:$0xff]
        %v833 = vld [vmem:[%s223 + $0x1060] sm:$0xff]
        %v834 = vld [vmem:[%s223 + $0x1068] sm:$0xff]
        %v835 = vld [vmem:[%s223 + $0x1070] sm:$0xff]
        %v836 = vld [vmem:[%s223 + $0x1078] sm:$0xff]
        %v837 = vld [vmem:[%s223 + $0x1080] sm:$0xff]
        %v838 = vld [vmem:[%s223 + $0x1088] sm:$0xff]
        %v839 = vld [vmem:[%s223 + $0x1090] sm:$0xff]
        %v840 = vld [vmem:[%s223 + $0x1098] sm:$0xff]
        %v841 = vld [vmem:[%s223 + $0x10a0] sm:$0xff]
        %v842 = vld [vmem:[%s223 + $0x10a8] sm:$0xff]
        %v843 = vld [vmem:[%s223 + $0x10b0] sm:$0xff]
        %v844 = vld [vmem:[%s223 + $0x10b8] sm:$0xff]
        %v845 = vld [vmem:[%s223 + $0x10c0] sm:$0xff]
        %v846 = vld [vmem:[%s223 + $0x10c8] sm:$0xff]
        %v847 = vld [vmem:[%s223 + $0x10d0] sm:$0xff]
        %v848 = vld [vmem:[%s223 + $0x10d8] sm:$0xff]
        %v849 = vld [vmem:[%s223 + $0x10e0] sm:$0xff]
        %v850 = vld [vmem:[%s223 + $0x10e8] sm:$0xff]
        %v851 = vld [vmem:[%s223 + $0x10f0] sm:$0xff]
        %v852 = vld [vmem:[%s223 + $0x10f8] sm:$0xff]
        %v853 = vld [vmem:[%s223 + $0x1100] sm:$0xff]
        %v854 = vld [vmem:[%s223 + $0x1108] sm:$0xff]
        %v855 = vld [vmem:[%s223 + $0x1110] sm:$0xff]
        %v856 = vld [vmem:[%s223 + $0x1118] sm:$0xff]
        %v857 = vld [vmem:[%s223 + $0x1120] sm:$0xff]
        %v858 = vld [vmem:[%s223 + $0x1128] sm:$0xff]
        %v859 = vld [vmem:[%s223 + $0x1130] sm:$0xff]
        %v860 = vld [vmem:[%s223 + $0x1138] sm:$0xff]
        %v861 = vld [vmem:[%s223 + $0x1140] sm:$0xff]
        %v862 = vld [vmem:[%s223 + $0x1148] sm:$0xff]
        %v863 = vld [vmem:[%s223 + $0x1150] sm:$0xff]
        %v864 = vld [vmem:[%s223 + $0x1158] sm:$0xff]
        %v865 = vld [vmem:[%s223 + $0x1160] sm:$0xff]
        %v866 = vld [vmem:[%s223 + $0x1168] sm:$0xff]
        %v867 = vld [vmem:[%s223 + $0x1170] sm:$0xff]
        %v868 = vld [vmem:[%s223 + $0x1178] sm:$0xff]
        %v869 = vld [vmem:[%s223 + $0x1180] sm:$0xff]
        %v870 = vld [vmem:[%s223 + $0x1188] sm:$0xff]
        %v871 = vld [vmem:[%s223 + $0x1190] sm:$0xff]
        %v872 = vld [vmem:[%s223 + $0x1198] sm:$0xff]
        %v873 = vld [vmem:[%s223 + $0x11a0] sm:$0xff]
        %v874 = vld [vmem:[%s223 + $0x11a8] sm:$0xff]
        %v875 = vld [vmem:[%s223 + $0x11b0] sm:$0xff]
        %v876 = vld [vmem:[%s223 + $0x11b8] sm:$0xff]
        %v877 = vld [vmem:[%s223 + $0x11c0] sm:$0xff]
        %v878 = vld [vmem:[%s223 + $0x11c8] sm:$0xff]
        %v879 = vld [vmem:[%s223 + $0x11d0] sm:$0xff]
        %v880 = vld [vmem:[%s223 + $0x11d8] sm:$0xff]
        %v881 = vld [vmem:[%s223 + $0x11e0] sm:$0xff]
        %v882 = vld [vmem:[%s223 + $0x11e8] sm:$0xff]
        %v883 = vld [vmem:[%s223 + $0x11f0] sm:$0xff]
        %v884 = vld [vmem:[%s223 + $0x11f8] sm:$0xff]
        %v885 = vld [vmem:[%s223 + $0x1200] sm:$0xff]
        %v886 = vld [vmem:[%s223 + $0x1208] sm:$0xff]
        %v887 = vld [vmem:[%s223 + $0x1210] sm:$0xff]
        %v888 = vld [vmem:[%s223 + $0x1218] sm:$0xff]
        %v889 = vld [vmem:[%s223 + $0x1220] sm:$0xff]
        %v890 = vld [vmem:[%s223 + $0x1228] sm:$0xff]
        %v891 = vld [vmem:[%s223 + $0x1230] sm:$0xff]
        %v892 = vld [vmem:[%s223 + $0x1238] sm:$0xff]
        %v893 = vld [vmem:[%s223 + $0x1240] sm:$0xff]
        %v894 = vld [vmem:[%s223 + $0x1248] sm:$0xff]
        %v895 = vld [vmem:[%s223 + $0x1250] sm:$0xff]
        %v896 = vld [vmem:[%s223 + $0x1258] sm:$0xff]
        %v897 = vld [vmem:[%s223 + $0x1260] sm:$0xff]
        %v898 = vld [vmem:[%s223 + $0x1268] sm:$0xff]
        %v899 = vld [vmem:[%s223 + $0x1270] sm:$0xff]
        %v900 = vld [vmem:[%s223 + $0x1278] sm:$0xff]
        %v901 = vld [vmem:[%s223 + $0x1280] sm:$0xff]
        %v902 = vld [vmem:[%s223 + $0x1288] sm:$0xff]
        %v903 = vld [vmem:[%s223 + $0x1290] sm:$0xff]
        %v904 = vld [vmem:[%s223 + $0x1298] sm:$0xff]
        %v905 = vld [vmem:[%s223 + $0x12a0] sm:$0xff]
        %v906 = vld [vmem:[%s223 + $0x12a8] sm:$0xff]
        %v907 = vld [vmem:[%s223 + $0x12b0] sm:$0xff]
        %v908 = vld [vmem:[%s223 + $0x12b8] sm:$0xff]
        %v909 = vld [vmem:[%s223 + $0x12c0] sm:$0xff]
        %v910 = vld [vmem:[%s223 + $0x12c8] sm:$0xff]
        %v911 = vld [vmem:[%s223 + $0x12d0] sm:$0xff]
        %v912 = vld [vmem:[%s223 + $0x12d8] sm:$0xff]
        %v913 = vld [vmem:[%s223 + $0x12e0] sm:$0xff]
        %v914 = vld [vmem:[%s223 + $0x12e8] sm:$0xff]
        %v915 = vld [vmem:[%s223 + $0x12f0] sm:$0xff]
        %v916 = vld [vmem:[%s223 + $0x12f8] sm:$0xff]
        %v917 = vld [vmem:[%s223 + $0x1300] sm:$0xff]
        %v918 = vld [vmem:[%s223 + $0x1308] sm:$0xff]
        %v919 = vld [vmem:[%s223 + $0x1310] sm:$0xff]
        %v920 = vld [vmem:[%s223 + $0x1318] sm:$0xff]
        %v921 = vld [vmem:[%s223 + $0x1320] sm:$0xff]
        %v922 = vld [vmem:[%s223 + $0x1328] sm:$0xff]
        %v923 = vld [vmem:[%s223 + $0x1330] sm:$0xff]
        %v924 = vld [vmem:[%s223 + $0x1338] sm:$0xff]
        %v925 = vld [vmem:[%s223 + $0x1340] sm:$0xff]
        %v926 = vld [vmem:[%s223 + $0x1348] sm:$0xff]
        %v927 = vld [vmem:[%s223 + $0x1350] sm:$0xff]
        %v928 = vld [vmem:[%s223 + $0x1358] sm:$0xff]
        %v929 = vld [vmem:[%s223 + $0x1360] sm:$0xff]
        %v930 = vld [vmem:[%s223 + $0x1368] sm:$0xff]
        %v931 = vld [vmem:[%s223 + $0x1370] sm:$0xff]
        %v932 = vld [vmem:[%s223 + $0x1378] sm:$0xff]
        %v933 = vld [vmem:[%s223 + $0x1380] sm:$0xff]
        %v934 = vld [vmem:[%s223 + $0x1388] sm:$0xff]
        %v935 = vld [vmem:[%s223 + $0x1390] sm:$0xff]
        %v936 = vld [vmem:[%s223 + $0x1398] sm:$0xff]
        %v937 = vld [vmem:[%s223 + $0x13a0] sm:$0xff]
        %v938 = vld [vmem:[%s223 + $0x13a8] sm:$0xff]
        %v939 = vld [vmem:[%s223 + $0x13b0] sm:$0xff]
        %v940 = vld [vmem:[%s223 + $0x13b8] sm:$0xff]
        %v941 = vld [vmem:[%s223 + $0x13c0] sm:$0xff]
        %v942 = vld [vmem:[%s223 + $0x13c8] sm:$0xff]
        %v943 = vld [vmem:[%s223 + $0x13d0] sm:$0xff]
        %v944 = vld [vmem:[%s223 + $0x13d8] sm:$0xff]
        %v945 = vld [vmem:[%s223 + $0x13e0] sm:$0xff]
        %v946 = vld [vmem:[%s223 + $0x13e8] sm:$0xff]
        %v947 = vld [vmem:[%s223 + $0x13f0] sm:$0xff]
        %v948 = vld [vmem:[%s223 + $0x13f8] sm:$0xff]
        %v949 = vld [vmem:[%s223 + $0x1400] sm:$0xff]
        %v950 = vld [vmem:[%s223 + $0x1408] sm:$0xff]
        %v951 = vld [vmem:[%s223 + $0x1410] sm:$0xff]
        %v952 = vld [vmem:[%s223 + $0x1418] sm:$0xff]
        %v953 = vld [vmem:[%s223 + $0x1420] sm:$0xff]
        %v954 = vld [vmem:[%s223 + $0x1428] sm:$0xff]
        %v955 = vld [vmem:[%s223 + $0x1430] sm:$0xff]
        %v956 = vld [vmem:[%s223 + $0x1438] sm:$0xff]
        %v957 = vld [vmem:[%s223 + $0x1440] sm:$0xff]
        %v958 = vld [vmem:[%s223 + $0x1448] sm:$0xff]
        %v959 = vld [vmem:[%s223 + $0x1450] sm:$0xff]
        %v960 = vld [vmem:[%s223 + $0x1458] sm:$0xff]
        %v961 = vld [vmem:[%s223 + $0x1460] sm:$0xff]
        %v962 = vld [vmem:[%s223 + $0x1468] sm:$0xff]
        %v963 = vld [vmem:[%s223 + $0x1470] sm:$0xff]
        %v964 = vld [vmem:[%s223 + $0x1478] sm:$0xff]
        %v965 = vld [vmem:[%s223 + $0x1480] sm:$0xff]
        %v966 = vld [vmem:[%s223 + $0x1488] sm:$0xff]
        %v967 = vld [vmem:[%s223 + $0x1490] sm:$0xff]
        %v968 = vld [vmem:[%s223 + $0x1498] sm:$0xff]
        %v969 = vld [vmem:[%s223 + $0x14a0] sm:$0xff]
        %v970 = vld [vmem:[%s223 + $0x14a8] sm:$0xff]
        %v971 = vld [vmem:[%s223 + $0x14b0] sm:$0xff]
        %v972 = vld [vmem:[%s223 + $0x14b8] sm:$0xff]
        %v973 = vld [vmem:[%s223 + $0x14c0] sm:$0xff]
        %v974 = vld [vmem:[%s223 + $0x14c8] sm:$0xff]
        %v975 = vld [vmem:[%s223 + $0x14d0] sm:$0xff]
        %v976 = vld [vmem:[%s223 + $0x14d8] sm:$0xff]
        %v977 = vld [vmem:[%s223 + $0x14e0] sm:$0xff]
        %v978 = vld [vmem:[%s223 + $0x14e8] sm:$0xff]
        %v979 = vld [vmem:[%s223 + $0x14f0] sm:$0xff]
        %v980 = vld [vmem:[%s223 + $0x14f8] sm:$0xff]
        %v981 = vld [vmem:[%s223 + $0x1500] sm:$0xff]
        %v982 = vld [vmem:[%s223 + $0x1508] sm:$0xff]
        %v983 = vld [vmem:[%s223 + $0x1510] sm:$0xff]
        %v984 = vld [vmem:[%s223 + $0x1518] sm:$0xff]
        %v985 = vld [vmem:[%s223 + $0x1520] sm:$0xff]
        %v986 = vld [vmem:[%s223 + $0x1528] sm:$0xff]
        %v987 = vld [vmem:[%s223 + $0x1530] sm:$0xff]
        %v988 = vld [vmem:[%s223 + $0x1538] sm:$0xff]
        %v989 = vld [vmem:[%s223 + $0x1540] sm:$0xff]
        %v990 = vld [vmem:[%s223 + $0x1548] sm:$0xff]
        %v991 = vld [vmem:[%s223 + $0x1550] sm:$0xff]
        %v992 = vld [vmem:[%s223 + $0x1558] sm:$0xff]
        %v993 = vld [vmem:[%s223 + $0x1560] sm:$0xff]
        %v994 = vld [vmem:[%s223 + $0x1568] sm:$0xff]
        %v995 = vld [vmem:[%s223 + $0x1570] sm:$0xff]
        %v996 = vld [vmem:[%s223 + $0x1578] sm:$0xff]
        %v997 = vld [vmem:[%s223 + $0x1580] sm:$0xff]
        %v998 = vld [vmem:[%s223 + $0x1588] sm:$0xff]
        %v999 = vld [vmem:[%s223 + $0x1590] sm:$0xff]
        %v1000 = vld [vmem:[%s223 + $0x1598] sm:$0xff]
        %v1001 = vld [vmem:[%s223 + $0x15a0] sm:$0xff]
        %v1002 = vld [vmem:[%s223 + $0x15a8] sm:$0xff]
        %v1003 = vld [vmem:[%s223 + $0x15b0] sm:$0xff]
        %v1004 = vld [vmem:[%s223 + $0x15b8] sm:$0xff]
        %v1005 = vld [vmem:[%s223 + $0x15c0] sm:$0xff]
        %v1006 = vld [vmem:[%s223 + $0x15c8] sm:$0xff]
        %v1007 = vld [vmem:[%s223 + $0x15d0] sm:$0xff]
        %v1008 = vld [vmem:[%s223 + $0x15d8] sm:$0xff]
        %v1009 = vld [vmem:[%s223 + $0x15e0] sm:$0xff]
        %v1010 = vld [vmem:[%s223 + $0x15e8] sm:$0xff]
        %v1011 = vld [vmem:[%s223 + $0x15f0] sm:$0xff]
        %v1012 = vld [vmem:[%s223 + $0x15f8] sm:$0xff]
        %1013 = vmatprep.subr.mxu0 %v310
        %1014 = vmatpush1.msra.mxu0 %v309
        %1015 = vmatprep.subr.mxu0 %v314
        %1016 = vmatpush1.msra.mxu0 %v313
        %1017 = vmatprep.subr.mxu0 %v318
        %1018 = vmatpush1.msra.mxu0 %v317
        %1019 = vmatprep.subr.mxu0 %v322
        %1020 = vmatpush1.msra.mxu0 %v321
        %1021 = vmatprep.subr.mxu0 %v326
        %1022 = vmatpush1.msra.mxu0 %v325
        %1023 = vmatprep.subr.mxu0 %v330
        %1024 = vmatpush1.msra.mxu0 %v329
        %1025 = vmatprep.subr.mxu0 %v334
        %1026 = vmatpush1.msra.mxu0 %v333
        %1027 = vmatprep.subr.mxu0 %v338
        %1028 = vmatpush1.msra.mxu0 %v337
        %1029 = vmatprep.subr.mxu0 %v342
        %1030 = vmatpush1.msra.mxu0 %v341
        %1031 = vmatprep.subr.mxu0 %v346
        %1032 = vmatpush1.msra.mxu0 %v345
        %1033 = vmatprep.subr.mxu0 %v350
        %1034 = vmatpush1.msra.mxu0 %v349
        %1035 = vmatprep.subr.mxu0 %v354
        %1036 = vmatpush1.msra.mxu0 %v353
        %1037 = vmatprep.subr.mxu0 %v358
        %1038 = vmatpush1.msra.mxu0 %v357
        %1039 = vmatprep.subr.mxu0 %v362
        %1040 = vmatpush1.msra.mxu0 %v361
        %1041 = vmatprep.subr.mxu0 %v366
        %1042 = vmatpush1.msra.mxu0 %v365
        %1043 = vmatprep.subr.mxu0 %v370
        %1044 = vmatpush1.msra.mxu0 %v369
        %1045 = vmatprep.subr.mxu0 %v374
        %1046 = vmatpush1.msra.mxu0 %v373
        %1047 = vmatprep.subr.mxu0 %v378
        %1048 = vmatpush1.msra.mxu0 %v377
        %1049 = vmatprep.subr.mxu0 %v382
        %1050 = vmatpush1.msra.mxu0 %v381
        %1051 = vmatprep.subr.mxu0 %v386
        %1052 = vmatpush1.msra.mxu0 %v385
        %1053 = vmatprep.subr.mxu0 %v390
        %1054 = vmatpush1.msra.mxu0 %v389
        %1055 = vmatprep.subr.mxu0 %v394
        %1056 = vmatpush1.msra.mxu0 %v393
        %1057 = vmatprep.subr.mxu0 %v398
        %1058 = vmatpush1.msra.mxu0 %v397
        %1059 = vmatprep.subr.mxu0 %v402
        %1060 = vmatpush1.msra.mxu0 %v401
        %1061 = vmatprep.subr.mxu0 %v406
        %1062 = vmatpush1.msra.mxu0 %v405
        %1063 = vmatprep.subr.mxu0 %v410
        %1064 = vmatpush1.msra.mxu0 %v409
        %1065 = vmatprep.subr.mxu0 %v414
        %1066 = vmatpush1.msra.mxu0 %v413
        %1067 = vmatprep.subr.mxu0 %v418
        %1068 = vmatpush1.msra.mxu0 %v417
        %1069 = vmatprep.subr.mxu0 %v422
        %1070 = vmatpush1.msra.mxu0 %v421
        %1071 = vmatprep.subr.mxu0 %v426
        %1072 = vmatpush1.msra.mxu0 %v425
        %1073 = vmatprep.subr.mxu0 %v430
        %1074 = vmatpush1.msra.mxu0 %v429
        %1075 = vmatprep.subr.mxu0 %v434
        %1076 = vmatpush1.msra.mxu0 %v433
        %1077 = vmatprep.mubr.f32.mxu0 %v299
        %1078 = vmatmul.mubr.f32.gmra.mrb[0].mxu0 %v298
        %v1079 = vpop.f32.mrb[0].mxu0
        %v1080 = vadd.f32 0.0, %v1079
        %v1081 = vpop.f32.mrb[0].mxu0
        %v1082 = vadd.f32 0.0, %v1081
        %1083 = vdwg.mxu0
        %1084 = vmatprep.subr.mxu0 %v438
        %1085 = vmatpush1.msra.mxu0 %v437
        %1086 = vmatprep.subr.mxu0 %v442
        %1087 = vmatpush1.msra.mxu0 %v441
        %1088 = vmatprep.subr.mxu0 %v446
        %1089 = vmatpush1.msra.mxu0 %v445
        %1090 = vmatprep.subr.mxu0 %v450
        %1091 = vmatpush1.msra.mxu0 %v449
        %1092 = vmatprep.subr.mxu0 %v454
        %1093 = vmatpush1.msra.mxu0 %v453
        %1094 = vmatprep.subr.mxu0 %v458
        %1095 = vmatpush1.msra.mxu0 %v457
        %1096 = vmatprep.subr.mxu0 %v462
        %1097 = vmatpush1.msra.mxu0 %v461
        %1098 = vmatprep.subr.mxu0 %v466
        %1099 = vmatpush1.msra.mxu0 %v465
        %1100 = vmatprep.subr.mxu0 %v470
        %1101 = vmatpush1.msra.mxu0 %v469
        %1102 = vmatprep.subr.mxu0 %v474
        %1103 = vmatpush1.msra.mxu0 %v473
        %1104 = vmatprep.subr.mxu0 %v478
        %1105 = vmatpush1.msra.mxu0 %v477
        %1106 = vmatprep.subr.mxu0 %v482
        %1107 = vmatpush1.msra.mxu0 %v481
        %1108 = vmatprep.subr.mxu0 %v486
        %1109 = vmatpush1.msra.mxu0 %v485
        %1110 = vmatprep.subr.mxu0 %v490
        %1111 = vmatpush1.msra.mxu0 %v489
        %1112 = vmatprep.subr.mxu0 %v494
        %1113 = vmatpush1.msra.mxu0 %v493
        %1114 = vmatprep.subr.mxu0 %v498
        %1115 = vmatpush1.msra.mxu0 %v497
        %1116 = vmatprep.subr.mxu0 %v502
        %1117 = vmatpush1.msra.mxu0 %v501
        %1118 = vmatprep.subr.mxu0 %v506
        %1119 = vmatpush1.msra.mxu0 %v505
        %1120 = vmatprep.subr.mxu0 %v510
        %1121 = vmatpush1.msra.mxu0 %v509
        %1122 = vmatprep.subr.mxu0 %v514
        %1123 = vmatpush1.msra.mxu0 %v513
        %1124 = vmatprep.subr.mxu0 %v518
        %1125 = vmatpush1.msra.mxu0 %v517
        %1126 = vmatprep.subr.mxu0 %v522
        %1127 = vmatpush1.msra.mxu0 %v521
        %1128 = vmatprep.subr.mxu0 %v526
        %1129 = vmatpush1.msra.mxu0 %v525
        %1130 = vmatprep.subr.mxu0 %v530
        %1131 = vmatpush1.msra.mxu0 %v529
        %1132 = vmatprep.subr.mxu0 %v534
        %1133 = vmatpush1.msra.mxu0 %v533
        %1134 = vmatprep.subr.mxu0 %v538
        %1135 = vmatpush1.msra.mxu0 %v537
        %1136 = vmatprep.subr.mxu0 %v542
        %1137 = vmatpush1.msra.mxu0 %v541
        %1138 = vmatprep.subr.mxu0 %v546
        %1139 = vmatpush1.msra.mxu0 %v545
        %1140 = vmatprep.subr.mxu0 %v550
        %1141 = vmatpush1.msra.mxu0 %v549
        %1142 = vmatprep.subr.mxu0 %v554
        %1143 = vmatpush1.msra.mxu0 %v553
        %1144 = vmatprep.subr.mxu0 %v558
        %1145 = vmatpush1.msra.mxu0 %v557
        %1146 = vmatprep.subr.mxu0 %v562
        %1147 = vmatpush1.msra.mxu0 %v561
        %1148 = vmatprep.mubr.f32.mxu0 %v301
        %1149 = vmatmul.mubr.f32.gmra.mrb[0].mxu0 %v300
        %v1150 = vpop.f32.mrb[0].mxu0
        %v1151 = vadd.f32 %v1080, %v1150
        %v1152 = vpop.f32.mrb[0].mxu0
        %v1153 = vadd.f32 %v1082, %v1152
        %1154 = vdwg.mxu0
        %1155 = vmatprep.subr.mxu0 %v566
        %1156 = vmatpush1.msra.mxu0 %v565
        %1157 = vmatprep.subr.mxu0 %v570
        %1158 = vmatpush1.msra.mxu0 %v569
        %1159 = vmatprep.subr.mxu0 %v574
        %1160 = vmatpush1.msra.mxu0 %v573
        %1161 = vmatprep.subr.mxu0 %v578
        %1162 = vmatpush1.msra.mxu0 %v577
        %1163 = vmatprep.subr.mxu0 %v582
        %1164 = vmatpush1.msra.mxu0 %v581
        %1165 = vmatprep.subr.mxu0 %v586
        %1166 = vmatpush1.msra.mxu0 %v585
        %1167 = vmatprep.subr.mxu0 %v590
        %1168 = vmatpush1.msra.mxu0 %v589
        %1169 = vmatprep.subr.mxu0 %v594
        %1170 = vmatpush1.msra.mxu0 %v593
        %1171 = vmatprep.subr.mxu0 %v598
        %1172 = vmatpush1.msra.mxu0 %v597
        %1173 = vmatprep.subr.mxu0 %v602
        %1174 = vmatpush1.msra.mxu0 %v601
        %1175 = vmatprep.subr.mxu0 %v606
        %1176 = vmatpush1.msra.mxu0 %v605
        %1177 = vmatprep.subr.mxu0 %v610
        %1178 = vmatpush1.msra.mxu0 %v609
        %1179 = vmatprep.subr.mxu0 %v614
        %1180 = vmatpush1.msra.mxu0 %v613
        %1181 = vmatprep.subr.mxu0 %v618
        %1182 = vmatpush1.msra.mxu0 %v617
        %1183 = vmatprep.subr.mxu0 %v622
        %1184 = vmatpush1.msra.mxu0 %v621
        %1185 = vmatprep.subr.mxu0 %v626
        %1186 = vmatpush1.msra.mxu0 %v625
        %1187 = vmatprep.subr.mxu0 %v630
        %1188 = vmatpush1.msra.mxu0 %v629
        %1189 = vmatprep.subr.mxu0 %v634
        %1190 = vmatpush1.msra.mxu0 %v633
        %1191 = vmatprep.subr.mxu0 %v638
        %1192 = vmatpush1.msra.mxu0 %v637
        %1193 = vmatprep.subr.mxu0 %v642
        %1194 = vmatpush1.msra.mxu0 %v641
        %1195 = vmatprep.subr.mxu0 %v646
        %1196 = vmatpush1.msra.mxu0 %v645
        %1197 = vmatprep.subr.mxu0 %v650
        %1198 = vmatpush1.msra.mxu0 %v649
        %1199 = vmatprep.subr.mxu0 %v654
        %1200 = vmatpush1.msra.mxu0 %v653
        %1201 = vmatprep.subr.mxu0 %v658
        %1202 = vmatpush1.msra.mxu0 %v657
        %1203 = vmatprep.subr.mxu0 %v662
        %1204 = vmatpush1.msra.mxu0 %v661
        %1205 = vmatprep.subr.mxu0 %v666
        %1206 = vmatpush1.msra.mxu0 %v665
        %1207 = vmatprep.subr.mxu0 %v670
        %1208 = vmatpush1.msra.mxu0 %v669
        %1209 = vmatprep.subr.mxu0 %v674
        %1210 = vmatpush1.msra.mxu0 %v673
        %1211 = vmatprep.subr.mxu0 %v678
        %1212 = vmatpush1.msra.mxu0 %v677
        %1213 = vmatprep.subr.mxu0 %v682
        %1214 = vmatpush1.msra.mxu0 %v681
        %1215 = vmatprep.subr.mxu0 %v686
        %1216 = vmatpush1.msra.mxu0 %v685
        %1217 = vmatprep.subr.mxu0 %v690
        %1218 = vmatpush1.msra.mxu0 %v689
        %1219 = vmatprep.mubr.f32.mxu0 %v303
        %1220 = vmatmul.mubr.f32.gmra.mrb[0].mxu0 %v302
        %v1221 = vpop.f32.mrb[0].mxu0
        %v1222 = vadd.f32 %v1151, %v1221
        %v1223 = vpop.f32.mrb[0].mxu0
        %v1224 = vadd.f32 %v1153, %v1223
        %1225 = vdwg.mxu0
        %1226 = vmatprep.subr.mxu0 %v694
        %1227 = vmatpush1.msra.mxu0 %v693
        %1228 = vmatprep.subr.mxu0 %v698
        %1229 = vmatpush1.msra.mxu0 %v697
        %1230 = vmatprep.subr.mxu0 %v702
        %1231 = vmatpush1.msra.mxu0 %v701
        %1232 = vmatprep.subr.mxu0 %v706
        %1233 = vmatpush1.msra.mxu0 %v705
        %1234 = vmatprep.subr.mxu0 %v710
        %1235 = vmatpush1.msra.mxu0 %v709
        %1236 = vmatprep.subr.mxu0 %v714
        %1237 = vmatpush1.msra.mxu0 %v713
        %1238 = vmatprep.subr.mxu0 %v718
        %1239 = vmatpush1.msra.mxu0 %v717
        %1240 = vmatprep.subr.mxu0 %v722
        %1241 = vmatpush1.msra.mxu0 %v721
        %1242 = vmatprep.subr.mxu0 %v726
        %1243 = vmatpush1.msra.mxu0 %v725
        %1244 = vmatprep.subr.mxu0 %v730
        %1245 = vmatpush1.msra.mxu0 %v729
        %1246 = vmatprep.subr.mxu0 %v734
        %1247 = vmatpush1.msra.mxu0 %v733
        %1248 = vmatprep.subr.mxu0 %v738
        %1249 = vmatpush1.msra.mxu0 %v737
        %1250 = vmatprep.subr.mxu0 %v742
        %1251 = vmatpush1.msra.mxu0 %v741
        %1252 = vmatprep.subr.mxu0 %v746
        %1253 = vmatpush1.msra.mxu0 %v745
        %1254 = vmatprep.subr.mxu0 %v750
        %1255 = vmatpush1.msra.mxu0 %v749
        %1256 = vmatprep.subr.mxu0 %v754
        %1257 = vmatpush1.msra.mxu0 %v753
        %1258 = vmatprep.subr.mxu0 %v758
        %1259 = vmatpush1.msra.mxu0 %v757
        %1260 = vmatprep.subr.mxu0 %v762
        %1261 = vmatpush1.msra.mxu0 %v761
        %1262 = vmatprep.subr.mxu0 %v766
        %1263 = vmatpush1.msra.mxu0 %v765
        %1264 = vmatprep.subr.mxu0 %v770
        %1265 = vmatpush1.msra.mxu0 %v769
        %1266 = vmatprep.subr.mxu0 %v774
        %1267 = vmatpush1.msra.mxu0 %v773
        %1268 = vmatprep.subr.mxu0 %v778
        %1269 = vmatpush1.msra.mxu0 %v777
        %1270 = vmatprep.subr.mxu0 %v782
        %1271 = vmatpush1.msra.mxu0 %v781
        %1272 = vmatprep.subr.mxu0 %v786
        %1273 = vmatpush1.msra.mxu0 %v785
        %1274 = vmatprep.subr.mxu0 %v790
        %1275 = vmatpush1.msra.mxu0 %v789
        %1276 = vmatprep.subr.mxu0 %v794
        %1277 = vmatpush1.msra.mxu0 %v793
        %1278 = vmatprep.subr.mxu0 %v798
        %1279 = vmatpush1.msra.mxu0 %v797
        %1280 = vmatprep.subr.mxu0 %v802
        %1281 = vmatpush1.msra.mxu0 %v801
        %1282 = vmatprep.subr.mxu0 %v806
        %1283 = vmatpush1.msra.mxu0 %v805
        %1284 = vmatprep.subr.mxu0 %v810
        %1285 = vmatpush1.msra.mxu0 %v809
        %1286 = vmatprep.subr.mxu0 %v814
        %1287 = vmatpush1.msra.mxu0 %v813
        %1288 = vmatprep.subr.mxu0 %v818
        %1289 = vmatpush1.msra.mxu0 %v817
        %1290 = vmatprep.mubr.f32.mxu0 %v305
        %1291 = vmatmul.mubr.f32.gmra.mrb[0].mxu0 %v304
        %v1292 = vpop.f32.mrb[0].mxu0
        %v1293 = vadd.f32 %v1222, %v1292
        %v1294 = vpop.f32.mrb[0].mxu0
        %v1295 = vadd.f32 %v1224, %v1294
        %1296 = vdwg.mxu0
        %1297 = vmatprep.subr.mxu0 %v822
        %1298 = vmatpush1.msra.mxu0 %v821
        %1299 = vmatprep.subr.mxu0 %v826
        %1300 = vmatpush1.msra.mxu0 %v825
        %1301 = vmatprep.subr.mxu0 %v830
        %1302 = vmatpush1.msra.mxu0 %v829
        %1303 = vmatprep.subr.mxu0 %v834
        %1304 = vmatpush1.msra.mxu0 %v833
        %1305 = vmatprep.subr.mxu0 %v838
        %1306 = vmatpush1.msra.mxu0 %v837
        %1307 = vmatprep.subr.mxu0 %v842
        %1308 = vmatpush1.msra.mxu0 %v841
        %1309 = vmatprep.subr.mxu0 %v846
        %1310 = vmatpush1.msra.mxu0 %v845
        %1311 = vmatprep.subr.mxu0 %v850
        %1312 = vmatpush1.msra.mxu0 %v849
        %1313 = vmatprep.subr.mxu0 %v854
        %1314 = vmatpush1.msra.mxu0 %v853
        %1315 = vmatprep.subr.mxu0 %v858
        %1316 = vmatpush1.msra.mxu0 %v857
        %1317 = vmatprep.subr.mxu0 %v862
        %1318 = vmatpush1.msra.mxu0 %v861
        %1319 = vmatprep.subr.mxu0 %v866
        %1320 = vmatpush1.msra.mxu0 %v865
        %1321 = vmatprep.subr.mxu0 %v870
        %1322 = vmatpush1.msra.mxu0 %v869
        %1323 = vmatprep.subr.mxu0 %v874
        %1324 = vmatpush1.msra.mxu0 %v873
        %1325 = vmatprep.subr.mxu0 %v878
        %1326 = vmatpush1.msra.mxu0 %v877
        %1327 = vmatprep.subr.mxu0 %v882
        %1328 = vmatpush1.msra.mxu0 %v881
        %1329 = vmatprep.subr.mxu0 %v886
        %1330 = vmatpush1.msra.mxu0 %v885
        %1331 = vmatprep.subr.mxu0 %v890
        %1332 = vmatpush1.msra.mxu0 %v889
        %1333 = vmatprep.subr.mxu0 %v894
        %1334 = vmatpush1.msra.mxu0 %v893
        %1335 = vmatprep.subr.mxu0 %v898
        %1336 = vmatpush1.msra.mxu0 %v897
        %1337 = vmatprep.subr.mxu0 %v902
        %1338 = vmatpush1.msra.mxu0 %v901
        %1339 = vmatprep.subr.mxu0 %v906
        %1340 = vmatpush1.msra.mxu0 %v905
        %1341 = vmatprep.subr.mxu0 %v910
        %1342 = vmatpush1.msra.mxu0 %v909
        %1343 = vmatprep.subr.mxu0 %v914
        %1344 = vmatpush1.msra.mxu0 %v913
        %1345 = vmatprep.subr.mxu0 %v918
        %1346 = vmatpush1.msra.mxu0 %v917
        %1347 = vmatprep.subr.mxu0 %v922
        %1348 = vmatpush1.msra.mxu0 %v921
        %1349 = vmatprep.subr.mxu0 %v926
        %1350 = vmatpush1.msra.mxu0 %v925
        %1351 = vmatprep.subr.mxu0 %v930
        %1352 = vmatpush1.msra.mxu0 %v929
        %1353 = vmatprep.subr.mxu0 %v934
        %1354 = vmatpush1.msra.mxu0 %v933
        %1355 = vmatprep.subr.mxu0 %v938
        %1356 = vmatpush1.msra.mxu0 %v937
        %1357 = vmatprep.subr.mxu0 %v942
        %1358 = vmatpush1.msra.mxu0 %v941
        %1359 = vmatprep.subr.mxu0 %v946
        %1360 = vmatpush1.msra.mxu0 %v945
        %1361 = vmatprep.mubr.f32.mxu0 %v307
        %1362 = vmatmul.mubr.f32.gmra.mrb[0].mxu0 %v306
        %v1363 = vpop.f32.mrb[0].mxu0
        %v1364 = vadd.f32 %v1293, %v1363
        %v1365 = vpop.f32.mrb[0].mxu0
        %v1366 = vadd.f32 %v1295, %v1365
        %1367 = vdwg.mxu0
        %1368 = vmatprep.subr.mxu0 %v950
        %1369 = vmatpush1.msra.mxu0 %v949
        %1370 = vmatprep.subr.mxu0 %v954
        %1371 = vmatpush1.msra.mxu0 %v953
        %1372 = vmatprep.subr.mxu0 %v958
        %1373 = vmatpush1.msra.mxu0 %v957
        %1374 = vmatprep.subr.mxu0 %v962
        %1375 = vmatpush1.msra.mxu0 %v961
        %1376 = vmatprep.subr.mxu0 %v966
        %1377 = vmatpush1.msra.mxu0 %v965
        %1378 = vmatprep.subr.mxu0 %v970
        %1379 = vmatpush1.msra.mxu0 %v969
        %1380 = vmatprep.subr.mxu0 %v974
        %1381 = vmatpush1.msra.mxu0 %v973
        %1382 = vmatprep.subr.mxu0 %v978
        %1383 = vmatpush1.msra.mxu0 %v977
        %1384 = vmatprep.subr.mxu0 %v982
        %1385 = vmatpush1.msra.mxu0 %v981
        %1386 = vmatprep.subr.mxu0 %v986
        %1387 = vmatpush1.msra.mxu0 %v985
        %1388 = vmatprep.subr.mxu0 %v990
        %1389 = vmatpush1.msra.mxu0 %v989
        %1390 = vmatprep.subr.mxu0 %v994
        %1391 = vmatpush1.msra.mxu0 %v993
        %1392 = vmatprep.subr.mxu0 %v998
        %1393 = vmatpush1.msra.mxu0 %v997
        %1394 = vmatprep.subr.mxu0 %v1002
        %1395 = vmatpush1.msra.mxu0 %v1001
        %1396 = vmatprep.subr.mxu0 %v1006
        %1397 = vmatpush1.msra.mxu0 %v1005
        %1398 = vmatprep.subr.mxu0 %v1010
        %1399 = vmatpush1.msra.mxu0 %v1009
        %1400 = vmatprep.subr.mxu0 0.0
        %1401 = vmatpush1.msra.mxu0 0.0
        %1402 = vmatprep.subr.mxu0 0.0
        %1403 = vmatpush1.msra.mxu0 0.0
        %1404 = vmatprep.subr.mxu0 0.0
        %1405 = vmatpush1.msra.mxu0 0.0
        %1406 = vmatprep.subr.mxu0 0.0
        %1407 = vmatpush1.msra.mxu0 0.0
        %1408 = vmatprep.subr.mxu0 0.0
        %1409 = vmatpush1.msra.mxu0 0.0
        %1410 = vmatprep.subr.mxu0 0.0
        %1411 = vmatpush1.msra.mxu0 0.0
        %1412 = vmatprep.subr.mxu0 0.0
        %1413 = vmatpush1.msra.mxu0 0.0
        %1414 = vmatprep.subr.mxu0 0.0
        %1415 = vmatpush1.msra.mxu0 0.0
        %1416 = vmatprep.subr.mxu0 0.0
        %1417 = vmatpush1.msra.mxu0 0.0
        %1418 = vmatprep.subr.mxu0 0.0
        %1419 = vmatpush1.msra.mxu0 0.0
        %1420 = vmatprep.subr.mxu0 0.0
        %1421 = vmatpush1.msra.mxu0 0.0
        %1422 = vmatprep.subr.mxu0 0.0
        %1423 = vmatpush1.msra.mxu0 0.0
        %1424 = vmatprep.subr.mxu0 0.0
        %1425 = vmatpush1.msra.mxu0 0.0
        %1426 = vmatprep.subr.mxu0 0.0
        %1427 = vmatpush1.msra.mxu0 0.0
        %1428 = vmatprep.subr.mxu0 0.0
        %1429 = vmatpush1.msra.mxu0 0.0
        %1430 = vmatprep.subr.mxu0 0.0
        %1431 = vmatpush1.msra.mxu0 0.0
        %1432 = vmatprep.mubr.f32.mxu0 0.0
        %1433 = vmatmul.mubr.f32.gmra.mrb[0].mxu0 %v308
        %v1434 = vpop.f32.mrb[0].mxu0
        %v1435 = vadd.f32 %v1364, %v1434
        %v1436 = vpop.f32.mrb[0].mxu0
        %v1437 = vadd.f32 %v1366, %v1436
        %1438 = vdwg.mxu0
        %1439 = vmatprep.subr.mxu0 %v312
        %1440 = vmatpush1.msra.mxu0 %v311
        %1441 = vmatprep.subr.mxu0 %v316
        %1442 = vmatpush1.msra.mxu0 %v315
        %1443 = vmatprep.subr.mxu0 %v320
        %1444 = vmatpush1.msra.mxu0 %v319
        %1445 = vmatprep.subr.mxu0 %v324
        %1446 = vmatpush1.msra.mxu0 %v323
        %1447 = vmatprep.subr.mxu0 %v328
        %1448 = vmatpush1.msra.mxu0 %v327
        %1449 = vmatprep.subr.mxu0 %v332
        %1450 = vmatpush1.msra.mxu0 %v331
        %1451 = vmatprep.subr.mxu0 %v336
        %1452 = vmatpush1.msra.mxu0 %v335
        %1453 = vmatprep.subr.mxu0 %v340
        %1454 = vmatpush1.msra.mxu0 %v339
        %1455 = vmatprep.subr.mxu0 %v344
        %1456 = vmatpush1.msra.mxu0 %v343
        %1457 = vmatprep.subr.mxu0 %v348
        %1458 = vmatpush1.msra.mxu0 %v347
        %1459 = vmatprep.subr.mxu0 %v352
        %1460 = vmatpush1.msra.mxu0 %v351
        %1461 = vmatprep.subr.mxu0 %v356
        %1462 = vmatpush1.msra.mxu0 %v355
        %1463 = vmatprep.subr.mxu0 %v360
        %1464 = vmatpush1.msra.mxu0 %v359
        %1465 = vmatprep.subr.mxu0 %v364
        %1466 = vmatpush1.msra.mxu0 %v363
        %1467 = vmatprep.subr.mxu0 %v368
        %1468 = vmatpush1.msra.mxu0 %v367
        %1469 = vmatprep.subr.mxu0 %v372
        %1470 = vmatpush1.msra.mxu0 %v371
        %1471 = vmatprep.subr.mxu0 %v376
        %1472 = vmatpush1.msra.mxu0 %v375
        %1473 = vmatprep.subr.mxu0 %v380
        %1474 = vmatpush1.msra.mxu0 %v379
        %1475 = vmatprep.subr.mxu0 %v384
        %1476 = vmatpush1.msra.mxu0 %v383
        %1477 = vmatprep.subr.mxu0 %v388
        %1478 = vmatpush1.msra.mxu0 %v387
        %1479 = vmatprep.subr.mxu0 %v392
        %1480 = vmatpush1.msra.mxu0 %v391
        %1481 = vmatprep.subr.mxu0 %v396
        %1482 = vmatpush1.msra.mxu0 %v395
        %1483 = vmatprep.subr.mxu0 %v400
        %1484 = vmatpush1.msra.mxu0 %v399
        %1485 = vmatprep.subr.mxu0 %v404
        %1486 = vmatpush1.msra.mxu0 %v403
        %1487 = vmatprep.subr.mxu0 %v408
        %1488 = vmatpush1.msra.mxu0 %v407
        %1489 = vmatprep.subr.mxu0 %v412
        %1490 = vmatpush1.msra.mxu0 %v411
        %1491 = vmatprep.subr.mxu0 %v416
        %1492 = vmatpush1.msra.mxu0 %v415
        %1493 = vmatprep.subr.mxu0 %v420
        %1494 = vmatpush1.msra.mxu0 %v419
        %1495 = vmatprep.subr.mxu0 %v424
        %1496 = vmatpush1.msra.mxu0 %v423
        %1497 = vmatprep.subr.mxu0 %v428
        %1498 = vmatpush1.msra.mxu0 %v427
        %1499 = vmatprep.subr.mxu0 %v432
        %1500 = vmatpush1.msra.mxu0 %v431
        %1501 = vmatprep.subr.mxu0 %v436
        %1502 = vmatpush1.msra.mxu0 %v435
        %1503 = vmatprep.mubr.f32.mxu0 %v299
        %1504 = vmatmul.mubr.f32.gmra.mrb[0].mxu0 %v298
        %v1505 = vpop.f32.mrb[0].mxu0
        %v1506 = vadd.f32 0.0, %v1505
        %v1507 = vpop.f32.mrb[0].mxu0
        %v1508 = vadd.f32 0.0, %v1507
        %1509 = vdwg.mxu0
        %1510 = vmatprep.subr.mxu0 %v440
        %1511 = vmatpush1.msra.mxu0 %v439
        %1512 = vmatprep.subr.mxu0 %v444
        %1513 = vmatpush1.msra.mxu0 %v443
        %1514 = vmatprep.subr.mxu0 %v448
        %1515 = vmatpush1.msra.mxu0 %v447
        %1516 = vmatprep.subr.mxu0 %v452
        %1517 = vmatpush1.msra.mxu0 %v451
        %1518 = vmatprep.subr.mxu0 %v456
        %1519 = vmatpush1.msra.mxu0 %v455
        %1520 = vmatprep.subr.mxu0 %v460
        %1521 = vmatpush1.msra.mxu0 %v459
        %1522 = vmatprep.subr.mxu0 %v464
        %1523 = vmatpush1.msra.mxu0 %v463
        %1524 = vmatprep.subr.mxu0 %v468
        %1525 = vmatpush1.msra.mxu0 %v467
        %1526 = vmatprep.subr.mxu0 %v472
        %1527 = vmatpush1.msra.mxu0 %v471
        %1528 = vmatprep.subr.mxu0 %v476
        %1529 = vmatpush1.msra.mxu0 %v475
        %1530 = vmatprep.subr.mxu0 %v480
        %1531 = vmatpush1.msra.mxu0 %v479
        %1532 = vmatprep.subr.mxu0 %v484
        %1533 = vmatpush1.msra.mxu0 %v483
        %1534 = vmatprep.subr.mxu0 %v488
        %1535 = vmatpush1.msra.mxu0 %v487
        %1536 = vmatprep.subr.mxu0 %v492
        %1537 = vmatpush1.msra.mxu0 %v491
        %1538 = vmatprep.subr.mxu0 %v496
        %1539 = vmatpush1.msra.mxu0 %v495
        %1540 = vmatprep.subr.mxu0 %v500
        %1541 = vmatpush1.msra.mxu0 %v499
        %1542 = vmatprep.subr.mxu0 %v504
        %1543 = vmatpush1.msra.mxu0 %v503
        %1544 = vmatprep.subr.mxu0 %v508
        %1545 = vmatpush1.msra.mxu0 %v507
        %1546 = vmatprep.subr.mxu0 %v512
        %1547 = vmatpush1.msra.mxu0 %v511
        %1548 = vmatprep.subr.mxu0 %v516
        %1549 = vmatpush1.msra.mxu0 %v515
        %1550 = vmatprep.subr.mxu0 %v520
        %1551 = vmatpush1.msra.mxu0 %v519
        %1552 = vmatprep.subr.mxu0 %v524
        %1553 = vmatpush1.msra.mxu0 %v523
        %1554 = vmatprep.subr.mxu0 %v528
        %1555 = vmatpush1.msra.mxu0 %v527
        %1556 = vmatprep.subr.mxu0 %v532
        %1557 = vmatpush1.msra.mxu0 %v531
        %1558 = vmatprep.subr.mxu0 %v536
        %1559 = vmatpush1.msra.mxu0 %v535
        %1560 = vmatprep.subr.mxu0 %v540
        %1561 = vmatpush1.msra.mxu0 %v539
        %1562 = vmatprep.subr.mxu0 %v544
        %1563 = vmatpush1.msra.mxu0 %v543
        %1564 = vmatprep.subr.mxu0 %v548
        %1565 = vmatpush1.msra.mxu0 %v547
        %1566 = vmatprep.subr.mxu0 %v552
        %1567 = vmatpush1.msra.mxu0 %v551
        %1568 = vmatprep.subr.mxu0 %v556
        %1569 = vmatpush1.msra.mxu0 %v555
        %1570 = vmatprep.subr.mxu0 %v560
        %1571 = vmatpush1.msra.mxu0 %v559
        %1572 = vmatprep.subr.mxu0 %v564
        %1573 = vmatpush1.msra.mxu0 %v563
        %1574 = vmatprep.mubr.f32.mxu0 %v301
        %1575 = vmatmul.mubr.f32.gmra.mrb[0].mxu0 %v300
        %v1576 = vpop.f32.mrb[0].mxu0
        %v1577 = vadd.f32 %v1506, %v1576
        %v1578 = vpop.f32.mrb[0].mxu0
        %v1579 = vadd.f32 %v1508, %v1578
        %1580 = vdwg.mxu0
        %1581 = vmatprep.subr.mxu0 %v568
        %1582 = vmatpush1.msra.mxu0 %v567
        %1583 = vmatprep.subr.mxu0 %v572
        %1584 = vmatpush1.msra.mxu0 %v571
        %1585 = vmatprep.subr.mxu0 %v576
        %1586 = vmatpush1.msra.mxu0 %v575
        %1587 = vmatprep.subr.mxu0 %v580
        %1588 = vmatpush1.msra.mxu0 %v579
        %1589 = vmatprep.subr.mxu0 %v584
        %1590 = vmatpush1.msra.mxu0 %v583
        %1591 = vmatprep.subr.mxu0 %v588
        %1592 = vmatpush1.msra.mxu0 %v587
        %1593 = vmatprep.subr.mxu0 %v592
        %1594 = vmatpush1.msra.mxu0 %v591
        %1595 = vmatprep.subr.mxu0 %v596
        %1596 = vmatpush1.msra.mxu0 %v595
        %1597 = vmatprep.subr.mxu0 %v600
        %1598 = vmatpush1.msra.mxu0 %v599
        %1599 = vmatprep.subr.mxu0 %v604
        %1600 = vmatpush1.msra.mxu0 %v603
        %1601 = vmatprep.subr.mxu0 %v608
        %1602 = vmatpush1.msra.mxu0 %v607
        %1603 = vmatprep.subr.mxu0 %v612
        %1604 = vmatpush1.msra.mxu0 %v611
        %1605 = vmatprep.subr.mxu0 %v616
        %1606 = vmatpush1.msra.mxu0 %v615
        %1607 = vmatprep.subr.mxu0 %v620
        %1608 = vmatpush1.msra.mxu0 %v619
        %1609 = vmatprep.subr.mxu0 %v624
        %1610 = vmatpush1.msra.mxu0 %v623
        %1611 = vmatprep.subr.mxu0 %v628
        %1612 = vmatpush1.msra.mxu0 %v627
        %1613 = vmatprep.subr.mxu0 %v632
        %1614 = vmatpush1.msra.mxu0 %v631
        %1615 = vmatprep.subr.mxu0 %v636
        %1616 = vmatpush1.msra.mxu0 %v635
        %1617 = vmatprep.subr.mxu0 %v640
        %1618 = vmatpush1.msra.mxu0 %v639
        %1619 = vmatprep.subr.mxu0 %v644
        %1620 = vmatpush1.msra.mxu0 %v643
        %1621 = vmatprep.subr.mxu0 %v648
        %1622 = vmatpush1.msra.mxu0 %v647
        %1623 = vmatprep.subr.mxu0 %v652
        %1624 = vmatpush1.msra.mxu0 %v651
        %1625 = vmatprep.subr.mxu0 %v656
        %1626 = vmatpush1.msra.mxu0 %v655
        %1627 = vmatprep.subr.mxu0 %v660
        %1628 = vmatpush1.msra.mxu0 %v659
        %1629 = vmatprep.subr.mxu0 %v664
        %1630 = vmatpush1.msra.mxu0 %v663
        %1631 = vmatprep.subr.mxu0 %v668
        %1632 = vmatpush1.msra.mxu0 %v667
        %1633 = vmatprep.subr.mxu0 %v672
        %1634 = vmatpush1.msra.mxu0 %v671
        %1635 = vmatprep.subr.mxu0 %v676
        %1636 = vmatpush1.msra.mxu0 %v675
        %1637 = vmatprep.subr.mxu0 %v680
        %1638 = vmatpush1.msra.mxu0 %v679
        %1639 = vmatprep.subr.mxu0 %v684
        %1640 = vmatpush1.msra.mxu0 %v683
        %1641 = vmatprep.subr.mxu0 %v688
        %1642 = vmatpush1.msra.mxu0 %v687
        %1643 = vmatprep.subr.mxu0 %v692
        %1644 = vmatpush1.msra.mxu0 %v691
        %1645 = vmatprep.mubr.f32.mxu0 %v303
        %1646 = vmatmul.mubr.f32.gmra.mrb[0].mxu0 %v302
        %v1647 = vpop.f32.mrb[0].mxu0
        %v1648 = vadd.f32 %v1577, %v1647
        %v1649 = vpop.f32.mrb[0].mxu0
        %v1650 = vadd.f32 %v1579, %v1649
        %1651 = vdwg.mxu0
        %1652 = vmatprep.subr.mxu0 %v696
        %1653 = vmatpush1.msra.mxu0 %v695
        %1654 = vmatprep.subr.mxu0 %v700
        %1655 = vmatpush1.msra.mxu0 %v699
        %1656 = vmatprep.subr.mxu0 %v704
        %1657 = vmatpush1.msra.mxu0 %v703
        %1658 = vmatprep.subr.mxu0 %v708
        %1659 = vmatpush1.msra.mxu0 %v707
        %1660 = vmatprep.subr.mxu0 %v712
        %1661 = vmatpush1.msra.mxu0 %v711
        %1662 = vmatprep.subr.mxu0 %v716
        %1663 = vmatpush1.msra.mxu0 %v715
        %1664 = vmatprep.subr.mxu0 %v720
        %1665 = vmatpush1.msra.mxu0 %v719
        %1666 = vmatprep.subr.mxu0 %v724
        %1667 = vmatpush1.msra.mxu0 %v723
        %1668 = vmatprep.subr.mxu0 %v728
        %1669 = vmatpush1.msra.mxu0 %v727
        %1670 = vmatprep.subr.mxu0 %v732
        %1671 = vmatpush1.msra.mxu0 %v731
        %1672 = vmatprep.subr.mxu0 %v736
        %1673 = vmatpush1.msra.mxu0 %v735
        %1674 = vmatprep.subr.mxu0 %v740
        %1675 = vmatpush1.msra.mxu0 %v739
        %1676 = vmatprep.subr.mxu0 %v744
        %1677 = vmatpush1.msra.mxu0 %v743
        %1678 = vmatprep.subr.mxu0 %v748
        %1679 = vmatpush1.msra.mxu0 %v747
        %1680 = vmatprep.subr.mxu0 %v752
        %1681 = vmatpush1.msra.mxu0 %v751
        %1682 = vmatprep.subr.mxu0 %v756
        %1683 = vmatpush1.msra.mxu0 %v755
        %1684 = vmatprep.subr.mxu0 %v760
        %1685 = vmatpush1.msra.mxu0 %v759
        %1686 = vmatprep.subr.mxu0 %v764
        %1687 = vmatpush1.msra.mxu0 %v763
        %1688 = vmatprep.subr.mxu0 %v768
        %1689 = vmatpush1.msra.mxu0 %v767
        %1690 = vmatprep.subr.mxu0 %v772
        %1691 = vmatpush1.msra.mxu0 %v771
        %1692 = vmatprep.subr.mxu0 %v776
        %1693 = vmatpush1.msra.mxu0 %v775
        %1694 = vmatprep.subr.mxu0 %v780
        %1695 = vmatpush1.msra.mxu0 %v779
        %1696 = vmatprep.subr.mxu0 %v784
        %1697 = vmatpush1.msra.mxu0 %v783
        %1698 = vmatprep.subr.mxu0 %v788
        %1699 = vmatpush1.msra.mxu0 %v787
        %1700 = vmatprep.subr.mxu0 %v792
        %1701 = vmatpush1.msra.mxu0 %v791
        %1702 = vmatprep.subr.mxu0 %v796
        %1703 = vmatpush1.msra.mxu0 %v795
        %1704 = vmatprep.subr.mxu0 %v800
        %1705 = vmatpush1.msra.mxu0 %v799
        %1706 = vmatprep.subr.mxu0 %v804
        %1707 = vmatpush1.msra.mxu0 %v803
        %1708 = vmatprep.subr.mxu0 %v808
        %1709 = vmatpush1.msra.mxu0 %v807
        %1710 = vmatprep.subr.mxu0 %v812
        %1711 = vmatpush1.msra.mxu0 %v811
        %1712 = vmatprep.subr.mxu0 %v816
        %1713 = vmatpush1.msra.mxu0 %v815
        %1714 = vmatprep.subr.mxu0 %v820
        %1715 = vmatpush1.msra.mxu0 %v819
        %1716 = vmatprep.mubr.f32.mxu0 %v305
        %1717 = vmatmul.mubr.f32.gmra.mrb[0].mxu0 %v304
        %v1718 = vpop.f32.mrb[0].mxu0
        %v1719 = vadd.f32 %v1648, %v1718
        %v1720 = vpop.f32.mrb[0].mxu0
        %v1721 = vadd.f32 %v1650, %v1720
        %1722 = vdwg.mxu0
        %1723 = vmatprep.subr.mxu0 %v824
        %1724 = vmatpush1.msra.mxu0 %v823
        %1725 = vmatprep.subr.mxu0 %v828
        %1726 = vmatpush1.msra.mxu0 %v827
        %1727 = vmatprep.subr.mxu0 %v832
        %1728 = vmatpush1.msra.mxu0 %v831
        %1729 = vmatprep.subr.mxu0 %v836
        %1730 = vmatpush1.msra.mxu0 %v835
        %1731 = vmatprep.subr.mxu0 %v840
        %1732 = vmatpush1.msra.mxu0 %v839
        %1733 = vmatprep.subr.mxu0 %v844
        %1734 = vmatpush1.msra.mxu0 %v843
        %1735 = vmatprep.subr.mxu0 %v848
        %1736 = vmatpush1.msra.mxu0 %v847
        %1737 = vmatprep.subr.mxu0 %v852
        %1738 = vmatpush1.msra.mxu0 %v851
        %1739 = vmatprep.subr.mxu0 %v856
        %1740 = vmatpush1.msra.mxu0 %v855
        %1741 = vmatprep.subr.mxu0 %v860
        %1742 = vmatpush1.msra.mxu0 %v859
        %1743 = vmatprep.subr.mxu0 %v864
        %1744 = vmatpush1.msra.mxu0 %v863
        %1745 = vmatprep.subr.mxu0 %v868
        %1746 = vmatpush1.msra.mxu0 %v867
        %1747 = vmatprep.subr.mxu0 %v872
        %1748 = vmatpush1.msra.mxu0 %v871
        %1749 = vmatprep.subr.mxu0 %v876
        %1750 = vmatpush1.msra.mxu0 %v875
        %1751 = vmatprep.subr.mxu0 %v880
        %1752 = vmatpush1.msra.mxu0 %v879
        %1753 = vmatprep.subr.mxu0 %v884
        %1754 = vmatpush1.msra.mxu0 %v883
        %1755 = vmatprep.subr.mxu0 %v888
        %1756 = vmatpush1.msra.mxu0 %v887
        %1757 = vmatprep.subr.mxu0 %v892
        %1758 = vmatpush1.msra.mxu0 %v891
        %1759 = vmatprep.subr.mxu0 %v896
        %1760 = vmatpush1.msra.mxu0 %v895
        %1761 = vmatprep.subr.mxu0 %v900
        %1762 = vmatpush1.msra.mxu0 %v899
        %1763 = vmatprep.subr.mxu0 %v904
        %1764 = vmatpush1.msra.mxu0 %v903
        %1765 = vmatprep.subr.mxu0 %v908
        %1766 = vmatpush1.msra.mxu0 %v907
        %1767 = vmatprep.subr.mxu0 %v912
        %1768 = vmatpush1.msra.mxu0 %v911
        %1769 = vmatprep.subr.mxu0 %v916
        %1770 = vmatpush1.msra.mxu0 %v915
        %1771 = vmatprep.subr.mxu0 %v920
        %1772 = vmatpush1.msra.mxu0 %v919
        %1773 = vmatprep.subr.mxu0 %v924
        %1774 = vmatpush1.msra.mxu0 %v923
        %1775 = vmatprep.subr.mxu0 %v928
        %1776 = vmatpush1.msra.mxu0 %v927
        %1777 = vmatprep.subr.mxu0 %v932
        %1778 = vmatpush1.msra.mxu0 %v931
        %1779 = vmatprep.subr.mxu0 %v936
        %1780 = vmatpush1.msra.mxu0 %v935
        %1781 = vmatprep.subr.mxu0 %v940
        %1782 = vmatpush1.msra.mxu0 %v939
        %1783 = vmatprep.subr.mxu0 %v944
        %1784 = vmatpush1.msra.mxu0 %v943
        %1785 = vmatprep.subr.mxu0 %v948
        %1786 = vmatpush1.msra.mxu0 %v947
        %1787 = vmatprep.mubr.f32.mxu0 %v307
        %1788 = vmatmul.mubr.f32.gmra.mrb[0].mxu0 %v306
        %v1789 = vpop.f32.mrb[0].mxu0
        %v1790 = vadd.f32 %v1719, %v1789
        %v1791 = vpop.f32.mrb[0].mxu0
        %v1792 = vadd.f32 %v1721, %v1791
        %1793 = vdwg.mxu0
        %1794 = vmatprep.subr.mxu0 %v952
        %1795 = vmatpush1.msra.mxu0 %v951
        %1796 = vmatprep.subr.mxu0 %v956
        %1797 = vmatpush1.msra.mxu0 %v955
        %1798 = vmatprep.subr.mxu0 %v960
        %1799 = vmatpush1.msra.mxu0 %v959
        %1800 = vmatprep.subr.mxu0 %v964
        %1801 = vmatpush1.msra.mxu0 %v963
        %1802 = vmatprep.subr.mxu0 %v968
        %1803 = vmatpush1.msra.mxu0 %v967
        %1804 = vmatprep.subr.mxu0 %v972
        %1805 = vmatpush1.msra.mxu0 %v971
        %1806 = vmatprep.subr.mxu0 %v976
        %1807 = vmatpush1.msra.mxu0 %v975
        %1808 = vmatprep.subr.mxu0 %v980
        %1809 = vmatpush1.msra.mxu0 %v979
        %1810 = vmatprep.subr.mxu0 %v984
        %1811 = vmatpush1.msra.mxu0 %v983
        %1812 = vmatprep.subr.mxu0 %v988
        %1813 = vmatpush1.msra.mxu0 %v987
        %1814 = vmatprep.subr.mxu0 %v992
        %1815 = vmatpush1.msra.mxu0 %v991
        %1816 = vmatprep.subr.mxu0 %v996
        %1817 = vmatpush1.msra.mxu0 %v995
        %1818 = vmatprep.subr.mxu0 %v1000
        %1819 = vmatpush1.msra.mxu0 %v999
        %1820 = vmatprep.subr.mxu0 %v1004
        %1821 = vmatpush1.msra.mxu0 %v1003
        %1822 = vmatprep.subr.mxu0 %v1008
        %1823 = vmatpush1.msra.mxu0 %v1007
        %1824 = vmatprep.subr.mxu0 %v1012
        %1825 = vmatpush1.msra.mxu0 %v1011
        %1826 = vmatprep.subr.mxu0 0.0
        %1827 = vmatpush1.msra.mxu0 0.0
        %1828 = vmatprep.subr.mxu0 0.0
        %1829 = vmatpush1.msra.mxu0 0.0
        %1830 = vmatprep.subr.mxu0 0.0
        %1831 = vmatpush1.msra.mxu0 0.0
        %1832 = vmatprep.subr.mxu0 0.0
        %1833 = vmatpush1.msra.mxu0 0.0
        %1834 = vmatprep.subr.mxu0 0.0
        %1835 = vmatpush1.msra.mxu0 0.0
        %1836 = vmatprep.subr.mxu0 0.0
        %1837 = vmatpush1.msra.mxu0 0.0
        %1838 = vmatprep.subr.mxu0 0.0
        %1839 = vmatpush1.msra.mxu0 0.0
        %1840 = vmatprep.subr.mxu0 0.0
        %1841 = vmatpush1.msra.mxu0 0.0
        %1842 = vmatprep.subr.mxu0 0.0
        %1843 = vmatpush1.msra.mxu0 0.0
        %1844 = vmatprep.subr.mxu0 0.0
        %1845 = vmatpush1.msra.mxu0 0.0
        %1846 = vmatprep.subr.mxu0 0.0
        %1847 = vmatpush1.msra.mxu0 0.0
        %1848 = vmatprep.subr.mxu0 0.0
        %1849 = vmatpush1.msra.mxu0 0.0
        %1850 = vmatprep.subr.mxu0 0.0
        %1851 = vmatpush1.msra.mxu0 0.0
        %1852 = vmatprep.subr.mxu0 0.0
        %1853 = vmatpush1.msra.mxu0 0.0
        %1854 = vmatprep.subr.mxu0 0.0
        %1855 = vmatpush1.msra.mxu0 0.0
        %1856 = vmatprep.subr.mxu0 0.0
        %1857 = vmatpush1.msra.mxu0 0.0
        %1858 = vmatprep.mubr.f32.mxu0 0.0
        %1859 = vmatmul.mubr.f32.gmra.mrb[0].mxu0 %v308
        %v1860 = vpop.f32.mrb[0].mxu0
        %v1861 = vadd.f32 %v1790, %v1860
        %v1862 = vpop.f32.mrb[0].mxu0
        %v1863 = vadd.f32 %v1792, %v1862
        %1864 = vdwg.mxu0
        %v1865 = vadd.f32 %v294, %v1435
        %v1866 = vadd.f32 %v295, %v1437
        %v1867 = vadd.f32 %v296, %v1861
        %v1868 = vadd.f32 %v297, %v1863
        %1869 = vst [vmem:[%s284] sm:$0xff] %v1865
        %1870 = vst [vmem:[%s284 + $0x8] sm:$0xff] %v1866
        %1871 = vst [vmem:[%s284 + $0x10] sm:$0xff] %v1867
        %1872 = vst [vmem:[%s284 + $0x18] sm:$0xff] %v1868
        %p1873 = scmp.eq.s32.totalorder %s25, 2
        // Predicated region
        $region45: #{model_regression_forward.4} parent=31 // pred_check
          %p1874 = pneg %p1873
        $region46: #{model_regression_forward.4} parent=31 // pred_check_branch
          %1876 = sbr.rel (%p1874) target = $region48
        $region47: #{model_regression_forward.4} parent=31 // pred_region
          %v1877 = vld [vmem:[%s284] sm:$0xff]
          %v1878 = vld [vmem:[%s284 + $0x8] sm:$0xff]
          %v1879 = vld [vmem:[%s284 + $0x10] sm:$0xff]
          %v1880 = vld [vmem:[%s284 + $0x18] sm:$0xff]
          %v1881 = vld [vmem:[#allocation4] sm:$0xf]
          %v1883 = vlaneseq
          %v1884 = vshrl.u32 %v1883, 7
          %v1885 = vsub.s32 0, %v1884
          %v1886 = vrot.slane %v1881, %v1885
          %v1887 = vlaneseq
          %v1888 = vshrl.u32 %v1887, 7
          %v1889 = vsub.s32 1, %v1888
          %v1890 = vrot.slane %v1881, %v1889
          %v1891 = vlaneseq
          %v1892 = vshrl.u32 %v1891, 7
          %v1893 = vsub.s32 2, %v1892
          %v1894 = vrot.slane %v1881, %v1893
          %v1895 = vlaneseq
          %v1896 = vshrl.u32 %v1895, 7
          %v1897 = vsub.s32 3, %v1896
          %v1898 = vrot.slane %v1881, %v1897
          %v1903 = vadd.f32 %v1877, %v1886
          %v1904 = vadd.f32 %v1878, %v1890
          %v1905 = vadd.f32 %v1879, %v1894
          %v1906 = vadd.f32 %v1880, %v1898
          %vm1907 = vcmp.gt.f32.partialorder %v1903, 0.0
          %vm1908 = vcmp.gt.f32.partialorder %v1904, 0.0
          %vm1909 = vcmp.gt.f32.partialorder %v1905, 0.0
          %vm1910 = vcmp.gt.f32.partialorder %v1906, 0.0
          %v1911 = vmul.f32 %v1903, 0.01
          %v1912 = vmul.f32 %v1904, 0.01
          %v1913 = vmul.f32 %v1905, 0.01
          %v1914 = vmul.f32 %v1906, 0.01
          %v1915 = vsel %vm1907, %v1903, %v1911
          %v1916 = vsel %vm1908, %v1904, %v1912
          %v1917 = vsel %vm1909, %v1905, %v1913
          %v1918 = vsel %vm1910, %v1906, %v1914
          %1919 = vst [vmem:[%s284] sm:$0xff] %v1915
          %1920 = vst [vmem:[%s284 + $0x8] sm:$0xff] %v1916
          %1921 = vst [vmem:[%s284 + $0x10] sm:$0xff] %v1917
          %1922 = vst [vmem:[%s284 + $0x18] sm:$0xff] %v1918
        $region48: #{model_regression_forward.4} parent=31 // pred_fallthru
          _
        %s1923 = smul.u32 4, %s24
        %p1924 = scmp.lt.s32.totalorder %s23, 0
        %s1925 = scalar_select %p1924, %s23, 0
        %p1926 = scmp.lt.s32.totalorder %s1923, 3
        %s1927 = scalar_select %p1926, %s1923, 3
        %s1928 = smul.addr %s1925, 4
        %s1929 = sadd.s32 %s1927, %s1928
        %s1930 = smul.addr %s1929, 8
        %s1931 = scalar_lea.vmem %s3, %s1930
        // Predicated region
        $region49: #{model_regression_forward.4} parent=31 // pred_check
          %p1932 = pneg %p139
        $region50: #{model_regression_forward.4} parent=31 // pred_check_branch
          %1934 = sbr.rel (%p1932) target = $region52
        $region51: #{model_regression_forward.4} parent=31 // pred_region
          %s1935 = smul.u32 4, %s24
        $region52: #{model_regression_forward.4} parent=31 // pred_fallthru
          _
        // Predicated region
        $region53: #{model_regression_forward.4} parent=31 // pred_check
          %p1936 = pneg %p139
        $region54: #{model_regression_forward.4} parent=31 // pred_check_branch
          %1938 = sbr.rel (%p1936) target = $region56
        $region55: #{model_regression_forward.4} parent=31 // pred_region
          %s1939 = smul.u32 4, %s24
          %p1940 = scmp.lt.s32.totalorder %s23, 0
          %s1941 = scalar_select %p1940, %s23, 0
          %p1942 = scmp.lt.s32.totalorder %s1939, 3
          %s1943 = scalar_select %p1942, %s1939, 3
          %s1944 = smul.addr %s1941, 4
          %s1945 = sadd.s32 %s1943, %s1944
          %s1946 = smul.addr %s1945, 8
          %s1947 = scalar_lea.vmem %s3, %s1946
        $region56: #{model_regression_forward.4} parent=31 // pred_fallthru
          _
      $region32: #{model_regression_forward.4} parent=5 // pred_fallthru
        _
      %p1948 = scmp.le.s32.totalorder 2, %s13
      // Predicated region
      $region57: #{model_regression_forward.4} parent=5 // pred_check
        %p1949 = pneg %p1948
      $region58: #{model_regression_forward.4} parent=5 // pred_check_branch
        %1951 = sbr.rel (%p1949) target = $region60
      $region59: #{model_regression_forward.4} parent=5 // pred_region
        %s1952 = ssub.s32 %s13, 2
      $region60: #{model_regression_forward.4} parent=5 // pred_fallthru
        _
    $region6: #{model_regression_forward.4} parent=1 // loop_footer
      %s17 = sadd.s32 1, %s13
    $region7: #{model_regression_forward.4} parent=1 // loop_footer_branch
      %12 = sbr.rel target = $region3
    $region8: #{model_regression_forward.4} parent=1 // loop_exit
      _
    %1953 = vsyncpa [#allocation3], 1
    %s1954 = scalar_lea.sflag [#allocation3], 1
    %1955 = vsyncpa %s1954, 1
    %1956 = vsyncpa [#allocation5], 1

</llo_original>
